<compile_context>
chip_gen: v6e
topology: v6e:2x2x1
jax: 0.10.0
libtpu: 0.0.40
codegen_flags: <defaults>
</compile_context>

<pallas_src>
import math
import functools

import jax
import jax.numpy as jnp
from jax.experimental import pallas as pl
from jax.experimental.pallas import tpu as pltpu


# ---------------------------------------------------------------------------
# Wrapper-side (trace-time) weight preprocessing
# ---------------------------------------------------------------------------
def _make_blur2d(blur_kernel):
    """Normalized 2-D blur kernel, flipped (upfirdn2d correlates with the flip)."""
    k1 = jnp.asarray(blur_kernel, jnp.float32)
    k2 = jnp.outer(k1, k1)
    k2 = k2 / jnp.sum(k2)
    return k2[::-1, ::-1]


def _full_conv2d(w, kb):
    """Full 2-D convolution of each (oc, c) filter with kb: (.., kh, kw) -> (.., kh+bh-1, kw+bw-1)."""
    kh, kw = w.shape[-2:]
    bh, bw = kb.shape
    out = jnp.zeros(w.shape[:-2] + (kh + bh - 1, kw + bw - 1), w.dtype)
    for i in range(bh):
        for j in range(bw):
            out = out.at[..., i:i + kh, j:j + kw].add(kb[i, j] * w)
    return out


def _parity_split(ap):
    """(N, C, Hp, Wp) (Hp, Wp even) -> (N, 4, C, (Hp//2)*(Wp//2)) parity planes.

    planes[n, 2*pi+pj, c, a*(Wp//2)+b] == ap[n, c, 2*a+pi, 2*b+pj]
    """
    N, C, Hp, Wp = ap.shape
    a = ap.reshape(N, C, Hp // 2, 2, Wp // 2, 2)
    a = jnp.transpose(a, (0, 3, 5, 1, 2, 4))
    return a.reshape(N, 4, C, (Hp // 2) * (Wp // 2))


# ---------------------------------------------------------------------------
# Kernel 1: conv1 (3x3, stride 1, pad 1) + bias + leaky_relu  (gain folded)
# ---------------------------------------------------------------------------
def _conv1_kernel(x_ref, w_ref, b_ref, o_ref, *, offs, L, neg_slope):
    # x_ref: (C, Hp*Wp) flattened zero-padded input (compute dtype)
    # w_ref: (9, C, C) per-tap weights; b_ref: (C, 1) f32 effective bias
    # o_ref: (C, H*Wp) row-wraparound output (columns ow < W of each row are valid)
    acc = None
    for t, off in enumerate(offs):                       # 9 static taps
        d = jnp.dot(w_ref[t], x_ref[:, off:off + L],
                    preferred_element_type=jnp.float32)
        acc = d if acc is None else acc + d
    acc = acc + b_ref[...]                               # (C, 1) broadcast over lanes
    acc = jnp.where(acc >= 0.0, acc, neg_slope * acc)
    o_ref[:, :L] = acc.astype(o_ref.dtype)               # single lane-dense store
    o_ref[:, L:] = jnp.zeros((o_ref.shape[0], o_ref.shape[1] - L), o_ref.dtype)


# ---------------------------------------------------------------------------
# Kernel 2: fused  conv2(blur folded, 6x6 s2) + bias + leaky_relu + skip(4x4 s2)
# ---------------------------------------------------------------------------
def _down_kernel(h_ref, x_ref, w2_ref, ws_ref, b2_ref, o_ref, *,
                 taps_conv, taps_skip, L, neg_slope):
    # h_ref/x_ref: (4, C, P) parity planes of the padded inputs (compute dtype)
    # w2_ref: (36, OC, C), ws_ref: (16, OC, C), b2_ref: (OC, 1) f32
    # o_ref: (OC, OH*Pw) row-wraparound output (columns ow < OW valid)
    hp = [h_ref[i] for i in range(4)]
    xp = [x_ref[i] for i in range(4)]

    acc = None
    for t, (p, off) in enumerate(taps_conv):             # 36 static taps
        d = jnp.dot(w2_ref[t], hp[p][:, off:off + L],
                    preferred_element_type=jnp.float32)
        acc = d if acc is None else acc + d
    acc = acc + b2_ref[...]
    y = jnp.where(acc >= 0.0, acc, neg_slope * acc)

    skip = None
    for t, (p, off) in enumerate(taps_skip):             # 16 static taps
        d = jnp.dot(ws_ref[t], xp[p][:, off:off + L],
                    preferred_element_type=jnp.float32)
        skip = d if skip is None else skip + d
    y = y + skip                                         # 1/sqrt2 already in ws

    o_ref[:, :L] = y.astype(o_ref.dtype)
    o_ref[:, L:] = jnp.zeros((o_ref.shape[0], o_ref.shape[1] - L), o_ref.dtype)


# ---------------------------------------------------------------------------
# ResBlock forward
# ---------------------------------------------------------------------------
def res_block(x, w1, b1, w2, b2, w_skip, *, blur_kernel=(1, 3, 3, 1),
              compute_dtype=jnp.bfloat16):
    N, C, H, W = x.shape
    OC = w2.shape[0]
    assert H % 2 == 0 and W % 2 == 0
    assert len(blur_kernel) == 4, "padding math below assumes a 4-tap blur"
    sqrt2 = math.sqrt(2.0)
    neg_slope = 0.2

    kb = _make_blur2d(blur_kernel)                       # (4, 4)

    # ---- fold every static scale / the blur into the weights (trace-time) -------
    # conv1: equalized-lr scale * sqrt2 activation gain (lrelu is pos. homogeneous).
    w1_eff = w1 * (sqrt2 / math.sqrt(C * 9))
    b1_eff = (b1 * sqrt2).reshape(C, 1).astype(jnp.float32)
    # conv2: blur folded in (3x3 s2 on blurred == 6x6 s2 on raw); the sqrt2 gain and
    # the final 1/sqrt2 residual scale cancel.
    w2_eff = _full_conv2d(w2, kb) * (1.0 / math.sqrt(C * 9))          # (OC, C, 6, 6)
    b2_eff = b2.reshape(OC, 1).astype(jnp.float32)
    # skip: blur folded in (1x1 s2 == 4x4 s2); carries the final 1/sqrt2.
    ws_eff = _full_conv2d(w_skip, kb) * (1.0 / (math.sqrt(C) * sqrt2))  # (OC, C, 4, 4)

    # ---- stage 1: conv1 --------------------------------------------------------
    # x is padded once ((1,3),(1,3)); the same padded bf16 array also feeds the skip
    # branch's parity planes, so the pad fuses with the required f32->bf16 cast.
    Hp, Wp = H + 4, W + 4
    x_pad = jnp.pad(x, ((0, 0), (0, 0), (1, 3), (1, 3))).astype(compute_dtype)
    x_flat = x_pad.reshape(N, C, Hp * Wp)
    w1_taps = jnp.transpose(w1_eff, (2, 3, 0, 1)).reshape(9, C, C).astype(compute_dtype)
    L1 = (H - 1) * Wp + W
    offs1 = tuple(ki * Wp + kj for ki in range(3) for kj in range(3))
    itemsize = jnp.dtype(compute_dtype).itemsize

    h_wrap = pl.pallas_call(
        functools.partial(_conv1_kernel, offs=offs1, L=L1, neg_slope=neg_slope),
        out_shape=jax.ShapeDtypeStruct((N, C, H * Wp), compute_dtype),
        grid_spec=pltpu.PrefetchScalarGridSpec(
            num_scalar_prefetch=0,
            grid=(N,),
            in_specs=[
                pl.BlockSpec((pl.Squeezed(), C, Hp * Wp), lambda n: (n, 0, 0)),
                pl.BlockSpec((9, C, C), lambda n: (0, 0, 0)),
                pl.BlockSpec((C, 1), lambda n: (0, 0)),
            ],
            out_specs=pl.BlockSpec((pl.Squeezed(), C, H * Wp), lambda n: (n, 0, 0)),
        ),
        compiler_params=pltpu.CompilerParams(
            dimension_semantics=("parallel",),
            vmem_limit_bytes=48 * 1024 * 1024,
        ),
        cost_estimate=pl.CostEstimate(
            flops=2 * N * C * C * 9 * H * Wp,
            transcendentals=0,
            bytes_accessed=int(x_flat.size * itemsize + w1_taps.size * itemsize
                               + N * C * H * Wp * itemsize + C * 4),
        ),
    )(x_flat, w1_taps, b1_eff)

    # valid columns of h + pad-2 + parity split: one fused XLA relayout pass over h
    # (replaces the old blur(h) + jnp.pad + 36x im2col patch tensor).
    h = h_wrap.reshape(N, C, H, Wp)[:, :, :, :W]
    h_pp = _parity_split(jnp.pad(h, ((0, 0), (0, 0), (2, 2), (2, 2))))
    x_pp = _parity_split(x_pad)        # reuse the already padded/cast x

    # ---- stage 2: fused conv2 + bias + leaky_relu + skip ------------------------
    OH, OW = H // 2, W // 2
    Ph, Pw = H // 2 + 2, W // 2 + 2
    P = Ph * Pw
    L2 = (OH - 1) * Pw + OW
    w2_taps = jnp.transpose(w2_eff, (2, 3, 0, 1)).reshape(36, OC, C).astype(compute_dtype)
    ws_taps = jnp.transpose(ws_eff, (2, 3, 0, 1)).reshape(16, OC, C).astype(compute_dtype)
    taps_conv = tuple(((ki % 2) * 2 + (kj % 2), (ki // 2) * Pw + (kj // 2))
                      for ki in range(6) for kj in range(6))
    taps_skip = tuple(((ki % 2) * 2 + (kj % 2), (ki // 2) * Pw + (kj // 2))
                      for ki in range(4) for kj in range(4))

    out_wrap = pl.pallas_call(
        functools.partial(_down_kernel, taps_conv=taps_conv, taps_skip=taps_skip,
                          L=L2, neg_slope=neg_slope),
        out_shape=jax.ShapeDtypeStruct((N, OC, OH * Pw), jnp.float32),
        grid_spec=pltpu.PrefetchScalarGridSpec(
            num_scalar_prefetch=0,
            grid=(N,),
            in_specs=[
                pl.BlockSpec((pl.Squeezed(), 4, C, P), lambda n: (n, 0, 0, 0)),
                pl.BlockSpec((pl.Squeezed(), 4, C, P), lambda n: (n, 0, 0, 0)),
                pl.BlockSpec((36, OC, C), lambda n: (0, 0, 0)),
                pl.BlockSpec((16, OC, C), lambda n: (0, 0, 0)),
                pl.BlockSpec((OC, 1), lambda n: (0, 0)),
            ],
            out_specs=pl.BlockSpec((pl.Squeezed(), OC, OH * Pw), lambda n: (n, 0, 0)),
        ),
        compiler_params=pltpu.CompilerParams(
            dimension_semantics=("parallel",),
            vmem_limit_bytes=48 * 1024 * 1024,
        ),
        cost_estimate=pl.CostEstimate(
            flops=2 * N * OC * C * (36 + 16) * OH * Pw,
            transcendentals=0,
            bytes_accessed=int(h_pp.size * itemsize + x_pp.size * itemsize
                               + (w2_taps.size + ws_taps.size) * itemsize
                               + N * OC * OH * Pw * 4 + OC * 4),
        ),
    )(h_pp, x_pp, w2_taps, ws_taps, b2_eff)

    return out_wrap.reshape(N, OC, OH, Pw)[:, :, :, :OW]


# ---------------------------------------------------------------------------
# Pure-JAX reference (matches the PyTorch module math, in f32)
# ---------------------------------------------------------------------------
def res_block_reference(x, w1, b1, w2, b2, w_skip, blur_kernel=(1, 3, 3, 1)):
    sqrt2 = math.sqrt(2.0)

    def eq_conv(x, w, stride, padding):
        C, K = w.shape[1], w.shape[2]
        scale = 1.0 / math.sqrt(C * K * K)
        return jax.lax.conv_general_dilated(
            x, w * scale, window_strides=(stride, stride),
            padding=[(padding, padding), (padding, padding)],
            dimension_numbers=("NCHW", "OIHW", "NCHW"))

    def fused_lrelu(x, b):
        y = x + b.reshape(1, -1, 1, 1)
        return jnp.where(y >= 0, y, 0.2 * y) * sqrt2

    def blur(x, pad):
        k1 = jnp.asarray(blur_kernel, jnp.float32)
        k2 = jnp.outer(k1, k1)
        k2 = k2 / jnp.sum(k2)
        k2 = k2[::-1, ::-1]                       # upfirdn2d = true convolution
        C = x.shape[1]
        kern = jnp.tile(k2[None, None], (C, 1, 1, 1))
        return jax.lax.conv_general_dilated(
            x, kern, window_strides=(1, 1),
            padding=[(pad[0], pad[1]), (pad[0], pad[1])],
            dimension_numbers=("NCHW", "OIHW", "NCHW"),
            feature_group_count=C)

    h = fused_lrelu(eq_conv(x, w1, 1, 1), b1)
    h = fused_lrelu(eq_conv(blur(h, (2, 2)), w2, 2, 0), b2)
    s = eq_conv(blur(x, (1, 1)), w_skip, 2, 0)
    return (h + s) / sqrt2


if __name__ == "__main__":
    # ResBlock(in_channel=4, out_channel=8) on (N=2, 4, 16, 16) input.
    N, C_in, C_out, H, W = 2, 4, 8, 16, 16
    key = jax.random.PRNGKey(0)
    k_x, k_w1, k_b1, k_w2, k_b2, k_ws = jax.random.split(key, 6)

    x = jax.random.normal(k_x, (N, C_in, H, W), jnp.float32)
    w1 = jax.random.normal(k_w1, (C_in, C_in, 3, 3), jnp.float32)
    b1 = 0.1 * jax.random.normal(k_b1, (C_in,), jnp.float32)
    w2 = jax.random.normal(k_w2, (C_out, C_in, 3, 3), jnp.float32)
    b2 = 0.1 * jax.random.normal(k_b2, (C_out,), jnp.float32)
    ws = jax.random.normal(k_ws, (C_out, C_in, 1, 1), jnp.float32)

    ref = res_block_reference(x, w1, b1, w2, b2, ws)

    # f32 compute path: tight structural / index-math / gain-folding check.
    res_block_f32 = jax.jit(functools.partial(res_block, compute_dtype=jnp.float32))
    out_f32 = jax.block_until_ready(res_block_f32(x, w1, b1, w2, b2, ws))
    assert out_f32.shape == (N, C_out, H // 2, W // 2)
    err32 = float(jnp.max(jnp.abs(out_f32 - ref)))
    assert err32 < 5e-4, ("f32 max abs err", err32)

    # bf16 compute path (default, MXU-native): relaxed tolerance for bf16 operands.
    res_block_bf16 = jax.jit(functools.partial(res_block, compute_dtype=jnp.bfloat16))
    out_bf16 = jax.block_until_ready(res_block_bf16(x, w1, b1, w2, b2, ws))
    assert out_bf16.shape == (N, C_out, H // 2, W // 2)
    err16 = float(jnp.max(jnp.abs(out_bf16 - ref)))
    assert err16 < 2e-1, ("bf16 max abs err", err16)

    print("KERNEL_OK")
</pallas_src>

<mosaic_0001>
module attributes {stable_mosaic.version = 11 : i64} {
  func.func @_conv1_kernel(%arg0: i32, %arg1: memref<1x4x400xf32, #tpu.memory_space<vmem>>, %arg2: memref<9x4x4xf32, #tpu.memory_space<vmem>>, %arg3: memref<4x1xf32, #tpu.memory_space<vmem>>, %arg4: memref<1x4x320xf32, #tpu.memory_space<vmem>>) attributes {dimension_semantics = [#tpu.dimension_semantics<parallel>], iteration_bounds = array<i64: 2>, scalar_prefetch = 0 : i64, scratch_operands = 0 : i64, tpu.core_type = #tpu.core_type<tc>, window_params = [{transform_indices = @transform_0, window_bounds = array<i64: 1, 4, 400>}, {pipeline_mode = #tpu.pipeline_mode<synchronous>, transform_indices = @transform_1, window_bounds = array<i64: 9, 4, 4>}, {pipeline_mode = #tpu.pipeline_mode<synchronous>, transform_indices = @transform_2, window_bounds = array<i64: 4, 1>}, {transform_indices = @transform_3, window_bounds = array<i64: 1, 4, 320>}]} {
    %c0 = arith.constant 0 : index
    %c0_0 = arith.constant 0 : index
    %c0_1 = arith.constant 0 : index
    %0 = vector.load %arg2[%c0, %c0_0, %c0_1] : memref<9x4x4xf32, #tpu.memory_space<vmem>>, vector<1x4x4xf32>
    %1 = vector.shape_cast %0 : vector<1x4x4xf32> to vector<4x4xf32>
    %c0_2 = arith.constant 0 : index
    %c0_3 = arith.constant 0 : index
    %c0_4 = arith.constant 0 : index
    %2 = vector.load %arg1[%c0_2, %c0_3, %c0_4] : memref<1x4x400xf32, #tpu.memory_space<vmem>>, vector<1x4x316xf32>
    %3 = vector.shape_cast %2 : vector<1x4x316xf32> to vector<4x316xf32>
    %cst = arith.constant dense<0.000000e+00> : vector<4x316xf32>
    %4 = tpu.matmul %1, %3, %cst {dimension_numbers = #tpu.dot_dimension_numbers<[1], [0], [0], [1], [0, 0, 1, 1], [], []>} : vector<4x4xf32>, vector<4x316xf32>, vector<4x316xf32> -> vector<4x316xf32>
    %c1 = arith.constant 1 : index
    %c0_5 = arith.constant 0 : index
    %c0_6 = arith.constant 0 : index
    %5 = vector.load %arg2[%c1, %c0_5, %c0_6] : memref<9x4x4xf32, #tpu.memory_space<vmem>>, vector<1x4x4xf32>
    %6 = vector.shape_cast %5 : vector<1x4x4xf32> to vector<4x4xf32>
    %c0_7 = arith.constant 0 : index
    %c0_8 = arith.constant 0 : index
    %c1_9 = arith.constant 1 : index
    %7 = vector.load %arg1[%c0_7, %c0_8, %c1_9] : memref<1x4x400xf32, #tpu.memory_space<vmem>>, vector<1x4x316xf32>
    %8 = vector.shape_cast %7 : vector<1x4x316xf32> to vector<4x316xf32>
    %cst_10 = arith.constant dense<0.000000e+00> : vector<4x316xf32>
    %9 = tpu.matmul %6, %8, %cst_10 {dimension_numbers = #tpu.dot_dimension_numbers<[1], [0], [0], [1], [0, 0, 1, 1], [], []>} : vector<4x4xf32>, vector<4x316xf32>, vector<4x316xf32> -> vector<4x316xf32>
    %10 = arith.addf %4, %9 : vector<4x316xf32>
    %c2 = arith.constant 2 : index
    %c0_11 = arith.constant 0 : index
    %c0_12 = arith.constant 0 : index
    %11 = vector.load %arg2[%c2, %c0_11, %c0_12] : memref<9x4x4xf32, #tpu.memory_space<vmem>>, vector<1x4x4xf32>
    %12 = vector.shape_cast %11 : vector<1x4x4xf32> to vector<4x4xf32>
    %c0_13 = arith.constant 0 : index
    %c0_14 = arith.constant 0 : index
    %c2_15 = arith.constant 2 : index
    %13 = vector.load %arg1[%c0_13, %c0_14, %c2_15] : memref<1x4x400xf32, #tpu.memory_space<vmem>>, vector<1x4x316xf32>
    %14 = vector.shape_cast %13 : vector<1x4x316xf32> to vector<4x316xf32>
    %cst_16 = arith.constant dense<0.000000e+00> : vector<4x316xf32>
    %15 = tpu.matmul %12, %14, %cst_16 {dimension_numbers = #tpu.dot_dimension_numbers<[1], [0], [0], [1], [0, 0, 1, 1], [], []>} : vector<4x4xf32>, vector<4x316xf32>, vector<4x316xf32> -> vector<4x316xf32>
    %16 = arith.addf %10, %15 : vector<4x316xf32>
    %c3 = arith.constant 3 : index
    %c0_17 = arith.constant 0 : index
    %c0_18 = arith.constant 0 : index
    %17 = vector.load %arg2[%c3, %c0_17, %c0_18] : memref<9x4x4xf32, #tpu.memory_space<vmem>>, vector<1x4x4xf32>
    %18 = vector.shape_cast %17 : vector<1x4x4xf32> to vector<4x4xf32>
    %c0_19 = arith.constant 0 : index
    %c0_20 = arith.constant 0 : index
    %c20 = arith.constant 20 : index
    %19 = vector.load %arg1[%c0_19, %c0_20, %c20] : memref<1x4x400xf32, #tpu.memory_space<vmem>>, vector<1x4x316xf32>
    %20 = vector.shape_cast %19 : vector<1x4x316xf32> to vector<4x316xf32>
    %cst_21 = arith.constant dense<0.000000e+00> : vector<4x316xf32>
    %21 = tpu.matmul %18, %20, %cst_21 {dimension_numbers = #tpu.dot_dimension_numbers<[1], [0], [0], [1], [0, 0, 1, 1], [], []>} : vector<4x4xf32>, vector<4x316xf32>, vector<4x316xf32> -> vector<4x316xf32>
    %22 = arith.addf %16, %21 : vector<4x316xf32>
    %c4 = arith.constant 4 : index
    %c0_22 = arith.constant 0 : index
    %c0_23 = arith.constant 0 : index
    %23 = vector.load %arg2[%c4, %c0_22, %c0_23] : memref<9x4x4xf32, #tpu.memory_space<vmem>>, vector<1x4x4xf32>
    %24 = vector.shape_cast %23 : vector<1x4x4xf32> to vector<4x4xf32>
    %c0_24 = arith.constant 0 : index
    %c0_25 = arith.constant 0 : index
    %c21 = arith.constant 21 : index
    %25 = vector.load %arg1[%c0_24, %c0_25, %c21] : memref<1x4x400xf32, #tpu.memory_space<vmem>>, vector<1x4x316xf32>
    %26 = vector.shape_cast %25 : vector<1x4x316xf32> to vector<4x316xf32>
    %cst_26 = arith.constant dense<0.000000e+00> : vector<4x316xf32>
    %27 = tpu.matmul %24, %26, %cst_26 {dimension_numbers = #tpu.dot_dimension_numbers<[1], [0], [0], [1], [0, 0, 1, 1], [], []>} : vector<4x4xf32>, vector<4x316xf32>, vector<4x316xf32> -> vector<4x316xf32>
    %28 = arith.addf %22, %27 : vector<4x316xf32>
    %c5 = arith.constant 5 : index
    %c0_27 = arith.constant 0 : index
    %c0_28 = arith.constant 0 : index
    %29 = vector.load %arg2[%c5, %c0_27, %c0_28] : memref<9x4x4xf32, #tpu.memory_space<vmem>>, vector<1x4x4xf32>
    %30 = vector.shape_cast %29 : vector<1x4x4xf32> to vector<4x4xf32>
    %c0_29 = arith.constant 0 : index
    %c0_30 = arith.constant 0 : index
    %c22 = arith.constant 22 : index
    %31 = vector.load %arg1[%c0_29, %c0_30, %c22] : memref<1x4x400xf32, #tpu.memory_space<vmem>>, vector<1x4x316xf32>
    %32 = vector.shape_cast %31 : vector<1x4x316xf32> to vector<4x316xf32>
    %cst_31 = arith.constant dense<0.000000e+00> : vector<4x316xf32>
    %33 = tpu.matmul %30, %32, %cst_31 {dimension_numbers = #tpu.dot_dimension_numbers<[1], [0], [0], [1], [0, 0, 1, 1], [], []>} : vector<4x4xf32>, vector<4x316xf32>, vector<4x316xf32> -> vector<4x316xf32>
    %34 = arith.addf %28, %33 : vector<4x316xf32>
    %c6 = arith.constant 6 : index
    %c0_32 = arith.constant 0 : index
    %c0_33 = arith.constant 0 : index
    %35 = vector.load %arg2[%c6, %c0_32, %c0_33] : memref<9x4x4xf32, #tpu.memory_space<vmem>>, vector<1x4x4xf32>
    %36 = vector.shape_cast %35 : vector<1x4x4xf32> to vector<4x4xf32>
    %c0_34 = arith.constant 0 : index
    %c0_35 = arith.constant 0 : index
    %c40 = arith.constant 40 : index
    %37 = vector.load %arg1[%c0_34, %c0_35, %c40] : memref<1x4x400xf32, #tpu.memory_space<vmem>>, vector<1x4x316xf32>
    %38 = vector.shape_cast %37 : vector<1x4x316xf32> to vector<4x316xf32>
    %cst_36 = arith.constant dense<0.000000e+00> : vector<4x316xf32>
    %39 = tpu.matmul %36, %38, %cst_36 {dimension_numbers = #tpu.dot_dimension_numbers<[1], [0], [0], [1], [0, 0, 1, 1], [], []>} : vector<4x4xf32>, vector<4x316xf32>, vector<4x316xf32> -> vector<4x316xf32>
    %40 = arith.addf %34, %39 : vector<4x316xf32>
    %c7 = arith.constant 7 : index
    %c0_37 = arith.constant 0 : index
    %c0_38 = arith.constant 0 : index
    %41 = vector.load %arg2[%c7, %c0_37, %c0_38] : memref<9x4x4xf32, #tpu.memory_space<vmem>>, vector<1x4x4xf32>
    %42 = vector.shape_cast %41 : vector<1x4x4xf32> to vector<4x4xf32>
    %c0_39 = arith.constant 0 : index
    %c0_40 = arith.constant 0 : index
    %c41 = arith.constant 41 : index
    %43 = vector.load %arg1[%c0_39, %c0_40, %c41] : memref<1x4x400xf32, #tpu.memory_space<vmem>>, vector<1x4x316xf32>
    %44 = vector.shape_cast %43 : vector<1x4x316xf32> to vector<4x316xf32>
    %cst_41 = arith.constant dense<0.000000e+00> : vector<4x316xf32>
    %45 = tpu.matmul %42, %44, %cst_41 {dimension_numbers = #tpu.dot_dimension_numbers<[1], [0], [0], [1], [0, 0, 1, 1], [], []>} : vector<4x4xf32>, vector<4x316xf32>, vector<4x316xf32> -> vector<4x316xf32>
    %46 = arith.addf %40, %45 : vector<4x316xf32>
    %c8 = arith.constant 8 : index
    %c0_42 = arith.constant 0 : index
    %c0_43 = arith.constant 0 : index
    %47 = vector.load %arg2[%c8, %c0_42, %c0_43] : memref<9x4x4xf32, #tpu.memory_space<vmem>>, vector<1x4x4xf32>
    %48 = vector.shape_cast %47 : vector<1x4x4xf32> to vector<4x4xf32>
    %c0_44 = arith.constant 0 : index
    %c0_45 = arith.constant 0 : index
    %c42 = arith.constant 42 : index
    %49 = vector.load %arg1[%c0_44, %c0_45, %c42] : memref<1x4x400xf32, #tpu.memory_space<vmem>>, vector<1x4x316xf32>
    %50 = vector.shape_cast %49 : vector<1x4x316xf32> to vector<4x316xf32>
    %cst_46 = arith.constant dense<0.000000e+00> : vector<4x316xf32>
    %51 = tpu.matmul %48, %50, %cst_46 {dimension_numbers = #tpu.dot_dimension_numbers<[1], [0], [0], [1], [0, 0, 1, 1], [], []>} : vector<4x4xf32>, vector<4x316xf32>, vector<4x316xf32> -> vector<4x316xf32>
    %52 = arith.addf %46, %51 : vector<4x316xf32>
    %c0_47 = arith.constant 0 : index
    %c0_48 = arith.constant 0 : index
    %53 = vector.load %arg3[%c0_47, %c0_48] : memref<4x1xf32, #tpu.memory_space<vmem>>, vector<4x1xf32>
    %54 = vector.broadcast %53 : vector<4x1xf32> to vector<4x316xf32>
    %55 = arith.addf %52, %54 : vector<4x316xf32>
    %cst_49 = arith.constant 0.000000e+00 : f32
    %56 = vector.broadcast %cst_49 : f32 to vector<4x316xf32>
    %57 = arith.cmpf oge, %55, %56 : vector<4x316xf32>
    %cst_50 = arith.constant 2.000000e-01 : f32
    %58 = vector.broadcast %cst_50 : f32 to vector<4x316xf32>
    %59 = arith.mulf %58, %55 : vector<4x316xf32>
    %60 = arith.select %57, %55, %59 : vector<4x316xi1>, vector<4x316xf32>
    %c0_51 = arith.constant 0 : index
    %c0_52 = arith.constant 0 : index
    %c0_53 = arith.constant 0 : index
    %61 = vector.load %arg4[%c0_51, %c0_52, %c0_53] : memref<1x4x320xf32, #tpu.memory_space<vmem>>, vector<1x4x316xf32>
    %62 = vector.shape_cast %61 : vector<1x4x316xf32> to vector<4x316xf32>
    %63 = vector.shape_cast %60 : vector<4x316xf32> to vector<1x4x316xf32>
    tpu.vector_store %arg4[%c0_51, %c0_52, %c0_53], %63 {strides = array<i32>} : memref<1x4x320xf32, #tpu.memory_space<vmem>>, vector<1x4x316xf32>,
    %cst_54 = arith.constant 0.000000e+00 : f32
    %64 = vector.broadcast %cst_54 : f32 to vector<4x4xf32>
    %c0_55 = arith.constant 0 : index
    %c0_56 = arith.constant 0 : index
    %c316 = arith.constant 316 : index
    %65 = vector.load %arg4[%c0_55, %c0_56, %c316] : memref<1x4x320xf32, #tpu.memory_space<vmem>>, vector<1x4x4xf32>
    %66 = vector.shape_cast %65 : vector<1x4x4xf32> to vector<4x4xf32>
    %67 = vector.shape_cast %64 : vector<4x4xf32> to vector<1x4x4xf32>
    tpu.vector_store %arg4[%c0_55, %c0_56, %c316], %67 {strides = array<i32>} : memref<1x4x320xf32, #tpu.memory_space<vmem>>, vector<1x4x4xf32>,
    return
  }
  func.func @transform_0(%arg0: i32) -> (i32, i32, i32) {
    %c0_i32 = arith.constant 0 : i32
    %c0_i32_0 = arith.constant 0 : i32
    %c0_i32_1 = arith.constant 0 : i32
    return %arg0, %c0_i32, %c0_i32_0 : i32, i32, i32
  }
  func.func @transform_1(%arg0: i32) -> (i32, i32, i32) {
    %c0_i32 = arith.constant 0 : i32
    %c0_i32_0 = arith.constant 0 : i32
    %c0_i32_1 = arith.constant 0 : i32
    %c0_i32_2 = arith.constant 0 : i32
    return %c0_i32, %c0_i32_0, %c0_i32_1 : i32, i32, i32
  }
  func.func @transform_2(%arg0: i32) -> (i32, i32) {
    %c0_i32 = arith.constant 0 : i32
    %c0_i32_0 = arith.constant 0 : i32
    %c0_i32_1 = arith.constant 0 : i32
    return %c0_i32, %c0_i32_0 : i32, i32
  }
  func.func @transform_3(%arg0: i32) -> (i32, i32, i32) {
    %c0_i32 = arith.constant 0 : i32
    %c0_i32_0 = arith.constant 0 : i32
    %c0_i32_1 = arith.constant 0 : i32
    return %arg0, %c0_i32, %c0_i32_0 : i32, i32, i32
  }
}

module attributes {stable_mosaic.version = 11 : i64} {
  func.func @_down_kernel(%arg0: i32, %arg1: memref<1x4x4x100xf32, #tpu.memory_space<vmem>>, %arg2: memref<1x4x4x100xf32, #tpu.memory_space<vmem>>, %arg3: memref<36x8x4xf32, #tpu.memory_space<vmem>>, %arg4: memref<16x8x4xf32, #tpu.memory_space<vmem>>, %arg5: memref<8x1xf32, #tpu.memory_space<vmem>>, %arg6: memref<1x8x80xf32, #tpu.memory_space<vmem>>) attributes {dimension_semantics = [#tpu.dimension_semantics<parallel>], iteration_bounds = array<i64: 2>, scalar_prefetch = 0 : i64, scratch_operands = 0 : i64, tpu.core_type = #tpu.core_type<tc>, window_params = [{transform_indices = @transform_0, window_bounds = array<i64: 1, 4, 4, 100>}, {transform_indices = @transform_1, window_bounds = array<i64: 1, 4, 4, 100>}, {pipeline_mode = #tpu.pipeline_mode<synchronous>, transform_indices = @transform_2, window_bounds = array<i64: 36, 8, 4>}, {pipeline_mode = #tpu.pipeline_mode<synchronous>, transform_indices = @transform_3, window_bounds = array<i64: 16, 8, 4>}, {pipeline_mode = #tpu.pipeline_mode<synchronous>, transform_indices = @transform_4, window_bounds = array<i64: 8, 1>}, {transform_indices = @transform_5, window_bounds = array<i64: 1, 8, 80>}]} {
    %c0 = arith.constant 0 : index
    %c0_0 = arith.constant 0 : index
    %c0_1 = arith.constant 0 : index
    %c0_2 = arith.constant 0 : index
    %0 = vector.load %arg1[%c0, %c0_0, %c0_1, %c0_2] : memref<1x4x4x100xf32, #tpu.memory_space<vmem>>, vector<1x1x4x100xf32>
    %1 = vector.shape_cast %0 : vector<1x1x4x100xf32> to vector<4x100xf32>
    %c0_3 = arith.constant 0 : index
    %c1 = arith.constant 1 : index
    %c0_4 = arith.constant 0 : index
    %c0_5 = arith.constant 0 : index
    %2 = vector.load %arg1[%c0_3, %c1, %c0_4, %c0_5] : memref<1x4x4x100xf32, #tpu.memory_space<vmem>>, vector<1x1x4x100xf32>
    %3 = vector.shape_cast %2 : vector<1x1x4x100xf32> to vector<4x100xf32>
    %c0_6 = arith.constant 0 : index
    %c2 = arith.constant 2 : index
    %c0_7 = arith.constant 0 : index
    %c0_8 = arith.constant 0 : index
    %4 = vector.load %arg1[%c0_6, %c2, %c0_7, %c0_8] : memref<1x4x4x100xf32, #tpu.memory_space<vmem>>, vector<1x1x4x100xf32>
    %5 = vector.shape_cast %4 : vector<1x1x4x100xf32> to vector<4x100xf32>
    %c0_9 = arith.constant 0 : index
    %c3 = arith.constant 3 : index
    %c0_10 = arith.constant 0 : index
    %c0_11 = arith.constant 0 : index
    %6 = vector.load %arg1[%c0_9, %c3, %c0_10, %c0_11] : memref<1x4x4x100xf32, #tpu.memory_space<vmem>>, vector<1x1x4x100xf32>
    %7 = vector.shape_cast %6 : vector<1x1x4x100xf32> to vector<4x100xf32>
    %c0_12 = arith.constant 0 : index
    %c0_13 = arith.constant 0 : index
    %c0_14 = arith.constant 0 : index
    %c0_15 = arith.constant 0 : index
    %8 = vector.load %arg2[%c0_12, %c0_13, %c0_14, %c0_15] : memref<1x4x4x100xf32, #tpu.memory_space<vmem>>, vector<1x1x4x100xf32>
    %9 = vector.shape_cast %8 : vector<1x1x4x100xf32> to vector<4x100xf32>
    %c0_16 = arith.constant 0 : index
    %c1_17 = arith.constant 1 : index
    %c0_18 = arith.constant 0 : index
    %c0_19 = arith.constant 0 : index
    %10 = vector.load %arg2[%c0_16, %c1_17, %c0_18, %c0_19] : memref<1x4x4x100xf32, #tpu.memory_space<vmem>>, vector<1x1x4x100xf32>
    %11 = vector.shape_cast %10 : vector<1x1x4x100xf32> to vector<4x100xf32>
    %c0_20 = arith.constant 0 : index
    %c2_21 = arith.constant 2 : index
    %c0_22 = arith.constant 0 : index
    %c0_23 = arith.constant 0 : index
    %12 = vector.load %arg2[%c0_20, %c2_21, %c0_22, %c0_23] : memref<1x4x4x100xf32, #tpu.memory_space<vmem>>, vector<1x1x4x100xf32>
    %13 = vector.shape_cast %12 : vector<1x1x4x100xf32> to vector<4x100xf32>
    %c0_24 = arith.constant 0 : index
    %c3_25 = arith.constant 3 : index
    %c0_26 = arith.constant 0 : index
    %c0_27 = arith.constant 0 : index
    %14 = vector.load %arg2[%c0_24, %c3_25, %c0_26, %c0_27] : memref<1x4x4x100xf32, #tpu.memory_space<vmem>>, vector<1x1x4x100xf32>
    %15 = vector.shape_cast %14 : vector<1x1x4x100xf32> to vector<4x100xf32>
    %c0_28 = arith.constant 0 : index
    %c0_29 = arith.constant 0 : index
    %c0_30 = arith.constant 0 : index
    %16 = vector.load %arg3[%c0_28, %c0_29, %c0_30] : memref<36x8x4xf32, #tpu.memory_space<vmem>>, vector<1x8x4xf32>
    %17 = vector.shape_cast %16 : vector<1x8x4xf32> to vector<8x4xf32>
    %18 = vector.extract_strided_slice %1 {offsets = [0, 0], sizes = [4, 78], strides = [1, 1]} : vector<4x100xf32> to vector<4x78xf32>
    %cst = arith.constant dense<0.000000e+00> : vector<8x78xf32>
    %19 = tpu.matmul %17, %18, %cst {dimension_numbers = #tpu.dot_dimension_numbers<[1], [0], [0], [1], [0, 0, 1, 1], [], []>} : vector<8x4xf32>, vector<4x78xf32>, vector<8x78xf32> -> vector<8x78xf32>
    %c1_31 = arith.constant 1 : index
    %c0_32 = arith.constant 0 : index
    %c0_33 = arith.constant 0 : index
    %20 = vector.load %arg3[%c1_31, %c0_32, %c0_33] : memref<36x8x4xf32, #tpu.memory_space<vmem>>, vector<1x8x4xf32>
    %21 = vector.shape_cast %20 : vector<1x8x4xf32> to vector<8x4xf32>
    %22 = vector.extract_strided_slice %3 {offsets = [0, 0], sizes = [4, 78], strides = [1, 1]} : vector<4x100xf32> to vector<4x78xf32>
    %cst_34 = arith.constant dense<0.000000e+00> : vector<8x78xf32>
    %23 = tpu.matmul %21, %22, %cst_34 {dimension_numbers = #tpu.dot_dimension_numbers<[1], [0], [0], [1], [0, 0, 1, 1], [], []>} : vector<8x4xf32>, vector<4x78xf32>, vector<8x78xf32> -> vector<8x78xf32>
    %24 = arith.addf %19, %23 : vector<8x78xf32>
    %c2_35 = arith.constant 2 : index
    %c0_36 = arith.constant 0 : index
    %c0_37 = arith.constant 0 : index
    %25 = vector.load %arg3[%c2_35, %c0_36, %c0_37] : memref<36x8x4xf32, #tpu.memory_space<vmem>>, vector<1x8x4xf32>
    %26 = vector.shape_cast %25 : vector<1x8x4xf32> to vector<8x4xf32>
    %27 = vector.extract_strided_slice %1 {offsets = [0, 1], sizes = [4, 78], strides = [1, 1]} : vector<4x100xf32> to vector<4x78xf32>
    %cst_38 = arith.constant dense<0.000000e+00> : vector<8x78xf32>
    %28 = tpu.matmul %26, %27, %cst_38 {dimension_numbers = #tpu.dot_dimension_numbers<[1], [0], [0], [1], [0, 0, 1, 1], [], []>} : vector<8x4xf32>, vector<4x78xf32>, vector<8x78xf32> -> vector<8x78xf32>
    %29 = arith.addf %24, %28 : vector<8x78xf32>
    %c3_39 = arith.constant 3 : index
    %c0_40 = arith.constant 0 : index
    %c0_41 = arith.constant 0 : index
    %30 = vector.load %arg3[%c3_39, %c0_40, %c0_41] : memref<36x8x4xf32, #tpu.memory_space<vmem>>, vector<1x8x4xf32>
    %31 = vector.shape_cast %30 : vector<1x8x4xf32> to vector<8x4xf32>
    %32 = vector.extract_strided_slice %3 {offsets = [0, 1], sizes = [4, 78], strides = [1, 1]} : vector<4x100xf32> to vector<4x78xf32>
    %cst_42 = arith.constant dense<0.000000e+00> : vector<8x78xf32>
    %33 = tpu.matmul %31, %32, %cst_42 {dimension_numbers = #tpu.dot_dimension_numbers<[1], [0], [0], [1], [0, 0, 1, 1], [], []>} : vector<8x4xf32>, vector<4x78xf32>, vector<8x78xf32> -> vector<8x78xf32>
    %34 = arith.addf %29, %33 : vector<8x78xf32>
    %c4 = arith.constant 4 : index
    %c0_43 = arith.constant 0 : index
    %c0_44 = arith.constant 0 : index
    %35 = vector.load %arg3[%c4, %c0_43, %c0_44] : memref<36x8x4xf32, #tpu.memory_space<vmem>>, vector<1x8x4xf32>
    %36 = vector.shape_cast %35 : vector<1x8x4xf32> to vector<8x4xf32>
    %37 = vector.extract_strided_slice %1 {offsets = [0, 2], sizes = [4, 78], strides = [1, 1]} : vector<4x100xf32> to vector<4x78xf32>
    %cst_45 = arith.constant dense<0.000000e+00> : vector<8x78xf32>
    %38 = tpu.matmul %36, %37, %cst_45 {dimension_numbers = #tpu.dot_dimension_numbers<[1], [0], [0], [1], [0, 0, 1, 1], [], []>} : vector<8x4xf32>, vector<4x78xf32>, vector<8x78xf32> -> vector<8x78xf32>
    %39 = arith.addf %34, %38 : vector<8x78xf32>
    %c5 = arith.constant 5 : index
    %c0_46 = arith.constant 0 : index
    %c0_47 = arith.constant 0 : index
    %40 = vector.load %arg3[%c5, %c0_46, %c0_47] : memref<36x8x4xf32, #tpu.memory_space<vmem>>, vector<1x8x4xf32>
    %41 = vector.shape_cast %40 : vector<1x8x4xf32> to vector<8x4xf32>
    %42 = vector.extract_strided_slice %3 {offsets = [0, 2], sizes = [4, 78], strides = [1, 1]} : vector<4x100xf32> to vector<4x78xf32>
    %cst_48 = arith.constant dense<0.000000e+00> : vector<8x78xf32>
    %43 = tpu.matmul %41, %42, %cst_48 {dimension_numbers = #tpu.dot_dimension_numbers<[1], [0], [0], [1], [0, 0, 1, 1], [], []>} : vector<8x4xf32>, vector<4x78xf32>, vector<8x78xf32> -> vector<8x78xf32>
    %44 = arith.addf %39, %43 : vector<8x78xf32>
    %c6 = arith.constant 6 : index
    %c0_49 = arith.constant 0 : index
    %c0_50 = arith.constant 0 : index
    %45 = vector.load %arg3[%c6, %c0_49, %c0_50] : memref<36x8x4xf32, #tpu.memory_space<vmem>>, vector<1x8x4xf32>
    %46 = vector.shape_cast %45 : vector<1x8x4xf32> to vector<8x4xf32>
    %47 = vector.extract_strided_slice %5 {offsets = [0, 0], sizes = [4, 78], strides = [1, 1]} : vector<4x100xf32> to vector<4x78xf32>
    %cst_51 = arith.constant dense<0.000000e+00> : vector<8x78xf32>
    %48 = tpu.matmul %46, %47, %cst_51 {dimension_numbers = #tpu.dot_dimension_numbers<[1], [0], [0], [1], [0, 0, 1, 1], [], []>} : vector<8x4xf32>, vector<4x78xf32>, vector<8x78xf32> -> vector<8x78xf32>
    %49 = arith.addf %44, %48 : vector<8x78xf32>
    %c7 = arith.constant 7 : index
    %c0_52 = arith.constant 0 : index
    %c0_53 = arith.constant 0 : index
    %50 = vector.load %arg3[%c7, %c0_52, %c0_53] : memref<36x8x4xf32, #tpu.memory_space<vmem>>, vector<1x8x4xf32>
    %51 = vector.shape_cast %50 : vector<1x8x4xf32> to vector<8x4xf32>
    %52 = vector.extract_strided_slice %7 {offsets = [0, 0], sizes = [4, 78], strides = [1, 1]} : vector<4x100xf32> to vector<4x78xf32>
    %cst_54 = arith.constant dense<0.000000e+00> : vector<8x78xf32>
    %53 = tpu.matmul %51, %52, %cst_54 {dimension_numbers = #tpu.dot_dimension_numbers<[1], [0], [0], [1], [0, 0, 1, 1], [], []>} : vector<8x4xf32>, vector<4x78xf32>, vector<8x78xf32> -> vector<8x78xf32>
    %54 = arith.addf %49, %53 : vector<8x78xf32>
    %c8 = arith.constant 8 : index
    %c0_55 = arith.constant 0 : index
    %c0_56 = arith.constant 0 : index
    %55 = vector.load %arg3[%c8, %c0_55, %c0_56] : memref<36x8x4xf32, #tpu.memory_space<vmem>>, vector<1x8x4xf32>
    %56 = vector.shape_cast %55 : vector<1x8x4xf32> to vector<8x4xf32>
    %57 = vector.extract_strided_slice %5 {offsets = [0, 1], sizes = [4, 78], strides = [1, 1]} : vector<4x100xf32> to vector<4x78xf32>
    %cst_57 = arith.constant dense<0.000000e+00> : vector<8x78xf32>
    %58 = tpu.matmul %56, %57, %cst_57 {dimension_numbers = #tpu.dot_dimension_numbers<[1], [0], [0], [1], [0, 0, 1, 1], [], []>} : vector<8x4xf32>, vector<4x78xf32>, vector<8x78xf32> -> vector<8x78xf32>
    %59 = arith.addf %54, %58 : vector<8x78xf32>
    %c9 = arith.constant 9 : index
    %c0_58 = arith.constant 0 : index
    %c0_59 = arith.constant 0 : index
    %60 = vector.load %arg3[%c9, %c0_58, %c0_59] : memref<36x8x4xf32, #tpu.memory_space<vmem>>, vector<1x8x4xf32>
    %61 = vector.shape_cast %60 : vector<1x8x4xf32> to vector<8x4xf32>
    %62 = vector.extract_strided_slice %7 {offsets = [0, 1], sizes = [4, 78], strides = [1, 1]} : vector<4x100xf32> to vector<4x78xf32>
    %cst_60 = arith.constant dense<0.000000e+00> : vector<8x78xf32>
    %63 = tpu.matmul %61, %62, %cst_60 {dimension_numbers = #tpu.dot_dimension_numbers<[1], [0], [0], [1], [0, 0, 1, 1], [], []>} : vector<8x4xf32>, vector<4x78xf32>, vector<8x78xf32> -> vector<8x78xf32>
    %64 = arith.addf %59, %63 : vector<8x78xf32>
    %c10 = arith.constant 10 : index
    %c0_61 = arith.constant 0 : index
    %c0_62 = arith.constant 0 : index
    %65 = vector.load %arg3[%c10, %c0_61, %c0_62] : memref<36x8x4xf32, #tpu.memory_space<vmem>>, vector<1x8x4xf32>
    %66 = vector.shape_cast %65 : vector<1x8x4xf32> to vector<8x4xf32>
    %67 = vector.extract_strided_slice %5 {offsets = [0, 2], sizes = [4, 78], strides = [1, 1]} : vector<4x100xf32> to vector<4x78xf32>
    %cst_63 = arith.constant dense<0.000000e+00> : vector<8x78xf32>
    %68 = tpu.matmul %66, %67, %cst_63 {dimension_numbers = #tpu.dot_dimension_numbers<[1], [0], [0], [1], [0, 0, 1, 1], [], []>} : vector<8x4xf32>, vector<4x78xf32>, vector<8x78xf32> -> vector<8x78xf32>
    %69 = arith.addf %64, %68 : vector<8x78xf32>
    %c11 = arith.constant 11 : index
    %c0_64 = arith.constant 0 : index
    %c0_65 = arith.constant 0 : index
    %70 = vector.load %arg3[%c11, %c0_64, %c0_65] : memref<36x8x4xf32, #tpu.memory_space<vmem>>, vector<1x8x4xf32>
    %71 = vector.shape_cast %70 : vector<1x8x4xf32> to vector<8x4xf32>
    %72 = vector.extract_strided_slice %7 {offsets = [0, 2], sizes = [4, 78], strides = [1, 1]} : vector<4x100xf32> to vector<4x78xf32>
    %cst_66 = arith.constant dense<0.000000e+00> : vector<8x78xf32>
    %73 = tpu.matmul %71, %72, %cst_66 {dimension_numbers = #tpu.dot_dimension_numbers<[1], [0], [0], [1], [0, 0, 1, 1], [], []>} : vector<8x4xf32>, vector<4x78xf32>, vector<8x78xf32> -> vector<8x78xf32>
    %74 = arith.addf %69, %73 : vector<8x78xf32>
    %c12 = arith.constant 12 : index
    %c0_67 = arith.constant 0 : index
    %c0_68 = arith.constant 0 : index
    %75 = vector.load %arg3[%c12, %c0_67, %c0_68] : memref<36x8x4xf32, #tpu.memory_space<vmem>>, vector<1x8x4xf32>
    %76 = vector.shape_cast %75 : vector<1x8x4xf32> to vector<8x4xf32>
    %77 = vector.extract_strided_slice %1 {offsets = [0, 10], sizes = [4, 78], strides = [1, 1]} : vector<4x100xf32> to vector<4x78xf32>
    %cst_69 = arith.constant dense<0.000000e+00> : vector<8x78xf32>
    %78 = tpu.matmul %76, %77, %cst_69 {dimension_numbers = #tpu.dot_dimension_numbers<[1], [0], [0], [1], [0, 0, 1, 1], [], []>} : vector<8x4xf32>, vector<4x78xf32>, vector<8x78xf32> -> vector<8x78xf32>
    %79 = arith.addf %74, %78 : vector<8x78xf32>
    %c13 = arith.constant 13 : index
    %c0_70 = arith.constant 0 : index
    %c0_71 = arith.constant 0 : index
    %80 = vector.load %arg3[%c13, %c0_70, %c0_71] : memref<36x8x4xf32, #tpu.memory_space<vmem>>, vector<1x8x4xf32>
    %81 = vector.shape_cast %80 : vector<1x8x4xf32> to vector<8x4xf32>
    %82 = vector.extract_strided_slice %3 {offsets = [0, 10], sizes = [4, 78], strides = [1, 1]} : vector<4x100xf32> to vector<4x78xf32>
    %cst_72 = arith.constant dense<0.000000e+00> : vector<8x78xf32>
    %83 = tpu.matmul %81, %82, %cst_72 {dimension_numbers = #tpu.dot_dimension_numbers<[1], [0], [0], [1], [0, 0, 1, 1], [], []>} : vector<8x4xf32>, vector<4x78xf32>, vector<8x78xf32> -> vector<8x78xf32>
    %84 = arith.addf %79, %83 : vector<8x78xf32>
    %c14 = arith.constant 14 : index
    %c0_73 = arith.constant 0 : index
    %c0_74 = arith.constant 0 : index
    %85 = vector.load %arg3[%c14, %c0_73, %c0_74] : memref<36x8x4xf32, #tpu.memory_space<vmem>>, vector<1x8x4xf32>
    %86 = vector.shape_cast %85 : vector<1x8x4xf32> to vector<8x4xf32>
    %87 = vector.extract_strided_slice %1 {offsets = [0, 11], sizes = [4, 78], strides = [1, 1]} : vector<4x100xf32> to vector<4x78xf32>
    %cst_75 = arith.constant dense<0.000000e+00> : vector<8x78xf32>
    %88 = tpu.matmul %86, %87, %cst_75 {dimension_numbers = #tpu.dot_dimension_numbers<[1], [0], [0], [1], [0, 0, 1, 1], [], []>} : vector<8x4xf32>, vector<4x78xf32>, vector<8x78xf32> -> vector<8x78xf32>
    %89 = arith.addf %84, %88 : vector<8x78xf32>
    %c15 = arith.constant 15 : index
    %c0_76 = arith.constant 0 : index
    %c0_77 = arith.constant 0 : index
    %90 = vector.load %arg3[%c15, %c0_76, %c0_77] : memref<36x8x4xf32, #tpu.memory_space<vmem>>, vector<1x8x4xf32>
    %91 = vector.shape_cast %90 : vector<1x8x4xf32> to vector<8x4xf32>
    %92 = vector.extract_strided_slice %3 {offsets = [0, 11], sizes = [4, 78], strides = [1, 1]} : vector<4x100xf32> to vector<4x78xf32>
    %cst_78 = arith.constant dense<0.000000e+00> : vector<8x78xf32>
    %93 = tpu.matmul %91, %92, %cst_78 {dimension_numbers = #tpu.dot_dimension_numbers<[1], [0], [0], [1], [0, 0, 1, 1], [], []>} : vector<8x4xf32>, vector<4x78xf32>, vector<8x78xf32> -> vector<8x78xf32>
    %94 = arith.addf %89, %93 : vector<8x78xf32>
    %c16 = arith.constant 16 : index
    %c0_79 = arith.constant 0 : index
    %c0_80 = arith.constant 0 : index
    %95 = vector.load %arg3[%c16, %c0_79, %c0_80] : memref<36x8x4xf32, #tpu.memory_space<vmem>>, vector<1x8x4xf32>
    %96 = vector.shape_cast %95 : vector<1x8x4xf32> to vector<8x4xf32>
    %97 = vector.extract_strided_slice %1 {offsets = [0, 12], sizes = [4, 78], strides = [1, 1]} : vector<4x100xf32> to vector<4x78xf32>
    %cst_81 = arith.constant dense<0.000000e+00> : vector<8x78xf32>
    %98 = tpu.matmul %96, %97, %cst_81 {dimension_numbers = #tpu.dot_dimension_numbers<[1], [0], [0], [1], [0, 0, 1, 1], [], []>} : vector<8x4xf32>, vector<4x78xf32>, vector<8x78xf32> -> vector<8x78xf32>
    %99 = arith.addf %94, %98 : vector<8x78xf32>
    %c17 = arith.constant 17 : index
    %c0_82 = arith.constant 0 : index
    %c0_83 = arith.constant 0 : index
    %100 = vector.load %arg3[%c17, %c0_82, %c0_83] : memref<36x8x4xf32, #tpu.memory_space<vmem>>, vector<1x8x4xf32>
    %101 = vector.shape_cast %100 : vector<1x8x4xf32> to vector<8x4xf32>
    %102 = vector.extract_strided_slice %3 {offsets = [0, 12], sizes = [4, 78], strides = [1, 1]} : vector<4x100xf32> to vector<4x78xf32>
    %cst_84 = arith.constant dense<0.000000e+00> : vector<8x78xf32>
    %103 = tpu.matmul %101, %102, %cst_84 {dimension_numbers = #tpu.dot_dimension_numbers<[1], [0], [0], [1], [0, 0, 1, 1], [], []>} : vector<8x4xf32>, vector<4x78xf32>, vector<8x78xf32> -> vector<8x78xf32>
    %104 = arith.addf %99, %103 : vector<8x78xf32>
    %c18 = arith.constant 18 : index
    %c0_85 = arith.constant 0 : index
    %c0_86 = arith.constant 0 : index
    %105 = vector.load %arg3[%c18, %c0_85, %c0_86] : memref<36x8x4xf32, #tpu.memory_space<vmem>>, vector<1x8x4xf32>
    %106 = vector.shape_cast %105 : vector<1x8x4xf32> to vector<8x4xf32>
    %107 = vector.extract_strided_slice %5 {offsets = [0, 10], sizes = [4, 78], strides = [1, 1]} : vector<4x100xf32> to vector<4x78xf32>
    %cst_87 = arith.constant dense<0.000000e+00> : vector<8x78xf32>
    %108 = tpu.matmul %106, %107, %cst_87 {dimension_numbers = #tpu.dot_dimension_numbers<[1], [0], [0], [1], [0, 0, 1, 1], [], []>} : vector<8x4xf32>, vector<4x78xf32>, vector<8x78xf32> -> vector<8x78xf32>
    %109 = arith.addf %104, %108 : vector<8x78xf32>
    %c19 = arith.constant 19 : index
    %c0_88 = arith.constant 0 : index
    %c0_89 = arith.constant 0 : index
    %110 = vector.load %arg3[%c19, %c0_88, %c0_89] : memref<36x8x4xf32, #tpu.memory_space<vmem>>, vector<1x8x4xf32>
    %111 = vector.shape_cast %110 : vector<1x8x4xf32> to vector<8x4xf32>
    %112 = vector.extract_strided_slice %7 {offsets = [0, 10], sizes = [4, 78], strides = [1, 1]} : vector<4x100xf32> to vector<4x78xf32>
    %cst_90 = arith.constant dense<0.000000e+00> : vector<8x78xf32>
    %113 = tpu.matmul %111, %112, %cst_90 {dimension_numbers = #tpu.dot_dimension_numbers<[1], [0], [0], [1], [0, 0, 1, 1], [], []>} : vector<8x4xf32>, vector<4x78xf32>, vector<8x78xf32> -> vector<8x78xf32>
    %114 = arith.addf %109, %113 : vector<8x78xf32>
    %c20 = arith.constant 20 : index
    %c0_91 = arith.constant 0 : index
    %c0_92 = arith.constant 0 : index
    %115 = vector.load %arg3[%c20, %c0_91, %c0_92] : memref<36x8x4xf32, #tpu.memory_space<vmem>>, vector<1x8x4xf32>
    %116 = vector.shape_cast %115 : vector<1x8x4xf32> to vector<8x4xf32>
    %117 = vector.extract_strided_slice %5 {offsets = [0, 11], sizes = [4, 78], strides = [1, 1]} : vector<4x100xf32> to vector<4x78xf32>
    %cst_93 = arith.constant dense<0.000000e+00> : vector<8x78xf32>
    %118 = tpu.matmul %116, %117, %cst_93 {dimension_numbers = #tpu.dot_dimension_numbers<[1], [0], [0], [1], [0, 0, 1, 1], [], []>} : vector<8x4xf32>, vector<4x78xf32>, vector<8x78xf32> -> vector<8x78xf32>
    %119 = arith.addf %114, %118 : vector<8x78xf32>
    %c21 = arith.constant 21 : index
    %c0_94 = arith.constant 0 : index
    %c0_95 = arith.constant 0 : index
    %120 = vector.load %arg3[%c21, %c0_94, %c0_95] : memref<36x8x4xf32, #tpu.memory_space<vmem>>, vector<1x8x4xf32>
    %121 = vector.shape_cast %120 : vector<1x8x4xf32> to vector<8x4xf32>
    %122 = vector.extract_strided_slice %7 {offsets = [0, 11], sizes = [4, 78], strides = [1, 1]} : vector<4x100xf32> to vector<4x78xf32>
    %cst_96 = arith.constant dense<0.000000e+00> : vector<8x78xf32>
    %123 = tpu.matmul %121, %122, %cst_96 {dimension_numbers = #tpu.dot_dimension_numbers<[1], [0], [0], [1], [0, 0, 1, 1], [], []>} : vector<8x4xf32>, vector<4x78xf32>, vector<8x78xf32> -> vector<8x78xf32>
    %124 = arith.addf %119, %123 : vector<8x78xf32>
    %c22 = arith.constant 22 : index
    %c0_97 = arith.constant 0 : index
    %c0_98 = arith.constant 0 : index
    %125 = vector.load %arg3[%c22, %c0_97, %c0_98] : memref<36x8x4xf32, #tpu.memory_space<vmem>>, vector<1x8x4xf32>
    %126 = vector.shape_cast %125 : vector<1x8x4xf32> to vector<8x4xf32>
    %127 = vector.extract_strided_slice %5 {offsets = [0, 12], sizes = [4, 78], strides = [1, 1]} : vector<4x100xf32> to vector<4x78xf32>
    %cst_99 = arith.constant dense<0.000000e+00> : vector<8x78xf32>
    %128 = tpu.matmul %126, %127, %cst_99 {dimension_numbers = #tpu.dot_dimension_numbers<[1], [0], [0], [1], [0, 0, 1, 1], [], []>} : vector<8x4xf32>, vector<4x78xf32>, vector<8x78xf32> -> vector<8x78xf32>
    %129 = arith.addf %124, %128 : vector<8x78xf32>
    %c23 = arith.constant 23 : index
    %c0_100 = arith.constant 0 : index
    %c0_101 = arith.constant 0 : index
    %130 = vector.load %arg3[%c23, %c0_100, %c0_101] : memref<36x8x4xf32, #tpu.memory_space<vmem>>, vector<1x8x4xf32>
    %131 = vector.shape_cast %130 : vector<1x8x4xf32> to vector<8x4xf32>
    %132 = vector.extract_strided_slice %7 {offsets = [0, 12], sizes = [4, 78], strides = [1, 1]} : vector<4x100xf32> to vector<4x78xf32>
    %cst_102 = arith.constant dense<0.000000e+00> : vector<8x78xf32>
    %133 = tpu.matmul %131, %132, %cst_102 {dimension_numbers = #tpu.dot_dimension_numbers<[1], [0], [0], [1], [0, 0, 1, 1], [], []>} : vector<8x4xf32>, vector<4x78xf32>, vector<8x78xf32> -> vector<8x78xf32>
    %134 = arith.addf %129, %133 : vector<8x78xf32>
    %c24 = arith.constant 24 : index
    %c0_103 = arith.constant 0 : index
    %c0_104 = arith.constant 0 : index
    %135 = vector.load %arg3[%c24, %c0_103, %c0_104] : memref<36x8x4xf32, #tpu.memory_space<vmem>>, vector<1x8x4xf32>
    %136 = vector.shape_cast %135 : vector<1x8x4xf32> to vector<8x4xf32>
    %137 = vector.extract_strided_slice %1 {offsets = [0, 20], sizes = [4, 78], strides = [1, 1]} : vector<4x100xf32> to vector<4x78xf32>
    %cst_105 = arith.constant dense<0.000000e+00> : vector<8x78xf32>
    %138 = tpu.matmul %136, %137, %cst_105 {dimension_numbers = #tpu.dot_dimension_numbers<[1], [0], [0], [1], [0, 0, 1, 1], [], []>} : vector<8x4xf32>, vector<4x78xf32>, vector<8x78xf32> -> vector<8x78xf32>
    %139 = arith.addf %134, %138 : vector<8x78xf32>
    %c25 = arith.constant 25 : index
    %c0_106 = arith.constant 0 : index
    %c0_107 = arith.constant 0 : index
    %140 = vector.load %arg3[%c25, %c0_106, %c0_107] : memref<36x8x4xf32, #tpu.memory_space<vmem>>, vector<1x8x4xf32>
    %141 = vector.shape_cast %140 : vector<1x8x4xf32> to vector<8x4xf32>
    %142 = vector.extract_strided_slice %3 {offsets = [0, 20], sizes = [4, 78], strides = [1, 1]} : vector<4x100xf32> to vector<4x78xf32>
    %cst_108 = arith.constant dense<0.000000e+00> : vector<8x78xf32>
    %143 = tpu.matmul %141, %142, %cst_108 {dimension_numbers = #tpu.dot_dimension_numbers<[1], [0], [0], [1], [0, 0, 1, 1], [], []>} : vector<8x4xf32>, vector<4x78xf32>, vector<8x78xf32> -> vector<8x78xf32>
    %144 = arith.addf %139, %143 : vector<8x78xf32>
    %c26 = arith.constant 26 : index
    %c0_109 = arith.constant 0 : index
    %c0_110 = arith.constant 0 : index
    %145 = vector.load %arg3[%c26, %c0_109, %c0_110] : memref<36x8x4xf32, #tpu.memory_space<vmem>>, vector<1x8x4xf32>
    %146 = vector.shape_cast %145 : vector<1x8x4xf32> to vector<8x4xf32>
    %147 = vector.extract_strided_slice %1 {offsets = [0, 21], sizes = [4, 78], strides = [1, 1]} : vector<4x100xf32> to vector<4x78xf32>
    %cst_111 = arith.constant dense<0.000000e+00> : vector<8x78xf32>
    %148 = tpu.matmul %146, %147, %cst_111 {dimension_numbers = #tpu.dot_dimension_numbers<[1], [0], [0], [1], [0, 0, 1, 1], [], []>} : vector<8x4xf32>, vector<4x78xf32>, vector<8x78xf32> -> vector<8x78xf32>
    %149 = arith.addf %144, %148 : vector<8x78xf32>
    %c27 = arith.constant 27 : index
    %c0_112 = arith.constant 0 : index
    %c0_113 = arith.constant 0 : index
    %150 = vector.load %arg3[%c27, %c0_112, %c0_113] : memref<36x8x4xf32, #tpu.memory_space<vmem>>, vector<1x8x4xf32>
    %151 = vector.shape_cast %150 : vector<1x8x4xf32> to vector<8x4xf32>
    %152 = vector.extract_strided_slice %3 {offsets = [0, 21], sizes = [4, 78], strides = [1, 1]} : vector<4x100xf32> to vector<4x78xf32>
    %cst_114 = arith.constant dense<0.000000e+00> : vector<8x78xf32>
    %153 = tpu.matmul %151, %152, %cst_114 {dimension_numbers = #tpu.dot_dimension_numbers<[1], [0], [0], [1], [0, 0, 1, 1], [], []>} : vector<8x4xf32>, vector<4x78xf32>, vector<8x78xf32> -> vector<8x78xf32>
    %154 = arith.addf %149, %153 : vector<8x78xf32>
    %c28 = arith.constant 28 : index
    %c0_115 = arith.constant 0 : index
    %c0_116 = arith.constant 0 : index
    %155 = vector.load %arg3[%c28, %c0_115, %c0_116] : memref<36x8x4xf32, #tpu.memory_space<vmem>>, vector<1x8x4xf32>
    %156 = vector.shape_cast %155 : vector<1x8x4xf32> to vector<8x4xf32>
    %157 = vector.extract_strided_slice %1 {offsets = [0, 22], sizes = [4, 78], strides = [1, 1]} : vector<4x100xf32> to vector<4x78xf32>
    %cst_117 = arith.constant dense<0.000000e+00> : vector<8x78xf32>
    %158 = tpu.matmul %156, %157, %cst_117 {dimension_numbers = #tpu.dot_dimension_numbers<[1], [0], [0], [1], [0, 0, 1, 1], [], []>} : vector<8x4xf32>, vector<4x78xf32>, vector<8x78xf32> -> vector<8x78xf32>
    %159 = arith.addf %154, %158 : vector<8x78xf32>
    %c29 = arith.constant 29 : index
    %c0_118 = arith.constant 0 : index
    %c0_119 = arith.constant 0 : index
    %160 = vector.load %arg3[%c29, %c0_118, %c0_119] : memref<36x8x4xf32, #tpu.memory_space<vmem>>, vector<1x8x4xf32>
    %161 = vector.shape_cast %160 : vector<1x8x4xf32> to vector<8x4xf32>
    %162 = vector.extract_strided_slice %3 {offsets = [0, 22], sizes = [4, 78], strides = [1, 1]} : vector<4x100xf32> to vector<4x78xf32>
    %cst_120 = arith.constant dense<0.000000e+00> : vector<8x78xf32>
    %163 = tpu.matmul %161, %162, %cst_120 {dimension_numbers = #tpu.dot_dimension_numbers<[1], [0], [0], [1], [0, 0, 1, 1], [], []>} : vector<8x4xf32>, vector<4x78xf32>, vector<8x78xf32> -> vector<8x78xf32>
    %164 = arith.addf %159, %163 : vector<8x78xf32>
    %c30 = arith.constant 30 : index
    %c0_121 = arith.constant 0 : index
    %c0_122 = arith.constant 0 : index
    %165 = vector.load %arg3[%c30, %c0_121, %c0_122] : memref<36x8x4xf32, #tpu.memory_space<vmem>>, vector<1x8x4xf32>
    %166 = vector.shape_cast %165 : vector<1x8x4xf32> to vector<8x4xf32>
    %167 = vector.extract_strided_slice %5 {offsets = [0, 20], sizes = [4, 78], strides = [1, 1]} : vector<4x100xf32> to vector<4x78xf32>
    %cst_123 = arith.constant dense<0.000000e+00> : vector<8x78xf32>
    %168 = tpu.matmul %166, %167, %cst_123 {dimension_numbers = #tpu.dot_dimension_numbers<[1], [0], [0], [1], [0, 0, 1, 1], [], []>} : vector<8x4xf32>, vector<4x78xf32>, vector<8x78xf32> -> vector<8x78xf32>
    %169 = arith.addf %164, %168 : vector<8x78xf32>
    %c31 = arith.constant 31 : index
    %c0_124 = arith.constant 0 : index
    %c0_125 = arith.constant 0 : index
    %170 = vector.load %arg3[%c31, %c0_124, %c0_125] : memref<36x8x4xf32, #tpu.memory_space<vmem>>, vector<1x8x4xf32>
    %171 = vector.shape_cast %170 : vector<1x8x4xf32> to vector<8x4xf32>
    %172 = vector.extract_strided_slice %7 {offsets = [0, 20], sizes = [4, 78], strides = [1, 1]} : vector<4x100xf32> to vector<4x78xf32>
    %cst_126 = arith.constant dense<0.000000e+00> : vector<8x78xf32>
    %173 = tpu.matmul %171, %172, %cst_126 {dimension_numbers = #tpu.dot_dimension_numbers<[1], [0], [0], [1], [0, 0, 1, 1], [], []>} : vector<8x4xf32>, vector<4x78xf32>, vector<8x78xf32> -> vector<8x78xf32>
    %174 = arith.addf %169, %173 : vector<8x78xf32>
    %c32 = arith.constant 32 : index
    %c0_127 = arith.constant 0 : index
    %c0_128 = arith.constant 0 : index
    %175 = vector.load %arg3[%c32, %c0_127, %c0_128] : memref<36x8x4xf32, #tpu.memory_space<vmem>>, vector<1x8x4xf32>
    %176 = vector.shape_cast %175 : vector<1x8x4xf32> to vector<8x4xf32>
    %177 = vector.extract_strided_slice %5 {offsets = [0, 21], sizes = [4, 78], strides = [1, 1]} : vector<4x100xf32> to vector<4x78xf32>
    %cst_129 = arith.constant dense<0.000000e+00> : vector<8x78xf32>
    %178 = tpu.matmul %176, %177, %cst_129 {dimension_numbers = #tpu.dot_dimension_numbers<[1], [0], [0], [1], [0, 0, 1, 1], [], []>} : vector<8x4xf32>, vector<4x78xf32>, vector<8x78xf32> -> vector<8x78xf32>
    %179 = arith.addf %174, %178 : vector<8x78xf32>
    %c33 = arith.constant 33 : index
    %c0_130 = arith.constant 0 : index
    %c0_131 = arith.constant 0 : index
    %180 = vector.load %arg3[%c33, %c0_130, %c0_131] : memref<36x8x4xf32, #tpu.memory_space<vmem>>, vector<1x8x4xf32>
    %181 = vector.shape_cast %180 : vector<1x8x4xf32> to vector<8x4xf32>
    %182 = vector.extract_strided_slice %7 {offsets = [0, 21], sizes = [4, 78], strides = [1, 1]} : vector<4x100xf32> to vector<4x78xf32>
    %cst_132 = arith.constant dense<0.000000e+00> : vector<8x78xf32>
    %183 = tpu.matmul %181, %182, %cst_132 {dimension_numbers = #tpu.dot_dimension_numbers<[1], [0], [0], [1], [0, 0, 1, 1], [], []>} : vector<8x4xf32>, vector<4x78xf32>, vector<8x78xf32> -> vector<8x78xf32>
    %184 = arith.addf %179, %183 : vector<8x78xf32>
    %c34 = arith.constant 34 : index
    %c0_133 = arith.constant 0 : index
    %c0_134 = arith.constant 0 : index
    %185 = vector.load %arg3[%c34, %c0_133, %c0_134] : memref<36x8x4xf32, #tpu.memory_space<vmem>>, vector<1x8x4xf32>
    %186 = vector.shape_cast %185 : vector<1x8x4xf32> to vector<8x4xf32>
    %187 = vector.extract_strided_slice %5 {offsets = [0, 22], sizes = [4, 78], strides = [1, 1]} : vector<4x100xf32> to vector<4x78xf32>
    %cst_135 = arith.constant dense<0.000000e+00> : vector<8x78xf32>
    %188 = tpu.matmul %186, %187, %cst_135 {dimension_numbers = #tpu.dot_dimension_numbers<[1], [0], [0], [1], [0, 0, 1, 1], [], []>} : vector<8x4xf32>, vector<4x78xf32>, vector<8x78xf32> -> vector<8x78xf32>
    %189 = arith.addf %184, %188 : vector<8x78xf32>
    %c35 = arith.constant 35 : index
    %c0_136 = arith.constant 0 : index
    %c0_137 = arith.constant 0 : index
    %190 = vector.load %arg3[%c35, %c0_136, %c0_137] : memref<36x8x4xf32, #tpu.memory_space<vmem>>, vector<1x8x4xf32>
    %191 = vector.shape_cast %190 : vector<1x8x4xf32> to vector<8x4xf32>
    %192 = vector.extract_strided_slice %7 {offsets = [0, 22], sizes = [4, 78], strides = [1, 1]} : vector<4x100xf32> to vector<4x78xf32>
    %cst_138 = arith.constant dense<0.000000e+00> : vector<8x78xf32>
    %193 = tpu.matmul %191, %192, %cst_138 {dimension_numbers = #tpu.dot_dimension_numbers<[1], [0], [0], [1], [0, 0, 1, 1], [], []>} : vector<8x4xf32>, vector<4x78xf32>, vector<8x78xf32> -> vector<8x78xf32>
    %194 = arith.addf %189, %193 : vector<8x78xf32>
    %c0_139 = arith.constant 0 : index
    %c0_140 = arith.constant 0 : index
    %195 = vector.load %arg5[%c0_139, %c0_140] : memref<8x1xf32, #tpu.memory_space<vmem>>, vector<8x1xf32>
    %196 = vector.broadcast %195 : vector<8x1xf32> to vector<8x78xf32>
    %197 = arith.addf %194, %196 : vector<8x78xf32>
    %cst_141 = arith.constant 0.000000e+00 : f32
    %198 = vector.broadcast %cst_141 : f32 to vector<8x78xf32>
    %199 = arith.cmpf oge, %197, %198 : vector<8x78xf32>
    %cst_142 = arith.constant 2.000000e-01 : f32
    %200 = vector.broadcast %cst_142 : f32 to vector<8x78xf32>
    %201 = arith.mulf %200, %197 : vector<8x78xf32>
    %202 = arith.select %199, %197, %201 : vector<8x78xi1>, vector<8x78xf32>
    %c0_143 = arith.constant 0 : index
    %c0_144 = arith.constant 0 : index
    %c0_145 = arith.constant 0 : index
    %203 = vector.load %arg4[%c0_143, %c0_144, %c0_145] : memref<16x8x4xf32, #tpu.memory_space<vmem>>, vector<1x8x4xf32>
    %204 = vector.shape_cast %203 : vector<1x8x4xf32> to vector<8x4xf32>
    %205 = vector.extract_strided_slice %9 {offsets = [0, 0], sizes = [4, 78], strides = [1, 1]} : vector<4x100xf32> to vector<4x78xf32>
    %cst_146 = arith.constant dense<0.000000e+00> : vector<8x78xf32>
    %206 = tpu.matmul %204, %205, %cst_146 {dimension_numbers = #tpu.dot_dimension_numbers<[1], [0], [0], [1], [0, 0, 1, 1], [], []>} : vector<8x4xf32>, vector<4x78xf32>, vector<8x78xf32> -> vector<8x78xf32>
    %c1_147 = arith.constant 1 : index
    %c0_148 = arith.constant 0 : index
    %c0_149 = arith.constant 0 : index
    %207 = vector.load %arg4[%c1_147, %c0_148, %c0_149] : memref<16x8x4xf32, #tpu.memory_space<vmem>>, vector<1x8x4xf32>
    %208 = vector.shape_cast %207 : vector<1x8x4xf32> to vector<8x4xf32>
    %209 = vector.extract_strided_slice %11 {offsets = [0, 0], sizes = [4, 78], strides = [1, 1]} : vector<4x100xf32> to vector<4x78xf32>
    %cst_150 = arith.constant dense<0.000000e+00> : vector<8x78xf32>
    %210 = tpu.matmul %208, %209, %cst_150 {dimension_numbers = #tpu.dot_dimension_numbers<[1], [0], [0], [1], [0, 0, 1, 1], [], []>} : vector<8x4xf32>, vector<4x78xf32>, vector<8x78xf32> -> vector<8x78xf32>
    %211 = arith.addf %206, %210 : vector<8x78xf32>
    %c2_151 = arith.constant 2 : index
    %c0_152 = arith.constant 0 : index
    %c0_153 = arith.constant 0 : index
    %212 = vector.load %arg4[%c2_151, %c0_152, %c0_153] : memref<16x8x4xf32, #tpu.memory_space<vmem>>, vector<1x8x4xf32>
    %213 = vector.shape_cast %212 : vector<1x8x4xf32> to vector<8x4xf32>
    %214 = vector.extract_strided_slice %9 {offsets = [0, 1], sizes = [4, 78], strides = [1, 1]} : vector<4x100xf32> to vector<4x78xf32>
    %cst_154 = arith.constant dense<0.000000e+00> : vector<8x78xf32>
    %215 = tpu.matmul %213, %214, %cst_154 {dimension_numbers = #tpu.dot_dimension_numbers<[1], [0], [0], [1], [0, 0, 1, 1], [], []>} : vector<8x4xf32>, vector<4x78xf32>, vector<8x78xf32> -> vector<8x78xf32>
    %216 = arith.addf %211, %215 : vector<8x78xf32>
    %c3_155 = arith.constant 3 : index
    %c0_156 = arith.constant 0 : index
    %c0_157 = arith.constant 0 : index
    %217 = vector.load %arg4[%c3_155, %c0_156, %c0_157] : memref<16x8x4xf32, #tpu.memory_space<vmem>>, vector<1x8x4xf32>
    %218 = vector.shape_cast %217 : vector<1x8x4xf32> to vector<8x4xf32>
    %219 = vector.extract_strided_slice %11 {offsets = [0, 1], sizes = [4, 78], strides = [1, 1]} : vector<4x100xf32> to vector<4x78xf32>
    %cst_158 = arith.constant dense<0.000000e+00> : vector<8x78xf32>
    %220 = tpu.matmul %218, %219, %cst_158 {dimension_numbers = #tpu.dot_dimension_numbers<[1], [0], [0], [1], [0, 0, 1, 1], [], []>} : vector<8x4xf32>, vector<4x78xf32>, vector<8x78xf32> -> vector<8x78xf32>
    %221 = arith.addf %216, %220 : vector<8x78xf32>
    %c4_159 = arith.constant 4 : index
    %c0_160 = arith.constant 0 : index
    %c0_161 = arith.constant 0 : index
    %222 = vector.load %arg4[%c4_159, %c0_160, %c0_161] : memref<16x8x4xf32, #tpu.memory_space<vmem>>, vector<1x8x4xf32>
    %223 = vector.shape_cast %222 : vector<1x8x4xf32> to vector<8x4xf32>
    %224 = vector.extract_strided_slice %13 {offsets = [0, 0], sizes = [4, 78], strides = [1, 1]} : vector<4x100xf32> to vector<4x78xf32>
    %cst_162 = arith.constant dense<0.000000e+00> : vector<8x78xf32>
    %225 = tpu.matmul %223, %224, %cst_162 {dimension_numbers = #tpu.dot_dimension_numbers<[1], [0], [0], [1], [0, 0, 1, 1], [], []>} : vector<8x4xf32>, vector<4x78xf32>, vector<8x78xf32> -> vector<8x78xf32>
    %226 = arith.addf %221, %225 : vector<8x78xf32>
    %c5_163 = arith.constant 5 : index
    %c0_164 = arith.constant 0 : index
    %c0_165 = arith.constant 0 : index
    %227 = vector.load %arg4[%c5_163, %c0_164, %c0_165] : memref<16x8x4xf32, #tpu.memory_space<vmem>>, vector<1x8x4xf32>
    %228 = vector.shape_cast %227 : vector<1x8x4xf32> to vector<8x4xf32>
    %229 = vector.extract_strided_slice %15 {offsets = [0, 0], sizes = [4, 78], strides = [1, 1]} : vector<4x100xf32> to vector<4x78xf32>
    %cst_166 = arith.constant dense<0.000000e+00> : vector<8x78xf32>
    %230 = tpu.matmul %228, %229, %cst_166 {dimension_numbers = #tpu.dot_dimension_numbers<[1], [0], [0], [1], [0, 0, 1, 1], [], []>} : vector<8x4xf32>, vector<4x78xf32>, vector<8x78xf32> -> vector<8x78xf32>
    %231 = arith.addf %226, %230 : vector<8x78xf32>
    %c6_167 = arith.constant 6 : index
    %c0_168 = arith.constant 0 : index
    %c0_169 = arith.constant 0 : index
    %232 = vector.load %arg4[%c6_167, %c0_168, %c0_169] : memref<16x8x4xf32, #tpu.memory_space<vmem>>, vector<1x8x4xf32>
    %233 = vector.shape_cast %232 : vector<1x8x4xf32> to vector<8x4xf32>
    %234 = vector.extract_strided_slice %13 {offsets = [0, 1], sizes = [4, 78], strides = [1, 1]} : vector<4x100xf32> to vector<4x78xf32>
    %cst_170 = arith.constant dense<0.000000e+00> : vector<8x78xf32>
    %235 = tpu.matmul %233, %234, %cst_170 {dimension_numbers = #tpu.dot_dimension_numbers<[1], [0], [0], [1], [0, 0, 1, 1], [], []>} : vector<8x4xf32>, vector<4x78xf32>, vector<8x78xf32> -> vector<8x78xf32>
    %236 = arith.addf %231, %235 : vector<8x78xf32>
    %c7_171 = arith.constant 7 : index
    %c0_172 = arith.constant 0 : index
    %c0_173 = arith.constant 0 : index
    %237 = vector.load %arg4[%c7_171, %c0_172, %c0_173] : memref<16x8x4xf32, #tpu.memory_space<vmem>>, vector<1x8x4xf32>
    %238 = vector.shape_cast %237 : vector<1x8x4xf32> to vector<8x4xf32>
    %239 = vector.extract_strided_slice %15 {offsets = [0, 1], sizes = [4, 78], strides = [1, 1]} : vector<4x100xf32> to vector<4x78xf32>
    %cst_174 = arith.constant dense<0.000000e+00> : vector<8x78xf32>
    %240 = tpu.matmul %238, %239, %cst_174 {dimension_numbers = #tpu.dot_dimension_numbers<[1], [0], [0], [1], [0, 0, 1, 1], [], []>} : vector<8x4xf32>, vector<4x78xf32>, vector<8x78xf32> -> vector<8x78xf32>
    %241 = arith.addf %236, %240 : vector<8x78xf32>
    %c8_175 = arith.constant 8 : index
    %c0_176 = arith.constant 0 : index
    %c0_177 = arith.constant 0 : index
    %242 = vector.load %arg4[%c8_175, %c0_176, %c0_177] : memref<16x8x4xf32, #tpu.memory_space<vmem>>, vector<1x8x4xf32>
    %243 = vector.shape_cast %242 : vector<1x8x4xf32> to vector<8x4xf32>
    %244 = vector.extract_strided_slice %9 {offsets = [0, 10], sizes = [4, 78], strides = [1, 1]} : vector<4x100xf32> to vector<4x78xf32>
    %cst_178 = arith.constant dense<0.000000e+00> : vector<8x78xf32>
    %245 = tpu.matmul %243, %244, %cst_178 {dimension_numbers = #tpu.dot_dimension_numbers<[1], [0], [0], [1], [0, 0, 1, 1], [], []>} : vector<8x4xf32>, vector<4x78xf32>, vector<8x78xf32> -> vector<8x78xf32>
    %246 = arith.addf %241, %245 : vector<8x78xf32>
    %c9_179 = arith.constant 9 : index
    %c0_180 = arith.constant 0 : index
    %c0_181 = arith.constant 0 : index
    %247 = vector.load %arg4[%c9_179, %c0_180, %c0_181] : memref<16x8x4xf32, #tpu.memory_space<vmem>>, vector<1x8x4xf32>
    %248 = vector.shape_cast %247 : vector<1x8x4xf32> to vector<8x4xf32>
    %249 = vector.extract_strided_slice %11 {offsets = [0, 10], sizes = [4, 78], strides = [1, 1]} : vector<4x100xf32> to vector<4x78xf32>
    %cst_182 = arith.constant dense<0.000000e+00> : vector<8x78xf32>
    %250 = tpu.matmul %248, %249, %cst_182 {dimension_numbers = #tpu.dot_dimension_numbers<[1], [0], [0], [1], [0, 0, 1, 1], [], []>} : vector<8x4xf32>, vector<4x78xf32>, vector<8x78xf32> -> vector<8x78xf32>
    %251 = arith.addf %246, %250 : vector<8x78xf32>
    %c10_183 = arith.constant 10 : index
    %c0_184 = arith.constant 0 : index
    %c0_185 = arith.constant 0 : index
    %252 = vector.load %arg4[%c10_183, %c0_184, %c0_185] : memref<16x8x4xf32, #tpu.memory_space<vmem>>, vector<1x8x4xf32>
    %253 = vector.shape_cast %252 : vector<1x8x4xf32> to vector<8x4xf32>
    %254 = vector.extract_strided_slice %9 {offsets = [0, 11], sizes = [4, 78], strides = [1, 1]} : vector<4x100xf32> to vector<4x78xf32>
    %cst_186 = arith.constant dense<0.000000e+00> : vector<8x78xf32>
    %255 = tpu.matmul %253, %254, %cst_186 {dimension_numbers = #tpu.dot_dimension_numbers<[1], [0], [0], [1], [0, 0, 1, 1], [], []>} : vector<8x4xf32>, vector<4x78xf32>, vector<8x78xf32> -> vector<8x78xf32>
    %256 = arith.addf %251, %255 : vector<8x78xf32>
    %c11_187 = arith.constant 11 : index
    %c0_188 = arith.constant 0 : index
    %c0_189 = arith.constant 0 : index
    %257 = vector.load %arg4[%c11_187, %c0_188, %c0_189] : memref<16x8x4xf32, #tpu.memory_space<vmem>>, vector<1x8x4xf32>
    %258 = vector.shape_cast %257 : vector<1x8x4xf32> to vector<8x4xf32>
    %259 = vector.extract_strided_slice %11 {offsets = [0, 11], sizes = [4, 78], strides = [1, 1]} : vector<4x100xf32> to vector<4x78xf32>
    %cst_190 = arith.constant dense<0.000000e+00> : vector<8x78xf32>
    %260 = tpu.matmul %258, %259, %cst_190 {dimension_numbers = #tpu.dot_dimension_numbers<[1], [0], [0], [1], [0, 0, 1, 1], [], []>} : vector<8x4xf32>, vector<4x78xf32>, vector<8x78xf32> -> vector<8x78xf32>
    %261 = arith.addf %256, %260 : vector<8x78xf32>
    %c12_191 = arith.constant 12 : index
    %c0_192 = arith.constant 0 : index
    %c0_193 = arith.constant 0 : index
    %262 = vector.load %arg4[%c12_191, %c0_192, %c0_193] : memref<16x8x4xf32, #tpu.memory_space<vmem>>, vector<1x8x4xf32>
    %263 = vector.shape_cast %262 : vector<1x8x4xf32> to vector<8x4xf32>
    %264 = vector.extract_strided_slice %13 {offsets = [0, 10], sizes = [4, 78], strides = [1, 1]} : vector<4x100xf32> to vector<4x78xf32>
    %cst_194 = arith.constant dense<0.000000e+00> : vector<8x78xf32>
    %265 = tpu.matmul %263, %264, %cst_194 {dimension_numbers = #tpu.dot_dimension_numbers<[1], [0], [0], [1], [0, 0, 1, 1], [], []>} : vector<8x4xf32>, vector<4x78xf32>, vector<8x78xf32> -> vector<8x78xf32>
    %266 = arith.addf %261, %265 : vector<8x78xf32>
    %c13_195 = arith.constant 13 : index
    %c0_196 = arith.constant 0 : index
    %c0_197 = arith.constant 0 : index
    %267 = vector.load %arg4[%c13_195, %c0_196, %c0_197] : memref<16x8x4xf32, #tpu.memory_space<vmem>>, vector<1x8x4xf32>
    %268 = vector.shape_cast %267 : vector<1x8x4xf32> to vector<8x4xf32>
    %269 = vector.extract_strided_slice %15 {offsets = [0, 10], sizes = [4, 78], strides = [1, 1]} : vector<4x100xf32> to vector<4x78xf32>
    %cst_198 = arith.constant dense<0.000000e+00> : vector<8x78xf32>
    %270 = tpu.matmul %268, %269, %cst_198 {dimension_numbers = #tpu.dot_dimension_numbers<[1], [0], [0], [1], [0, 0, 1, 1], [], []>} : vector<8x4xf32>, vector<4x78xf32>, vector<8x78xf32> -> vector<8x78xf32>
    %271 = arith.addf %266, %270 : vector<8x78xf32>
    %c14_199 = arith.constant 14 : index
    %c0_200 = arith.constant 0 : index
    %c0_201 = arith.constant 0 : index
    %272 = vector.load %arg4[%c14_199, %c0_200, %c0_201] : memref<16x8x4xf32, #tpu.memory_space<vmem>>, vector<1x8x4xf32>
    %273 = vector.shape_cast %272 : vector<1x8x4xf32> to vector<8x4xf32>
    %274 = vector.extract_strided_slice %13 {offsets = [0, 11], sizes = [4, 78], strides = [1, 1]} : vector<4x100xf32> to vector<4x78xf32>
    %cst_202 = arith.constant dense<0.000000e+00> : vector<8x78xf32>
    %275 = tpu.matmul %273, %274, %cst_202 {dimension_numbers = #tpu.dot_dimension_numbers<[1], [0], [0], [1], [0, 0, 1, 1], [], []>} : vector<8x4xf32>, vector<4x78xf32>, vector<8x78xf32> -> vector<8x78xf32>
    %276 = arith.addf %271, %275 : vector<8x78xf32>
    %c15_203 = arith.constant 15 : index
    %c0_204 = arith.constant 0 : index
    %c0_205 = arith.constant 0 : index
    %277 = vector.load %arg4[%c15_203, %c0_204, %c0_205] : memref<16x8x4xf32, #tpu.memory_space<vmem>>, vector<1x8x4xf32>
    %278 = vector.shape_cast %277 : vector<1x8x4xf32> to vector<8x4xf32>
    %279 = vector.extract_strided_slice %15 {offsets = [0, 11], sizes = [4, 78], strides = [1, 1]} : vector<4x100xf32> to vector<4x78xf32>
    %cst_206 = arith.constant dense<0.000000e+00> : vector<8x78xf32>
    %280 = tpu.matmul %278, %279, %cst_206 {dimension_numbers = #tpu.dot_dimension_numbers<[1], [0], [0], [1], [0, 0, 1, 1], [], []>} : vector<8x4xf32>, vector<4x78xf32>, vector<8x78xf32> -> vector<8x78xf32>
    %281 = arith.addf %276, %280 : vector<8x78xf32>
    %282 = arith.addf %202, %281 : vector<8x78xf32>
    %c0_207 = arith.constant 0 : index
    %c0_208 = arith.constant 0 : index
    %c0_209 = arith.constant 0 : index
    %283 = vector.load %arg6[%c0_207, %c0_208, %c0_209] : memref<1x8x80xf32, #tpu.memory_space<vmem>>, vector<1x8x78xf32>
    %284 = vector.shape_cast %283 : vector<1x8x78xf32> to vector<8x78xf32>
    %285 = vector.shape_cast %282 : vector<8x78xf32> to vector<1x8x78xf32>
    tpu.vector_store %arg6[%c0_207, %c0_208, %c0_209], %285 {strides = array<i32>} : memref<1x8x80xf32, #tpu.memory_space<vmem>>, vector<1x8x78xf32>,
    %cst_210 = arith.constant 0.000000e+00 : f32
    %286 = vector.broadcast %cst_210 : f32 to vector<8x2xf32>
    %c0_211 = arith.constant 0 : index
    %c0_212 = arith.constant 0 : index
    %c78 = arith.constant 78 : index
    %287 = vector.load %arg6[%c0_211, %c0_212, %c78] : memref<1x8x80xf32, #tpu.memory_space<vmem>>, vector<1x8x2xf32>
    %288 = vector.shape_cast %287 : vector<1x8x2xf32> to vector<8x2xf32>
    %289 = vector.shape_cast %286 : vector<8x2xf32> to vector<1x8x2xf32>
    tpu.vector_store %arg6[%c0_211, %c0_212, %c78], %289 {strides = array<i32>} : memref<1x8x80xf32, #tpu.memory_space<vmem>>, vector<1x8x2xf32>,
    return
  }
  func.func @transform_0(%arg0: i32) -> (i32, i32, i32, i32) {
    %c0_i32 = arith.constant 0 : i32
    %c0_i32_0 = arith.constant 0 : i32
    %c0_i32_1 = arith.constant 0 : i32
    %c0_i32_2 = arith.constant 0 : i32
    return %arg0, %c0_i32, %c0_i32_0, %c0_i32_1 : i32, i32, i32, i32
  }
  func.func @transform_1(%arg0: i32) -> (i32, i32, i32, i32) {
    %c0_i32 = arith.constant 0 : i32
    %c0_i32_0 = arith.constant 0 : i32
    %c0_i32_1 = arith.constant 0 : i32
    %c0_i32_2 = arith.constant 0 : i32
    return %arg0, %c0_i32, %c0_i32_0, %c0_i32_1 : i32, i32, i32, i32
  }
  func.func @transform_2(%arg0: i32) -> (i32, i32, i32) {
    %c0_i32 = arith.constant 0 : i32
    %c0_i32_0 = arith.constant 0 : i32
    %c0_i32_1 = arith.constant 0 : i32
    %c0_i32_2 = arith.constant 0 : i32
    return %c0_i32, %c0_i32_0, %c0_i32_1 : i32, i32, i32
  }
  func.func @transform_3(%arg0: i32) -> (i32, i32, i32) {
    %c0_i32 = arith.constant 0 : i32
    %c0_i32_0 = arith.constant 0 : i32
    %c0_i32_1 = arith.constant 0 : i32
    %c0_i32_2 = arith.constant 0 : i32
    return %c0_i32, %c0_i32_0, %c0_i32_1 : i32, i32, i32
  }
  func.func @transform_4(%arg0: i32) -> (i32, i32) {
    %c0_i32 = arith.constant 0 : i32
    %c0_i32_0 = arith.constant 0 : i32
    %c0_i32_1 = arith.constant 0 : i32
    return %c0_i32, %c0_i32_0 : i32, i32
  }
  func.func @transform_5(%arg0: i32) -> (i32, i32, i32) {
    %c0_i32 = arith.constant 0 : i32
    %c0_i32_0 = arith.constant 0 : i32
    %c0_i32_1 = arith.constant 0 : i32
    return %arg0, %c0_i32, %c0_i32_0 : i32, i32, i32
  }
}

</mosaic_0001>

<llo_original>
// kernel: res_block.2
$region0: #{res_block.2}
  #allocation0 [shape = 'u32[]', space=smem, size = 0x4, offset = 0x4, fixed_abs, tag = 'smem constant byte address 0x4 - core index']
  #allocation1 [shape = 'u32[144,128]{1,0:T(1,128)}', space=vmem, size = 0x12000, scoped, tag = 'internal scratch']
  %s0 = inlined_call_operand.vmem [shape: f32[2,4,400], index: 0, kind: input, shape index: {}]
  %s1 = inlined_call_operand.vmem [shape: f32[9,4,4], index: 1, kind: input, shape index: {}]
  %s2 = inlined_call_operand.vmem [shape: f32[4,1], index: 2, kind: input, shape index: {}]
  %s3 = inlined_call_operand.vmem [shape: f32[2,4,320], index: 3, kind: output, shape index: {}]
  %s4 = sld [smem:[#allocation0]]
  $region45: #{res_block.2} parent=0
    _
  %s6 = ssub.s32 1, %s4
  %s7 = scalar_select 0, %s6, %s4
  loop: start=0, step=1, limit=4
  $region2: #{res_block.2} parent=0 // loop_pre_header
    _
  $region3: #{res_block.2} parent=0 // loop_header
    %s9 = sphi 0, %s13
    %p10 = scmp.ge.s32.totalorder %s9, 4
    %s19 = sphi 0, %s21
    %s22 = sphi 0, %s19
    %s23 = sphi 0, %s22
    %s39 = sphi 0, %s23
    %s43 = sphi 0, %s43
    %s45 = sphi 0, %s43
    %s46 = sphi 0, %s45
    %s60 = sphi 0, %s46
    %s64 = sphi 0, %s64
    %s66 = sphi 0, %s64
    %s67 = sphi 0, %s66
    %s81 = sphi 0, %s67
    %s87 = sphi 0, %s89
    %s90 = sphi 0, %s87
    %s91 = sphi 0, %s90
    %s107 = sphi 0, %s91
  $region4: #{res_block.2} parent=0 // loop_header_branch
    %12 = sbr.rel (%p10) target = $region8
  $region5: #{res_block.2} parent=0 // loop_body
    %s14 = ssub.s32 %s9, 1
    %s15 = ssub.s32 %s9, 2
    %s16 = sadd.s32 %s9, 1
    %s17 = ssub.s32 %s9, %s16
    %p18 = scmp.eq.s32.totalorder %s17, 0
    %s20 = sadd.s32 %s19, 1
    %s21 = scalar_select %p18, %s19, %s20
    %p24 = pneg %p18
    %p25 = scmp.eq.s32.totalorder %s9, 1
    %p26 = por %p24, %p25
    %p27 = scmp.ne.s32.totalorder %s19, %s22
    %p28 = scmp.eq.s32.totalorder %s9, 0
    %p29 = por %p27, %p28
    %p30 = scmp.ne.s32.totalorder %s19, %s22
    %p31 = scmp.eq.s32.totalorder %s14, 1
    %p32 = por %p30, %p31
    %p33 = scmp.ne.s32.totalorder %s22, %s23
    %p34 = scmp.eq.s32.totalorder %s14, 0
    %p35 = por %p33, %p34
    %p36 = scmp.ne.s32.totalorder %s22, %s23
    %p37 = scmp.eq.s32.totalorder %s15, 1
    %p38 = por %p36, %p37
    %p40 = scmp.ne.s32.totalorder %s23, %s39
    %p41 = scmp.eq.s32.totalorder %s15, 0
    %p42 = por %p40, %p41
    %s44 = sadd.s32 %s43, 1
    %p47 = scmp.eq.s32.totalorder %s9, 1
    %p48 = scmp.ne.s32.totalorder %s43, %s45
    %p49 = scmp.eq.s32.totalorder %s9, 0
    %p50 = por %p48, %p49
    %p51 = scmp.ne.s32.totalorder %s43, %s45
    %p52 = scmp.eq.s32.totalorder %s14, 1
    %p53 = por %p51, %p52
    %p54 = scmp.ne.s32.totalorder %s45, %s46
    %p55 = scmp.eq.s32.totalorder %s14, 0
    %p56 = por %p54, %p55
    %p57 = scmp.ne.s32.totalorder %s45, %s46
    %p58 = scmp.eq.s32.totalorder %s15, 1
    %p59 = por %p57, %p58
    %p61 = scmp.ne.s32.totalorder %s46, %s60
    %p62 = scmp.eq.s32.totalorder %s15, 0
    %p63 = por %p61, %p62
    %s65 = sadd.s32 %s64, 1
    %p68 = scmp.eq.s32.totalorder %s9, 1
    %p69 = scmp.ne.s32.totalorder %s64, %s66
    %p70 = scmp.eq.s32.totalorder %s9, 0
    %p71 = por %p69, %p70
    %p72 = scmp.ne.s32.totalorder %s64, %s66
    %p73 = scmp.eq.s32.totalorder %s14, 1
    %p74 = por %p72, %p73
    %p75 = scmp.ne.s32.totalorder %s66, %s67
    %p76 = scmp.eq.s32.totalorder %s14, 0
    %p77 = por %p75, %p76
    %p78 = scmp.ne.s32.totalorder %s66, %s67
    %p79 = scmp.eq.s32.totalorder %s15, 1
    %p80 = por %p78, %p79
    %p82 = scmp.ne.s32.totalorder %s67, %s81
    %p83 = scmp.eq.s32.totalorder %s15, 0
    %p84 = por %p82, %p83
    %s85 = ssub.s32 %s9, %s16
    %p86 = scmp.eq.s32.totalorder %s85, 0
    %s88 = sadd.s32 %s87, 1
    %s89 = scalar_select %p86, %s87, %s88
    %p92 = pneg %p86
    %p93 = scmp.eq.s32.totalorder %s9, 1
    %p94 = por %p92, %p93
    %p95 = scmp.ne.s32.totalorder %s87, %s90
    %p96 = scmp.eq.s32.totalorder %s9, 0
    %p97 = por %p95, %p96
    %p98 = scmp.ne.s32.totalorder %s87, %s90
    %p99 = scmp.eq.s32.totalorder %s14, 1
    %p100 = por %p98, %p99
    %p101 = scmp.ne.s32.totalorder %s90, %s91
    %p102 = scmp.eq.s32.totalorder %s14, 0
    %p103 = por %p101, %p102
    %p104 = scmp.ne.s32.totalorder %s90, %s91
    %p105 = scmp.eq.s32.totalorder %s15, 1
    %p106 = por %p104, %p105
    %p108 = scmp.ne.s32.totalorder %s91, %s107
    %p109 = scmp.eq.s32.totalorder %s15, 0
    %p110 = por %p108, %p109
    %p111 = scmp.le.s32.totalorder 1, %s9
    %p112 = scmp.lt.s32.totalorder %s9, 3
    %p113 = pnand %p111, %p112
    %p114 = pneg %p113
    // Predicated region
    $region9: #{res_block.2} parent=5 // pred_check
      _
    $region10: #{res_block.2} parent=5 // pred_check_branch
      %116 = sbr.rel (%p113) target = $region12
    $region11: #{res_block.2} parent=5 // pred_region
      %s117 = ssub.s32 %s9, 1
      // Predicated region
      $region13: #{res_block.2} parent=11 // pred_check
        %p118 = pneg %p56
      $region14: #{res_block.2} parent=11 // pred_check_branch
        %120 = sbr.rel (%p118) target = $region16
      $region15: #{res_block.2} parent=11 // pred_region
        _
      $region16: #{res_block.2} parent=11 // pred_fallthru
        _
      // Predicated region
      $region17: #{res_block.2} parent=11 // pred_check
        %p121 = pneg %p77
      $region18: #{res_block.2} parent=11 // pred_check_branch
        %123 = sbr.rel (%p121) target = $region20
      $region19: #{res_block.2} parent=11 // pred_region
        _
      $region20: #{res_block.2} parent=11 // pred_fallthru
        _
    $region12: #{res_block.2} parent=5 // pred_fallthru
      _
    %p124 = scmp.lt.s32.totalorder %s9, 2
    // Predicated region
    $region21: #{res_block.2} parent=5 // pred_check
      %p125 = pneg %p124
    $region22: #{res_block.2} parent=5 // pred_check_branch
      %127 = sbr.rel (%p125) target = $region24
    $region23: #{res_block.2} parent=5 // pred_region
      // Predicated region
      $region25: #{res_block.2} parent=23 // pred_check
        %p128 = pneg %p29
      $region26: #{res_block.2} parent=23 // pred_check_branch
        %130 = sbr.rel (%p128) target = $region28
      $region27: #{res_block.2} parent=23 // pred_region
        %p131 = scmp.lt.s32.totalorder %s9, 1
        %s132 = scalar_select %p131, %s9, 1
        %s133 = smul.addr %s132, 4
        %s134 = smul.addr %s133, 4
        %s135 = scalar_lea.vmem %s0, %s134
      $region28: #{res_block.2} parent=23 // pred_fallthru
        _
    $region24: #{res_block.2} parent=5 // pred_fallthru
      _
    %p136 = scmp.le.s32.totalorder 1, %s9
    %p137 = scmp.lt.s32.totalorder %s9, 3
    %p138 = pnand %p136, %p137
    %p139 = pneg %p138
    // Predicated region
    $region29: #{res_block.2} parent=5 // pred_check
      _
    $region30: #{res_block.2} parent=5 // pred_check_branch
      %141 = sbr.rel (%p138) target = $region32
    $region31: #{res_block.2} parent=5 // pred_region
      %s142 = ssub.s32 %s9, 1
      %p143 = scmp.lt.s32.totalorder %s14, 1
      %s144 = scalar_select %p143, %s14, 1
      %s145 = smul.addr %s144, 4
      %s146 = smul.addr %s145, 4
      %s147 = scalar_lea.vmem %s0, %s146
      %p148 = pneg %p35
      %p149 = pneg %p32
      %p150 = pneg %p56
      %p151 = pneg %p53
      %p152 = pneg %p77
      %p153 = pneg %p74
      %p154 = pneg %p103
      %p155 = pneg %p100
      %p156 = scmp.lt.s32.totalorder %s14, 1
      %s157 = scalar_select %p156, %s14, 1
      %s158 = smul.addr %s157, 3
      %s159 = smul.addr %s158, 4
      %s160 = scalar_lea.vmem %s3, %s159
      %p161 = scmp.lt.s32.totalorder %s14, 1
      %s162 = scalar_select %p161, %s14, 1
      %s163 = smul.addr %s162, 4
      %s164 = smul.addr %s163, 4
      %s165 = scalar_lea.vmem %s0, %s164
      %p166 = scmp.lt.s32.totalorder %s14, 1
      %s167 = scalar_select %p166, %s14, 1
      %s168 = smul.addr %s167, 3
      %s169 = smul.addr %s168, 4
      %s170 = scalar_lea.vmem %s3, %s169
      %v171 = vld [vmem:[%s1] sm:$0xf]
      %v172 = vld [vmem:[%s165] sm:$0xff]
      %v173 = vld [vmem:[%s165 + $0x8] sm:$0xf]
      %s174 = scalar_lea.vmem %s1, 4
      %v175 = vld [vmem:[%s174] sm:$0xf]
      %v178 = vcombine.high %v172, %v172
      %179 = vrot.lane.b32.xlu0 %v172, 127
      %v180 = vpop.permute.xlu0 %179
      %181 = vrot.lane.b32.xlu0 %v178, 127
      %v182 = vpop.permute.xlu0 %181
      %183 = vrot.lane.b32.xlu0 %v173, 127
      %v184 = vpop.permute.xlu0 %183
      %vm185 = vcmask 1039360
      %v186 = vsel %vm185, %v180, %v182
      %v187 = vsel %vm185, %v182, %v184
      %vm188 = vcmask 31744
      %v190 = vsel %vm188, %v175, 0
      %vm192 = vcmask 1043456
      %v193 = vsel %vm192, %v186, 0
      %v195 = vsel %vm192, %v187, 0
      %v197 = vsel %vm192, %v184, 0
      %199 = vmatprep.subr.mxu0 0.0
      %200 = vmatpush1.msra.mxu0 0.0
      %201 = vmatprep.subr.mxu0 0.0
      %202 = vmatpush1.msra.mxu0 0.0
      %203 = vmatprep.subr.mxu0 0.0
      %204 = vmatpush1.msra.mxu0 0.0
      %205 = vmatprep.subr.mxu0 0.0
      %206 = vmatpush1.msra.mxu0 0.0
      %207 = vmatprep.subr.mxu0 0.0
      %208 = vmatpush1.msra.mxu0 0.0
      %209 = vmatprep.subr.mxu0 0.0
      %210 = vmatpush1.msra.mxu0 0.0
      %211 = vmatprep.subr.mxu0 0.0
      %212 = vmatpush1.msra.mxu0 0.0
      %213 = vmatprep.subr.mxu0 0.0
      %214 = vmatpush1.msra.mxu0 0.0
      %215 = vmatprep.subr.mxu0 0.0
      %216 = vmatpush1.msra.mxu0 0.0
      %217 = vmatprep.subr.mxu0 0.0
      %218 = vmatpush1.msra.mxu0 0.0
      %219 = vmatprep.subr.mxu0 0.0
      %220 = vmatpush1.msra.mxu0 0.0
      %221 = vmatprep.subr.mxu0 0.0
      %222 = vmatpush1.msra.mxu0 0.0
      %223 = vmatprep.subr.mxu0 0.0
      %224 = vmatpush1.msra.mxu0 0.0
      %225 = vmatprep.subr.mxu0 0.0
      %226 = vmatpush1.msra.mxu0 0.0
      %227 = vmatprep.subr.mxu0 0.0
      %228 = vmatpush1.msra.mxu0 0.0
      %229 = vmatprep.subr.mxu0 %v195
      %230 = vmatpush1.msra.mxu0 %v193
      %231 = vmatprep.subr.mxu0 0.0
      %232 = vmatpush2.msra.mxu0 0.0
      %233 = vmatprep.subr.mxu0 0.0
      %234 = vmatpush2.msra.mxu0 0.0
      %235 = vmatprep.subr.mxu0 0.0
      %236 = vmatpush2.msra.mxu0 0.0
      %237 = vmatprep.subr.mxu0 0.0
      %238 = vmatpush2.msra.mxu0 0.0
      %239 = vmatprep.subr.mxu0 0.0
      %240 = vmatpush2.msra.mxu0 0.0
      %241 = vmatprep.subr.mxu0 0.0
      %242 = vmatpush2.msra.mxu0 0.0
      %243 = vmatprep.subr.mxu0 0.0
      %244 = vmatpush2.msra.mxu0 0.0
      %245 = vmatprep.subr.mxu0 0.0
      %246 = vmatpush2.msra.mxu0 0.0
      %247 = vmatprep.subr.mxu0 0.0
      %248 = vmatpush2.msra.mxu0 0.0
      %249 = vmatprep.subr.mxu0 0.0
      %250 = vmatpush2.msra.mxu0 0.0
      %251 = vmatprep.subr.mxu0 0.0
      %252 = vmatpush2.msra.mxu0 0.0
      %253 = vmatprep.subr.mxu0 0.0
      %254 = vmatpush2.msra.mxu0 0.0
      %255 = vmatprep.subr.mxu0 0.0
      %256 = vmatpush2.msra.mxu0 0.0
      %257 = vmatprep.subr.mxu0 0.0
      %258 = vmatpush2.msra.mxu0 0.0
      %259 = vmatprep.subr.mxu0 0.0
      %260 = vmatpush2.msra.mxu0 0.0
      %261 = vmatprep.subr.mxu0 0.0
      %262 = vmatpush2.msra.mxu0 0.0
      %263 = vmatprep.mubr.f32.mxu0 0.0
      %264 = vmatmul.mubr.f32.gmra.mxu0 %v190
      %v265 = vpop.f32.mrf.mxu0
      %v266 = vadd.f32 0.0, %v265
      %v267 = vpop.f32.mrf.mxu0
      %v268 = vadd.f32 0.0, %v267
      %269 = vdwg.mxu0
      %270 = vmatprep.subr.mxu0 0.0
      %271 = vmatpush1.msra.mxu0 0.0
      %272 = vmatprep.subr.mxu0 0.0
      %273 = vmatpush1.msra.mxu0 0.0
      %274 = vmatprep.subr.mxu0 0.0
      %275 = vmatpush1.msra.mxu0 0.0
      %276 = vmatprep.subr.mxu0 0.0
      %277 = vmatpush1.msra.mxu0 0.0
      %278 = vmatprep.subr.mxu0 0.0
      %279 = vmatpush1.msra.mxu0 0.0
      %280 = vmatprep.subr.mxu0 0.0
      %281 = vmatpush1.msra.mxu0 0.0
      %282 = vmatprep.subr.mxu0 0.0
      %283 = vmatpush1.msra.mxu0 0.0
      %284 = vmatprep.subr.mxu0 0.0
      %285 = vmatpush1.msra.mxu0 0.0
      %286 = vmatprep.subr.mxu0 0.0
      %287 = vmatpush1.msra.mxu0 0.0
      %288 = vmatprep.subr.mxu0 0.0
      %289 = vmatpush1.msra.mxu0 0.0
      %290 = vmatprep.subr.mxu0 0.0
      %291 = vmatpush1.msra.mxu0 0.0
      %292 = vmatprep.subr.mxu0 0.0
      %293 = vmatpush1.msra.mxu0 0.0
      %294 = vmatprep.subr.mxu0 0.0
      %295 = vmatpush1.msra.mxu0 0.0
      %296 = vmatprep.subr.mxu0 0.0
      %297 = vmatpush1.msra.mxu0 0.0
      %298 = vmatprep.subr.mxu0 0.0
      %299 = vmatpush1.msra.mxu0 0.0
      %300 = vmatprep.subr.mxu0 0.0
      %301 = vmatpush1.msra.mxu0 %v197
      %302 = vmatprep.subr.mxu0 0.0
      %303 = vmatpush2.msra.mxu0 0.0
      %304 = vmatprep.subr.mxu0 0.0
      %305 = vmatpush2.msra.mxu0 0.0
      %306 = vmatprep.subr.mxu0 0.0
      %307 = vmatpush2.msra.mxu0 0.0
      %308 = vmatprep.subr.mxu0 0.0
      %309 = vmatpush2.msra.mxu0 0.0
      %310 = vmatprep.subr.mxu0 0.0
      %311 = vmatpush2.msra.mxu0 0.0
      %312 = vmatprep.subr.mxu0 0.0
      %313 = vmatpush2.msra.mxu0 0.0
      %314 = vmatprep.subr.mxu0 0.0
      %315 = vmatpush2.msra.mxu0 0.0
      %316 = vmatprep.subr.mxu0 0.0
      %317 = vmatpush2.msra.mxu0 0.0
      %318 = vmatprep.subr.mxu0 0.0
      %319 = vmatpush2.msra.mxu0 0.0
      %320 = vmatprep.subr.mxu0 0.0
      %321 = vmatpush2.msra.mxu0 0.0
      %322 = vmatprep.subr.mxu0 0.0
      %323 = vmatpush2.msra.mxu0 0.0
      %324 = vmatprep.subr.mxu0 0.0
      %325 = vmatpush2.msra.mxu0 0.0
      %326 = vmatprep.subr.mxu0 0.0
      %327 = vmatpush2.msra.mxu0 0.0
      %328 = vmatprep.subr.mxu0 0.0
      %329 = vmatpush2.msra.mxu0 0.0
      %330 = vmatprep.subr.mxu0 0.0
      %331 = vmatpush2.msra.mxu0 0.0
      %332 = vmatprep.subr.mxu0 0.0
      %333 = vmatpush2.msra.mxu0 0.0
      %334 = vmatprep.mubr.f32.mxu0 0.0
      %335 = vmatmul.mubr.f32.gmra.mxu0 %v190
      %v336 = vpop.f32.mrf.mxu0
      %v337 = vadd.f32 0.0, %v336
      %v338 = vpop.f32.mrf.mxu0
      %339 = vdwg.mxu0
      %v341 = vsel %vm188, %v171, 0
      %v343 = vsel %vm192, %v172, 0
      %v345 = vsel %vm192, %v178, 0
      %v347 = vsel %vm192, %v173, 0
      %349 = vmatprep.subr.mxu0 0.0
      %350 = vmatpush1.msra.mxu0 0.0
      %351 = vmatprep.subr.mxu0 0.0
      %352 = vmatpush1.msra.mxu0 0.0
      %353 = vmatprep.subr.mxu0 0.0
      %354 = vmatpush1.msra.mxu0 0.0
      %355 = vmatprep.subr.mxu0 0.0
      %356 = vmatpush1.msra.mxu0 0.0
      %357 = vmatprep.subr.mxu0 0.0
      %358 = vmatpush1.msra.mxu0 0.0
      %359 = vmatprep.subr.mxu0 0.0
      %360 = vmatpush1.msra.mxu0 0.0
      %361 = vmatprep.subr.mxu0 0.0
      %362 = vmatpush1.msra.mxu0 0.0
      %363 = vmatprep.subr.mxu0 0.0
      %364 = vmatpush1.msra.mxu0 0.0
      %365 = vmatprep.subr.mxu0 0.0
      %366 = vmatpush1.msra.mxu0 0.0
      %367 = vmatprep.subr.mxu0 0.0
      %368 = vmatpush1.msra.mxu0 0.0
      %369 = vmatprep.subr.mxu0 0.0
      %370 = vmatpush1.msra.mxu0 0.0
      %371 = vmatprep.subr.mxu0 0.0
      %372 = vmatpush1.msra.mxu0 0.0
      %373 = vmatprep.subr.mxu0 0.0
      %374 = vmatpush1.msra.mxu0 0.0
      %375 = vmatprep.subr.mxu0 0.0
      %376 = vmatpush1.msra.mxu0 0.0
      %377 = vmatprep.subr.mxu0 0.0
      %378 = vmatpush1.msra.mxu0 0.0
      %379 = vmatprep.subr.mxu0 %v345
      %380 = vmatpush1.msra.mxu0 %v343
      %381 = vmatprep.subr.mxu0 0.0
      %382 = vmatpush2.msra.mxu0 0.0
      %383 = vmatprep.subr.mxu0 0.0
      %384 = vmatpush2.msra.mxu0 0.0
      %385 = vmatprep.subr.mxu0 0.0
      %386 = vmatpush2.msra.mxu0 0.0
      %387 = vmatprep.subr.mxu0 0.0
      %388 = vmatpush2.msra.mxu0 0.0
      %389 = vmatprep.subr.mxu0 0.0
      %390 = vmatpush2.msra.mxu0 0.0
      %391 = vmatprep.subr.mxu0 0.0
      %392 = vmatpush2.msra.mxu0 0.0
      %393 = vmatprep.subr.mxu0 0.0
      %394 = vmatpush2.msra.mxu0 0.0
      %395 = vmatprep.subr.mxu0 0.0
      %396 = vmatpush2.msra.mxu0 0.0
      %397 = vmatprep.subr.mxu0 0.0
      %398 = vmatpush2.msra.mxu0 0.0
      %399 = vmatprep.subr.mxu0 0.0
      %400 = vmatpush2.msra.mxu0 0.0
      %401 = vmatprep.subr.mxu0 0.0
      %402 = vmatpush2.msra.mxu0 0.0
      %403 = vmatprep.subr.mxu0 0.0
      %404 = vmatpush2.msra.mxu0 0.0
      %405 = vmatprep.subr.mxu0 0.0
      %406 = vmatpush2.msra.mxu0 0.0
      %407 = vmatprep.subr.mxu0 0.0
      %408 = vmatpush2.msra.mxu0 0.0
      %409 = vmatprep.subr.mxu0 0.0
      %410 = vmatpush2.msra.mxu0 0.0
      %411 = vmatprep.subr.mxu0 0.0
      %412 = vmatpush2.msra.mxu0 0.0
      %413 = vmatprep.mubr.f32.mxu0 0.0
      %414 = vmatmul.mubr.f32.gmra.mxu0 %v341
      %v415 = vpop.f32.mrf.mxu0
      %v416 = vadd.f32 %v266, %v415
      %v417 = vpop.f32.mrf.mxu0
      %v418 = vadd.f32 %v268, %v417
      %419 = vdwg.mxu0
      %420 = vmatprep.subr.mxu0 0.0
      %421 = vmatpush1.msra.mxu0 0.0
      %422 = vmatprep.subr.mxu0 0.0
      %423 = vmatpush1.msra.mxu0 0.0
      %424 = vmatprep.subr.mxu0 0.0
      %425 = vmatpush1.msra.mxu0 0.0
      %426 = vmatprep.subr.mxu0 0.0
      %427 = vmatpush1.msra.mxu0 0.0
      %428 = vmatprep.subr.mxu0 0.0
      %429 = vmatpush1.msra.mxu0 0.0
      %430 = vmatprep.subr.mxu0 0.0
      %431 = vmatpush1.msra.mxu0 0.0
      %432 = vmatprep.subr.mxu0 0.0
      %433 = vmatpush1.msra.mxu0 0.0
      %434 = vmatprep.subr.mxu0 0.0
      %435 = vmatpush1.msra.mxu0 0.0
      %436 = vmatprep.subr.mxu0 0.0
      %437 = vmatpush1.msra.mxu0 0.0
      %438 = vmatprep.subr.mxu0 0.0
      %439 = vmatpush1.msra.mxu0 0.0
      %440 = vmatprep.subr.mxu0 0.0
      %441 = vmatpush1.msra.mxu0 0.0
      %442 = vmatprep.subr.mxu0 0.0
      %443 = vmatpush1.msra.mxu0 0.0
      %444 = vmatprep.subr.mxu0 0.0
      %445 = vmatpush1.msra.mxu0 0.0
      %446 = vmatprep.subr.mxu0 0.0
      %447 = vmatpush1.msra.mxu0 0.0
      %448 = vmatprep.subr.mxu0 0.0
      %449 = vmatpush1.msra.mxu0 0.0
      %450 = vmatprep.subr.mxu0 0.0
      %451 = vmatpush1.msra.mxu0 %v347
      %452 = vmatprep.subr.mxu0 0.0
      %453 = vmatpush2.msra.mxu0 0.0
      %454 = vmatprep.subr.mxu0 0.0
      %455 = vmatpush2.msra.mxu0 0.0
      %456 = vmatprep.subr.mxu0 0.0
      %457 = vmatpush2.msra.mxu0 0.0
      %458 = vmatprep.subr.mxu0 0.0
      %459 = vmatpush2.msra.mxu0 0.0
      %460 = vmatprep.subr.mxu0 0.0
      %461 = vmatpush2.msra.mxu0 0.0
      %462 = vmatprep.subr.mxu0 0.0
      %463 = vmatpush2.msra.mxu0 0.0
      %464 = vmatprep.subr.mxu0 0.0
      %465 = vmatpush2.msra.mxu0 0.0
      %466 = vmatprep.subr.mxu0 0.0
      %467 = vmatpush2.msra.mxu0 0.0
      %468 = vmatprep.subr.mxu0 0.0
      %469 = vmatpush2.msra.mxu0 0.0
      %470 = vmatprep.subr.mxu0 0.0
      %471 = vmatpush2.msra.mxu0 0.0
      %472 = vmatprep.subr.mxu0 0.0
      %473 = vmatpush2.msra.mxu0 0.0
      %474 = vmatprep.subr.mxu0 0.0
      %475 = vmatpush2.msra.mxu0 0.0
      %476 = vmatprep.subr.mxu0 0.0
      %477 = vmatpush2.msra.mxu0 0.0
      %478 = vmatprep.subr.mxu0 0.0
      %479 = vmatpush2.msra.mxu0 0.0
      %480 = vmatprep.subr.mxu0 0.0
      %481 = vmatpush2.msra.mxu0 0.0
      %482 = vmatprep.subr.mxu0 0.0
      %483 = vmatpush2.msra.mxu0 0.0
      %484 = vmatprep.mubr.f32.mxu0 0.0
      %485 = vmatmul.mubr.f32.gmra.mxu0 %v341
      %v486 = vpop.f32.mrf.mxu0
      %v487 = vadd.f32 %v337, %v486
      %v488 = vpop.f32.mrf.mxu0
      %489 = vdwg.mxu0
      %s490 = scalar_lea.vmem %s1, 8
      %v491 = vld [vmem:[%s490] sm:$0xf]
      %v492 = vld [vmem:[%s165] sm:$0xff]
      %v493 = vld [vmem:[%s165 + $0x8] sm:$0xf]
      %v496 = vcombine.high %v492, %v492
      %497 = vrot.lane.b32.xlu0 %v492, 126
      %v498 = vpop.permute.xlu0 %497
      %499 = vrot.lane.b32.xlu0 %v496, 126
      %v500 = vpop.permute.xlu0 %499
      %501 = vrot.lane.b32.xlu0 %v493, 126
      %v502 = vpop.permute.xlu0 %501
      %vm503 = vcmask 1031168
      %v504 = vsel %vm503, %v498, %v500
      %v505 = vsel %vm503, %v500, %v502
      %v507 = vsel %vm188, %v491, 0
      %v509 = vsel %vm192, %v504, 0
      %v511 = vsel %vm192, %v505, 0
      %v513 = vsel %vm192, %v502, 0
      %515 = vmatprep.subr.mxu0 0.0
      %516 = vmatpush1.msra.mxu0 0.0
      %517 = vmatprep.subr.mxu0 0.0
      %518 = vmatpush1.msra.mxu0 0.0
      %519 = vmatprep.subr.mxu0 0.0
      %520 = vmatpush1.msra.mxu0 0.0
      %521 = vmatprep.subr.mxu0 0.0
      %522 = vmatpush1.msra.mxu0 0.0
      %523 = vmatprep.subr.mxu0 0.0
      %524 = vmatpush1.msra.mxu0 0.0
      %525 = vmatprep.subr.mxu0 0.0
      %526 = vmatpush1.msra.mxu0 0.0
      %527 = vmatprep.subr.mxu0 0.0
      %528 = vmatpush1.msra.mxu0 0.0
      %529 = vmatprep.subr.mxu0 0.0
      %530 = vmatpush1.msra.mxu0 0.0
      %531 = vmatprep.subr.mxu0 0.0
      %532 = vmatpush1.msra.mxu0 0.0
      %533 = vmatprep.subr.mxu0 0.0
      %534 = vmatpush1.msra.mxu0 0.0
      %535 = vmatprep.subr.mxu0 0.0
      %536 = vmatpush1.msra.mxu0 0.0
      %537 = vmatprep.subr.mxu0 0.0
      %538 = vmatpush1.msra.mxu0 0.0
      %539 = vmatprep.subr.mxu0 0.0
      %540 = vmatpush1.msra.mxu0 0.0
      %541 = vmatprep.subr.mxu0 0.0
      %542 = vmatpush1.msra.mxu0 0.0
      %543 = vmatprep.subr.mxu0 0.0
      %544 = vmatpush1.msra.mxu0 0.0
      %545 = vmatprep.subr.mxu0 %v511
      %546 = vmatpush1.msra.mxu0 %v509
      %547 = vmatprep.subr.mxu0 0.0
      %548 = vmatpush2.msra.mxu0 0.0
      %549 = vmatprep.subr.mxu0 0.0
      %550 = vmatpush2.msra.mxu0 0.0
      %551 = vmatprep.subr.mxu0 0.0
      %552 = vmatpush2.msra.mxu0 0.0
      %553 = vmatprep.subr.mxu0 0.0
      %554 = vmatpush2.msra.mxu0 0.0
      %555 = vmatprep.subr.mxu0 0.0
      %556 = vmatpush2.msra.mxu0 0.0
      %557 = vmatprep.subr.mxu0 0.0
      %558 = vmatpush2.msra.mxu0 0.0
      %559 = vmatprep.subr.mxu0 0.0
      %560 = vmatpush2.msra.mxu0 0.0
      %561 = vmatprep.subr.mxu0 0.0
      %562 = vmatpush2.msra.mxu0 0.0
      %563 = vmatprep.subr.mxu0 0.0
      %564 = vmatpush2.msra.mxu0 0.0
      %565 = vmatprep.subr.mxu0 0.0
      %566 = vmatpush2.msra.mxu0 0.0
      %567 = vmatprep.subr.mxu0 0.0
      %568 = vmatpush2.msra.mxu0 0.0
      %569 = vmatprep.subr.mxu0 0.0
      %570 = vmatpush2.msra.mxu0 0.0
      %571 = vmatprep.subr.mxu0 0.0
      %572 = vmatpush2.msra.mxu0 0.0
      %573 = vmatprep.subr.mxu0 0.0
      %574 = vmatpush2.msra.mxu0 0.0
      %575 = vmatprep.subr.mxu0 0.0
      %576 = vmatpush2.msra.mxu0 0.0
      %577 = vmatprep.subr.mxu0 0.0
      %578 = vmatpush2.msra.mxu0 0.0
      %579 = vmatprep.mubr.f32.mxu0 0.0
      %580 = vmatmul.mubr.f32.gmra.mxu0 %v507
      %v581 = vpop.f32.mrf.mxu0
      %v582 = vadd.f32 0.0, %v581
      %v583 = vpop.f32.mrf.mxu0
      %v584 = vadd.f32 0.0, %v583
      %585 = vdwg.mxu0
      %586 = vmatprep.subr.mxu0 0.0
      %587 = vmatpush1.msra.mxu0 0.0
      %588 = vmatprep.subr.mxu0 0.0
      %589 = vmatpush1.msra.mxu0 0.0
      %590 = vmatprep.subr.mxu0 0.0
      %591 = vmatpush1.msra.mxu0 0.0
      %592 = vmatprep.subr.mxu0 0.0
      %593 = vmatpush1.msra.mxu0 0.0
      %594 = vmatprep.subr.mxu0 0.0
      %595 = vmatpush1.msra.mxu0 0.0
      %596 = vmatprep.subr.mxu0 0.0
      %597 = vmatpush1.msra.mxu0 0.0
      %598 = vmatprep.subr.mxu0 0.0
      %599 = vmatpush1.msra.mxu0 0.0
      %600 = vmatprep.subr.mxu0 0.0
      %601 = vmatpush1.msra.mxu0 0.0
      %602 = vmatprep.subr.mxu0 0.0
      %603 = vmatpush1.msra.mxu0 0.0
      %604 = vmatprep.subr.mxu0 0.0
      %605 = vmatpush1.msra.mxu0 0.0
      %606 = vmatprep.subr.mxu0 0.0
      %607 = vmatpush1.msra.mxu0 0.0
      %608 = vmatprep.subr.mxu0 0.0
      %609 = vmatpush1.msra.mxu0 0.0
      %610 = vmatprep.subr.mxu0 0.0
      %611 = vmatpush1.msra.mxu0 0.0
      %612 = vmatprep.subr.mxu0 0.0
      %613 = vmatpush1.msra.mxu0 0.0
      %614 = vmatprep.subr.mxu0 0.0
      %615 = vmatpush1.msra.mxu0 0.0
      %616 = vmatprep.subr.mxu0 0.0
      %617 = vmatpush1.msra.mxu0 %v513
      %618 = vmatprep.subr.mxu0 0.0
      %619 = vmatpush2.msra.mxu0 0.0
      %620 = vmatprep.subr.mxu0 0.0
      %621 = vmatpush2.msra.mxu0 0.0
      %622 = vmatprep.subr.mxu0 0.0
      %623 = vmatpush2.msra.mxu0 0.0
      %624 = vmatprep.subr.mxu0 0.0
      %625 = vmatpush2.msra.mxu0 0.0
      %626 = vmatprep.subr.mxu0 0.0
      %627 = vmatpush2.msra.mxu0 0.0
      %628 = vmatprep.subr.mxu0 0.0
      %629 = vmatpush2.msra.mxu0 0.0
      %630 = vmatprep.subr.mxu0 0.0
      %631 = vmatpush2.msra.mxu0 0.0
      %632 = vmatprep.subr.mxu0 0.0
      %633 = vmatpush2.msra.mxu0 0.0
      %634 = vmatprep.subr.mxu0 0.0
      %635 = vmatpush2.msra.mxu0 0.0
      %636 = vmatprep.subr.mxu0 0.0
      %637 = vmatpush2.msra.mxu0 0.0
      %638 = vmatprep.subr.mxu0 0.0
      %639 = vmatpush2.msra.mxu0 0.0
      %640 = vmatprep.subr.mxu0 0.0
      %641 = vmatpush2.msra.mxu0 0.0
      %642 = vmatprep.subr.mxu0 0.0
      %643 = vmatpush2.msra.mxu0 0.0
      %644 = vmatprep.subr.mxu0 0.0
      %645 = vmatpush2.msra.mxu0 0.0
      %646 = vmatprep.subr.mxu0 0.0
      %647 = vmatpush2.msra.mxu0 0.0
      %648 = vmatprep.subr.mxu0 0.0
      %649 = vmatpush2.msra.mxu0 0.0
      %650 = vmatprep.mubr.f32.mxu0 0.0
      %651 = vmatmul.mubr.f32.gmra.mxu0 %v507
      %v652 = vpop.f32.mrf.mxu0
      %v653 = vadd.f32 0.0, %v652
      %v654 = vpop.f32.mrf.mxu0
      %655 = vdwg.mxu0
      %v656 = vadd.f32 %v416, %v582
      %v657 = vadd.f32 %v418, %v584
      %v658 = vadd.f32 %v487, %v653
      %s659 = scalar_lea.vmem %s1, 12
      %v660 = vld [vmem:[%s659] sm:$0xf]
      %v661 = vld [vmem:[%s165] sm:$0xff]
      %v662 = vld [vmem:[%s165 + $0x8] sm:$0xf]
      %v665 = vcombine.high %v661, %v661
      %666 = vrot.lane.b32.xlu0 %v661, 108
      %v667 = vpop.permute.xlu0 %666
      %668 = vrot.lane.b32.xlu0 %v665, 108
      %v669 = vpop.permute.xlu0 %668
      %670 = vrot.lane.b32.xlu0 %v662, 108
      %v671 = vpop.permute.xlu0 %670
      %vm672 = vcmask 883712
      %v673 = vsel %vm672, %v667, %v669
      %v674 = vsel %vm672, %v669, %v671
      %v676 = vsel %vm188, %v660, 0
      %v678 = vsel %vm192, %v673, 0
      %v680 = vsel %vm192, %v674, 0
      %v682 = vsel %vm192, %v671, 0
      %684 = vmatprep.subr.mxu0 0.0
      %685 = vmatpush1.msra.mxu0 0.0
      %686 = vmatprep.subr.mxu0 0.0
      %687 = vmatpush1.msra.mxu0 0.0
      %688 = vmatprep.subr.mxu0 0.0
      %689 = vmatpush1.msra.mxu0 0.0
      %690 = vmatprep.subr.mxu0 0.0
      %691 = vmatpush1.msra.mxu0 0.0
      %692 = vmatprep.subr.mxu0 0.0
      %693 = vmatpush1.msra.mxu0 0.0
      %694 = vmatprep.subr.mxu0 0.0
      %695 = vmatpush1.msra.mxu0 0.0
      %696 = vmatprep.subr.mxu0 0.0
      %697 = vmatpush1.msra.mxu0 0.0
      %698 = vmatprep.subr.mxu0 0.0
      %699 = vmatpush1.msra.mxu0 0.0
      %700 = vmatprep.subr.mxu0 0.0
      %701 = vmatpush1.msra.mxu0 0.0
      %702 = vmatprep.subr.mxu0 0.0
      %703 = vmatpush1.msra.mxu0 0.0
      %704 = vmatprep.subr.mxu0 0.0
      %705 = vmatpush1.msra.mxu0 0.0
      %706 = vmatprep.subr.mxu0 0.0
      %707 = vmatpush1.msra.mxu0 0.0
      %708 = vmatprep.subr.mxu0 0.0
      %709 = vmatpush1.msra.mxu0 0.0
      %710 = vmatprep.subr.mxu0 0.0
      %711 = vmatpush1.msra.mxu0 0.0
      %712 = vmatprep.subr.mxu0 0.0
      %713 = vmatpush1.msra.mxu0 0.0
      %714 = vmatprep.subr.mxu0 %v680
      %715 = vmatpush1.msra.mxu0 %v678
      %716 = vmatprep.subr.mxu0 0.0
      %717 = vmatpush2.msra.mxu0 0.0
      %718 = vmatprep.subr.mxu0 0.0
      %719 = vmatpush2.msra.mxu0 0.0
      %720 = vmatprep.subr.mxu0 0.0
      %721 = vmatpush2.msra.mxu0 0.0
      %722 = vmatprep.subr.mxu0 0.0
      %723 = vmatpush2.msra.mxu0 0.0
      %724 = vmatprep.subr.mxu0 0.0
      %725 = vmatpush2.msra.mxu0 0.0
      %726 = vmatprep.subr.mxu0 0.0
      %727 = vmatpush2.msra.mxu0 0.0
      %728 = vmatprep.subr.mxu0 0.0
      %729 = vmatpush2.msra.mxu0 0.0
      %730 = vmatprep.subr.mxu0 0.0
      %731 = vmatpush2.msra.mxu0 0.0
      %732 = vmatprep.subr.mxu0 0.0
      %733 = vmatpush2.msra.mxu0 0.0
      %734 = vmatprep.subr.mxu0 0.0
      %735 = vmatpush2.msra.mxu0 0.0
      %736 = vmatprep.subr.mxu0 0.0
      %737 = vmatpush2.msra.mxu0 0.0
      %738 = vmatprep.subr.mxu0 0.0
      %739 = vmatpush2.msra.mxu0 0.0
      %740 = vmatprep.subr.mxu0 0.0
      %741 = vmatpush2.msra.mxu0 0.0
      %742 = vmatprep.subr.mxu0 0.0
      %743 = vmatpush2.msra.mxu0 0.0
      %744 = vmatprep.subr.mxu0 0.0
      %745 = vmatpush2.msra.mxu0 0.0
      %746 = vmatprep.subr.mxu0 0.0
      %747 = vmatpush2.msra.mxu0 0.0
      %748 = vmatprep.mubr.f32.mxu0 0.0
      %749 = vmatmul.mubr.f32.gmra.mxu0 %v676
      %v750 = vpop.f32.mrf.mxu0
      %v751 = vadd.f32 0.0, %v750
      %v752 = vpop.f32.mrf.mxu0
      %v753 = vadd.f32 0.0, %v752
      %754 = vdwg.mxu0
      %755 = vmatprep.subr.mxu0 0.0
      %756 = vmatpush1.msra.mxu0 0.0
      %757 = vmatprep.subr.mxu0 0.0
      %758 = vmatpush1.msra.mxu0 0.0
      %759 = vmatprep.subr.mxu0 0.0
      %760 = vmatpush1.msra.mxu0 0.0
      %761 = vmatprep.subr.mxu0 0.0
      %762 = vmatpush1.msra.mxu0 0.0
      %763 = vmatprep.subr.mxu0 0.0
      %764 = vmatpush1.msra.mxu0 0.0
      %765 = vmatprep.subr.mxu0 0.0
      %766 = vmatpush1.msra.mxu0 0.0
      %767 = vmatprep.subr.mxu0 0.0
      %768 = vmatpush1.msra.mxu0 0.0
      %769 = vmatprep.subr.mxu0 0.0
      %770 = vmatpush1.msra.mxu0 0.0
      %771 = vmatprep.subr.mxu0 0.0
      %772 = vmatpush1.msra.mxu0 0.0
      %773 = vmatprep.subr.mxu0 0.0
      %774 = vmatpush1.msra.mxu0 0.0
      %775 = vmatprep.subr.mxu0 0.0
      %776 = vmatpush1.msra.mxu0 0.0
      %777 = vmatprep.subr.mxu0 0.0
      %778 = vmatpush1.msra.mxu0 0.0
      %779 = vmatprep.subr.mxu0 0.0
      %780 = vmatpush1.msra.mxu0 0.0
      %781 = vmatprep.subr.mxu0 0.0
      %782 = vmatpush1.msra.mxu0 0.0
      %783 = vmatprep.subr.mxu0 0.0
      %784 = vmatpush1.msra.mxu0 0.0
      %785 = vmatprep.subr.mxu0 0.0
      %786 = vmatpush1.msra.mxu0 %v682
      %787 = vmatprep.subr.mxu0 0.0
      %788 = vmatpush2.msra.mxu0 0.0
      %789 = vmatprep.subr.mxu0 0.0
      %790 = vmatpush2.msra.mxu0 0.0
      %791 = vmatprep.subr.mxu0 0.0
      %792 = vmatpush2.msra.mxu0 0.0
      %793 = vmatprep.subr.mxu0 0.0
      %794 = vmatpush2.msra.mxu0 0.0
      %795 = vmatprep.subr.mxu0 0.0
      %796 = vmatpush2.msra.mxu0 0.0
      %797 = vmatprep.subr.mxu0 0.0
      %798 = vmatpush2.msra.mxu0 0.0
      %799 = vmatprep.subr.mxu0 0.0
      %800 = vmatpush2.msra.mxu0 0.0
      %801 = vmatprep.subr.mxu0 0.0
      %802 = vmatpush2.msra.mxu0 0.0
      %803 = vmatprep.subr.mxu0 0.0
      %804 = vmatpush2.msra.mxu0 0.0
      %805 = vmatprep.subr.mxu0 0.0
      %806 = vmatpush2.msra.mxu0 0.0
      %807 = vmatprep.subr.mxu0 0.0
      %808 = vmatpush2.msra.mxu0 0.0
      %809 = vmatprep.subr.mxu0 0.0
      %810 = vmatpush2.msra.mxu0 0.0
      %811 = vmatprep.subr.mxu0 0.0
      %812 = vmatpush2.msra.mxu0 0.0
      %813 = vmatprep.subr.mxu0 0.0
      %814 = vmatpush2.msra.mxu0 0.0
      %815 = vmatprep.subr.mxu0 0.0
      %816 = vmatpush2.msra.mxu0 0.0
      %817 = vmatprep.subr.mxu0 0.0
      %818 = vmatpush2.msra.mxu0 0.0
      %819 = vmatprep.mubr.f32.mxu0 0.0
      %820 = vmatmul.mubr.f32.gmra.mxu0 %v676
      %v821 = vpop.f32.mrf.mxu0
      %v822 = vadd.f32 0.0, %v821
      %v823 = vpop.f32.mrf.mxu0
      %824 = vdwg.mxu0
      %v825 = vadd.f32 %v656, %v751
      %v826 = vadd.f32 %v657, %v753
      %v827 = vadd.f32 %v658, %v822
      %s828 = scalar_lea.vmem %s1, 16
      %v829 = vld [vmem:[%s828] sm:$0xf]
      %v830 = vld [vmem:[%s165] sm:$0xff]
      %v831 = vld [vmem:[%s165 + $0x8] sm:$0xf]
      %v834 = vcombine.high %v830, %v830
      %835 = vrot.lane.b32.xlu0 %v830, 107
      %v836 = vpop.permute.xlu0 %835
      %837 = vrot.lane.b32.xlu0 %v834, 107
      %v838 = vpop.permute.xlu0 %837
      %839 = vrot.lane.b32.xlu0 %v831, 107
      %v840 = vpop.permute.xlu0 %839
      %vm841 = vcmask 875520
      %v842 = vsel %vm841, %v836, %v838
      %v843 = vsel %vm841, %v838, %v840
      %v845 = vsel %vm188, %v829, 0
      %v847 = vsel %vm192, %v842, 0
      %v849 = vsel %vm192, %v843, 0
      %v851 = vsel %vm192, %v840, 0
      %853 = vmatprep.subr.mxu0 0.0
      %854 = vmatpush1.msra.mxu0 0.0
      %855 = vmatprep.subr.mxu0 0.0
      %856 = vmatpush1.msra.mxu0 0.0
      %857 = vmatprep.subr.mxu0 0.0
      %858 = vmatpush1.msra.mxu0 0.0
      %859 = vmatprep.subr.mxu0 0.0
      %860 = vmatpush1.msra.mxu0 0.0
      %861 = vmatprep.subr.mxu0 0.0
      %862 = vmatpush1.msra.mxu0 0.0
      %863 = vmatprep.subr.mxu0 0.0
      %864 = vmatpush1.msra.mxu0 0.0
      %865 = vmatprep.subr.mxu0 0.0
      %866 = vmatpush1.msra.mxu0 0.0
      %867 = vmatprep.subr.mxu0 0.0
      %868 = vmatpush1.msra.mxu0 0.0
      %869 = vmatprep.subr.mxu0 0.0
      %870 = vmatpush1.msra.mxu0 0.0
      %871 = vmatprep.subr.mxu0 0.0
      %872 = vmatpush1.msra.mxu0 0.0
      %873 = vmatprep.subr.mxu0 0.0
      %874 = vmatpush1.msra.mxu0 0.0
      %875 = vmatprep.subr.mxu0 0.0
      %876 = vmatpush1.msra.mxu0 0.0
      %877 = vmatprep.subr.mxu0 0.0
      %878 = vmatpush1.msra.mxu0 0.0
      %879 = vmatprep.subr.mxu0 0.0
      %880 = vmatpush1.msra.mxu0 0.0
      %881 = vmatprep.subr.mxu0 0.0
      %882 = vmatpush1.msra.mxu0 0.0
      %883 = vmatprep.subr.mxu0 %v849
      %884 = vmatpush1.msra.mxu0 %v847
      %885 = vmatprep.subr.mxu0 0.0
      %886 = vmatpush2.msra.mxu0 0.0
      %887 = vmatprep.subr.mxu0 0.0
      %888 = vmatpush2.msra.mxu0 0.0
      %889 = vmatprep.subr.mxu0 0.0
      %890 = vmatpush2.msra.mxu0 0.0
      %891 = vmatprep.subr.mxu0 0.0
      %892 = vmatpush2.msra.mxu0 0.0
      %893 = vmatprep.subr.mxu0 0.0
      %894 = vmatpush2.msra.mxu0 0.0
      %895 = vmatprep.subr.mxu0 0.0
      %896 = vmatpush2.msra.mxu0 0.0
      %897 = vmatprep.subr.mxu0 0.0
      %898 = vmatpush2.msra.mxu0 0.0
      %899 = vmatprep.subr.mxu0 0.0
      %900 = vmatpush2.msra.mxu0 0.0
      %901 = vmatprep.subr.mxu0 0.0
      %902 = vmatpush2.msra.mxu0 0.0
      %903 = vmatprep.subr.mxu0 0.0
      %904 = vmatpush2.msra.mxu0 0.0
      %905 = vmatprep.subr.mxu0 0.0
      %906 = vmatpush2.msra.mxu0 0.0
      %907 = vmatprep.subr.mxu0 0.0
      %908 = vmatpush2.msra.mxu0 0.0
      %909 = vmatprep.subr.mxu0 0.0
      %910 = vmatpush2.msra.mxu0 0.0
      %911 = vmatprep.subr.mxu0 0.0
      %912 = vmatpush2.msra.mxu0 0.0
      %913 = vmatprep.subr.mxu0 0.0
      %914 = vmatpush2.msra.mxu0 0.0
      %915 = vmatprep.subr.mxu0 0.0
      %916 = vmatpush2.msra.mxu0 0.0
      %917 = vmatprep.mubr.f32.mxu0 0.0
      %918 = vmatmul.mubr.f32.gmra.mxu0 %v845
      %v919 = vpop.f32.mrf.mxu0
      %v920 = vadd.f32 0.0, %v919
      %v921 = vpop.f32.mrf.mxu0
      %v922 = vadd.f32 0.0, %v921
      %923 = vdwg.mxu0
      %924 = vmatprep.subr.mxu0 0.0
      %925 = vmatpush1.msra.mxu0 0.0
      %926 = vmatprep.subr.mxu0 0.0
      %927 = vmatpush1.msra.mxu0 0.0
      %928 = vmatprep.subr.mxu0 0.0
      %929 = vmatpush1.msra.mxu0 0.0
      %930 = vmatprep.subr.mxu0 0.0
      %931 = vmatpush1.msra.mxu0 0.0
      %932 = vmatprep.subr.mxu0 0.0
      %933 = vmatpush1.msra.mxu0 0.0
      %934 = vmatprep.subr.mxu0 0.0
      %935 = vmatpush1.msra.mxu0 0.0
      %936 = vmatprep.subr.mxu0 0.0
      %937 = vmatpush1.msra.mxu0 0.0
      %938 = vmatprep.subr.mxu0 0.0
      %939 = vmatpush1.msra.mxu0 0.0
      %940 = vmatprep.subr.mxu0 0.0
      %941 = vmatpush1.msra.mxu0 0.0
      %942 = vmatprep.subr.mxu0 0.0
      %943 = vmatpush1.msra.mxu0 0.0
      %944 = vmatprep.subr.mxu0 0.0
      %945 = vmatpush1.msra.mxu0 0.0
      %946 = vmatprep.subr.mxu0 0.0
      %947 = vmatpush1.msra.mxu0 0.0
      %948 = vmatprep.subr.mxu0 0.0
      %949 = vmatpush1.msra.mxu0 0.0
      %950 = vmatprep.subr.mxu0 0.0
      %951 = vmatpush1.msra.mxu0 0.0
      %952 = vmatprep.subr.mxu0 0.0
      %953 = vmatpush1.msra.mxu0 0.0
      %954 = vmatprep.subr.mxu0 0.0
      %955 = vmatpush1.msra.mxu0 %v851
      %956 = vmatprep.subr.mxu0 0.0
      %957 = vmatpush2.msra.mxu0 0.0
      %958 = vmatprep.subr.mxu0 0.0
      %959 = vmatpush2.msra.mxu0 0.0
      %960 = vmatprep.subr.mxu0 0.0
      %961 = vmatpush2.msra.mxu0 0.0
      %962 = vmatprep.subr.mxu0 0.0
      %963 = vmatpush2.msra.mxu0 0.0
      %964 = vmatprep.subr.mxu0 0.0
      %965 = vmatpush2.msra.mxu0 0.0
      %966 = vmatprep.subr.mxu0 0.0
      %967 = vmatpush2.msra.mxu0 0.0
      %968 = vmatprep.subr.mxu0 0.0
      %969 = vmatpush2.msra.mxu0 0.0
      %970 = vmatprep.subr.mxu0 0.0
      %971 = vmatpush2.msra.mxu0 0.0
      %972 = vmatprep.subr.mxu0 0.0
      %973 = vmatpush2.msra.mxu0 0.0
      %974 = vmatprep.subr.mxu0 0.0
      %975 = vmatpush2.msra.mxu0 0.0
      %976 = vmatprep.subr.mxu0 0.0
      %977 = vmatpush2.msra.mxu0 0.0
      %978 = vmatprep.subr.mxu0 0.0
      %979 = vmatpush2.msra.mxu0 0.0
      %980 = vmatprep.subr.mxu0 0.0
      %981 = vmatpush2.msra.mxu0 0.0
      %982 = vmatprep.subr.mxu0 0.0
      %983 = vmatpush2.msra.mxu0 0.0
      %984 = vmatprep.subr.mxu0 0.0
      %985 = vmatpush2.msra.mxu0 0.0
      %986 = vmatprep.subr.mxu0 0.0
      %987 = vmatpush2.msra.mxu0 0.0
      %988 = vmatprep.mubr.f32.mxu0 0.0
      %989 = vmatmul.mubr.f32.gmra.mxu0 %v845
      %v990 = vpop.f32.mrf.mxu0
      %v991 = vadd.f32 0.0, %v990
      %v992 = vpop.f32.mrf.mxu0
      %993 = vdwg.mxu0
      %v994 = vadd.f32 %v825, %v920
      %v995 = vadd.f32 %v826, %v922
      %v996 = vadd.f32 %v827, %v991
      %s997 = scalar_lea.vmem %s1, 20
      %v998 = vld [vmem:[%s997] sm:$0xf]
      %v999 = vld [vmem:[%s165] sm:$0xff]
      %v1000 = vld [vmem:[%s165 + $0x8] sm:$0xf]
      %v1003 = vcombine.high %v999, %v999
      %1004 = vrot.lane.b32.xlu0 %v999, 106
      %v1005 = vpop.permute.xlu0 %1004
      %1006 = vrot.lane.b32.xlu0 %v1003, 106
      %v1007 = vpop.permute.xlu0 %1006
      %1008 = vrot.lane.b32.xlu0 %v1000, 106
      %v1009 = vpop.permute.xlu0 %1008
      %vm1010 = vcmask 867328
      %v1011 = vsel %vm1010, %v1005, %v1007
      %v1012 = vsel %vm1010, %v1007, %v1009
      %v1014 = vsel %vm188, %v998, 0
      %v1016 = vsel %vm192, %v1011, 0
      %v1018 = vsel %vm192, %v1012, 0
      %v1020 = vsel %vm192, %v1009, 0
      %1022 = vmatprep.subr.mxu0 0.0
      %1023 = vmatpush1.msra.mxu0 0.0
      %1024 = vmatprep.subr.mxu0 0.0
      %1025 = vmatpush1.msra.mxu0 0.0
      %1026 = vmatprep.subr.mxu0 0.0
      %1027 = vmatpush1.msra.mxu0 0.0
      %1028 = vmatprep.subr.mxu0 0.0
      %1029 = vmatpush1.msra.mxu0 0.0
      %1030 = vmatprep.subr.mxu0 0.0
      %1031 = vmatpush1.msra.mxu0 0.0
      %1032 = vmatprep.subr.mxu0 0.0
      %1033 = vmatpush1.msra.mxu0 0.0
      %1034 = vmatprep.subr.mxu0 0.0
      %1035 = vmatpush1.msra.mxu0 0.0
      %1036 = vmatprep.subr.mxu0 0.0
      %1037 = vmatpush1.msra.mxu0 0.0
      %1038 = vmatprep.subr.mxu0 0.0
      %1039 = vmatpush1.msra.mxu0 0.0
      %1040 = vmatprep.subr.mxu0 0.0
      %1041 = vmatpush1.msra.mxu0 0.0
      %1042 = vmatprep.subr.mxu0 0.0
      %1043 = vmatpush1.msra.mxu0 0.0
      %1044 = vmatprep.subr.mxu0 0.0
      %1045 = vmatpush1.msra.mxu0 0.0
      %1046 = vmatprep.subr.mxu0 0.0
      %1047 = vmatpush1.msra.mxu0 0.0
      %1048 = vmatprep.subr.mxu0 0.0
      %1049 = vmatpush1.msra.mxu0 0.0
      %1050 = vmatprep.subr.mxu0 0.0
      %1051 = vmatpush1.msra.mxu0 0.0
      %1052 = vmatprep.subr.mxu0 %v1018
      %1053 = vmatpush1.msra.mxu0 %v1016
      %1054 = vmatprep.subr.mxu0 0.0
      %1055 = vmatpush2.msra.mxu0 0.0
      %1056 = vmatprep.subr.mxu0 0.0
      %1057 = vmatpush2.msra.mxu0 0.0
      %1058 = vmatprep.subr.mxu0 0.0
      %1059 = vmatpush2.msra.mxu0 0.0
      %1060 = vmatprep.subr.mxu0 0.0
      %1061 = vmatpush2.msra.mxu0 0.0
      %1062 = vmatprep.subr.mxu0 0.0
      %1063 = vmatpush2.msra.mxu0 0.0
      %1064 = vmatprep.subr.mxu0 0.0
      %1065 = vmatpush2.msra.mxu0 0.0
      %1066 = vmatprep.subr.mxu0 0.0
      %1067 = vmatpush2.msra.mxu0 0.0
      %1068 = vmatprep.subr.mxu0 0.0
      %1069 = vmatpush2.msra.mxu0 0.0
      %1070 = vmatprep.subr.mxu0 0.0
      %1071 = vmatpush2.msra.mxu0 0.0
      %1072 = vmatprep.subr.mxu0 0.0
      %1073 = vmatpush2.msra.mxu0 0.0
      %1074 = vmatprep.subr.mxu0 0.0
      %1075 = vmatpush2.msra.mxu0 0.0
      %1076 = vmatprep.subr.mxu0 0.0
      %1077 = vmatpush2.msra.mxu0 0.0
      %1078 = vmatprep.subr.mxu0 0.0
      %1079 = vmatpush2.msra.mxu0 0.0
      %1080 = vmatprep.subr.mxu0 0.0
      %1081 = vmatpush2.msra.mxu0 0.0
      %1082 = vmatprep.subr.mxu0 0.0
      %1083 = vmatpush2.msra.mxu0 0.0
      %1084 = vmatprep.subr.mxu0 0.0
      %1085 = vmatpush2.msra.mxu0 0.0
      %1086 = vmatprep.mubr.f32.mxu0 0.0
      %1087 = vmatmul.mubr.f32.gmra.mxu0 %v1014
      %v1088 = vpop.f32.mrf.mxu0
      %v1089 = vadd.f32 0.0, %v1088
      %v1090 = vpop.f32.mrf.mxu0
      %v1091 = vadd.f32 0.0, %v1090
      %1092 = vdwg.mxu0
      %1093 = vmatprep.subr.mxu0 0.0
      %1094 = vmatpush1.msra.mxu0 0.0
      %1095 = vmatprep.subr.mxu0 0.0
      %1096 = vmatpush1.msra.mxu0 0.0
      %1097 = vmatprep.subr.mxu0 0.0
      %1098 = vmatpush1.msra.mxu0 0.0
      %1099 = vmatprep.subr.mxu0 0.0
      %1100 = vmatpush1.msra.mxu0 0.0
      %1101 = vmatprep.subr.mxu0 0.0
      %1102 = vmatpush1.msra.mxu0 0.0
      %1103 = vmatprep.subr.mxu0 0.0
      %1104 = vmatpush1.msra.mxu0 0.0
      %1105 = vmatprep.subr.mxu0 0.0
      %1106 = vmatpush1.msra.mxu0 0.0
      %1107 = vmatprep.subr.mxu0 0.0
      %1108 = vmatpush1.msra.mxu0 0.0
      %1109 = vmatprep.subr.mxu0 0.0
      %1110 = vmatpush1.msra.mxu0 0.0
      %1111 = vmatprep.subr.mxu0 0.0
      %1112 = vmatpush1.msra.mxu0 0.0
      %1113 = vmatprep.subr.mxu0 0.0
      %1114 = vmatpush1.msra.mxu0 0.0
      %1115 = vmatprep.subr.mxu0 0.0
      %1116 = vmatpush1.msra.mxu0 0.0
      %1117 = vmatprep.subr.mxu0 0.0
      %1118 = vmatpush1.msra.mxu0 0.0
      %1119 = vmatprep.subr.mxu0 0.0
      %1120 = vmatpush1.msra.mxu0 0.0
      %1121 = vmatprep.subr.mxu0 0.0
      %1122 = vmatpush1.msra.mxu0 0.0
      %1123 = vmatprep.subr.mxu0 0.0
      %1124 = vmatpush1.msra.mxu0 %v1020
      %1125 = vmatprep.subr.mxu0 0.0
      %1126 = vmatpush2.msra.mxu0 0.0
      %1127 = vmatprep.subr.mxu0 0.0
      %1128 = vmatpush2.msra.mxu0 0.0
      %1129 = vmatprep.subr.mxu0 0.0
      %1130 = vmatpush2.msra.mxu0 0.0
      %1131 = vmatprep.subr.mxu0 0.0
      %1132 = vmatpush2.msra.mxu0 0.0
      %1133 = vmatprep.subr.mxu0 0.0
      %1134 = vmatpush2.msra.mxu0 0.0
      %1135 = vmatprep.subr.mxu0 0.0
      %1136 = vmatpush2.msra.mxu0 0.0
      %1137 = vmatprep.subr.mxu0 0.0
      %1138 = vmatpush2.msra.mxu0 0.0
      %1139 = vmatprep.subr.mxu0 0.0
      %1140 = vmatpush2.msra.mxu0 0.0
      %1141 = vmatprep.subr.mxu0 0.0
      %1142 = vmatpush2.msra.mxu0 0.0
      %1143 = vmatprep.subr.mxu0 0.0
      %1144 = vmatpush2.msra.mxu0 0.0
      %1145 = vmatprep.subr.mxu0 0.0
      %1146 = vmatpush2.msra.mxu0 0.0
      %1147 = vmatprep.subr.mxu0 0.0
      %1148 = vmatpush2.msra.mxu0 0.0
      %1149 = vmatprep.subr.mxu0 0.0
      %1150 = vmatpush2.msra.mxu0 0.0
      %1151 = vmatprep.subr.mxu0 0.0
      %1152 = vmatpush2.msra.mxu0 0.0
      %1153 = vmatprep.subr.mxu0 0.0
      %1154 = vmatpush2.msra.mxu0 0.0
      %1155 = vmatprep.subr.mxu0 0.0
      %1156 = vmatpush2.msra.mxu0 0.0
      %1157 = vmatprep.mubr.f32.mxu0 0.0
      %1158 = vmatmul.mubr.f32.gmra.mxu0 %v1014
      %v1159 = vpop.f32.mrf.mxu0
      %v1160 = vadd.f32 0.0, %v1159
      %v1161 = vpop.f32.mrf.mxu0
      %1162 = vdwg.mxu0
      %v1163 = vadd.f32 %v994, %v1089
      %v1164 = vadd.f32 %v995, %v1091
      %v1165 = vadd.f32 %v996, %v1160
      %s1166 = scalar_lea.vmem %s1, 24
      %v1167 = vld [vmem:[%s1166] sm:$0xf]
      %v1168 = vld [vmem:[%s165] sm:$0xff]
      %v1169 = vld [vmem:[%s165 + $0x8] sm:$0xf]
      %v1172 = vcombine.high %v1168, %v1168
      %1173 = vrot.lane.b32.xlu0 %v1168, 88
      %v1174 = vpop.permute.xlu0 %1173
      %1175 = vrot.lane.b32.xlu0 %v1172, 88
      %v1176 = vpop.permute.xlu0 %1175
      %1177 = vrot.lane.b32.xlu0 %v1169, 88
      %v1178 = vpop.permute.xlu0 %1177
      %vm1179 = vcmask 719872
      %v1180 = vsel %vm1179, %v1174, %v1176
      %v1181 = vsel %vm1179, %v1176, %v1178
      %v1183 = vsel %vm188, %v1167, 0
      %v1185 = vsel %vm192, %v1180, 0
      %v1187 = vsel %vm192, %v1181, 0
      %v1189 = vsel %vm192, %v1178, 0
      %1191 = vmatprep.subr.mxu0 0.0
      %1192 = vmatpush1.msra.mxu0 0.0
      %1193 = vmatprep.subr.mxu0 0.0
      %1194 = vmatpush1.msra.mxu0 0.0
      %1195 = vmatprep.subr.mxu0 0.0
      %1196 = vmatpush1.msra.mxu0 0.0
      %1197 = vmatprep.subr.mxu0 0.0
      %1198 = vmatpush1.msra.mxu0 0.0
      %1199 = vmatprep.subr.mxu0 0.0
      %1200 = vmatpush1.msra.mxu0 0.0
      %1201 = vmatprep.subr.mxu0 0.0
      %1202 = vmatpush1.msra.mxu0 0.0
      %1203 = vmatprep.subr.mxu0 0.0
      %1204 = vmatpush1.msra.mxu0 0.0
      %1205 = vmatprep.subr.mxu0 0.0
      %1206 = vmatpush1.msra.mxu0 0.0
      %1207 = vmatprep.subr.mxu0 0.0
      %1208 = vmatpush1.msra.mxu0 0.0
      %1209 = vmatprep.subr.mxu0 0.0
      %1210 = vmatpush1.msra.mxu0 0.0
      %1211 = vmatprep.subr.mxu0 0.0
      %1212 = vmatpush1.msra.mxu0 0.0
      %1213 = vmatprep.subr.mxu0 0.0
      %1214 = vmatpush1.msra.mxu0 0.0
      %1215 = vmatprep.subr.mxu0 0.0
      %1216 = vmatpush1.msra.mxu0 0.0
      %1217 = vmatprep.subr.mxu0 0.0
      %1218 = vmatpush1.msra.mxu0 0.0
      %1219 = vmatprep.subr.mxu0 0.0
      %1220 = vmatpush1.msra.mxu0 0.0
      %1221 = vmatprep.subr.mxu0 %v1187
      %1222 = vmatpush1.msra.mxu0 %v1185
      %1223 = vmatprep.subr.mxu0 0.0
      %1224 = vmatpush2.msra.mxu0 0.0
      %1225 = vmatprep.subr.mxu0 0.0
      %1226 = vmatpush2.msra.mxu0 0.0
      %1227 = vmatprep.subr.mxu0 0.0
      %1228 = vmatpush2.msra.mxu0 0.0
      %1229 = vmatprep.subr.mxu0 0.0
      %1230 = vmatpush2.msra.mxu0 0.0
      %1231 = vmatprep.subr.mxu0 0.0
      %1232 = vmatpush2.msra.mxu0 0.0
      %1233 = vmatprep.subr.mxu0 0.0
      %1234 = vmatpush2.msra.mxu0 0.0
      %1235 = vmatprep.subr.mxu0 0.0
      %1236 = vmatpush2.msra.mxu0 0.0
      %1237 = vmatprep.subr.mxu0 0.0
      %1238 = vmatpush2.msra.mxu0 0.0
      %1239 = vmatprep.subr.mxu0 0.0
      %1240 = vmatpush2.msra.mxu0 0.0
      %1241 = vmatprep.subr.mxu0 0.0
      %1242 = vmatpush2.msra.mxu0 0.0
      %1243 = vmatprep.subr.mxu0 0.0
      %1244 = vmatpush2.msra.mxu0 0.0
      %1245 = vmatprep.subr.mxu0 0.0
      %1246 = vmatpush2.msra.mxu0 0.0
      %1247 = vmatprep.subr.mxu0 0.0
      %1248 = vmatpush2.msra.mxu0 0.0
      %1249 = vmatprep.subr.mxu0 0.0
      %1250 = vmatpush2.msra.mxu0 0.0
      %1251 = vmatprep.subr.mxu0 0.0
      %1252 = vmatpush2.msra.mxu0 0.0
      %1253 = vmatprep.subr.mxu0 0.0
      %1254 = vmatpush2.msra.mxu0 0.0
      %1255 = vmatprep.mubr.f32.mxu0 0.0
      %1256 = vmatmul.mubr.f32.gmra.mxu0 %v1183
      %v1257 = vpop.f32.mrf.mxu0
      %v1258 = vadd.f32 0.0, %v1257
      %v1259 = vpop.f32.mrf.mxu0
      %v1260 = vadd.f32 0.0, %v1259
      %1261 = vdwg.mxu0
      %1262 = vmatprep.subr.mxu0 0.0
      %1263 = vmatpush1.msra.mxu0 0.0
      %1264 = vmatprep.subr.mxu0 0.0
      %1265 = vmatpush1.msra.mxu0 0.0
      %1266 = vmatprep.subr.mxu0 0.0
      %1267 = vmatpush1.msra.mxu0 0.0
      %1268 = vmatprep.subr.mxu0 0.0
      %1269 = vmatpush1.msra.mxu0 0.0
      %1270 = vmatprep.subr.mxu0 0.0
      %1271 = vmatpush1.msra.mxu0 0.0
      %1272 = vmatprep.subr.mxu0 0.0
      %1273 = vmatpush1.msra.mxu0 0.0
      %1274 = vmatprep.subr.mxu0 0.0
      %1275 = vmatpush1.msra.mxu0 0.0
      %1276 = vmatprep.subr.mxu0 0.0
      %1277 = vmatpush1.msra.mxu0 0.0
      %1278 = vmatprep.subr.mxu0 0.0
      %1279 = vmatpush1.msra.mxu0 0.0
      %1280 = vmatprep.subr.mxu0 0.0
      %1281 = vmatpush1.msra.mxu0 0.0
      %1282 = vmatprep.subr.mxu0 0.0
      %1283 = vmatpush1.msra.mxu0 0.0
      %1284 = vmatprep.subr.mxu0 0.0
      %1285 = vmatpush1.msra.mxu0 0.0
      %1286 = vmatprep.subr.mxu0 0.0
      %1287 = vmatpush1.msra.mxu0 0.0
      %1288 = vmatprep.subr.mxu0 0.0
      %1289 = vmatpush1.msra.mxu0 0.0
      %1290 = vmatprep.subr.mxu0 0.0
      %1291 = vmatpush1.msra.mxu0 0.0
      %1292 = vmatprep.subr.mxu0 0.0
      %1293 = vmatpush1.msra.mxu0 %v1189
      %1294 = vmatprep.subr.mxu0 0.0
      %1295 = vmatpush2.msra.mxu0 0.0
      %1296 = vmatprep.subr.mxu0 0.0
      %1297 = vmatpush2.msra.mxu0 0.0
      %1298 = vmatprep.subr.mxu0 0.0
      %1299 = vmatpush2.msra.mxu0 0.0
      %1300 = vmatprep.subr.mxu0 0.0
      %1301 = vmatpush2.msra.mxu0 0.0
      %1302 = vmatprep.subr.mxu0 0.0
      %1303 = vmatpush2.msra.mxu0 0.0
      %1304 = vmatprep.subr.mxu0 0.0
      %1305 = vmatpush2.msra.mxu0 0.0
      %1306 = vmatprep.subr.mxu0 0.0
      %1307 = vmatpush2.msra.mxu0 0.0
      %1308 = vmatprep.subr.mxu0 0.0
      %1309 = vmatpush2.msra.mxu0 0.0
      %1310 = vmatprep.subr.mxu0 0.0
      %1311 = vmatpush2.msra.mxu0 0.0
      %1312 = vmatprep.subr.mxu0 0.0
      %1313 = vmatpush2.msra.mxu0 0.0
      %1314 = vmatprep.subr.mxu0 0.0
      %1315 = vmatpush2.msra.mxu0 0.0
      %1316 = vmatprep.subr.mxu0 0.0
      %1317 = vmatpush2.msra.mxu0 0.0
      %1318 = vmatprep.subr.mxu0 0.0
      %1319 = vmatpush2.msra.mxu0 0.0
      %1320 = vmatprep.subr.mxu0 0.0
      %1321 = vmatpush2.msra.mxu0 0.0
      %1322 = vmatprep.subr.mxu0 0.0
      %1323 = vmatpush2.msra.mxu0 0.0
      %1324 = vmatprep.subr.mxu0 0.0
      %1325 = vmatpush2.msra.mxu0 0.0
      %1326 = vmatprep.mubr.f32.mxu0 0.0
      %1327 = vmatmul.mubr.f32.gmra.mxu0 %v1183
      %v1328 = vpop.f32.mrf.mxu0
      %v1329 = vadd.f32 0.0, %v1328
      %v1330 = vpop.f32.mrf.mxu0
      %1331 = vdwg.mxu0
      %v1332 = vadd.f32 %v1163, %v1258
      %v1333 = vadd.f32 %v1164, %v1260
      %v1334 = vadd.f32 %v1165, %v1329
      %s1335 = scalar_lea.vmem %s1, 28
      %v1336 = vld [vmem:[%s1335] sm:$0xf]
      %v1337 = vld [vmem:[%s165] sm:$0xff]
      %v1338 = vld [vmem:[%s165 + $0x8] sm:$0xf]
      %v1341 = vcombine.high %v1337, %v1337
      %1342 = vrot.lane.b32.xlu0 %v1337, 87
      %v1343 = vpop.permute.xlu0 %1342
      %1344 = vrot.lane.b32.xlu0 %v1341, 87
      %v1345 = vpop.permute.xlu0 %1344
      %1346 = vrot.lane.b32.xlu0 %v1338, 87
      %v1347 = vpop.permute.xlu0 %1346
      %vm1348 = vcmask 711680
      %v1349 = vsel %vm1348, %v1343, %v1345
      %v1350 = vsel %vm1348, %v1345, %v1347
      %v1352 = vsel %vm188, %v1336, 0
      %v1354 = vsel %vm192, %v1349, 0
      %v1356 = vsel %vm192, %v1350, 0
      %v1358 = vsel %vm192, %v1347, 0
      %1360 = vmatprep.subr.mxu0 0.0
      %1361 = vmatpush1.msra.mxu0 0.0
      %1362 = vmatprep.subr.mxu0 0.0
      %1363 = vmatpush1.msra.mxu0 0.0
      %1364 = vmatprep.subr.mxu0 0.0
      %1365 = vmatpush1.msra.mxu0 0.0
      %1366 = vmatprep.subr.mxu0 0.0
      %1367 = vmatpush1.msra.mxu0 0.0
      %1368 = vmatprep.subr.mxu0 0.0
      %1369 = vmatpush1.msra.mxu0 0.0
      %1370 = vmatprep.subr.mxu0 0.0
      %1371 = vmatpush1.msra.mxu0 0.0
      %1372 = vmatprep.subr.mxu0 0.0
      %1373 = vmatpush1.msra.mxu0 0.0
      %1374 = vmatprep.subr.mxu0 0.0
      %1375 = vmatpush1.msra.mxu0 0.0
      %1376 = vmatprep.subr.mxu0 0.0
      %1377 = vmatpush1.msra.mxu0 0.0
      %1378 = vmatprep.subr.mxu0 0.0
      %1379 = vmatpush1.msra.mxu0 0.0
      %1380 = vmatprep.subr.mxu0 0.0
      %1381 = vmatpush1.msra.mxu0 0.0
      %1382 = vmatprep.subr.mxu0 0.0
      %1383 = vmatpush1.msra.mxu0 0.0
      %1384 = vmatprep.subr.mxu0 0.0
      %1385 = vmatpush1.msra.mxu0 0.0
      %1386 = vmatprep.subr.mxu0 0.0
      %1387 = vmatpush1.msra.mxu0 0.0
      %1388 = vmatprep.subr.mxu0 0.0
      %1389 = vmatpush1.msra.mxu0 0.0
      %1390 = vmatprep.subr.mxu0 %v1356
      %1391 = vmatpush1.msra.mxu0 %v1354
      %1392 = vmatprep.subr.mxu0 0.0
      %1393 = vmatpush2.msra.mxu0 0.0
      %1394 = vmatprep.subr.mxu0 0.0
      %1395 = vmatpush2.msra.mxu0 0.0
      %1396 = vmatprep.subr.mxu0 0.0
      %1397 = vmatpush2.msra.mxu0 0.0
      %1398 = vmatprep.subr.mxu0 0.0
      %1399 = vmatpush2.msra.mxu0 0.0
      %1400 = vmatprep.subr.mxu0 0.0
      %1401 = vmatpush2.msra.mxu0 0.0
      %1402 = vmatprep.subr.mxu0 0.0
      %1403 = vmatpush2.msra.mxu0 0.0
      %1404 = vmatprep.subr.mxu0 0.0
      %1405 = vmatpush2.msra.mxu0 0.0
      %1406 = vmatprep.subr.mxu0 0.0
      %1407 = vmatpush2.msra.mxu0 0.0
      %1408 = vmatprep.subr.mxu0 0.0
      %1409 = vmatpush2.msra.mxu0 0.0
      %1410 = vmatprep.subr.mxu0 0.0
      %1411 = vmatpush2.msra.mxu0 0.0
      %1412 = vmatprep.subr.mxu0 0.0
      %1413 = vmatpush2.msra.mxu0 0.0
      %1414 = vmatprep.subr.mxu0 0.0
      %1415 = vmatpush2.msra.mxu0 0.0
      %1416 = vmatprep.subr.mxu0 0.0
      %1417 = vmatpush2.msra.mxu0 0.0
      %1418 = vmatprep.subr.mxu0 0.0
      %1419 = vmatpush2.msra.mxu0 0.0
      %1420 = vmatprep.subr.mxu0 0.0
      %1421 = vmatpush2.msra.mxu0 0.0
      %1422 = vmatprep.subr.mxu0 0.0
      %1423 = vmatpush2.msra.mxu0 0.0
      %1424 = vmatprep.mubr.f32.mxu0 0.0
      %1425 = vmatmul.mubr.f32.gmra.mxu0 %v1352
      %v1426 = vpop.f32.mrf.mxu0
      %v1427 = vadd.f32 0.0, %v1426
      %v1428 = vpop.f32.mrf.mxu0
      %v1429 = vadd.f32 0.0, %v1428
      %1430 = vdwg.mxu0
      %1431 = vmatprep.subr.mxu0 0.0
      %1432 = vmatpush1.msra.mxu0 0.0
      %1433 = vmatprep.subr.mxu0 0.0
      %1434 = vmatpush1.msra.mxu0 0.0
      %1435 = vmatprep.subr.mxu0 0.0
      %1436 = vmatpush1.msra.mxu0 0.0
      %1437 = vmatprep.subr.mxu0 0.0
      %1438 = vmatpush1.msra.mxu0 0.0
      %1439 = vmatprep.subr.mxu0 0.0
      %1440 = vmatpush1.msra.mxu0 0.0
      %1441 = vmatprep.subr.mxu0 0.0
      %1442 = vmatpush1.msra.mxu0 0.0
      %1443 = vmatprep.subr.mxu0 0.0
      %1444 = vmatpush1.msra.mxu0 0.0
      %1445 = vmatprep.subr.mxu0 0.0
      %1446 = vmatpush1.msra.mxu0 0.0
      %1447 = vmatprep.subr.mxu0 0.0
      %1448 = vmatpush1.msra.mxu0 0.0
      %1449 = vmatprep.subr.mxu0 0.0
      %1450 = vmatpush1.msra.mxu0 0.0
      %1451 = vmatprep.subr.mxu0 0.0
      %1452 = vmatpush1.msra.mxu0 0.0
      %1453 = vmatprep.subr.mxu0 0.0
      %1454 = vmatpush1.msra.mxu0 0.0
      %1455 = vmatprep.subr.mxu0 0.0
      %1456 = vmatpush1.msra.mxu0 0.0
      %1457 = vmatprep.subr.mxu0 0.0
      %1458 = vmatpush1.msra.mxu0 0.0
      %1459 = vmatprep.subr.mxu0 0.0
      %1460 = vmatpush1.msra.mxu0 0.0
      %1461 = vmatprep.subr.mxu0 0.0
      %1462 = vmatpush1.msra.mxu0 %v1358
      %1463 = vmatprep.subr.mxu0 0.0
      %1464 = vmatpush2.msra.mxu0 0.0
      %1465 = vmatprep.subr.mxu0 0.0
      %1466 = vmatpush2.msra.mxu0 0.0
      %1467 = vmatprep.subr.mxu0 0.0
      %1468 = vmatpush2.msra.mxu0 0.0
      %1469 = vmatprep.subr.mxu0 0.0
      %1470 = vmatpush2.msra.mxu0 0.0
      %1471 = vmatprep.subr.mxu0 0.0
      %1472 = vmatpush2.msra.mxu0 0.0
      %1473 = vmatprep.subr.mxu0 0.0
      %1474 = vmatpush2.msra.mxu0 0.0
      %1475 = vmatprep.subr.mxu0 0.0
      %1476 = vmatpush2.msra.mxu0 0.0
      %1477 = vmatprep.subr.mxu0 0.0
      %1478 = vmatpush2.msra.mxu0 0.0
      %1479 = vmatprep.subr.mxu0 0.0
      %1480 = vmatpush2.msra.mxu0 0.0
      %1481 = vmatprep.subr.mxu0 0.0
      %1482 = vmatpush2.msra.mxu0 0.0
      %1483 = vmatprep.subr.mxu0 0.0
      %1484 = vmatpush2.msra.mxu0 0.0
      %1485 = vmatprep.subr.mxu0 0.0
      %1486 = vmatpush2.msra.mxu0 0.0
      %1487 = vmatprep.subr.mxu0 0.0
      %1488 = vmatpush2.msra.mxu0 0.0
      %1489 = vmatprep.subr.mxu0 0.0
      %1490 = vmatpush2.msra.mxu0 0.0
      %1491 = vmatprep.subr.mxu0 0.0
      %1492 = vmatpush2.msra.mxu0 0.0
      %1493 = vmatprep.subr.mxu0 0.0
      %1494 = vmatpush2.msra.mxu0 0.0
      %1495 = vmatprep.mubr.f32.mxu0 0.0
      %1496 = vmatmul.mubr.f32.gmra.mxu0 %v1352
      %v1497 = vpop.f32.mrf.mxu0
      %v1498 = vadd.f32 0.0, %v1497
      %v1499 = vpop.f32.mrf.mxu0
      %1500 = vdwg.mxu0
      %v1501 = vadd.f32 %v1332, %v1427
      %v1502 = vadd.f32 %v1333, %v1429
      %v1503 = vadd.f32 %v1334, %v1498
      %s1504 = scalar_lea.vmem %s1, 32
      %v1505 = vld [vmem:[%s1504] sm:$0xf]
      %v1506 = vld [vmem:[%s165] sm:$0xff]
      %v1507 = vld [vmem:[%s165 + $0x8] sm:$0xf]
      %v1510 = vcombine.high %v1506, %v1506
      %1511 = vrot.lane.b32.xlu0 %v1506, 86
      %v1512 = vpop.permute.xlu0 %1511
      %1513 = vrot.lane.b32.xlu0 %v1510, 86
      %v1514 = vpop.permute.xlu0 %1513
      %1515 = vrot.lane.b32.xlu0 %v1507, 86
      %v1516 = vpop.permute.xlu0 %1515
      %vm1517 = vcmask 703488
      %v1518 = vsel %vm1517, %v1512, %v1514
      %v1519 = vsel %vm1517, %v1514, %v1516
      %v1521 = vsel %vm188, %v1505, 0
      %v1523 = vsel %vm192, %v1518, 0
      %v1525 = vsel %vm192, %v1519, 0
      %v1527 = vsel %vm192, %v1516, 0
      %1529 = vmatprep.subr.mxu0 0.0
      %1530 = vmatpush1.msra.mxu0 0.0
      %1531 = vmatprep.subr.mxu0 0.0
      %1532 = vmatpush1.msra.mxu0 0.0
      %1533 = vmatprep.subr.mxu0 0.0
      %1534 = vmatpush1.msra.mxu0 0.0
      %1535 = vmatprep.subr.mxu0 0.0
      %1536 = vmatpush1.msra.mxu0 0.0
      %1537 = vmatprep.subr.mxu0 0.0
      %1538 = vmatpush1.msra.mxu0 0.0
      %1539 = vmatprep.subr.mxu0 0.0
      %1540 = vmatpush1.msra.mxu0 0.0
      %1541 = vmatprep.subr.mxu0 0.0
      %1542 = vmatpush1.msra.mxu0 0.0
      %1543 = vmatprep.subr.mxu0 0.0
      %1544 = vmatpush1.msra.mxu0 0.0
      %1545 = vmatprep.subr.mxu0 0.0
      %1546 = vmatpush1.msra.mxu0 0.0
      %1547 = vmatprep.subr.mxu0 0.0
      %1548 = vmatpush1.msra.mxu0 0.0
      %1549 = vmatprep.subr.mxu0 0.0
      %1550 = vmatpush1.msra.mxu0 0.0
      %1551 = vmatprep.subr.mxu0 0.0
      %1552 = vmatpush1.msra.mxu0 0.0
      %1553 = vmatprep.subr.mxu0 0.0
      %1554 = vmatpush1.msra.mxu0 0.0
      %1555 = vmatprep.subr.mxu0 0.0
      %1556 = vmatpush1.msra.mxu0 0.0
      %1557 = vmatprep.subr.mxu0 0.0
      %1558 = vmatpush1.msra.mxu0 0.0
      %1559 = vmatprep.subr.mxu0 %v1525
      %1560 = vmatpush1.msra.mxu0 %v1523
      %1561 = vmatprep.subr.mxu0 0.0
      %1562 = vmatpush2.msra.mxu0 0.0
      %1563 = vmatprep.subr.mxu0 0.0
      %1564 = vmatpush2.msra.mxu0 0.0
      %1565 = vmatprep.subr.mxu0 0.0
      %1566 = vmatpush2.msra.mxu0 0.0
      %1567 = vmatprep.subr.mxu0 0.0
      %1568 = vmatpush2.msra.mxu0 0.0
      %1569 = vmatprep.subr.mxu0 0.0
      %1570 = vmatpush2.msra.mxu0 0.0
      %1571 = vmatprep.subr.mxu0 0.0
      %1572 = vmatpush2.msra.mxu0 0.0
      %1573 = vmatprep.subr.mxu0 0.0
      %1574 = vmatpush2.msra.mxu0 0.0
      %1575 = vmatprep.subr.mxu0 0.0
      %1576 = vmatpush2.msra.mxu0 0.0
      %1577 = vmatprep.subr.mxu0 0.0
      %1578 = vmatpush2.msra.mxu0 0.0
      %1579 = vmatprep.subr.mxu0 0.0
      %1580 = vmatpush2.msra.mxu0 0.0
      %1581 = vmatprep.subr.mxu0 0.0
      %1582 = vmatpush2.msra.mxu0 0.0
      %1583 = vmatprep.subr.mxu0 0.0
      %1584 = vmatpush2.msra.mxu0 0.0
      %1585 = vmatprep.subr.mxu0 0.0
      %1586 = vmatpush2.msra.mxu0 0.0
      %1587 = vmatprep.subr.mxu0 0.0
      %1588 = vmatpush2.msra.mxu0 0.0
      %1589 = vmatprep.subr.mxu0 0.0
      %1590 = vmatpush2.msra.mxu0 0.0
      %1591 = vmatprep.subr.mxu0 0.0
      %1592 = vmatpush2.msra.mxu0 0.0
      %1593 = vmatprep.mubr.f32.mxu0 0.0
      %1594 = vmatmul.mubr.f32.gmra.mxu0 %v1521
      %v1595 = vpop.f32.mrf.mxu0
      %v1596 = vadd.f32 0.0, %v1595
      %v1597 = vpop.f32.mrf.mxu0
      %v1598 = vadd.f32 0.0, %v1597
      %1599 = vdwg.mxu0
      %1600 = vmatprep.subr.mxu0 0.0
      %1601 = vmatpush1.msra.mxu0 0.0
      %1602 = vmatprep.subr.mxu0 0.0
      %1603 = vmatpush1.msra.mxu0 0.0
      %1604 = vmatprep.subr.mxu0 0.0
      %1605 = vmatpush1.msra.mxu0 0.0
      %1606 = vmatprep.subr.mxu0 0.0
      %1607 = vmatpush1.msra.mxu0 0.0
      %1608 = vmatprep.subr.mxu0 0.0
      %1609 = vmatpush1.msra.mxu0 0.0
      %1610 = vmatprep.subr.mxu0 0.0
      %1611 = vmatpush1.msra.mxu0 0.0
      %1612 = vmatprep.subr.mxu0 0.0
      %1613 = vmatpush1.msra.mxu0 0.0
      %1614 = vmatprep.subr.mxu0 0.0
      %1615 = vmatpush1.msra.mxu0 0.0
      %1616 = vmatprep.subr.mxu0 0.0
      %1617 = vmatpush1.msra.mxu0 0.0
      %1618 = vmatprep.subr.mxu0 0.0
      %1619 = vmatpush1.msra.mxu0 0.0
      %1620 = vmatprep.subr.mxu0 0.0
      %1621 = vmatpush1.msra.mxu0 0.0
      %1622 = vmatprep.subr.mxu0 0.0
      %1623 = vmatpush1.msra.mxu0 0.0
      %1624 = vmatprep.subr.mxu0 0.0
      %1625 = vmatpush1.msra.mxu0 0.0
      %1626 = vmatprep.subr.mxu0 0.0
      %1627 = vmatpush1.msra.mxu0 0.0
      %1628 = vmatprep.subr.mxu0 0.0
      %1629 = vmatpush1.msra.mxu0 0.0
      %1630 = vmatprep.subr.mxu0 0.0
      %1631 = vmatpush1.msra.mxu0 %v1527
      %1632 = vmatprep.subr.mxu0 0.0
      %1633 = vmatpush2.msra.mxu0 0.0
      %1634 = vmatprep.subr.mxu0 0.0
      %1635 = vmatpush2.msra.mxu0 0.0
      %1636 = vmatprep.subr.mxu0 0.0
      %1637 = vmatpush2.msra.mxu0 0.0
      %1638 = vmatprep.subr.mxu0 0.0
      %1639 = vmatpush2.msra.mxu0 0.0
      %1640 = vmatprep.subr.mxu0 0.0
      %1641 = vmatpush2.msra.mxu0 0.0
      %1642 = vmatprep.subr.mxu0 0.0
      %1643 = vmatpush2.msra.mxu0 0.0
      %1644 = vmatprep.subr.mxu0 0.0
      %1645 = vmatpush2.msra.mxu0 0.0
      %1646 = vmatprep.subr.mxu0 0.0
      %1647 = vmatpush2.msra.mxu0 0.0
      %1648 = vmatprep.subr.mxu0 0.0
      %1649 = vmatpush2.msra.mxu0 0.0
      %1650 = vmatprep.subr.mxu0 0.0
      %1651 = vmatpush2.msra.mxu0 0.0
      %1652 = vmatprep.subr.mxu0 0.0
      %1653 = vmatpush2.msra.mxu0 0.0
      %1654 = vmatprep.subr.mxu0 0.0
      %1655 = vmatpush2.msra.mxu0 0.0
      %1656 = vmatprep.subr.mxu0 0.0
      %1657 = vmatpush2.msra.mxu0 0.0
      %1658 = vmatprep.subr.mxu0 0.0
      %1659 = vmatpush2.msra.mxu0 0.0
      %1660 = vmatprep.subr.mxu0 0.0
      %1661 = vmatpush2.msra.mxu0 0.0
      %1662 = vmatprep.subr.mxu0 0.0
      %1663 = vmatpush2.msra.mxu0 0.0
      %1664 = vmatprep.mubr.f32.mxu0 0.0
      %1665 = vmatmul.mubr.f32.gmra.mxu0 %v1521
      %v1666 = vpop.f32.mrf.mxu0
      %v1667 = vadd.f32 0.0, %v1666
      %v1668 = vpop.f32.mrf.mxu0
      %1669 = vdwg.mxu0
      %v1670 = vadd.f32 %v1501, %v1596
      %v1671 = vadd.f32 %v1502, %v1598
      %v1672 = vadd.f32 %v1503, %v1667
      %v1673 = vld [vmem:[%s2] sm:$0xf]
      %1675 = vset.pattern.permute.xlu0 0
      %1676 = vperm.xlu0 %1675, %v1673
      %v1677 = vpop.permute.xlu0 %1676
      %v1679 = vadd.f32 %v1670, %v1677
      %v1680 = vadd.f32 %v1671, %v1677
      %v1681 = vadd.f32 %v1672, %v1677
      %vm1682 = vcmp.ge.f32.partialorder %v1679, 0.0
      %vm1683 = vcmp.ge.f32.partialorder %v1680, 0.0
      %vm1684 = vcmp.ge.f32.partialorder %v1681, 0.0
      %v1685 = vmul.f32 %v1679, 0.2
      %v1686 = vmul.f32 %v1680, 0.2
      %v1687 = vmul.f32 %v1681, 0.2
      %v1688 = vsel %vm1682, %v1679, %v1685
      %v1689 = vsel %vm1683, %v1680, %v1686
      %v1690 = vsel %vm1684, %v1681, %v1687
      %v1693 = vcombine.low %v1688, %v1689
      %1695 = vst [vmem:[%s170] sm:$0xff] %v1693
      %vm1696 = vcmask 486400
      %1697 = vst.msk [vmem:[%s170 + $0x8] sm:$0xf] %vm1696, %v1690
      %vm1698 = vcmask 519648
      %1699 = vst.msk [vmem:[%s170 + $0x8] sm:$0xf] %vm1698, 0.0
      %p1700 = scmp.lt.s32.totalorder %s14, 1
      %s1701 = scalar_select %p1700, %s14, 1
      %s1702 = smul.addr %s1701, 3
      %s1703 = smul.addr %s1702, 4
      %s1704 = scalar_lea.vmem %s3, %s1703
      // Predicated region
      $region33: #{res_block.2} parent=31 // pred_check
        %p1705 = pneg %p100
      $region34: #{res_block.2} parent=31 // pred_check_branch
        %1707 = sbr.rel (%p1705) target = $region36
      $region35: #{res_block.2} parent=31 // pred_region
        _
      $region36: #{res_block.2} parent=31 // pred_fallthru
        _
    $region32: #{res_block.2} parent=5 // pred_fallthru
      _
    %p1708 = scmp.le.s32.totalorder 2, %s9
    // Predicated region
    $region37: #{res_block.2} parent=5 // pred_check
      %p1709 = pneg %p1708
    $region38: #{res_block.2} parent=5 // pred_check_branch
      %1711 = sbr.rel (%p1709) target = $region40
    $region39: #{res_block.2} parent=5 // pred_region
      %s1712 = ssub.s32 %s9, 2
      // Predicated region
      $region41: #{res_block.2} parent=39 // pred_check
        %p1713 = pneg %p106
      $region42: #{res_block.2} parent=39 // pred_check_branch
        %1715 = sbr.rel (%p1713) target = $region44
      $region43: #{res_block.2} parent=39 // pred_region
        %p1716 = scmp.lt.s32.totalorder %s15, 1
        %s1717 = scalar_select %p1716, %s15, 1
        %s1718 = smul.addr %s1717, 3
        %s1719 = smul.addr %s1718, 4
        %s1720 = scalar_lea.vmem %s3, %s1719
      $region44: #{res_block.2} parent=39 // pred_fallthru
        _
    $region40: #{res_block.2} parent=5 // pred_fallthru
      _
  $region6: #{res_block.2} parent=0 // loop_footer
    %s13 = sadd.s32 1, %s9
  $region7: #{res_block.2} parent=0 // loop_footer_branch
    %8 = sbr.rel target = $region3
  $region8: #{res_block.2} parent=0 // loop_exit
    _

// kernel: reverse
$region0: #{reverse}
  %s0 = inlined_call_operand.vmem [shape: f32[4,4], index: 0, kind: input, shape index: {}]
  %s1 = inlined_call_operand.vmem [shape: f32[4,4], index: 1, kind: output, shape index: {}]
  %v2 = vlaneseq
  %v3 = vsub.s32 3, %v2
  %4 = vset.pattern.permute.xlu0 %v3
  $region1: #{reverse} parent=0
    #allocation0 [shape = 'u8[8192]{0}', space=vmem, size = 0x2000, scoped, tag = 'operand span for operand 0']
    #allocation1 [shape = 'u8[4096]{0}', space=vmem, size = 0x1000, scoped, tag = 'packed  for operand 0']
    #allocation2 [shape = 'u8[4096]{0}', space=vmem, size = 0x1000, scoped, tag = 'operand span for operand 1']
    #allocation3 [shape = 'u8[2048]{0}', space=vmem, size = 0x800, scoped, tag = 'packed  for operand 1']
    %s5 = scalar_lea.vmem [#allocation1], 4
    // Predicated region
    $region2: #{reverse} parent=1 // pred_check
      _
    $region3: #{reverse} parent=1 // pred_check_branch
      %7 = sbr.rel (0) target = $region5
    $region4: #{reverse} parent=1 // pred_region
      // Predicated region
      $region6: #{reverse} parent=4 // pred_check
        _
      $region7: #{reverse} parent=4 // pred_check_branch
        %9 = sbr.rel target = $region9
      $region8: #{reverse} parent=4 // pred_region
        // Predicated region
        $region21: #{reverse} parent=8 // pred_check
          _
        $region22: #{reverse} parent=8 // pred_check_branch
          %25 = sbr.rel (0) target = $region24
        $region23: #{reverse} parent=8 // pred_region
          %s27 = ssub.s32 16, 1
          loop: start=0, step=1, limit=1
          $region25: #{reverse} parent=23 // loop_pre_header
            _
          $region26: #{reverse} parent=23 // loop_header
            %s29 = sphi 0, %s33
            %p30 = scmp.ge.s32.totalorder %s29, 1
            %s34 = sphi %s0, %s0
            %s35 = sphi %s5, %s5
          $region27: #{reverse} parent=23 // loop_header_branch
            %32 = sbr.rel (%p30) target = $region31
          $region28: #{reverse} parent=23 // loop_body
            %v36 = vld [vmem:[%s34] sm:%s27]
            %37 = vst [vmem:[%s35] sm:%s27] %v36
          $region29: #{reverse} parent=23 // loop_footer
            %s33 = sadd.s32 1, %s29
          $region30: #{reverse} parent=23 // loop_footer_branch
            %28 = sbr.rel target = $region26
          $region31: #{reverse} parent=23 // loop_exit
            _
        $region24: #{reverse} parent=8 // pred_fallthru
          _
      $region9: #{reverse} parent=4 // pred_fallthru
        _
      // Predicated region
      $region10: #{reverse} parent=4 // pred_check
        _
      $region11: #{reverse} parent=4 // pred_check_branch
        %11 = sbr.rel (0) target = $region13
      $region12: #{reverse} parent=4 // pred_region
        %s13 = ssub.s32 16, 1
        loop: start=0, step=1, limit=1
        $region14: #{reverse} parent=12 // loop_pre_header
          _
        $region15: #{reverse} parent=12 // loop_header
          %s15 = sphi 0, %s19
          %p16 = scmp.ge.s32.totalorder %s15, 1
          %s20 = sphi %s0, %s0
          %s21 = sphi %s5, %s5
        $region16: #{reverse} parent=12 // loop_header_branch
          %18 = sbr.rel (%p16) target = $region20
        $region17: #{reverse} parent=12 // loop_body
          %v22 = vld [vmem:[%s20] sm:%s13]
          %23 = vst [vmem:[%s21] sm:%s13] %v22
        $region18: #{reverse} parent=12 // loop_footer
          %s19 = sadd.s32 1, %s15
        $region19: #{reverse} parent=12 // loop_footer_branch
          %14 = sbr.rel target = $region15
        $region20: #{reverse} parent=12 // loop_exit
          _
      $region13: #{reverse} parent=4 // pred_fallthru
        _
    $region5: #{reverse} parent=1 // pred_fallthru
      _
    %38 = vnop
    %s40 = sshll.u32 1, 4
    %s41 = ssub.s32 %s40, 1
    %s42 = scalar_lea.vmem [#allocation1], 4
    %v43 = vld [vmem:[%s42] sm:%s41]
    %s44 = scalar_lea.vmem [#allocation0], 8
    %45 = vst [vmem:[%s44] sm:%s41] %v43
    %v46 = vld [vmem:[#allocation1] sm:%s41]
    %47 = vst [vmem:[#allocation0] sm:%s41] %v46
    %s48 = scalar_lea.vmem [#allocation0], 7
    %v49 = vld [vmem:[%s48] ss:$-1 sm:$0xff]
    %v50 = vrot.slane %v49, 4
    %51 = vperm.xlu0 %4, %v50
    %v52 = vpop.permute.xlu0 %51
    %53 = vst [vmem:[#allocation2] sm:$0xff] %v52
    %s54 = scalar_lea.vmem [#allocation0], 8
    %s55 = scalar_lea.vmem %s54, 7 [#allocation0]
    %v56 = vld [vmem:[%s55] ss:$-1 sm:$0xff]
    %v57 = vrot.slane %v56, 4
    %58 = vperm.xlu0 %4, %v57
    %v59 = vpop.permute.xlu0 %58
    %v60 = vlaneseq
    %v61 = vshrl.u32 %v60, 7
    %vm62 = vcmp.lt.s32.totalorder %v61, 4
    %63 = vst.msk [vmem:[#allocation2] sm:$0xff] %vm62, %v59
    %s65 = sshll.u32 1, 4
    %s66 = ssub.s32 %s65, 1
    %v68 = vld [vmem:[#allocation2] sm:%s66]
    %s69 = sshll.u32 1, 4
    %s70 = ssub.s32 %s69, 1
    %71 = vst [vmem:[#allocation3] sm:%s70] %v68
    // Predicated region
    $region32: #{reverse} parent=1 // pred_check
      _
    $region33: #{reverse} parent=1 // pred_check_branch
      %73 = sbr.rel (0) target = $region35
    $region34: #{reverse} parent=1 // pred_region
      // Predicated region
      $region36: #{reverse} parent=34 // pred_check
        _
      $region37: #{reverse} parent=34 // pred_check_branch
        %75 = sbr.rel target = $region39
      $region38: #{reverse} parent=34 // pred_region
        // Predicated region
        $region51: #{reverse} parent=38 // pred_check
          _
        $region52: #{reverse} parent=38 // pred_check_branch
          %91 = sbr.rel (0) target = $region54
        $region53: #{reverse} parent=38 // pred_region
          %s93 = ssub.s32 16, 1
          loop: start=0, step=1, limit=1
          $region55: #{reverse} parent=53 // loop_pre_header
            _
          $region56: #{reverse} parent=53 // loop_header
            %s95 = sphi 0, %s99
            %p96 = scmp.ge.s32.totalorder %s95, 1
            %s100 = sphi [#allocation3], [#allocation3]
            %s101 = sphi %s1, %s1
          $region57: #{reverse} parent=53 // loop_header_branch
            %98 = sbr.rel (%p96) target = $region61
          $region58: #{reverse} parent=53 // loop_body
            %v102 = vld [vmem:[%s100] sm:%s93]
            %103 = vst [vmem:[%s101] sm:%s93] %v102
          $region59: #{reverse} parent=53 // loop_footer
            %s99 = sadd.s32 1, %s95
          $region60: #{reverse} parent=53 // loop_footer_branch
            %94 = sbr.rel target = $region56
          $region61: #{reverse} parent=53 // loop_exit
            _
        $region54: #{reverse} parent=38 // pred_fallthru
          _
      $region39: #{reverse} parent=34 // pred_fallthru
        _
      // Predicated region
      $region40: #{reverse} parent=34 // pred_check
        _
      $region41: #{reverse} parent=34 // pred_check_branch
        %77 = sbr.rel (0) target = $region43
      $region42: #{reverse} parent=34 // pred_region
        %s79 = ssub.s32 16, 1
        loop: start=0, step=1, limit=1
        $region44: #{reverse} parent=42 // loop_pre_header
          _
        $region45: #{reverse} parent=42 // loop_header
          %s81 = sphi 0, %s85
          %p82 = scmp.ge.s32.totalorder %s81, 1
          %s86 = sphi [#allocation3], [#allocation3]
          %s87 = sphi %s1, %s1
        $region46: #{reverse} parent=42 // loop_header_branch
          %84 = sbr.rel (%p82) target = $region50
        $region47: #{reverse} parent=42 // loop_body
          %v88 = vld [vmem:[%s86] sm:%s79]
          %89 = vst [vmem:[%s87] sm:%s79] %v88
        $region48: #{reverse} parent=42 // loop_footer
          %s85 = sadd.s32 1, %s81
        $region49: #{reverse} parent=42 // loop_footer_branch
          %80 = sbr.rel target = $region45
        $region50: #{reverse} parent=42 // loop_exit
          _
      $region43: #{reverse} parent=34 // pred_fallthru
        _
    $region35: #{reverse} parent=1 // pred_fallthru
      _
    %104 = vnop

// kernel: res_block.3
$region0: #{res_block.3}
  #allocation0 [shape = 'u32[]', space=smem, size = 0x4, offset = 0x4, fixed_abs, tag = 'smem constant byte address 0x4 - core index']
  #allocation1 [shape = 'u32[144,128]{1,0:T(1,128)}', space=vmem, size = 0x12000, scoped, tag = 'internal scratch']
  %s0 = inlined_call_operand.vmem [shape: f32[2,4,4,100], index: 0, kind: input, shape index: {}]
  %s1 = inlined_call_operand.vmem [shape: f32[2,4,4,100], index: 1, kind: input, shape index: {}]
  %s2 = inlined_call_operand.vmem [shape: f32[36,8,4], index: 2, kind: input, shape index: {}]
  %s3 = inlined_call_operand.vmem [shape: f32[16,8,4], index: 3, kind: input, shape index: {}]
  %s4 = inlined_call_operand.vmem [shape: f32[8,1], index: 4, kind: input, shape index: {}]
  %s5 = inlined_call_operand.vmem [shape: f32[2,8,80], index: 5, kind: output, shape index: {}]
  %s6 = sld [smem:[#allocation0]]
  $region53: #{res_block.3} parent=0
    _
  %s8 = ssub.s32 1, %s6
  %s9 = scalar_select 0, %s8, %s6
  loop: start=0, step=1, limit=4
  $region2: #{res_block.3} parent=0 // loop_pre_header
    _
  $region3: #{res_block.3} parent=0 // loop_header
    %s11 = sphi 0, %s15
    %p12 = scmp.ge.s32.totalorder %s11, 4
    %s21 = sphi 0, %s23
    %s24 = sphi 0, %s21
    %s25 = sphi 0, %s24
    %s41 = sphi 0, %s25
    %s47 = sphi 0, %s49
    %s50 = sphi 0, %s47
    %s51 = sphi 0, %s50
    %s67 = sphi 0, %s51
    %s71 = sphi 0, %s71
    %s73 = sphi 0, %s71
    %s74 = sphi 0, %s73
    %s88 = sphi 0, %s74
    %s92 = sphi 0, %s92
    %s94 = sphi 0, %s92
    %s95 = sphi 0, %s94
    %s109 = sphi 0, %s95
    %s113 = sphi 0, %s113
    %s115 = sphi 0, %s113
    %s116 = sphi 0, %s115
    %s130 = sphi 0, %s116
    %s136 = sphi 0, %s138
    %s139 = sphi 0, %s136
    %s140 = sphi 0, %s139
    %s156 = sphi 0, %s140
  $region4: #{res_block.3} parent=0 // loop_header_branch
    %14 = sbr.rel (%p12) target = $region8
  $region5: #{res_block.3} parent=0 // loop_body
    %s16 = ssub.s32 %s11, 1
    %s17 = ssub.s32 %s11, 2
    %s18 = sadd.s32 %s11, 1
    %s19 = ssub.s32 %s11, %s18
    %p20 = scmp.eq.s32.totalorder %s19, 0
    %s22 = sadd.s32 %s21, 1
    %s23 = scalar_select %p20, %s21, %s22
    %p26 = pneg %p20
    %p27 = scmp.eq.s32.totalorder %s11, 1
    %p28 = por %p26, %p27
    %p29 = scmp.ne.s32.totalorder %s21, %s24
    %p30 = scmp.eq.s32.totalorder %s11, 0
    %p31 = por %p29, %p30
    %p32 = scmp.ne.s32.totalorder %s21, %s24
    %p33 = scmp.eq.s32.totalorder %s16, 1
    %p34 = por %p32, %p33
    %p35 = scmp.ne.s32.totalorder %s24, %s25
    %p36 = scmp.eq.s32.totalorder %s16, 0
    %p37 = por %p35, %p36
    %p38 = scmp.ne.s32.totalorder %s24, %s25
    %p39 = scmp.eq.s32.totalorder %s17, 1
    %p40 = por %p38, %p39
    %p42 = scmp.ne.s32.totalorder %s25, %s41
    %p43 = scmp.eq.s32.totalorder %s17, 0
    %p44 = por %p42, %p43
    %s45 = ssub.s32 %s11, %s18
    %p46 = scmp.eq.s32.totalorder %s45, 0
    %s48 = sadd.s32 %s47, 1
    %s49 = scalar_select %p46, %s47, %s48
    %p52 = pneg %p46
    %p53 = scmp.eq.s32.totalorder %s11, 1
    %p54 = por %p52, %p53
    %p55 = scmp.ne.s32.totalorder %s47, %s50
    %p56 = scmp.eq.s32.totalorder %s11, 0
    %p57 = por %p55, %p56
    %p58 = scmp.ne.s32.totalorder %s47, %s50
    %p59 = scmp.eq.s32.totalorder %s16, 1
    %p60 = por %p58, %p59
    %p61 = scmp.ne.s32.totalorder %s50, %s51
    %p62 = scmp.eq.s32.totalorder %s16, 0
    %p63 = por %p61, %p62
    %p64 = scmp.ne.s32.totalorder %s50, %s51
    %p65 = scmp.eq.s32.totalorder %s17, 1
    %p66 = por %p64, %p65
    %p68 = scmp.ne.s32.totalorder %s51, %s67
    %p69 = scmp.eq.s32.totalorder %s17, 0
    %p70 = por %p68, %p69
    %s72 = sadd.s32 %s71, 1
    %p75 = scmp.eq.s32.totalorder %s11, 1
    %p76 = scmp.ne.s32.totalorder %s71, %s73
    %p77 = scmp.eq.s32.totalorder %s11, 0
    %p78 = por %p76, %p77
    %p79 = scmp.ne.s32.totalorder %s71, %s73
    %p80 = scmp.eq.s32.totalorder %s16, 1
    %p81 = por %p79, %p80
    %p82 = scmp.ne.s32.totalorder %s73, %s74
    %p83 = scmp.eq.s32.totalorder %s16, 0
    %p84 = por %p82, %p83
    %p85 = scmp.ne.s32.totalorder %s73, %s74
    %p86 = scmp.eq.s32.totalorder %s17, 1
    %p87 = por %p85, %p86
    %p89 = scmp.ne.s32.totalorder %s74, %s88
    %p90 = scmp.eq.s32.totalorder %s17, 0
    %p91 = por %p89, %p90
    %s93 = sadd.s32 %s92, 1
    %p96 = scmp.eq.s32.totalorder %s11, 1
    %p97 = scmp.ne.s32.totalorder %s92, %s94
    %p98 = scmp.eq.s32.totalorder %s11, 0
    %p99 = por %p97, %p98
    %p100 = scmp.ne.s32.totalorder %s92, %s94
    %p101 = scmp.eq.s32.totalorder %s16, 1
    %p102 = por %p100, %p101
    %p103 = scmp.ne.s32.totalorder %s94, %s95
    %p104 = scmp.eq.s32.totalorder %s16, 0
    %p105 = por %p103, %p104
    %p106 = scmp.ne.s32.totalorder %s94, %s95
    %p107 = scmp.eq.s32.totalorder %s17, 1
    %p108 = por %p106, %p107
    %p110 = scmp.ne.s32.totalorder %s95, %s109
    %p111 = scmp.eq.s32.totalorder %s17, 0
    %p112 = por %p110, %p111
    %s114 = sadd.s32 %s113, 1
    %p117 = scmp.eq.s32.totalorder %s11, 1
    %p118 = scmp.ne.s32.totalorder %s113, %s115
    %p119 = scmp.eq.s32.totalorder %s11, 0
    %p120 = por %p118, %p119
    %p121 = scmp.ne.s32.totalorder %s113, %s115
    %p122 = scmp.eq.s32.totalorder %s16, 1
    %p123 = por %p121, %p122
    %p124 = scmp.ne.s32.totalorder %s115, %s116
    %p125 = scmp.eq.s32.totalorder %s16, 0
    %p126 = por %p124, %p125
    %p127 = scmp.ne.s32.totalorder %s115, %s116
    %p128 = scmp.eq.s32.totalorder %s17, 1
    %p129 = por %p127, %p128
    %p131 = scmp.ne.s32.totalorder %s116, %s130
    %p132 = scmp.eq.s32.totalorder %s17, 0
    %p133 = por %p131, %p132
    %s134 = ssub.s32 %s11, %s18
    %p135 = scmp.eq.s32.totalorder %s134, 0
    %s137 = sadd.s32 %s136, 1
    %s138 = scalar_select %p135, %s136, %s137
    %p141 = pneg %p135
    %p142 = scmp.eq.s32.totalorder %s11, 1
    %p143 = por %p141, %p142
    %p144 = scmp.ne.s32.totalorder %s136, %s139
    %p145 = scmp.eq.s32.totalorder %s11, 0
    %p146 = por %p144, %p145
    %p147 = scmp.ne.s32.totalorder %s136, %s139
    %p148 = scmp.eq.s32.totalorder %s16, 1
    %p149 = por %p147, %p148
    %p150 = scmp.ne.s32.totalorder %s139, %s140
    %p151 = scmp.eq.s32.totalorder %s16, 0
    %p152 = por %p150, %p151
    %p153 = scmp.ne.s32.totalorder %s139, %s140
    %p154 = scmp.eq.s32.totalorder %s17, 1
    %p155 = por %p153, %p154
    %p157 = scmp.ne.s32.totalorder %s140, %s156
    %p158 = scmp.eq.s32.totalorder %s17, 0
    %p159 = por %p157, %p158
    %p160 = scmp.le.s32.totalorder 1, %s11
    %p161 = scmp.lt.s32.totalorder %s11, 3
    %p162 = pnand %p160, %p161
    %p163 = pneg %p162
    // Predicated region
    $region9: #{res_block.3} parent=5 // pred_check
      _
    $region10: #{res_block.3} parent=5 // pred_check_branch
      %165 = sbr.rel (%p162) target = $region12
    $region11: #{res_block.3} parent=5 // pred_region
      %s166 = ssub.s32 %s11, 1
      // Predicated region
      $region13: #{res_block.3} parent=11 // pred_check
        %p167 = pneg %p84
      $region14: #{res_block.3} parent=11 // pred_check_branch
        %169 = sbr.rel (%p167) target = $region16
      $region15: #{res_block.3} parent=11 // pred_region
        _
      $region16: #{res_block.3} parent=11 // pred_fallthru
        _
      // Predicated region
      $region17: #{res_block.3} parent=11 // pred_check
        %p170 = pneg %p105
      $region18: #{res_block.3} parent=11 // pred_check_branch
        %172 = sbr.rel (%p170) target = $region20
      $region19: #{res_block.3} parent=11 // pred_region
        _
      $region20: #{res_block.3} parent=11 // pred_fallthru
        _
      // Predicated region
      $region21: #{res_block.3} parent=11 // pred_check
        %p173 = pneg %p126
      $region22: #{res_block.3} parent=11 // pred_check_branch
        %175 = sbr.rel (%p173) target = $region24
      $region23: #{res_block.3} parent=11 // pred_region
        _
      $region24: #{res_block.3} parent=11 // pred_fallthru
        _
    $region12: #{res_block.3} parent=5 // pred_fallthru
      _
    %p176 = scmp.lt.s32.totalorder %s11, 2
    // Predicated region
    $region25: #{res_block.3} parent=5 // pred_check
      %p177 = pneg %p176
    $region26: #{res_block.3} parent=5 // pred_check_branch
      %179 = sbr.rel (%p177) target = $region28
    $region27: #{res_block.3} parent=5 // pred_region
      // Predicated region
      $region29: #{res_block.3} parent=27 // pred_check
        %p180 = pneg %p31
      $region30: #{res_block.3} parent=27 // pred_check_branch
        %182 = sbr.rel (%p180) target = $region32
      $region31: #{res_block.3} parent=27 // pred_region
        %p183 = scmp.lt.s32.totalorder %s11, 1
        %s184 = scalar_select %p183, %s11, 1
        %s185 = smul.addr %s184, 4
        %s186 = smul.addr %s185, 4
        %s187 = scalar_lea.vmem %s0, %s186
      $region32: #{res_block.3} parent=27 // pred_fallthru
        _
      // Predicated region
      $region33: #{res_block.3} parent=27 // pred_check
        %p188 = pneg %p57
      $region34: #{res_block.3} parent=27 // pred_check_branch
        %190 = sbr.rel (%p188) target = $region36
      $region35: #{res_block.3} parent=27 // pred_region
        %p191 = scmp.lt.s32.totalorder %s11, 1
        %s192 = scalar_select %p191, %s11, 1
        %s193 = smul.addr %s192, 4
        %s194 = smul.addr %s193, 4
        %s195 = scalar_lea.vmem %s1, %s194
      $region36: #{res_block.3} parent=27 // pred_fallthru
        _
    $region28: #{res_block.3} parent=5 // pred_fallthru
      _
    %p196 = scmp.le.s32.totalorder 1, %s11
    %p197 = scmp.lt.s32.totalorder %s11, 3
    %p198 = pnand %p196, %p197
    %p199 = pneg %p198
    // Predicated region
    $region37: #{res_block.3} parent=5 // pred_check
      _
    $region38: #{res_block.3} parent=5 // pred_check_branch
      %201 = sbr.rel (%p198) target = $region40
    $region39: #{res_block.3} parent=5 // pred_region
      %s202 = ssub.s32 %s11, 1
      %p203 = scmp.lt.s32.totalorder %s16, 1
      %s204 = scalar_select %p203, %s16, 1
      %s205 = smul.addr %s204, 4
      %s206 = smul.addr %s205, 4
      %s207 = scalar_lea.vmem %s0, %s206
      %p208 = pneg %p37
      %p209 = pneg %p34
      %p210 = scmp.lt.s32.totalorder %s16, 1
      %s211 = scalar_select %p210, %s16, 1
      %s212 = smul.addr %s211, 4
      %s213 = smul.addr %s212, 4
      %s214 = scalar_lea.vmem %s1, %s213
      %p215 = pneg %p63
      %p216 = pneg %p60
      %p217 = pneg %p84
      %p218 = pneg %p81
      %p219 = pneg %p105
      %p220 = pneg %p102
      %p221 = pneg %p126
      %p222 = pneg %p123
      %p223 = pneg %p152
      %p224 = pneg %p149
      %p225 = scmp.lt.s32.totalorder %s16, 1
      %s226 = scalar_select %p225, %s16, 1
      %s227 = smul.addr %s226, 8
      %s228 = scalar_lea.vmem %s5, %s227
      %p229 = scmp.lt.s32.totalorder %s16, 1
      %s230 = scalar_select %p229, %s16, 1
      %s231 = smul.addr %s230, 4
      %s232 = smul.addr %s231, 4
      %s233 = scalar_lea.vmem %s0, %s232
      %p234 = scmp.lt.s32.totalorder %s16, 1
      %s235 = scalar_select %p234, %s16, 1
      %s236 = smul.addr %s235, 4
      %s237 = smul.addr %s236, 4
      %s238 = scalar_lea.vmem %s1, %s237
      %p239 = scmp.lt.s32.totalorder %s16, 1
      %s240 = scalar_select %p239, %s16, 1
      %s241 = smul.addr %s240, 8
      %s242 = scalar_lea.vmem %s5, %s241
      %v243 = vld [vmem:[%s233] sm:$0xf]
      %s244 = scalar_lea.vmem %s233, 4
      %v245 = vld [vmem:[%s244] sm:$0xf]
      %s246 = scalar_lea.vmem %s233, 8
      %v247 = vld [vmem:[%s246] sm:$0xf]
      %s248 = scalar_lea.vmem %s233, 12
      %v249 = vld [vmem:[%s248] sm:$0xf]
      %v250 = vld [vmem:[%s238] sm:$0xf]
      %s251 = scalar_lea.vmem %s238, 4
      %v252 = vld [vmem:[%s251] sm:$0xf]
      %s253 = scalar_lea.vmem %s238, 8
      %v254 = vld [vmem:[%s253] sm:$0xf]
      %s255 = scalar_lea.vmem %s238, 12
      %v256 = vld [vmem:[%s255] sm:$0xf]
      %v257 = vld [vmem:[%s2] sm:$0xff]
      %s258 = scalar_lea.vmem %s2, 8
      %v259 = vld [vmem:[%s258] sm:$0xff]
      %vm260 = vcmask 31744
      %v262 = vsel %vm260, %v259, 0
      %vm264 = vcmask 1043456
      %v266 = vsel %vm264, %v245, 0
      %268 = vmatprep.subr.mxu0 0.0
      %269 = vmatpush1.msra.mxu0 0.0
      %270 = vmatprep.subr.mxu0 0.0
      %271 = vmatpush1.msra.mxu0 0.0
      %272 = vmatprep.subr.mxu0 0.0
      %273 = vmatpush1.msra.mxu0 0.0
      %274 = vmatprep.subr.mxu0 0.0
      %275 = vmatpush1.msra.mxu0 0.0
      %276 = vmatprep.subr.mxu0 0.0
      %277 = vmatpush1.msra.mxu0 0.0
      %278 = vmatprep.subr.mxu0 0.0
      %279 = vmatpush1.msra.mxu0 0.0
      %280 = vmatprep.subr.mxu0 0.0
      %281 = vmatpush1.msra.mxu0 0.0
      %282 = vmatprep.subr.mxu0 0.0
      %283 = vmatpush1.msra.mxu0 0.0
      %284 = vmatprep.subr.mxu0 0.0
      %285 = vmatpush1.msra.mxu0 0.0
      %286 = vmatprep.subr.mxu0 0.0
      %287 = vmatpush1.msra.mxu0 0.0
      %288 = vmatprep.subr.mxu0 0.0
      %289 = vmatpush1.msra.mxu0 0.0
      %290 = vmatprep.subr.mxu0 0.0
      %291 = vmatpush1.msra.mxu0 0.0
      %292 = vmatprep.subr.mxu0 0.0
      %293 = vmatpush1.msra.mxu0 0.0
      %294 = vmatprep.subr.mxu0 0.0
      %295 = vmatpush1.msra.mxu0 0.0
      %296 = vmatprep.subr.mxu0 0.0
      %297 = vmatpush1.msra.mxu0 0.0
      %298 = vmatprep.subr.mxu0 0.0
      %299 = vmatpush1.msra.mxu0 %v266
      %300 = vmatprep.subr.mxu0 0.0
      %301 = vmatpush2.msra.mxu0 0.0
      %302 = vmatprep.subr.mxu0 0.0
      %303 = vmatpush2.msra.mxu0 0.0
      %304 = vmatprep.subr.mxu0 0.0
      %305 = vmatpush2.msra.mxu0 0.0
      %306 = vmatprep.subr.mxu0 0.0
      %307 = vmatpush2.msra.mxu0 0.0
      %308 = vmatprep.subr.mxu0 0.0
      %309 = vmatpush2.msra.mxu0 0.0
      %310 = vmatprep.subr.mxu0 0.0
      %311 = vmatpush2.msra.mxu0 0.0
      %312 = vmatprep.subr.mxu0 0.0
      %313 = vmatpush2.msra.mxu0 0.0
      %314 = vmatprep.subr.mxu0 0.0
      %315 = vmatpush2.msra.mxu0 0.0
      %316 = vmatprep.subr.mxu0 0.0
      %317 = vmatpush2.msra.mxu0 0.0
      %318 = vmatprep.subr.mxu0 0.0
      %319 = vmatpush2.msra.mxu0 0.0
      %320 = vmatprep.subr.mxu0 0.0
      %321 = vmatpush2.msra.mxu0 0.0
      %322 = vmatprep.subr.mxu0 0.0
      %323 = vmatpush2.msra.mxu0 0.0
      %324 = vmatprep.subr.mxu0 0.0
      %325 = vmatpush2.msra.mxu0 0.0
      %326 = vmatprep.subr.mxu0 0.0
      %327 = vmatpush2.msra.mxu0 0.0
      %328 = vmatprep.subr.mxu0 0.0
      %329 = vmatpush2.msra.mxu0 0.0
      %330 = vmatprep.subr.mxu0 0.0
      %331 = vmatpush2.msra.mxu0 0.0
      %332 = vmatprep.mubr.f32.mxu0 0.0
      %333 = vmatmul.mubr.f32.gmra.mxu0 %v262
      %v334 = vpop.f32.mrf.mxu0
      %v335 = vadd.f32 0.0, %v334
      %v336 = vpop.f32.mrf.mxu0
      %337 = vdwg.mxu0
      %v339 = vsel %vm260, %v257, 0
      %v342 = vsel %vm264, %v243, 0
      %344 = vmatprep.subr.mxu0 0.0
      %345 = vmatpush1.msra.mxu0 0.0
      %346 = vmatprep.subr.mxu0 0.0
      %347 = vmatpush1.msra.mxu0 0.0
      %348 = vmatprep.subr.mxu0 0.0
      %349 = vmatpush1.msra.mxu0 0.0
      %350 = vmatprep.subr.mxu0 0.0
      %351 = vmatpush1.msra.mxu0 0.0
      %352 = vmatprep.subr.mxu0 0.0
      %353 = vmatpush1.msra.mxu0 0.0
      %354 = vmatprep.subr.mxu0 0.0
      %355 = vmatpush1.msra.mxu0 0.0
      %356 = vmatprep.subr.mxu0 0.0
      %357 = vmatpush1.msra.mxu0 0.0
      %358 = vmatprep.subr.mxu0 0.0
      %359 = vmatpush1.msra.mxu0 0.0
      %360 = vmatprep.subr.mxu0 0.0
      %361 = vmatpush1.msra.mxu0 0.0
      %362 = vmatprep.subr.mxu0 0.0
      %363 = vmatpush1.msra.mxu0 0.0
      %364 = vmatprep.subr.mxu0 0.0
      %365 = vmatpush1.msra.mxu0 0.0
      %366 = vmatprep.subr.mxu0 0.0
      %367 = vmatpush1.msra.mxu0 0.0
      %368 = vmatprep.subr.mxu0 0.0
      %369 = vmatpush1.msra.mxu0 0.0
      %370 = vmatprep.subr.mxu0 0.0
      %371 = vmatpush1.msra.mxu0 0.0
      %372 = vmatprep.subr.mxu0 0.0
      %373 = vmatpush1.msra.mxu0 0.0
      %374 = vmatprep.subr.mxu0 0.0
      %375 = vmatpush1.msra.mxu0 %v342
      %376 = vmatprep.subr.mxu0 0.0
      %377 = vmatpush2.msra.mxu0 0.0
      %378 = vmatprep.subr.mxu0 0.0
      %379 = vmatpush2.msra.mxu0 0.0
      %380 = vmatprep.subr.mxu0 0.0
      %381 = vmatpush2.msra.mxu0 0.0
      %382 = vmatprep.subr.mxu0 0.0
      %383 = vmatpush2.msra.mxu0 0.0
      %384 = vmatprep.subr.mxu0 0.0
      %385 = vmatpush2.msra.mxu0 0.0
      %386 = vmatprep.subr.mxu0 0.0
      %387 = vmatpush2.msra.mxu0 0.0
      %388 = vmatprep.subr.mxu0 0.0
      %389 = vmatpush2.msra.mxu0 0.0
      %390 = vmatprep.subr.mxu0 0.0
      %391 = vmatpush2.msra.mxu0 0.0
      %392 = vmatprep.subr.mxu0 0.0
      %393 = vmatpush2.msra.mxu0 0.0
      %394 = vmatprep.subr.mxu0 0.0
      %395 = vmatpush2.msra.mxu0 0.0
      %396 = vmatprep.subr.mxu0 0.0
      %397 = vmatpush2.msra.mxu0 0.0
      %398 = vmatprep.subr.mxu0 0.0
      %399 = vmatpush2.msra.mxu0 0.0
      %400 = vmatprep.subr.mxu0 0.0
      %401 = vmatpush2.msra.mxu0 0.0
      %402 = vmatprep.subr.mxu0 0.0
      %403 = vmatpush2.msra.mxu0 0.0
      %404 = vmatprep.subr.mxu0 0.0
      %405 = vmatpush2.msra.mxu0 0.0
      %406 = vmatprep.subr.mxu0 0.0
      %407 = vmatpush2.msra.mxu0 0.0
      %408 = vmatprep.mubr.f32.mxu0 0.0
      %409 = vmatmul.mubr.f32.gmra.mxu0 %v339
      %v410 = vpop.f32.mrf.mxu0
      %v411 = vadd.f32 %v335, %v410
      %v412 = vpop.f32.mrf.mxu0
      %413 = vdwg.mxu0
      %s414 = scalar_lea.vmem %s2, 16
      %v415 = vld [vmem:[%s414] sm:$0xff]
      %416 = vrot.lane.b32.xlu0 %v243, 127
      %v417 = vpop.permute.xlu0 %416
      %v419 = vsel %vm260, %v415, 0
      %v421 = vsel %vm264, %v417, 0
      %423 = vmatprep.subr.mxu0 0.0
      %424 = vmatpush1.msra.mxu0 0.0
      %425 = vmatprep.subr.mxu0 0.0
      %426 = vmatpush1.msra.mxu0 0.0
      %427 = vmatprep.subr.mxu0 0.0
      %428 = vmatpush1.msra.mxu0 0.0
      %429 = vmatprep.subr.mxu0 0.0
      %430 = vmatpush1.msra.mxu0 0.0
      %431 = vmatprep.subr.mxu0 0.0
      %432 = vmatpush1.msra.mxu0 0.0
      %433 = vmatprep.subr.mxu0 0.0
      %434 = vmatpush1.msra.mxu0 0.0
      %435 = vmatprep.subr.mxu0 0.0
      %436 = vmatpush1.msra.mxu0 0.0
      %437 = vmatprep.subr.mxu0 0.0
      %438 = vmatpush1.msra.mxu0 0.0
      %439 = vmatprep.subr.mxu0 0.0
      %440 = vmatpush1.msra.mxu0 0.0
      %441 = vmatprep.subr.mxu0 0.0
      %442 = vmatpush1.msra.mxu0 0.0
      %443 = vmatprep.subr.mxu0 0.0
      %444 = vmatpush1.msra.mxu0 0.0
      %445 = vmatprep.subr.mxu0 0.0
      %446 = vmatpush1.msra.mxu0 0.0
      %447 = vmatprep.subr.mxu0 0.0
      %448 = vmatpush1.msra.mxu0 0.0
      %449 = vmatprep.subr.mxu0 0.0
      %450 = vmatpush1.msra.mxu0 0.0
      %451 = vmatprep.subr.mxu0 0.0
      %452 = vmatpush1.msra.mxu0 0.0
      %453 = vmatprep.subr.mxu0 0.0
      %454 = vmatpush1.msra.mxu0 %v421
      %455 = vmatprep.subr.mxu0 0.0
      %456 = vmatpush2.msra.mxu0 0.0
      %457 = vmatprep.subr.mxu0 0.0
      %458 = vmatpush2.msra.mxu0 0.0
      %459 = vmatprep.subr.mxu0 0.0
      %460 = vmatpush2.msra.mxu0 0.0
      %461 = vmatprep.subr.mxu0 0.0
      %462 = vmatpush2.msra.mxu0 0.0
      %463 = vmatprep.subr.mxu0 0.0
      %464 = vmatpush2.msra.mxu0 0.0
      %465 = vmatprep.subr.mxu0 0.0
      %466 = vmatpush2.msra.mxu0 0.0
      %467 = vmatprep.subr.mxu0 0.0
      %468 = vmatpush2.msra.mxu0 0.0
      %469 = vmatprep.subr.mxu0 0.0
      %470 = vmatpush2.msra.mxu0 0.0
      %471 = vmatprep.subr.mxu0 0.0
      %472 = vmatpush2.msra.mxu0 0.0
      %473 = vmatprep.subr.mxu0 0.0
      %474 = vmatpush2.msra.mxu0 0.0
      %475 = vmatprep.subr.mxu0 0.0
      %476 = vmatpush2.msra.mxu0 0.0
      %477 = vmatprep.subr.mxu0 0.0
      %478 = vmatpush2.msra.mxu0 0.0
      %479 = vmatprep.subr.mxu0 0.0
      %480 = vmatpush2.msra.mxu0 0.0
      %481 = vmatprep.subr.mxu0 0.0
      %482 = vmatpush2.msra.mxu0 0.0
      %483 = vmatprep.subr.mxu0 0.0
      %484 = vmatpush2.msra.mxu0 0.0
      %485 = vmatprep.subr.mxu0 0.0
      %486 = vmatpush2.msra.mxu0 0.0
      %487 = vmatprep.mubr.f32.mxu0 0.0
      %488 = vmatmul.mubr.f32.gmra.mxu0 %v419
      %v489 = vpop.f32.mrf.mxu0
      %v490 = vadd.f32 0.0, %v489
      %v491 = vpop.f32.mrf.mxu0
      %492 = vdwg.mxu0
      %v493 = vadd.f32 %v411, %v490
      %s494 = scalar_lea.vmem %s2, 24
      %v495 = vld [vmem:[%s494] sm:$0xff]
      %496 = vrot.lane.b32.xlu0 %v245, 127
      %v497 = vpop.permute.xlu0 %496
      %v499 = vsel %vm260, %v495, 0
      %v501 = vsel %vm264, %v497, 0
      %503 = vmatprep.subr.mxu0 0.0
      %504 = vmatpush1.msra.mxu0 0.0
      %505 = vmatprep.subr.mxu0 0.0
      %506 = vmatpush1.msra.mxu0 0.0
      %507 = vmatprep.subr.mxu0 0.0
      %508 = vmatpush1.msra.mxu0 0.0
      %509 = vmatprep.subr.mxu0 0.0
      %510 = vmatpush1.msra.mxu0 0.0
      %511 = vmatprep.subr.mxu0 0.0
      %512 = vmatpush1.msra.mxu0 0.0
      %513 = vmatprep.subr.mxu0 0.0
      %514 = vmatpush1.msra.mxu0 0.0
      %515 = vmatprep.subr.mxu0 0.0
      %516 = vmatpush1.msra.mxu0 0.0
      %517 = vmatprep.subr.mxu0 0.0
      %518 = vmatpush1.msra.mxu0 0.0
      %519 = vmatprep.subr.mxu0 0.0
      %520 = vmatpush1.msra.mxu0 0.0
      %521 = vmatprep.subr.mxu0 0.0
      %522 = vmatpush1.msra.mxu0 0.0
      %523 = vmatprep.subr.mxu0 0.0
      %524 = vmatpush1.msra.mxu0 0.0
      %525 = vmatprep.subr.mxu0 0.0
      %526 = vmatpush1.msra.mxu0 0.0
      %527 = vmatprep.subr.mxu0 0.0
      %528 = vmatpush1.msra.mxu0 0.0
      %529 = vmatprep.subr.mxu0 0.0
      %530 = vmatpush1.msra.mxu0 0.0
      %531 = vmatprep.subr.mxu0 0.0
      %532 = vmatpush1.msra.mxu0 0.0
      %533 = vmatprep.subr.mxu0 0.0
      %534 = vmatpush1.msra.mxu0 %v501
      %535 = vmatprep.subr.mxu0 0.0
      %536 = vmatpush2.msra.mxu0 0.0
      %537 = vmatprep.subr.mxu0 0.0
      %538 = vmatpush2.msra.mxu0 0.0
      %539 = vmatprep.subr.mxu0 0.0
      %540 = vmatpush2.msra.mxu0 0.0
      %541 = vmatprep.subr.mxu0 0.0
      %542 = vmatpush2.msra.mxu0 0.0
      %543 = vmatprep.subr.mxu0 0.0
      %544 = vmatpush2.msra.mxu0 0.0
      %545 = vmatprep.subr.mxu0 0.0
      %546 = vmatpush2.msra.mxu0 0.0
      %547 = vmatprep.subr.mxu0 0.0
      %548 = vmatpush2.msra.mxu0 0.0
      %549 = vmatprep.subr.mxu0 0.0
      %550 = vmatpush2.msra.mxu0 0.0
      %551 = vmatprep.subr.mxu0 0.0
      %552 = vmatpush2.msra.mxu0 0.0
      %553 = vmatprep.subr.mxu0 0.0
      %554 = vmatpush2.msra.mxu0 0.0
      %555 = vmatprep.subr.mxu0 0.0
      %556 = vmatpush2.msra.mxu0 0.0
      %557 = vmatprep.subr.mxu0 0.0
      %558 = vmatpush2.msra.mxu0 0.0
      %559 = vmatprep.subr.mxu0 0.0
      %560 = vmatpush2.msra.mxu0 0.0
      %561 = vmatprep.subr.mxu0 0.0
      %562 = vmatpush2.msra.mxu0 0.0
      %563 = vmatprep.subr.mxu0 0.0
      %564 = vmatpush2.msra.mxu0 0.0
      %565 = vmatprep.subr.mxu0 0.0
      %566 = vmatpush2.msra.mxu0 0.0
      %567 = vmatprep.mubr.f32.mxu0 0.0
      %568 = vmatmul.mubr.f32.gmra.mxu0 %v499
      %v569 = vpop.f32.mrf.mxu0
      %v570 = vadd.f32 0.0, %v569
      %v571 = vpop.f32.mrf.mxu0
      %572 = vdwg.mxu0
      %v573 = vadd.f32 %v493, %v570
      %s574 = scalar_lea.vmem %s2, 32
      %v575 = vld [vmem:[%s574] sm:$0xff]
      %576 = vrot.lane.b32.xlu0 %v243, 126
      %v577 = vpop.permute.xlu0 %576
      %v579 = vsel %vm260, %v575, 0
      %v581 = vsel %vm264, %v577, 0
      %583 = vmatprep.subr.mxu0 0.0
      %584 = vmatpush1.msra.mxu0 0.0
      %585 = vmatprep.subr.mxu0 0.0
      %586 = vmatpush1.msra.mxu0 0.0
      %587 = vmatprep.subr.mxu0 0.0
      %588 = vmatpush1.msra.mxu0 0.0
      %589 = vmatprep.subr.mxu0 0.0
      %590 = vmatpush1.msra.mxu0 0.0
      %591 = vmatprep.subr.mxu0 0.0
      %592 = vmatpush1.msra.mxu0 0.0
      %593 = vmatprep.subr.mxu0 0.0
      %594 = vmatpush1.msra.mxu0 0.0
      %595 = vmatprep.subr.mxu0 0.0
      %596 = vmatpush1.msra.mxu0 0.0
      %597 = vmatprep.subr.mxu0 0.0
      %598 = vmatpush1.msra.mxu0 0.0
      %599 = vmatprep.subr.mxu0 0.0
      %600 = vmatpush1.msra.mxu0 0.0
      %601 = vmatprep.subr.mxu0 0.0
      %602 = vmatpush1.msra.mxu0 0.0
      %603 = vmatprep.subr.mxu0 0.0
      %604 = vmatpush1.msra.mxu0 0.0
      %605 = vmatprep.subr.mxu0 0.0
      %606 = vmatpush1.msra.mxu0 0.0
      %607 = vmatprep.subr.mxu0 0.0
      %608 = vmatpush1.msra.mxu0 0.0
      %609 = vmatprep.subr.mxu0 0.0
      %610 = vmatpush1.msra.mxu0 0.0
      %611 = vmatprep.subr.mxu0 0.0
      %612 = vmatpush1.msra.mxu0 0.0
      %613 = vmatprep.subr.mxu0 0.0
      %614 = vmatpush1.msra.mxu0 %v581
      %615 = vmatprep.subr.mxu0 0.0
      %616 = vmatpush2.msra.mxu0 0.0
      %617 = vmatprep.subr.mxu0 0.0
      %618 = vmatpush2.msra.mxu0 0.0
      %619 = vmatprep.subr.mxu0 0.0
      %620 = vmatpush2.msra.mxu0 0.0
      %621 = vmatprep.subr.mxu0 0.0
      %622 = vmatpush2.msra.mxu0 0.0
      %623 = vmatprep.subr.mxu0 0.0
      %624 = vmatpush2.msra.mxu0 0.0
      %625 = vmatprep.subr.mxu0 0.0
      %626 = vmatpush2.msra.mxu0 0.0
      %627 = vmatprep.subr.mxu0 0.0
      %628 = vmatpush2.msra.mxu0 0.0
      %629 = vmatprep.subr.mxu0 0.0
      %630 = vmatpush2.msra.mxu0 0.0
      %631 = vmatprep.subr.mxu0 0.0
      %632 = vmatpush2.msra.mxu0 0.0
      %633 = vmatprep.subr.mxu0 0.0
      %634 = vmatpush2.msra.mxu0 0.0
      %635 = vmatprep.subr.mxu0 0.0
      %636 = vmatpush2.msra.mxu0 0.0
      %637 = vmatprep.subr.mxu0 0.0
      %638 = vmatpush2.msra.mxu0 0.0
      %639 = vmatprep.subr.mxu0 0.0
      %640 = vmatpush2.msra.mxu0 0.0
      %641 = vmatprep.subr.mxu0 0.0
      %642 = vmatpush2.msra.mxu0 0.0
      %643 = vmatprep.subr.mxu0 0.0
      %644 = vmatpush2.msra.mxu0 0.0
      %645 = vmatprep.subr.mxu0 0.0
      %646 = vmatpush2.msra.mxu0 0.0
      %647 = vmatprep.mubr.f32.mxu0 0.0
      %648 = vmatmul.mubr.f32.gmra.mxu0 %v579
      %v649 = vpop.f32.mrf.mxu0
      %v650 = vadd.f32 0.0, %v649
      %v651 = vpop.f32.mrf.mxu0
      %652 = vdwg.mxu0
      %v653 = vadd.f32 %v573, %v650
      %s654 = scalar_lea.vmem %s2, 40
      %v655 = vld [vmem:[%s654] sm:$0xff]
      %656 = vrot.lane.b32.xlu0 %v245, 126
      %v657 = vpop.permute.xlu0 %656
      %v659 = vsel %vm260, %v655, 0
      %v661 = vsel %vm264, %v657, 0
      %663 = vmatprep.subr.mxu0 0.0
      %664 = vmatpush1.msra.mxu0 0.0
      %665 = vmatprep.subr.mxu0 0.0
      %666 = vmatpush1.msra.mxu0 0.0
      %667 = vmatprep.subr.mxu0 0.0
      %668 = vmatpush1.msra.mxu0 0.0
      %669 = vmatprep.subr.mxu0 0.0
      %670 = vmatpush1.msra.mxu0 0.0
      %671 = vmatprep.subr.mxu0 0.0
      %672 = vmatpush1.msra.mxu0 0.0
      %673 = vmatprep.subr.mxu0 0.0
      %674 = vmatpush1.msra.mxu0 0.0
      %675 = vmatprep.subr.mxu0 0.0
      %676 = vmatpush1.msra.mxu0 0.0
      %677 = vmatprep.subr.mxu0 0.0
      %678 = vmatpush1.msra.mxu0 0.0
      %679 = vmatprep.subr.mxu0 0.0
      %680 = vmatpush1.msra.mxu0 0.0
      %681 = vmatprep.subr.mxu0 0.0
      %682 = vmatpush1.msra.mxu0 0.0
      %683 = vmatprep.subr.mxu0 0.0
      %684 = vmatpush1.msra.mxu0 0.0
      %685 = vmatprep.subr.mxu0 0.0
      %686 = vmatpush1.msra.mxu0 0.0
      %687 = vmatprep.subr.mxu0 0.0
      %688 = vmatpush1.msra.mxu0 0.0
      %689 = vmatprep.subr.mxu0 0.0
      %690 = vmatpush1.msra.mxu0 0.0
      %691 = vmatprep.subr.mxu0 0.0
      %692 = vmatpush1.msra.mxu0 0.0
      %693 = vmatprep.subr.mxu0 0.0
      %694 = vmatpush1.msra.mxu0 %v661
      %695 = vmatprep.subr.mxu0 0.0
      %696 = vmatpush2.msra.mxu0 0.0
      %697 = vmatprep.subr.mxu0 0.0
      %698 = vmatpush2.msra.mxu0 0.0
      %699 = vmatprep.subr.mxu0 0.0
      %700 = vmatpush2.msra.mxu0 0.0
      %701 = vmatprep.subr.mxu0 0.0
      %702 = vmatpush2.msra.mxu0 0.0
      %703 = vmatprep.subr.mxu0 0.0
      %704 = vmatpush2.msra.mxu0 0.0
      %705 = vmatprep.subr.mxu0 0.0
      %706 = vmatpush2.msra.mxu0 0.0
      %707 = vmatprep.subr.mxu0 0.0
      %708 = vmatpush2.msra.mxu0 0.0
      %709 = vmatprep.subr.mxu0 0.0
      %710 = vmatpush2.msra.mxu0 0.0
      %711 = vmatprep.subr.mxu0 0.0
      %712 = vmatpush2.msra.mxu0 0.0
      %713 = vmatprep.subr.mxu0 0.0
      %714 = vmatpush2.msra.mxu0 0.0
      %715 = vmatprep.subr.mxu0 0.0
      %716 = vmatpush2.msra.mxu0 0.0
      %717 = vmatprep.subr.mxu0 0.0
      %718 = vmatpush2.msra.mxu0 0.0
      %719 = vmatprep.subr.mxu0 0.0
      %720 = vmatpush2.msra.mxu0 0.0
      %721 = vmatprep.subr.mxu0 0.0
      %722 = vmatpush2.msra.mxu0 0.0
      %723 = vmatprep.subr.mxu0 0.0
      %724 = vmatpush2.msra.mxu0 0.0
      %725 = vmatprep.subr.mxu0 0.0
      %726 = vmatpush2.msra.mxu0 0.0
      %727 = vmatprep.mubr.f32.mxu0 0.0
      %728 = vmatmul.mubr.f32.gmra.mxu0 %v659
      %v729 = vpop.f32.mrf.mxu0
      %v730 = vadd.f32 0.0, %v729
      %v731 = vpop.f32.mrf.mxu0
      %732 = vdwg.mxu0
      %v733 = vadd.f32 %v653, %v730
      %s734 = scalar_lea.vmem %s2, 48
      %v735 = vld [vmem:[%s734] sm:$0xff]
      %v737 = vsel %vm260, %v735, 0
      %v740 = vsel %vm264, %v247, 0
      %742 = vmatprep.subr.mxu0 0.0
      %743 = vmatpush1.msra.mxu0 0.0
      %744 = vmatprep.subr.mxu0 0.0
      %745 = vmatpush1.msra.mxu0 0.0
      %746 = vmatprep.subr.mxu0 0.0
      %747 = vmatpush1.msra.mxu0 0.0
      %748 = vmatprep.subr.mxu0 0.0
      %749 = vmatpush1.msra.mxu0 0.0
      %750 = vmatprep.subr.mxu0 0.0
      %751 = vmatpush1.msra.mxu0 0.0
      %752 = vmatprep.subr.mxu0 0.0
      %753 = vmatpush1.msra.mxu0 0.0
      %754 = vmatprep.subr.mxu0 0.0
      %755 = vmatpush1.msra.mxu0 0.0
      %756 = vmatprep.subr.mxu0 0.0
      %757 = vmatpush1.msra.mxu0 0.0
      %758 = vmatprep.subr.mxu0 0.0
      %759 = vmatpush1.msra.mxu0 0.0
      %760 = vmatprep.subr.mxu0 0.0
      %761 = vmatpush1.msra.mxu0 0.0
      %762 = vmatprep.subr.mxu0 0.0
      %763 = vmatpush1.msra.mxu0 0.0
      %764 = vmatprep.subr.mxu0 0.0
      %765 = vmatpush1.msra.mxu0 0.0
      %766 = vmatprep.subr.mxu0 0.0
      %767 = vmatpush1.msra.mxu0 0.0
      %768 = vmatprep.subr.mxu0 0.0
      %769 = vmatpush1.msra.mxu0 0.0
      %770 = vmatprep.subr.mxu0 0.0
      %771 = vmatpush1.msra.mxu0 0.0
      %772 = vmatprep.subr.mxu0 0.0
      %773 = vmatpush1.msra.mxu0 %v740
      %774 = vmatprep.subr.mxu0 0.0
      %775 = vmatpush2.msra.mxu0 0.0
      %776 = vmatprep.subr.mxu0 0.0
      %777 = vmatpush2.msra.mxu0 0.0
      %778 = vmatprep.subr.mxu0 0.0
      %779 = vmatpush2.msra.mxu0 0.0
      %780 = vmatprep.subr.mxu0 0.0
      %781 = vmatpush2.msra.mxu0 0.0
      %782 = vmatprep.subr.mxu0 0.0
      %783 = vmatpush2.msra.mxu0 0.0
      %784 = vmatprep.subr.mxu0 0.0
      %785 = vmatpush2.msra.mxu0 0.0
      %786 = vmatprep.subr.mxu0 0.0
      %787 = vmatpush2.msra.mxu0 0.0
      %788 = vmatprep.subr.mxu0 0.0
      %789 = vmatpush2.msra.mxu0 0.0
      %790 = vmatprep.subr.mxu0 0.0
      %791 = vmatpush2.msra.mxu0 0.0
      %792 = vmatprep.subr.mxu0 0.0
      %793 = vmatpush2.msra.mxu0 0.0
      %794 = vmatprep.subr.mxu0 0.0
      %795 = vmatpush2.msra.mxu0 0.0
      %796 = vmatprep.subr.mxu0 0.0
      %797 = vmatpush2.msra.mxu0 0.0
      %798 = vmatprep.subr.mxu0 0.0
      %799 = vmatpush2.msra.mxu0 0.0
      %800 = vmatprep.subr.mxu0 0.0
      %801 = vmatpush2.msra.mxu0 0.0
      %802 = vmatprep.subr.mxu0 0.0
      %803 = vmatpush2.msra.mxu0 0.0
      %804 = vmatprep.subr.mxu0 0.0
      %805 = vmatpush2.msra.mxu0 0.0
      %806 = vmatprep.mubr.f32.mxu0 0.0
      %807 = vmatmul.mubr.f32.gmra.mxu0 %v737
      %v808 = vpop.f32.mrf.mxu0
      %v809 = vadd.f32 0.0, %v808
      %v810 = vpop.f32.mrf.mxu0
      %811 = vdwg.mxu0
      %v812 = vadd.f32 %v733, %v809
      %s813 = scalar_lea.vmem %s2, 56
      %v814 = vld [vmem:[%s813] sm:$0xff]
      %v816 = vsel %vm260, %v814, 0
      %v819 = vsel %vm264, %v249, 0
      %821 = vmatprep.subr.mxu0 0.0
      %822 = vmatpush1.msra.mxu0 0.0
      %823 = vmatprep.subr.mxu0 0.0
      %824 = vmatpush1.msra.mxu0 0.0
      %825 = vmatprep.subr.mxu0 0.0
      %826 = vmatpush1.msra.mxu0 0.0
      %827 = vmatprep.subr.mxu0 0.0
      %828 = vmatpush1.msra.mxu0 0.0
      %829 = vmatprep.subr.mxu0 0.0
      %830 = vmatpush1.msra.mxu0 0.0
      %831 = vmatprep.subr.mxu0 0.0
      %832 = vmatpush1.msra.mxu0 0.0
      %833 = vmatprep.subr.mxu0 0.0
      %834 = vmatpush1.msra.mxu0 0.0
      %835 = vmatprep.subr.mxu0 0.0
      %836 = vmatpush1.msra.mxu0 0.0
      %837 = vmatprep.subr.mxu0 0.0
      %838 = vmatpush1.msra.mxu0 0.0
      %839 = vmatprep.subr.mxu0 0.0
      %840 = vmatpush1.msra.mxu0 0.0
      %841 = vmatprep.subr.mxu0 0.0
      %842 = vmatpush1.msra.mxu0 0.0
      %843 = vmatprep.subr.mxu0 0.0
      %844 = vmatpush1.msra.mxu0 0.0
      %845 = vmatprep.subr.mxu0 0.0
      %846 = vmatpush1.msra.mxu0 0.0
      %847 = vmatprep.subr.mxu0 0.0
      %848 = vmatpush1.msra.mxu0 0.0
      %849 = vmatprep.subr.mxu0 0.0
      %850 = vmatpush1.msra.mxu0 0.0
      %851 = vmatprep.subr.mxu0 0.0
      %852 = vmatpush1.msra.mxu0 %v819
      %853 = vmatprep.subr.mxu0 0.0
      %854 = vmatpush2.msra.mxu0 0.0
      %855 = vmatprep.subr.mxu0 0.0
      %856 = vmatpush2.msra.mxu0 0.0
      %857 = vmatprep.subr.mxu0 0.0
      %858 = vmatpush2.msra.mxu0 0.0
      %859 = vmatprep.subr.mxu0 0.0
      %860 = vmatpush2.msra.mxu0 0.0
      %861 = vmatprep.subr.mxu0 0.0
      %862 = vmatpush2.msra.mxu0 0.0
      %863 = vmatprep.subr.mxu0 0.0
      %864 = vmatpush2.msra.mxu0 0.0
      %865 = vmatprep.subr.mxu0 0.0
      %866 = vmatpush2.msra.mxu0 0.0
      %867 = vmatprep.subr.mxu0 0.0
      %868 = vmatpush2.msra.mxu0 0.0
      %869 = vmatprep.subr.mxu0 0.0
      %870 = vmatpush2.msra.mxu0 0.0
      %871 = vmatprep.subr.mxu0 0.0
      %872 = vmatpush2.msra.mxu0 0.0
      %873 = vmatprep.subr.mxu0 0.0
      %874 = vmatpush2.msra.mxu0 0.0
      %875 = vmatprep.subr.mxu0 0.0
      %876 = vmatpush2.msra.mxu0 0.0
      %877 = vmatprep.subr.mxu0 0.0
      %878 = vmatpush2.msra.mxu0 0.0
      %879 = vmatprep.subr.mxu0 0.0
      %880 = vmatpush2.msra.mxu0 0.0
      %881 = vmatprep.subr.mxu0 0.0
      %882 = vmatpush2.msra.mxu0 0.0
      %883 = vmatprep.subr.mxu0 0.0
      %884 = vmatpush2.msra.mxu0 0.0
      %885 = vmatprep.mubr.f32.mxu0 0.0
      %886 = vmatmul.mubr.f32.gmra.mxu0 %v816
      %v887 = vpop.f32.mrf.mxu0
      %v888 = vadd.f32 0.0, %v887
      %v889 = vpop.f32.mrf.mxu0
      %890 = vdwg.mxu0
      %v891 = vadd.f32 %v812, %v888
      %s892 = scalar_lea.vmem %s2, 64
      %v893 = vld [vmem:[%s892] sm:$0xff]
      %894 = vrot.lane.b32.xlu0 %v247, 127
      %v895 = vpop.permute.xlu0 %894
      %v897 = vsel %vm260, %v893, 0
      %v899 = vsel %vm264, %v895, 0
      %901 = vmatprep.subr.mxu0 0.0
      %902 = vmatpush1.msra.mxu0 0.0
      %903 = vmatprep.subr.mxu0 0.0
      %904 = vmatpush1.msra.mxu0 0.0
      %905 = vmatprep.subr.mxu0 0.0
      %906 = vmatpush1.msra.mxu0 0.0
      %907 = vmatprep.subr.mxu0 0.0
      %908 = vmatpush1.msra.mxu0 0.0
      %909 = vmatprep.subr.mxu0 0.0
      %910 = vmatpush1.msra.mxu0 0.0
      %911 = vmatprep.subr.mxu0 0.0
      %912 = vmatpush1.msra.mxu0 0.0
      %913 = vmatprep.subr.mxu0 0.0
      %914 = vmatpush1.msra.mxu0 0.0
      %915 = vmatprep.subr.mxu0 0.0
      %916 = vmatpush1.msra.mxu0 0.0
      %917 = vmatprep.subr.mxu0 0.0
      %918 = vmatpush1.msra.mxu0 0.0
      %919 = vmatprep.subr.mxu0 0.0
      %920 = vmatpush1.msra.mxu0 0.0
      %921 = vmatprep.subr.mxu0 0.0
      %922 = vmatpush1.msra.mxu0 0.0
      %923 = vmatprep.subr.mxu0 0.0
      %924 = vmatpush1.msra.mxu0 0.0
      %925 = vmatprep.subr.mxu0 0.0
      %926 = vmatpush1.msra.mxu0 0.0
      %927 = vmatprep.subr.mxu0 0.0
      %928 = vmatpush1.msra.mxu0 0.0
      %929 = vmatprep.subr.mxu0 0.0
      %930 = vmatpush1.msra.mxu0 0.0
      %931 = vmatprep.subr.mxu0 0.0
      %932 = vmatpush1.msra.mxu0 %v899
      %933 = vmatprep.subr.mxu0 0.0
      %934 = vmatpush2.msra.mxu0 0.0
      %935 = vmatprep.subr.mxu0 0.0
      %936 = vmatpush2.msra.mxu0 0.0
      %937 = vmatprep.subr.mxu0 0.0
      %938 = vmatpush2.msra.mxu0 0.0
      %939 = vmatprep.subr.mxu0 0.0
      %940 = vmatpush2.msra.mxu0 0.0
      %941 = vmatprep.subr.mxu0 0.0
      %942 = vmatpush2.msra.mxu0 0.0
      %943 = vmatprep.subr.mxu0 0.0
      %944 = vmatpush2.msra.mxu0 0.0
      %945 = vmatprep.subr.mxu0 0.0
      %946 = vmatpush2.msra.mxu0 0.0
      %947 = vmatprep.subr.mxu0 0.0
      %948 = vmatpush2.msra.mxu0 0.0
      %949 = vmatprep.subr.mxu0 0.0
      %950 = vmatpush2.msra.mxu0 0.0
      %951 = vmatprep.subr.mxu0 0.0
      %952 = vmatpush2.msra.mxu0 0.0
      %953 = vmatprep.subr.mxu0 0.0
      %954 = vmatpush2.msra.mxu0 0.0
      %955 = vmatprep.subr.mxu0 0.0
      %956 = vmatpush2.msra.mxu0 0.0
      %957 = vmatprep.subr.mxu0 0.0
      %958 = vmatpush2.msra.mxu0 0.0
      %959 = vmatprep.subr.mxu0 0.0
      %960 = vmatpush2.msra.mxu0 0.0
      %961 = vmatprep.subr.mxu0 0.0
      %962 = vmatpush2.msra.mxu0 0.0
      %963 = vmatprep.subr.mxu0 0.0
      %964 = vmatpush2.msra.mxu0 0.0
      %965 = vmatprep.mubr.f32.mxu0 0.0
      %966 = vmatmul.mubr.f32.gmra.mxu0 %v897
      %v967 = vpop.f32.mrf.mxu0
      %v968 = vadd.f32 0.0, %v967
      %v969 = vpop.f32.mrf.mxu0
      %970 = vdwg.mxu0
      %v971 = vadd.f32 %v891, %v968
      %s972 = scalar_lea.vmem %s2, 72
      %v973 = vld [vmem:[%s972] sm:$0xff]
      %974 = vrot.lane.b32.xlu0 %v249, 127
      %v975 = vpop.permute.xlu0 %974
      %v977 = vsel %vm260, %v973, 0
      %v979 = vsel %vm264, %v975, 0
      %981 = vmatprep.subr.mxu0 0.0
      %982 = vmatpush1.msra.mxu0 0.0
      %983 = vmatprep.subr.mxu0 0.0
      %984 = vmatpush1.msra.mxu0 0.0
      %985 = vmatprep.subr.mxu0 0.0
      %986 = vmatpush1.msra.mxu0 0.0
      %987 = vmatprep.subr.mxu0 0.0
      %988 = vmatpush1.msra.mxu0 0.0
      %989 = vmatprep.subr.mxu0 0.0
      %990 = vmatpush1.msra.mxu0 0.0
      %991 = vmatprep.subr.mxu0 0.0
      %992 = vmatpush1.msra.mxu0 0.0
      %993 = vmatprep.subr.mxu0 0.0
      %994 = vmatpush1.msra.mxu0 0.0
      %995 = vmatprep.subr.mxu0 0.0
      %996 = vmatpush1.msra.mxu0 0.0
      %997 = vmatprep.subr.mxu0 0.0
      %998 = vmatpush1.msra.mxu0 0.0
      %999 = vmatprep.subr.mxu0 0.0
      %1000 = vmatpush1.msra.mxu0 0.0
      %1001 = vmatprep.subr.mxu0 0.0
      %1002 = vmatpush1.msra.mxu0 0.0
      %1003 = vmatprep.subr.mxu0 0.0
      %1004 = vmatpush1.msra.mxu0 0.0
      %1005 = vmatprep.subr.mxu0 0.0
      %1006 = vmatpush1.msra.mxu0 0.0
      %1007 = vmatprep.subr.mxu0 0.0
      %1008 = vmatpush1.msra.mxu0 0.0
      %1009 = vmatprep.subr.mxu0 0.0
      %1010 = vmatpush1.msra.mxu0 0.0
      %1011 = vmatprep.subr.mxu0 0.0
      %1012 = vmatpush1.msra.mxu0 %v979
      %1013 = vmatprep.subr.mxu0 0.0
      %1014 = vmatpush2.msra.mxu0 0.0
      %1015 = vmatprep.subr.mxu0 0.0
      %1016 = vmatpush2.msra.mxu0 0.0
      %1017 = vmatprep.subr.mxu0 0.0
      %1018 = vmatpush2.msra.mxu0 0.0
      %1019 = vmatprep.subr.mxu0 0.0
      %1020 = vmatpush2.msra.mxu0 0.0
      %1021 = vmatprep.subr.mxu0 0.0
      %1022 = vmatpush2.msra.mxu0 0.0
      %1023 = vmatprep.subr.mxu0 0.0
      %1024 = vmatpush2.msra.mxu0 0.0
      %1025 = vmatprep.subr.mxu0 0.0
      %1026 = vmatpush2.msra.mxu0 0.0
      %1027 = vmatprep.subr.mxu0 0.0
      %1028 = vmatpush2.msra.mxu0 0.0
      %1029 = vmatprep.subr.mxu0 0.0
      %1030 = vmatpush2.msra.mxu0 0.0
      %1031 = vmatprep.subr.mxu0 0.0
      %1032 = vmatpush2.msra.mxu0 0.0
      %1033 = vmatprep.subr.mxu0 0.0
      %1034 = vmatpush2.msra.mxu0 0.0
      %1035 = vmatprep.subr.mxu0 0.0
      %1036 = vmatpush2.msra.mxu0 0.0
      %1037 = vmatprep.subr.mxu0 0.0
      %1038 = vmatpush2.msra.mxu0 0.0
      %1039 = vmatprep.subr.mxu0 0.0
      %1040 = vmatpush2.msra.mxu0 0.0
      %1041 = vmatprep.subr.mxu0 0.0
      %1042 = vmatpush2.msra.mxu0 0.0
      %1043 = vmatprep.subr.mxu0 0.0
      %1044 = vmatpush2.msra.mxu0 0.0
      %1045 = vmatprep.mubr.f32.mxu0 0.0
      %1046 = vmatmul.mubr.f32.gmra.mxu0 %v977
      %v1047 = vpop.f32.mrf.mxu0
      %v1048 = vadd.f32 0.0, %v1047
      %v1049 = vpop.f32.mrf.mxu0
      %1050 = vdwg.mxu0
      %v1051 = vadd.f32 %v971, %v1048
      %s1052 = scalar_lea.vmem %s2, 80
      %v1053 = vld [vmem:[%s1052] sm:$0xff]
      %1054 = vrot.lane.b32.xlu0 %v247, 126
      %v1055 = vpop.permute.xlu0 %1054
      %v1057 = vsel %vm260, %v1053, 0
      %v1059 = vsel %vm264, %v1055, 0
      %1061 = vmatprep.subr.mxu0 0.0
      %1062 = vmatpush1.msra.mxu0 0.0
      %1063 = vmatprep.subr.mxu0 0.0
      %1064 = vmatpush1.msra.mxu0 0.0
      %1065 = vmatprep.subr.mxu0 0.0
      %1066 = vmatpush1.msra.mxu0 0.0
      %1067 = vmatprep.subr.mxu0 0.0
      %1068 = vmatpush1.msra.mxu0 0.0
      %1069 = vmatprep.subr.mxu0 0.0
      %1070 = vmatpush1.msra.mxu0 0.0
      %1071 = vmatprep.subr.mxu0 0.0
      %1072 = vmatpush1.msra.mxu0 0.0
      %1073 = vmatprep.subr.mxu0 0.0
      %1074 = vmatpush1.msra.mxu0 0.0
      %1075 = vmatprep.subr.mxu0 0.0
      %1076 = vmatpush1.msra.mxu0 0.0
      %1077 = vmatprep.subr.mxu0 0.0
      %1078 = vmatpush1.msra.mxu0 0.0
      %1079 = vmatprep.subr.mxu0 0.0
      %1080 = vmatpush1.msra.mxu0 0.0
      %1081 = vmatprep.subr.mxu0 0.0
      %1082 = vmatpush1.msra.mxu0 0.0
      %1083 = vmatprep.subr.mxu0 0.0
      %1084 = vmatpush1.msra.mxu0 0.0
      %1085 = vmatprep.subr.mxu0 0.0
      %1086 = vmatpush1.msra.mxu0 0.0
      %1087 = vmatprep.subr.mxu0 0.0
      %1088 = vmatpush1.msra.mxu0 0.0
      %1089 = vmatprep.subr.mxu0 0.0
      %1090 = vmatpush1.msra.mxu0 0.0
      %1091 = vmatprep.subr.mxu0 0.0
      %1092 = vmatpush1.msra.mxu0 %v1059
      %1093 = vmatprep.subr.mxu0 0.0
      %1094 = vmatpush2.msra.mxu0 0.0
      %1095 = vmatprep.subr.mxu0 0.0
      %1096 = vmatpush2.msra.mxu0 0.0
      %1097 = vmatprep.subr.mxu0 0.0
      %1098 = vmatpush2.msra.mxu0 0.0
      %1099 = vmatprep.subr.mxu0 0.0
      %1100 = vmatpush2.msra.mxu0 0.0
      %1101 = vmatprep.subr.mxu0 0.0
      %1102 = vmatpush2.msra.mxu0 0.0
      %1103 = vmatprep.subr.mxu0 0.0
      %1104 = vmatpush2.msra.mxu0 0.0
      %1105 = vmatprep.subr.mxu0 0.0
      %1106 = vmatpush2.msra.mxu0 0.0
      %1107 = vmatprep.subr.mxu0 0.0
      %1108 = vmatpush2.msra.mxu0 0.0
      %1109 = vmatprep.subr.mxu0 0.0
      %1110 = vmatpush2.msra.mxu0 0.0
      %1111 = vmatprep.subr.mxu0 0.0
      %1112 = vmatpush2.msra.mxu0 0.0
      %1113 = vmatprep.subr.mxu0 0.0
      %1114 = vmatpush2.msra.mxu0 0.0
      %1115 = vmatprep.subr.mxu0 0.0
      %1116 = vmatpush2.msra.mxu0 0.0
      %1117 = vmatprep.subr.mxu0 0.0
      %1118 = vmatpush2.msra.mxu0 0.0
      %1119 = vmatprep.subr.mxu0 0.0
      %1120 = vmatpush2.msra.mxu0 0.0
      %1121 = vmatprep.subr.mxu0 0.0
      %1122 = vmatpush2.msra.mxu0 0.0
      %1123 = vmatprep.subr.mxu0 0.0
      %1124 = vmatpush2.msra.mxu0 0.0
      %1125 = vmatprep.mubr.f32.mxu0 0.0
      %1126 = vmatmul.mubr.f32.gmra.mxu0 %v1057
      %v1127 = vpop.f32.mrf.mxu0
      %v1128 = vadd.f32 0.0, %v1127
      %v1129 = vpop.f32.mrf.mxu0
      %1130 = vdwg.mxu0
      %v1131 = vadd.f32 %v1051, %v1128
      %s1132 = scalar_lea.vmem %s2, 88
      %v1133 = vld [vmem:[%s1132] sm:$0xff]
      %1134 = vrot.lane.b32.xlu0 %v249, 126
      %v1135 = vpop.permute.xlu0 %1134
      %v1137 = vsel %vm260, %v1133, 0
      %v1139 = vsel %vm264, %v1135, 0
      %1141 = vmatprep.subr.mxu0 0.0
      %1142 = vmatpush1.msra.mxu0 0.0
      %1143 = vmatprep.subr.mxu0 0.0
      %1144 = vmatpush1.msra.mxu0 0.0
      %1145 = vmatprep.subr.mxu0 0.0
      %1146 = vmatpush1.msra.mxu0 0.0
      %1147 = vmatprep.subr.mxu0 0.0
      %1148 = vmatpush1.msra.mxu0 0.0
      %1149 = vmatprep.subr.mxu0 0.0
      %1150 = vmatpush1.msra.mxu0 0.0
      %1151 = vmatprep.subr.mxu0 0.0
      %1152 = vmatpush1.msra.mxu0 0.0
      %1153 = vmatprep.subr.mxu0 0.0
      %1154 = vmatpush1.msra.mxu0 0.0
      %1155 = vmatprep.subr.mxu0 0.0
      %1156 = vmatpush1.msra.mxu0 0.0
      %1157 = vmatprep.subr.mxu0 0.0
      %1158 = vmatpush1.msra.mxu0 0.0
      %1159 = vmatprep.subr.mxu0 0.0
      %1160 = vmatpush1.msra.mxu0 0.0
      %1161 = vmatprep.subr.mxu0 0.0
      %1162 = vmatpush1.msra.mxu0 0.0
      %1163 = vmatprep.subr.mxu0 0.0
      %1164 = vmatpush1.msra.mxu0 0.0
      %1165 = vmatprep.subr.mxu0 0.0
      %1166 = vmatpush1.msra.mxu0 0.0
      %1167 = vmatprep.subr.mxu0 0.0
      %1168 = vmatpush1.msra.mxu0 0.0
      %1169 = vmatprep.subr.mxu0 0.0
      %1170 = vmatpush1.msra.mxu0 0.0
      %1171 = vmatprep.subr.mxu0 0.0
      %1172 = vmatpush1.msra.mxu0 %v1139
      %1173 = vmatprep.subr.mxu0 0.0
      %1174 = vmatpush2.msra.mxu0 0.0
      %1175 = vmatprep.subr.mxu0 0.0
      %1176 = vmatpush2.msra.mxu0 0.0
      %1177 = vmatprep.subr.mxu0 0.0
      %1178 = vmatpush2.msra.mxu0 0.0
      %1179 = vmatprep.subr.mxu0 0.0
      %1180 = vmatpush2.msra.mxu0 0.0
      %1181 = vmatprep.subr.mxu0 0.0
      %1182 = vmatpush2.msra.mxu0 0.0
      %1183 = vmatprep.subr.mxu0 0.0
      %1184 = vmatpush2.msra.mxu0 0.0
      %1185 = vmatprep.subr.mxu0 0.0
      %1186 = vmatpush2.msra.mxu0 0.0
      %1187 = vmatprep.subr.mxu0 0.0
      %1188 = vmatpush2.msra.mxu0 0.0
      %1189 = vmatprep.subr.mxu0 0.0
      %1190 = vmatpush2.msra.mxu0 0.0
      %1191 = vmatprep.subr.mxu0 0.0
      %1192 = vmatpush2.msra.mxu0 0.0
      %1193 = vmatprep.subr.mxu0 0.0
      %1194 = vmatpush2.msra.mxu0 0.0
      %1195 = vmatprep.subr.mxu0 0.0
      %1196 = vmatpush2.msra.mxu0 0.0
      %1197 = vmatprep.subr.mxu0 0.0
      %1198 = vmatpush2.msra.mxu0 0.0
      %1199 = vmatprep.subr.mxu0 0.0
      %1200 = vmatpush2.msra.mxu0 0.0
      %1201 = vmatprep.subr.mxu0 0.0
      %1202 = vmatpush2.msra.mxu0 0.0
      %1203 = vmatprep.subr.mxu0 0.0
      %1204 = vmatpush2.msra.mxu0 0.0
      %1205 = vmatprep.mubr.f32.mxu0 0.0
      %1206 = vmatmul.mubr.f32.gmra.mxu0 %v1137
      %v1207 = vpop.f32.mrf.mxu0
      %v1208 = vadd.f32 0.0, %v1207
      %v1209 = vpop.f32.mrf.mxu0
      %1210 = vdwg.mxu0
      %v1211 = vadd.f32 %v1131, %v1208
      %s1212 = scalar_lea.vmem %s2, 96
      %v1213 = vld [vmem:[%s1212] sm:$0xff]
      %1214 = vrot.lane.b32.xlu0 %v243, 118
      %v1215 = vpop.permute.xlu0 %1214
      %v1217 = vsel %vm260, %v1213, 0
      %v1219 = vsel %vm264, %v1215, 0
      %1221 = vmatprep.subr.mxu0 0.0
      %1222 = vmatpush1.msra.mxu0 0.0
      %1223 = vmatprep.subr.mxu0 0.0
      %1224 = vmatpush1.msra.mxu0 0.0
      %1225 = vmatprep.subr.mxu0 0.0
      %1226 = vmatpush1.msra.mxu0 0.0
      %1227 = vmatprep.subr.mxu0 0.0
      %1228 = vmatpush1.msra.mxu0 0.0
      %1229 = vmatprep.subr.mxu0 0.0
      %1230 = vmatpush1.msra.mxu0 0.0
      %1231 = vmatprep.subr.mxu0 0.0
      %1232 = vmatpush1.msra.mxu0 0.0
      %1233 = vmatprep.subr.mxu0 0.0
      %1234 = vmatpush1.msra.mxu0 0.0
      %1235 = vmatprep.subr.mxu0 0.0
      %1236 = vmatpush1.msra.mxu0 0.0
      %1237 = vmatprep.subr.mxu0 0.0
      %1238 = vmatpush1.msra.mxu0 0.0
      %1239 = vmatprep.subr.mxu0 0.0
      %1240 = vmatpush1.msra.mxu0 0.0
      %1241 = vmatprep.subr.mxu0 0.0
      %1242 = vmatpush1.msra.mxu0 0.0
      %1243 = vmatprep.subr.mxu0 0.0
      %1244 = vmatpush1.msra.mxu0 0.0
      %1245 = vmatprep.subr.mxu0 0.0
      %1246 = vmatpush1.msra.mxu0 0.0
      %1247 = vmatprep.subr.mxu0 0.0
      %1248 = vmatpush1.msra.mxu0 0.0
      %1249 = vmatprep.subr.mxu0 0.0
      %1250 = vmatpush1.msra.mxu0 0.0
      %1251 = vmatprep.subr.mxu0 0.0
      %1252 = vmatpush1.msra.mxu0 %v1219
      %1253 = vmatprep.subr.mxu0 0.0
      %1254 = vmatpush2.msra.mxu0 0.0
      %1255 = vmatprep.subr.mxu0 0.0
      %1256 = vmatpush2.msra.mxu0 0.0
      %1257 = vmatprep.subr.mxu0 0.0
      %1258 = vmatpush2.msra.mxu0 0.0
      %1259 = vmatprep.subr.mxu0 0.0
      %1260 = vmatpush2.msra.mxu0 0.0
      %1261 = vmatprep.subr.mxu0 0.0
      %1262 = vmatpush2.msra.mxu0 0.0
      %1263 = vmatprep.subr.mxu0 0.0
      %1264 = vmatpush2.msra.mxu0 0.0
      %1265 = vmatprep.subr.mxu0 0.0
      %1266 = vmatpush2.msra.mxu0 0.0
      %1267 = vmatprep.subr.mxu0 0.0
      %1268 = vmatpush2.msra.mxu0 0.0
      %1269 = vmatprep.subr.mxu0 0.0
      %1270 = vmatpush2.msra.mxu0 0.0
      %1271 = vmatprep.subr.mxu0 0.0
      %1272 = vmatpush2.msra.mxu0 0.0
      %1273 = vmatprep.subr.mxu0 0.0
      %1274 = vmatpush2.msra.mxu0 0.0
      %1275 = vmatprep.subr.mxu0 0.0
      %1276 = vmatpush2.msra.mxu0 0.0
      %1277 = vmatprep.subr.mxu0 0.0
      %1278 = vmatpush2.msra.mxu0 0.0
      %1279 = vmatprep.subr.mxu0 0.0
      %1280 = vmatpush2.msra.mxu0 0.0
      %1281 = vmatprep.subr.mxu0 0.0
      %1282 = vmatpush2.msra.mxu0 0.0
      %1283 = vmatprep.subr.mxu0 0.0
      %1284 = vmatpush2.msra.mxu0 0.0
      %1285 = vmatprep.mubr.f32.mxu0 0.0
      %1286 = vmatmul.mubr.f32.gmra.mxu0 %v1217
      %v1287 = vpop.f32.mrf.mxu0
      %v1288 = vadd.f32 0.0, %v1287
      %v1289 = vpop.f32.mrf.mxu0
      %1290 = vdwg.mxu0
      %v1291 = vadd.f32 %v1211, %v1288
      %s1292 = scalar_lea.vmem %s2, 104
      %v1293 = vld [vmem:[%s1292] sm:$0xff]
      %1294 = vrot.lane.b32.xlu0 %v245, 118
      %v1295 = vpop.permute.xlu0 %1294
      %v1297 = vsel %vm260, %v1293, 0
      %v1299 = vsel %vm264, %v1295, 0
      %1301 = vmatprep.subr.mxu0 0.0
      %1302 = vmatpush1.msra.mxu0 0.0
      %1303 = vmatprep.subr.mxu0 0.0
      %1304 = vmatpush1.msra.mxu0 0.0
      %1305 = vmatprep.subr.mxu0 0.0
      %1306 = vmatpush1.msra.mxu0 0.0
      %1307 = vmatprep.subr.mxu0 0.0
      %1308 = vmatpush1.msra.mxu0 0.0
      %1309 = vmatprep.subr.mxu0 0.0
      %1310 = vmatpush1.msra.mxu0 0.0
      %1311 = vmatprep.subr.mxu0 0.0
      %1312 = vmatpush1.msra.mxu0 0.0
      %1313 = vmatprep.subr.mxu0 0.0
      %1314 = vmatpush1.msra.mxu0 0.0
      %1315 = vmatprep.subr.mxu0 0.0
      %1316 = vmatpush1.msra.mxu0 0.0
      %1317 = vmatprep.subr.mxu0 0.0
      %1318 = vmatpush1.msra.mxu0 0.0
      %1319 = vmatprep.subr.mxu0 0.0
      %1320 = vmatpush1.msra.mxu0 0.0
      %1321 = vmatprep.subr.mxu0 0.0
      %1322 = vmatpush1.msra.mxu0 0.0
      %1323 = vmatprep.subr.mxu0 0.0
      %1324 = vmatpush1.msra.mxu0 0.0
      %1325 = vmatprep.subr.mxu0 0.0
      %1326 = vmatpush1.msra.mxu0 0.0
      %1327 = vmatprep.subr.mxu0 0.0
      %1328 = vmatpush1.msra.mxu0 0.0
      %1329 = vmatprep.subr.mxu0 0.0
      %1330 = vmatpush1.msra.mxu0 0.0
      %1331 = vmatprep.subr.mxu0 0.0
      %1332 = vmatpush1.msra.mxu0 %v1299
      %1333 = vmatprep.subr.mxu0 0.0
      %1334 = vmatpush2.msra.mxu0 0.0
      %1335 = vmatprep.subr.mxu0 0.0
      %1336 = vmatpush2.msra.mxu0 0.0
      %1337 = vmatprep.subr.mxu0 0.0
      %1338 = vmatpush2.msra.mxu0 0.0
      %1339 = vmatprep.subr.mxu0 0.0
      %1340 = vmatpush2.msra.mxu0 0.0
      %1341 = vmatprep.subr.mxu0 0.0
      %1342 = vmatpush2.msra.mxu0 0.0
      %1343 = vmatprep.subr.mxu0 0.0
      %1344 = vmatpush2.msra.mxu0 0.0
      %1345 = vmatprep.subr.mxu0 0.0
      %1346 = vmatpush2.msra.mxu0 0.0
      %1347 = vmatprep.subr.mxu0 0.0
      %1348 = vmatpush2.msra.mxu0 0.0
      %1349 = vmatprep.subr.mxu0 0.0
      %1350 = vmatpush2.msra.mxu0 0.0
      %1351 = vmatprep.subr.mxu0 0.0
      %1352 = vmatpush2.msra.mxu0 0.0
      %1353 = vmatprep.subr.mxu0 0.0
      %1354 = vmatpush2.msra.mxu0 0.0
      %1355 = vmatprep.subr.mxu0 0.0
      %1356 = vmatpush2.msra.mxu0 0.0
      %1357 = vmatprep.subr.mxu0 0.0
      %1358 = vmatpush2.msra.mxu0 0.0
      %1359 = vmatprep.subr.mxu0 0.0
      %1360 = vmatpush2.msra.mxu0 0.0
      %1361 = vmatprep.subr.mxu0 0.0
      %1362 = vmatpush2.msra.mxu0 0.0
      %1363 = vmatprep.subr.mxu0 0.0
      %1364 = vmatpush2.msra.mxu0 0.0
      %1365 = vmatprep.mubr.f32.mxu0 0.0
      %1366 = vmatmul.mubr.f32.gmra.mxu0 %v1297
      %v1367 = vpop.f32.mrf.mxu0
      %v1368 = vadd.f32 0.0, %v1367
      %v1369 = vpop.f32.mrf.mxu0
      %1370 = vdwg.mxu0
      %v1371 = vadd.f32 %v1291, %v1368
      %s1372 = scalar_lea.vmem %s2, 112
      %v1373 = vld [vmem:[%s1372] sm:$0xff]
      %1374 = vrot.lane.b32.xlu0 %v243, 117
      %v1375 = vpop.permute.xlu0 %1374
      %v1377 = vsel %vm260, %v1373, 0
      %v1379 = vsel %vm264, %v1375, 0
      %1381 = vmatprep.subr.mxu0 0.0
      %1382 = vmatpush1.msra.mxu0 0.0
      %1383 = vmatprep.subr.mxu0 0.0
      %1384 = vmatpush1.msra.mxu0 0.0
      %1385 = vmatprep.subr.mxu0 0.0
      %1386 = vmatpush1.msra.mxu0 0.0
      %1387 = vmatprep.subr.mxu0 0.0
      %1388 = vmatpush1.msra.mxu0 0.0
      %1389 = vmatprep.subr.mxu0 0.0
      %1390 = vmatpush1.msra.mxu0 0.0
      %1391 = vmatprep.subr.mxu0 0.0
      %1392 = vmatpush1.msra.mxu0 0.0
      %1393 = vmatprep.subr.mxu0 0.0
      %1394 = vmatpush1.msra.mxu0 0.0
      %1395 = vmatprep.subr.mxu0 0.0
      %1396 = vmatpush1.msra.mxu0 0.0
      %1397 = vmatprep.subr.mxu0 0.0
      %1398 = vmatpush1.msra.mxu0 0.0
      %1399 = vmatprep.subr.mxu0 0.0
      %1400 = vmatpush1.msra.mxu0 0.0
      %1401 = vmatprep.subr.mxu0 0.0
      %1402 = vmatpush1.msra.mxu0 0.0
      %1403 = vmatprep.subr.mxu0 0.0
      %1404 = vmatpush1.msra.mxu0 0.0
      %1405 = vmatprep.subr.mxu0 0.0
      %1406 = vmatpush1.msra.mxu0 0.0
      %1407 = vmatprep.subr.mxu0 0.0
      %1408 = vmatpush1.msra.mxu0 0.0
      %1409 = vmatprep.subr.mxu0 0.0
      %1410 = vmatpush1.msra.mxu0 0.0
      %1411 = vmatprep.subr.mxu0 0.0
      %1412 = vmatpush1.msra.mxu0 %v1379
      %1413 = vmatprep.subr.mxu0 0.0
      %1414 = vmatpush2.msra.mxu0 0.0
      %1415 = vmatprep.subr.mxu0 0.0
      %1416 = vmatpush2.msra.mxu0 0.0
      %1417 = vmatprep.subr.mxu0 0.0
      %1418 = vmatpush2.msra.mxu0 0.0
      %1419 = vmatprep.subr.mxu0 0.0
      %1420 = vmatpush2.msra.mxu0 0.0
      %1421 = vmatprep.subr.mxu0 0.0
      %1422 = vmatpush2.msra.mxu0 0.0
      %1423 = vmatprep.subr.mxu0 0.0
      %1424 = vmatpush2.msra.mxu0 0.0
      %1425 = vmatprep.subr.mxu0 0.0
      %1426 = vmatpush2.msra.mxu0 0.0
      %1427 = vmatprep.subr.mxu0 0.0
      %1428 = vmatpush2.msra.mxu0 0.0
      %1429 = vmatprep.subr.mxu0 0.0
      %1430 = vmatpush2.msra.mxu0 0.0
      %1431 = vmatprep.subr.mxu0 0.0
      %1432 = vmatpush2.msra.mxu0 0.0
      %1433 = vmatprep.subr.mxu0 0.0
      %1434 = vmatpush2.msra.mxu0 0.0
      %1435 = vmatprep.subr.mxu0 0.0
      %1436 = vmatpush2.msra.mxu0 0.0
      %1437 = vmatprep.subr.mxu0 0.0
      %1438 = vmatpush2.msra.mxu0 0.0
      %1439 = vmatprep.subr.mxu0 0.0
      %1440 = vmatpush2.msra.mxu0 0.0
      %1441 = vmatprep.subr.mxu0 0.0
      %1442 = vmatpush2.msra.mxu0 0.0
      %1443 = vmatprep.subr.mxu0 0.0
      %1444 = vmatpush2.msra.mxu0 0.0
      %1445 = vmatprep.mubr.f32.mxu0 0.0
      %1446 = vmatmul.mubr.f32.gmra.mxu0 %v1377
      %v1447 = vpop.f32.mrf.mxu0
      %v1448 = vadd.f32 0.0, %v1447
      %v1449 = vpop.f32.mrf.mxu0
      %1450 = vdwg.mxu0
      %v1451 = vadd.f32 %v1371, %v1448
      %s1452 = scalar_lea.vmem %s2, 120
      %v1453 = vld [vmem:[%s1452] sm:$0xff]
      %1454 = vrot.lane.b32.xlu0 %v245, 117
      %v1455 = vpop.permute.xlu0 %1454
      %v1457 = vsel %vm260, %v1453, 0
      %v1459 = vsel %vm264, %v1455, 0
      %1461 = vmatprep.subr.mxu0 0.0
      %1462 = vmatpush1.msra.mxu0 0.0
      %1463 = vmatprep.subr.mxu0 0.0
      %1464 = vmatpush1.msra.mxu0 0.0
      %1465 = vmatprep.subr.mxu0 0.0
      %1466 = vmatpush1.msra.mxu0 0.0
      %1467 = vmatprep.subr.mxu0 0.0
      %1468 = vmatpush1.msra.mxu0 0.0
      %1469 = vmatprep.subr.mxu0 0.0
      %1470 = vmatpush1.msra.mxu0 0.0
      %1471 = vmatprep.subr.mxu0 0.0
      %1472 = vmatpush1.msra.mxu0 0.0
      %1473 = vmatprep.subr.mxu0 0.0
      %1474 = vmatpush1.msra.mxu0 0.0
      %1475 = vmatprep.subr.mxu0 0.0
      %1476 = vmatpush1.msra.mxu0 0.0
      %1477 = vmatprep.subr.mxu0 0.0
      %1478 = vmatpush1.msra.mxu0 0.0
      %1479 = vmatprep.subr.mxu0 0.0
      %1480 = vmatpush1.msra.mxu0 0.0
      %1481 = vmatprep.subr.mxu0 0.0
      %1482 = vmatpush1.msra.mxu0 0.0
      %1483 = vmatprep.subr.mxu0 0.0
      %1484 = vmatpush1.msra.mxu0 0.0
      %1485 = vmatprep.subr.mxu0 0.0
      %1486 = vmatpush1.msra.mxu0 0.0
      %1487 = vmatprep.subr.mxu0 0.0
      %1488 = vmatpush1.msra.mxu0 0.0
      %1489 = vmatprep.subr.mxu0 0.0
      %1490 = vmatpush1.msra.mxu0 0.0
      %1491 = vmatprep.subr.mxu0 0.0
      %1492 = vmatpush1.msra.mxu0 %v1459
      %1493 = vmatprep.subr.mxu0 0.0
      %1494 = vmatpush2.msra.mxu0 0.0
      %1495 = vmatprep.subr.mxu0 0.0
      %1496 = vmatpush2.msra.mxu0 0.0
      %1497 = vmatprep.subr.mxu0 0.0
      %1498 = vmatpush2.msra.mxu0 0.0
      %1499 = vmatprep.subr.mxu0 0.0
      %1500 = vmatpush2.msra.mxu0 0.0
      %1501 = vmatprep.subr.mxu0 0.0
      %1502 = vmatpush2.msra.mxu0 0.0
      %1503 = vmatprep.subr.mxu0 0.0
      %1504 = vmatpush2.msra.mxu0 0.0
      %1505 = vmatprep.subr.mxu0 0.0
      %1506 = vmatpush2.msra.mxu0 0.0
      %1507 = vmatprep.subr.mxu0 0.0
      %1508 = vmatpush2.msra.mxu0 0.0
      %1509 = vmatprep.subr.mxu0 0.0
      %1510 = vmatpush2.msra.mxu0 0.0
      %1511 = vmatprep.subr.mxu0 0.0
      %1512 = vmatpush2.msra.mxu0 0.0
      %1513 = vmatprep.subr.mxu0 0.0
      %1514 = vmatpush2.msra.mxu0 0.0
      %1515 = vmatprep.subr.mxu0 0.0
      %1516 = vmatpush2.msra.mxu0 0.0
      %1517 = vmatprep.subr.mxu0 0.0
      %1518 = vmatpush2.msra.mxu0 0.0
      %1519 = vmatprep.subr.mxu0 0.0
      %1520 = vmatpush2.msra.mxu0 0.0
      %1521 = vmatprep.subr.mxu0 0.0
      %1522 = vmatpush2.msra.mxu0 0.0
      %1523 = vmatprep.subr.mxu0 0.0
      %1524 = vmatpush2.msra.mxu0 0.0
      %1525 = vmatprep.mubr.f32.mxu0 0.0
      %1526 = vmatmul.mubr.f32.gmra.mxu0 %v1457
      %v1527 = vpop.f32.mrf.mxu0
      %v1528 = vadd.f32 0.0, %v1527
      %v1529 = vpop.f32.mrf.mxu0
      %1530 = vdwg.mxu0
      %v1531 = vadd.f32 %v1451, %v1528
      %s1532 = scalar_lea.vmem %s2, 128
      %v1533 = vld [vmem:[%s1532] sm:$0xff]
      %1534 = vrot.lane.b32.xlu0 %v243, 116
      %v1535 = vpop.permute.xlu0 %1534
      %v1537 = vsel %vm260, %v1533, 0
      %v1539 = vsel %vm264, %v1535, 0
      %1541 = vmatprep.subr.mxu0 0.0
      %1542 = vmatpush1.msra.mxu0 0.0
      %1543 = vmatprep.subr.mxu0 0.0
      %1544 = vmatpush1.msra.mxu0 0.0
      %1545 = vmatprep.subr.mxu0 0.0
      %1546 = vmatpush1.msra.mxu0 0.0
      %1547 = vmatprep.subr.mxu0 0.0
      %1548 = vmatpush1.msra.mxu0 0.0
      %1549 = vmatprep.subr.mxu0 0.0
      %1550 = vmatpush1.msra.mxu0 0.0
      %1551 = vmatprep.subr.mxu0 0.0
      %1552 = vmatpush1.msra.mxu0 0.0
      %1553 = vmatprep.subr.mxu0 0.0
      %1554 = vmatpush1.msra.mxu0 0.0
      %1555 = vmatprep.subr.mxu0 0.0
      %1556 = vmatpush1.msra.mxu0 0.0
      %1557 = vmatprep.subr.mxu0 0.0
      %1558 = vmatpush1.msra.mxu0 0.0
      %1559 = vmatprep.subr.mxu0 0.0
      %1560 = vmatpush1.msra.mxu0 0.0
      %1561 = vmatprep.subr.mxu0 0.0
      %1562 = vmatpush1.msra.mxu0 0.0
      %1563 = vmatprep.subr.mxu0 0.0
      %1564 = vmatpush1.msra.mxu0 0.0
      %1565 = vmatprep.subr.mxu0 0.0
      %1566 = vmatpush1.msra.mxu0 0.0
      %1567 = vmatprep.subr.mxu0 0.0
      %1568 = vmatpush1.msra.mxu0 0.0
      %1569 = vmatprep.subr.mxu0 0.0
      %1570 = vmatpush1.msra.mxu0 0.0
      %1571 = vmatprep.subr.mxu0 0.0
      %1572 = vmatpush1.msra.mxu0 %v1539
      %1573 = vmatprep.subr.mxu0 0.0
      %1574 = vmatpush2.msra.mxu0 0.0
      %1575 = vmatprep.subr.mxu0 0.0
      %1576 = vmatpush2.msra.mxu0 0.0
      %1577 = vmatprep.subr.mxu0 0.0
      %1578 = vmatpush2.msra.mxu0 0.0
      %1579 = vmatprep.subr.mxu0 0.0
      %1580 = vmatpush2.msra.mxu0 0.0
      %1581 = vmatprep.subr.mxu0 0.0
      %1582 = vmatpush2.msra.mxu0 0.0
      %1583 = vmatprep.subr.mxu0 0.0
      %1584 = vmatpush2.msra.mxu0 0.0
      %1585 = vmatprep.subr.mxu0 0.0
      %1586 = vmatpush2.msra.mxu0 0.0
      %1587 = vmatprep.subr.mxu0 0.0
      %1588 = vmatpush2.msra.mxu0 0.0
      %1589 = vmatprep.subr.mxu0 0.0
      %1590 = vmatpush2.msra.mxu0 0.0
      %1591 = vmatprep.subr.mxu0 0.0
      %1592 = vmatpush2.msra.mxu0 0.0
      %1593 = vmatprep.subr.mxu0 0.0
      %1594 = vmatpush2.msra.mxu0 0.0
      %1595 = vmatprep.subr.mxu0 0.0
      %1596 = vmatpush2.msra.mxu0 0.0
      %1597 = vmatprep.subr.mxu0 0.0
      %1598 = vmatpush2.msra.mxu0 0.0
      %1599 = vmatprep.subr.mxu0 0.0
      %1600 = vmatpush2.msra.mxu0 0.0
      %1601 = vmatprep.subr.mxu0 0.0
      %1602 = vmatpush2.msra.mxu0 0.0
      %1603 = vmatprep.subr.mxu0 0.0
      %1604 = vmatpush2.msra.mxu0 0.0
      %1605 = vmatprep.mubr.f32.mxu0 0.0
      %1606 = vmatmul.mubr.f32.gmra.mxu0 %v1537
      %v1607 = vpop.f32.mrf.mxu0
      %v1608 = vadd.f32 0.0, %v1607
      %v1609 = vpop.f32.mrf.mxu0
      %1610 = vdwg.mxu0
      %v1611 = vadd.f32 %v1531, %v1608
      %s1612 = scalar_lea.vmem %s2, 136
      %v1613 = vld [vmem:[%s1612] sm:$0xff]
      %1614 = vrot.lane.b32.xlu0 %v245, 116
      %v1615 = vpop.permute.xlu0 %1614
      %v1617 = vsel %vm260, %v1613, 0
      %v1619 = vsel %vm264, %v1615, 0
      %1621 = vmatprep.subr.mxu0 0.0
      %1622 = vmatpush1.msra.mxu0 0.0
      %1623 = vmatprep.subr.mxu0 0.0
      %1624 = vmatpush1.msra.mxu0 0.0
      %1625 = vmatprep.subr.mxu0 0.0
      %1626 = vmatpush1.msra.mxu0 0.0
      %1627 = vmatprep.subr.mxu0 0.0
      %1628 = vmatpush1.msra.mxu0 0.0
      %1629 = vmatprep.subr.mxu0 0.0
      %1630 = vmatpush1.msra.mxu0 0.0
      %1631 = vmatprep.subr.mxu0 0.0
      %1632 = vmatpush1.msra.mxu0 0.0
      %1633 = vmatprep.subr.mxu0 0.0
      %1634 = vmatpush1.msra.mxu0 0.0
      %1635 = vmatprep.subr.mxu0 0.0
      %1636 = vmatpush1.msra.mxu0 0.0
      %1637 = vmatprep.subr.mxu0 0.0
      %1638 = vmatpush1.msra.mxu0 0.0
      %1639 = vmatprep.subr.mxu0 0.0
      %1640 = vmatpush1.msra.mxu0 0.0
      %1641 = vmatprep.subr.mxu0 0.0
      %1642 = vmatpush1.msra.mxu0 0.0
      %1643 = vmatprep.subr.mxu0 0.0
      %1644 = vmatpush1.msra.mxu0 0.0
      %1645 = vmatprep.subr.mxu0 0.0
      %1646 = vmatpush1.msra.mxu0 0.0
      %1647 = vmatprep.subr.mxu0 0.0
      %1648 = vmatpush1.msra.mxu0 0.0
      %1649 = vmatprep.subr.mxu0 0.0
      %1650 = vmatpush1.msra.mxu0 0.0
      %1651 = vmatprep.subr.mxu0 0.0
      %1652 = vmatpush1.msra.mxu0 %v1619
      %1653 = vmatprep.subr.mxu0 0.0
      %1654 = vmatpush2.msra.mxu0 0.0
      %1655 = vmatprep.subr.mxu0 0.0
      %1656 = vmatpush2.msra.mxu0 0.0
      %1657 = vmatprep.subr.mxu0 0.0
      %1658 = vmatpush2.msra.mxu0 0.0
      %1659 = vmatprep.subr.mxu0 0.0
      %1660 = vmatpush2.msra.mxu0 0.0
      %1661 = vmatprep.subr.mxu0 0.0
      %1662 = vmatpush2.msra.mxu0 0.0
      %1663 = vmatprep.subr.mxu0 0.0
      %1664 = vmatpush2.msra.mxu0 0.0
      %1665 = vmatprep.subr.mxu0 0.0
      %1666 = vmatpush2.msra.mxu0 0.0
      %1667 = vmatprep.subr.mxu0 0.0
      %1668 = vmatpush2.msra.mxu0 0.0
      %1669 = vmatprep.subr.mxu0 0.0
      %1670 = vmatpush2.msra.mxu0 0.0
      %1671 = vmatprep.subr.mxu0 0.0
      %1672 = vmatpush2.msra.mxu0 0.0
      %1673 = vmatprep.subr.mxu0 0.0
      %1674 = vmatpush2.msra.mxu0 0.0
      %1675 = vmatprep.subr.mxu0 0.0
      %1676 = vmatpush2.msra.mxu0 0.0
      %1677 = vmatprep.subr.mxu0 0.0
      %1678 = vmatpush2.msra.mxu0 0.0
      %1679 = vmatprep.subr.mxu0 0.0
      %1680 = vmatpush2.msra.mxu0 0.0
      %1681 = vmatprep.subr.mxu0 0.0
      %1682 = vmatpush2.msra.mxu0 0.0
      %1683 = vmatprep.subr.mxu0 0.0
      %1684 = vmatpush2.msra.mxu0 0.0
      %1685 = vmatprep.mubr.f32.mxu0 0.0
      %1686 = vmatmul.mubr.f32.gmra.mxu0 %v1617
      %v1687 = vpop.f32.mrf.mxu0
      %v1688 = vadd.f32 0.0, %v1687
      %v1689 = vpop.f32.mrf.mxu0
      %1690 = vdwg.mxu0
      %v1691 = vadd.f32 %v1611, %v1688
      %s1692 = scalar_lea.vmem %s2, 144
      %v1693 = vld [vmem:[%s1692] sm:$0xff]
      %1694 = vrot.lane.b32.xlu0 %v247, 118
      %v1695 = vpop.permute.xlu0 %1694
      %v1697 = vsel %vm260, %v1693, 0
      %v1699 = vsel %vm264, %v1695, 0
      %1701 = vmatprep.subr.mxu0 0.0
      %1702 = vmatpush1.msra.mxu0 0.0
      %1703 = vmatprep.subr.mxu0 0.0
      %1704 = vmatpush1.msra.mxu0 0.0
      %1705 = vmatprep.subr.mxu0 0.0
      %1706 = vmatpush1.msra.mxu0 0.0
      %1707 = vmatprep.subr.mxu0 0.0
      %1708 = vmatpush1.msra.mxu0 0.0
      %1709 = vmatprep.subr.mxu0 0.0
      %1710 = vmatpush1.msra.mxu0 0.0
      %1711 = vmatprep.subr.mxu0 0.0
      %1712 = vmatpush1.msra.mxu0 0.0
      %1713 = vmatprep.subr.mxu0 0.0
      %1714 = vmatpush1.msra.mxu0 0.0
      %1715 = vmatprep.subr.mxu0 0.0
      %1716 = vmatpush1.msra.mxu0 0.0
      %1717 = vmatprep.subr.mxu0 0.0
      %1718 = vmatpush1.msra.mxu0 0.0
      %1719 = vmatprep.subr.mxu0 0.0
      %1720 = vmatpush1.msra.mxu0 0.0
      %1721 = vmatprep.subr.mxu0 0.0
      %1722 = vmatpush1.msra.mxu0 0.0
      %1723 = vmatprep.subr.mxu0 0.0
      %1724 = vmatpush1.msra.mxu0 0.0
      %1725 = vmatprep.subr.mxu0 0.0
      %1726 = vmatpush1.msra.mxu0 0.0
      %1727 = vmatprep.subr.mxu0 0.0
      %1728 = vmatpush1.msra.mxu0 0.0
      %1729 = vmatprep.subr.mxu0 0.0
      %1730 = vmatpush1.msra.mxu0 0.0
      %1731 = vmatprep.subr.mxu0 0.0
      %1732 = vmatpush1.msra.mxu0 %v1699
      %1733 = vmatprep.subr.mxu0 0.0
      %1734 = vmatpush2.msra.mxu0 0.0
      %1735 = vmatprep.subr.mxu0 0.0
      %1736 = vmatpush2.msra.mxu0 0.0
      %1737 = vmatprep.subr.mxu0 0.0
      %1738 = vmatpush2.msra.mxu0 0.0
      %1739 = vmatprep.subr.mxu0 0.0
      %1740 = vmatpush2.msra.mxu0 0.0
      %1741 = vmatprep.subr.mxu0 0.0
      %1742 = vmatpush2.msra.mxu0 0.0
      %1743 = vmatprep.subr.mxu0 0.0
      %1744 = vmatpush2.msra.mxu0 0.0
      %1745 = vmatprep.subr.mxu0 0.0
      %1746 = vmatpush2.msra.mxu0 0.0
      %1747 = vmatprep.subr.mxu0 0.0
      %1748 = vmatpush2.msra.mxu0 0.0
      %1749 = vmatprep.subr.mxu0 0.0
      %1750 = vmatpush2.msra.mxu0 0.0
      %1751 = vmatprep.subr.mxu0 0.0
      %1752 = vmatpush2.msra.mxu0 0.0
      %1753 = vmatprep.subr.mxu0 0.0
      %1754 = vmatpush2.msra.mxu0 0.0
      %1755 = vmatprep.subr.mxu0 0.0
      %1756 = vmatpush2.msra.mxu0 0.0
      %1757 = vmatprep.subr.mxu0 0.0
      %1758 = vmatpush2.msra.mxu0 0.0
      %1759 = vmatprep.subr.mxu0 0.0
      %1760 = vmatpush2.msra.mxu0 0.0
      %1761 = vmatprep.subr.mxu0 0.0
      %1762 = vmatpush2.msra.mxu0 0.0
      %1763 = vmatprep.subr.mxu0 0.0
      %1764 = vmatpush2.msra.mxu0 0.0
      %1765 = vmatprep.mubr.f32.mxu0 0.0
      %1766 = vmatmul.mubr.f32.gmra.mxu0 %v1697
      %v1767 = vpop.f32.mrf.mxu0
      %v1768 = vadd.f32 0.0, %v1767
      %v1769 = vpop.f32.mrf.mxu0
      %1770 = vdwg.mxu0
      %v1771 = vadd.f32 %v1691, %v1768
      %s1772 = scalar_lea.vmem %s2, 152
      %v1773 = vld [vmem:[%s1772] sm:$0xff]
      %1774 = vrot.lane.b32.xlu0 %v249, 118
      %v1775 = vpop.permute.xlu0 %1774
      %v1777 = vsel %vm260, %v1773, 0
      %v1779 = vsel %vm264, %v1775, 0
      %1781 = vmatprep.subr.mxu0 0.0
      %1782 = vmatpush1.msra.mxu0 0.0
      %1783 = vmatprep.subr.mxu0 0.0
      %1784 = vmatpush1.msra.mxu0 0.0
      %1785 = vmatprep.subr.mxu0 0.0
      %1786 = vmatpush1.msra.mxu0 0.0
      %1787 = vmatprep.subr.mxu0 0.0
      %1788 = vmatpush1.msra.mxu0 0.0
      %1789 = vmatprep.subr.mxu0 0.0
      %1790 = vmatpush1.msra.mxu0 0.0
      %1791 = vmatprep.subr.mxu0 0.0
      %1792 = vmatpush1.msra.mxu0 0.0
      %1793 = vmatprep.subr.mxu0 0.0
      %1794 = vmatpush1.msra.mxu0 0.0
      %1795 = vmatprep.subr.mxu0 0.0
      %1796 = vmatpush1.msra.mxu0 0.0
      %1797 = vmatprep.subr.mxu0 0.0
      %1798 = vmatpush1.msra.mxu0 0.0
      %1799 = vmatprep.subr.mxu0 0.0
      %1800 = vmatpush1.msra.mxu0 0.0
      %1801 = vmatprep.subr.mxu0 0.0
      %1802 = vmatpush1.msra.mxu0 0.0
      %1803 = vmatprep.subr.mxu0 0.0
      %1804 = vmatpush1.msra.mxu0 0.0
      %1805 = vmatprep.subr.mxu0 0.0
      %1806 = vmatpush1.msra.mxu0 0.0
      %1807 = vmatprep.subr.mxu0 0.0
      %1808 = vmatpush1.msra.mxu0 0.0
      %1809 = vmatprep.subr.mxu0 0.0
      %1810 = vmatpush1.msra.mxu0 0.0
      %1811 = vmatprep.subr.mxu0 0.0
      %1812 = vmatpush1.msra.mxu0 %v1779
      %1813 = vmatprep.subr.mxu0 0.0
      %1814 = vmatpush2.msra.mxu0 0.0
      %1815 = vmatprep.subr.mxu0 0.0
      %1816 = vmatpush2.msra.mxu0 0.0
      %1817 = vmatprep.subr.mxu0 0.0
      %1818 = vmatpush2.msra.mxu0 0.0
      %1819 = vmatprep.subr.mxu0 0.0
      %1820 = vmatpush2.msra.mxu0 0.0
      %1821 = vmatprep.subr.mxu0 0.0
      %1822 = vmatpush2.msra.mxu0 0.0
      %1823 = vmatprep.subr.mxu0 0.0
      %1824 = vmatpush2.msra.mxu0 0.0
      %1825 = vmatprep.subr.mxu0 0.0
      %1826 = vmatpush2.msra.mxu0 0.0
      %1827 = vmatprep.subr.mxu0 0.0
      %1828 = vmatpush2.msra.mxu0 0.0
      %1829 = vmatprep.subr.mxu0 0.0
      %1830 = vmatpush2.msra.mxu0 0.0
      %1831 = vmatprep.subr.mxu0 0.0
      %1832 = vmatpush2.msra.mxu0 0.0
      %1833 = vmatprep.subr.mxu0 0.0
      %1834 = vmatpush2.msra.mxu0 0.0
      %1835 = vmatprep.subr.mxu0 0.0
      %1836 = vmatpush2.msra.mxu0 0.0
      %1837 = vmatprep.subr.mxu0 0.0
      %1838 = vmatpush2.msra.mxu0 0.0
      %1839 = vmatprep.subr.mxu0 0.0
      %1840 = vmatpush2.msra.mxu0 0.0
      %1841 = vmatprep.subr.mxu0 0.0
      %1842 = vmatpush2.msra.mxu0 0.0
      %1843 = vmatprep.subr.mxu0 0.0
      %1844 = vmatpush2.msra.mxu0 0.0
      %1845 = vmatprep.mubr.f32.mxu0 0.0
      %1846 = vmatmul.mubr.f32.gmra.mxu0 %v1777
      %v1847 = vpop.f32.mrf.mxu0
      %v1848 = vadd.f32 0.0, %v1847
      %v1849 = vpop.f32.mrf.mxu0
      %1850 = vdwg.mxu0
      %v1851 = vadd.f32 %v1771, %v1848
      %s1852 = scalar_lea.vmem %s2, 160
      %v1853 = vld [vmem:[%s1852] sm:$0xff]
      %1854 = vrot.lane.b32.xlu0 %v247, 117
      %v1855 = vpop.permute.xlu0 %1854
      %v1857 = vsel %vm260, %v1853, 0
      %v1859 = vsel %vm264, %v1855, 0
      %1861 = vmatprep.subr.mxu0 0.0
      %1862 = vmatpush1.msra.mxu0 0.0
      %1863 = vmatprep.subr.mxu0 0.0
      %1864 = vmatpush1.msra.mxu0 0.0
      %1865 = vmatprep.subr.mxu0 0.0
      %1866 = vmatpush1.msra.mxu0 0.0
      %1867 = vmatprep.subr.mxu0 0.0
      %1868 = vmatpush1.msra.mxu0 0.0
      %1869 = vmatprep.subr.mxu0 0.0
      %1870 = vmatpush1.msra.mxu0 0.0
      %1871 = vmatprep.subr.mxu0 0.0
      %1872 = vmatpush1.msra.mxu0 0.0
      %1873 = vmatprep.subr.mxu0 0.0
      %1874 = vmatpush1.msra.mxu0 0.0
      %1875 = vmatprep.subr.mxu0 0.0
      %1876 = vmatpush1.msra.mxu0 0.0
      %1877 = vmatprep.subr.mxu0 0.0
      %1878 = vmatpush1.msra.mxu0 0.0
      %1879 = vmatprep.subr.mxu0 0.0
      %1880 = vmatpush1.msra.mxu0 0.0
      %1881 = vmatprep.subr.mxu0 0.0
      %1882 = vmatpush1.msra.mxu0 0.0
      %1883 = vmatprep.subr.mxu0 0.0
      %1884 = vmatpush1.msra.mxu0 0.0
      %1885 = vmatprep.subr.mxu0 0.0
      %1886 = vmatpush1.msra.mxu0 0.0
      %1887 = vmatprep.subr.mxu0 0.0
      %1888 = vmatpush1.msra.mxu0 0.0
      %1889 = vmatprep.subr.mxu0 0.0
      %1890 = vmatpush1.msra.mxu0 0.0
      %1891 = vmatprep.subr.mxu0 0.0
      %1892 = vmatpush1.msra.mxu0 %v1859
      %1893 = vmatprep.subr.mxu0 0.0
      %1894 = vmatpush2.msra.mxu0 0.0
      %1895 = vmatprep.subr.mxu0 0.0
      %1896 = vmatpush2.msra.mxu0 0.0
      %1897 = vmatprep.subr.mxu0 0.0
      %1898 = vmatpush2.msra.mxu0 0.0
      %1899 = vmatprep.subr.mxu0 0.0
      %1900 = vmatpush2.msra.mxu0 0.0
      %1901 = vmatprep.subr.mxu0 0.0
      %1902 = vmatpush2.msra.mxu0 0.0
      %1903 = vmatprep.subr.mxu0 0.0
      %1904 = vmatpush2.msra.mxu0 0.0
      %1905 = vmatprep.subr.mxu0 0.0
      %1906 = vmatpush2.msra.mxu0 0.0
      %1907 = vmatprep.subr.mxu0 0.0
      %1908 = vmatpush2.msra.mxu0 0.0
      %1909 = vmatprep.subr.mxu0 0.0
      %1910 = vmatpush2.msra.mxu0 0.0
      %1911 = vmatprep.subr.mxu0 0.0
      %1912 = vmatpush2.msra.mxu0 0.0
      %1913 = vmatprep.subr.mxu0 0.0
      %1914 = vmatpush2.msra.mxu0 0.0
      %1915 = vmatprep.subr.mxu0 0.0
      %1916 = vmatpush2.msra.mxu0 0.0
      %1917 = vmatprep.subr.mxu0 0.0
      %1918 = vmatpush2.msra.mxu0 0.0
      %1919 = vmatprep.subr.mxu0 0.0
      %1920 = vmatpush2.msra.mxu0 0.0
      %1921 = vmatprep.subr.mxu0 0.0
      %1922 = vmatpush2.msra.mxu0 0.0
      %1923 = vmatprep.subr.mxu0 0.0
      %1924 = vmatpush2.msra.mxu0 0.0
      %1925 = vmatprep.mubr.f32.mxu0 0.0
      %1926 = vmatmul.mubr.f32.gmra.mxu0 %v1857
      %v1927 = vpop.f32.mrf.mxu0
      %v1928 = vadd.f32 0.0, %v1927
      %v1929 = vpop.f32.mrf.mxu0
      %1930 = vdwg.mxu0
      %v1931 = vadd.f32 %v1851, %v1928
      %s1932 = scalar_lea.vmem %s2, 168
      %v1933 = vld [vmem:[%s1932] sm:$0xff]
      %1934 = vrot.lane.b32.xlu0 %v249, 117
      %v1935 = vpop.permute.xlu0 %1934
      %v1937 = vsel %vm260, %v1933, 0
      %v1939 = vsel %vm264, %v1935, 0
      %1941 = vmatprep.subr.mxu0 0.0
      %1942 = vmatpush1.msra.mxu0 0.0
      %1943 = vmatprep.subr.mxu0 0.0
      %1944 = vmatpush1.msra.mxu0 0.0
      %1945 = vmatprep.subr.mxu0 0.0
      %1946 = vmatpush1.msra.mxu0 0.0
      %1947 = vmatprep.subr.mxu0 0.0
      %1948 = vmatpush1.msra.mxu0 0.0
      %1949 = vmatprep.subr.mxu0 0.0
      %1950 = vmatpush1.msra.mxu0 0.0
      %1951 = vmatprep.subr.mxu0 0.0
      %1952 = vmatpush1.msra.mxu0 0.0
      %1953 = vmatprep.subr.mxu0 0.0
      %1954 = vmatpush1.msra.mxu0 0.0
      %1955 = vmatprep.subr.mxu0 0.0
      %1956 = vmatpush1.msra.mxu0 0.0
      %1957 = vmatprep.subr.mxu0 0.0
      %1958 = vmatpush1.msra.mxu0 0.0
      %1959 = vmatprep.subr.mxu0 0.0
      %1960 = vmatpush1.msra.mxu0 0.0
      %1961 = vmatprep.subr.mxu0 0.0
      %1962 = vmatpush1.msra.mxu0 0.0
      %1963 = vmatprep.subr.mxu0 0.0
      %1964 = vmatpush1.msra.mxu0 0.0
      %1965 = vmatprep.subr.mxu0 0.0
      %1966 = vmatpush1.msra.mxu0 0.0
      %1967 = vmatprep.subr.mxu0 0.0
      %1968 = vmatpush1.msra.mxu0 0.0
      %1969 = vmatprep.subr.mxu0 0.0
      %1970 = vmatpush1.msra.mxu0 0.0
      %1971 = vmatprep.subr.mxu0 0.0
      %1972 = vmatpush1.msra.mxu0 %v1939
      %1973 = vmatprep.subr.mxu0 0.0
      %1974 = vmatpush2.msra.mxu0 0.0
      %1975 = vmatprep.subr.mxu0 0.0
      %1976 = vmatpush2.msra.mxu0 0.0
      %1977 = vmatprep.subr.mxu0 0.0
      %1978 = vmatpush2.msra.mxu0 0.0
      %1979 = vmatprep.subr.mxu0 0.0
      %1980 = vmatpush2.msra.mxu0 0.0
      %1981 = vmatprep.subr.mxu0 0.0
      %1982 = vmatpush2.msra.mxu0 0.0
      %1983 = vmatprep.subr.mxu0 0.0
      %1984 = vmatpush2.msra.mxu0 0.0
      %1985 = vmatprep.subr.mxu0 0.0
      %1986 = vmatpush2.msra.mxu0 0.0
      %1987 = vmatprep.subr.mxu0 0.0
      %1988 = vmatpush2.msra.mxu0 0.0
      %1989 = vmatprep.subr.mxu0 0.0
      %1990 = vmatpush2.msra.mxu0 0.0
      %1991 = vmatprep.subr.mxu0 0.0
      %1992 = vmatpush2.msra.mxu0 0.0
      %1993 = vmatprep.subr.mxu0 0.0
      %1994 = vmatpush2.msra.mxu0 0.0
      %1995 = vmatprep.subr.mxu0 0.0
      %1996 = vmatpush2.msra.mxu0 0.0
      %1997 = vmatprep.subr.mxu0 0.0
      %1998 = vmatpush2.msra.mxu0 0.0
      %1999 = vmatprep.subr.mxu0 0.0
      %2000 = vmatpush2.msra.mxu0 0.0
      %2001 = vmatprep.subr.mxu0 0.0
      %2002 = vmatpush2.msra.mxu0 0.0
      %2003 = vmatprep.subr.mxu0 0.0
      %2004 = vmatpush2.msra.mxu0 0.0
      %2005 = vmatprep.mubr.f32.mxu0 0.0
      %2006 = vmatmul.mubr.f32.gmra.mxu0 %v1937
      %v2007 = vpop.f32.mrf.mxu0
      %v2008 = vadd.f32 0.0, %v2007
      %v2009 = vpop.f32.mrf.mxu0
      %2010 = vdwg.mxu0
      %v2011 = vadd.f32 %v1931, %v2008
      %s2012 = scalar_lea.vmem %s2, 176
      %v2013 = vld [vmem:[%s2012] sm:$0xff]
      %2014 = vrot.lane.b32.xlu0 %v247, 116
      %v2015 = vpop.permute.xlu0 %2014
      %v2017 = vsel %vm260, %v2013, 0
      %v2019 = vsel %vm264, %v2015, 0
      %2021 = vmatprep.subr.mxu0 0.0
      %2022 = vmatpush1.msra.mxu0 0.0
      %2023 = vmatprep.subr.mxu0 0.0
      %2024 = vmatpush1.msra.mxu0 0.0
      %2025 = vmatprep.subr.mxu0 0.0
      %2026 = vmatpush1.msra.mxu0 0.0
      %2027 = vmatprep.subr.mxu0 0.0
      %2028 = vmatpush1.msra.mxu0 0.0
      %2029 = vmatprep.subr.mxu0 0.0
      %2030 = vmatpush1.msra.mxu0 0.0
      %2031 = vmatprep.subr.mxu0 0.0
      %2032 = vmatpush1.msra.mxu0 0.0
      %2033 = vmatprep.subr.mxu0 0.0
      %2034 = vmatpush1.msra.mxu0 0.0
      %2035 = vmatprep.subr.mxu0 0.0
      %2036 = vmatpush1.msra.mxu0 0.0
      %2037 = vmatprep.subr.mxu0 0.0
      %2038 = vmatpush1.msra.mxu0 0.0
      %2039 = vmatprep.subr.mxu0 0.0
      %2040 = vmatpush1.msra.mxu0 0.0
      %2041 = vmatprep.subr.mxu0 0.0
      %2042 = vmatpush1.msra.mxu0 0.0
      %2043 = vmatprep.subr.mxu0 0.0
      %2044 = vmatpush1.msra.mxu0 0.0
      %2045 = vmatprep.subr.mxu0 0.0
      %2046 = vmatpush1.msra.mxu0 0.0
      %2047 = vmatprep.subr.mxu0 0.0
      %2048 = vmatpush1.msra.mxu0 0.0
      %2049 = vmatprep.subr.mxu0 0.0
      %2050 = vmatpush1.msra.mxu0 0.0
      %2051 = vmatprep.subr.mxu0 0.0
      %2052 = vmatpush1.msra.mxu0 %v2019
      %2053 = vmatprep.subr.mxu0 0.0
      %2054 = vmatpush2.msra.mxu0 0.0
      %2055 = vmatprep.subr.mxu0 0.0
      %2056 = vmatpush2.msra.mxu0 0.0
      %2057 = vmatprep.subr.mxu0 0.0
      %2058 = vmatpush2.msra.mxu0 0.0
      %2059 = vmatprep.subr.mxu0 0.0
      %2060 = vmatpush2.msra.mxu0 0.0
      %2061 = vmatprep.subr.mxu0 0.0
      %2062 = vmatpush2.msra.mxu0 0.0
      %2063 = vmatprep.subr.mxu0 0.0
      %2064 = vmatpush2.msra.mxu0 0.0
      %2065 = vmatprep.subr.mxu0 0.0
      %2066 = vmatpush2.msra.mxu0 0.0
      %2067 = vmatprep.subr.mxu0 0.0
      %2068 = vmatpush2.msra.mxu0 0.0
      %2069 = vmatprep.subr.mxu0 0.0
      %2070 = vmatpush2.msra.mxu0 0.0
      %2071 = vmatprep.subr.mxu0 0.0
      %2072 = vmatpush2.msra.mxu0 0.0
      %2073 = vmatprep.subr.mxu0 0.0
      %2074 = vmatpush2.msra.mxu0 0.0
      %2075 = vmatprep.subr.mxu0 0.0
      %2076 = vmatpush2.msra.mxu0 0.0
      %2077 = vmatprep.subr.mxu0 0.0
      %2078 = vmatpush2.msra.mxu0 0.0
      %2079 = vmatprep.subr.mxu0 0.0
      %2080 = vmatpush2.msra.mxu0 0.0
      %2081 = vmatprep.subr.mxu0 0.0
      %2082 = vmatpush2.msra.mxu0 0.0
      %2083 = vmatprep.subr.mxu0 0.0
      %2084 = vmatpush2.msra.mxu0 0.0
      %2085 = vmatprep.mubr.f32.mxu0 0.0
      %2086 = vmatmul.mubr.f32.gmra.mxu0 %v2017
      %v2087 = vpop.f32.mrf.mxu0
      %v2088 = vadd.f32 0.0, %v2087
      %v2089 = vpop.f32.mrf.mxu0
      %2090 = vdwg.mxu0
      %v2091 = vadd.f32 %v2011, %v2088
      %s2092 = scalar_lea.vmem %s2, 184
      %v2093 = vld [vmem:[%s2092] sm:$0xff]
      %2094 = vrot.lane.b32.xlu0 %v249, 116
      %v2095 = vpop.permute.xlu0 %2094
      %v2097 = vsel %vm260, %v2093, 0
      %v2099 = vsel %vm264, %v2095, 0
      %2101 = vmatprep.subr.mxu0 0.0
      %2102 = vmatpush1.msra.mxu0 0.0
      %2103 = vmatprep.subr.mxu0 0.0
      %2104 = vmatpush1.msra.mxu0 0.0
      %2105 = vmatprep.subr.mxu0 0.0
      %2106 = vmatpush1.msra.mxu0 0.0
      %2107 = vmatprep.subr.mxu0 0.0
      %2108 = vmatpush1.msra.mxu0 0.0
      %2109 = vmatprep.subr.mxu0 0.0
      %2110 = vmatpush1.msra.mxu0 0.0
      %2111 = vmatprep.subr.mxu0 0.0
      %2112 = vmatpush1.msra.mxu0 0.0
      %2113 = vmatprep.subr.mxu0 0.0
      %2114 = vmatpush1.msra.mxu0 0.0
      %2115 = vmatprep.subr.mxu0 0.0
      %2116 = vmatpush1.msra.mxu0 0.0
      %2117 = vmatprep.subr.mxu0 0.0
      %2118 = vmatpush1.msra.mxu0 0.0
      %2119 = vmatprep.subr.mxu0 0.0
      %2120 = vmatpush1.msra.mxu0 0.0
      %2121 = vmatprep.subr.mxu0 0.0
      %2122 = vmatpush1.msra.mxu0 0.0
      %2123 = vmatprep.subr.mxu0 0.0
      %2124 = vmatpush1.msra.mxu0 0.0
      %2125 = vmatprep.subr.mxu0 0.0
      %2126 = vmatpush1.msra.mxu0 0.0
      %2127 = vmatprep.subr.mxu0 0.0
      %2128 = vmatpush1.msra.mxu0 0.0
      %2129 = vmatprep.subr.mxu0 0.0
      %2130 = vmatpush1.msra.mxu0 0.0
      %2131 = vmatprep.subr.mxu0 0.0
      %2132 = vmatpush1.msra.mxu0 %v2099
      %2133 = vmatprep.subr.mxu0 0.0
      %2134 = vmatpush2.msra.mxu0 0.0
      %2135 = vmatprep.subr.mxu0 0.0
      %2136 = vmatpush2.msra.mxu0 0.0
      %2137 = vmatprep.subr.mxu0 0.0
      %2138 = vmatpush2.msra.mxu0 0.0
      %2139 = vmatprep.subr.mxu0 0.0
      %2140 = vmatpush2.msra.mxu0 0.0
      %2141 = vmatprep.subr.mxu0 0.0
      %2142 = vmatpush2.msra.mxu0 0.0
      %2143 = vmatprep.subr.mxu0 0.0
      %2144 = vmatpush2.msra.mxu0 0.0
      %2145 = vmatprep.subr.mxu0 0.0
      %2146 = vmatpush2.msra.mxu0 0.0
      %2147 = vmatprep.subr.mxu0 0.0
      %2148 = vmatpush2.msra.mxu0 0.0
      %2149 = vmatprep.subr.mxu0 0.0
      %2150 = vmatpush2.msra.mxu0 0.0
      %2151 = vmatprep.subr.mxu0 0.0
      %2152 = vmatpush2.msra.mxu0 0.0
      %2153 = vmatprep.subr.mxu0 0.0
      %2154 = vmatpush2.msra.mxu0 0.0
      %2155 = vmatprep.subr.mxu0 0.0
      %2156 = vmatpush2.msra.mxu0 0.0
      %2157 = vmatprep.subr.mxu0 0.0
      %2158 = vmatpush2.msra.mxu0 0.0
      %2159 = vmatprep.subr.mxu0 0.0
      %2160 = vmatpush2.msra.mxu0 0.0
      %2161 = vmatprep.subr.mxu0 0.0
      %2162 = vmatpush2.msra.mxu0 0.0
      %2163 = vmatprep.subr.mxu0 0.0
      %2164 = vmatpush2.msra.mxu0 0.0
      %2165 = vmatprep.mubr.f32.mxu0 0.0
      %2166 = vmatmul.mubr.f32.gmra.mxu0 %v2097
      %v2167 = vpop.f32.mrf.mxu0
      %v2168 = vadd.f32 0.0, %v2167
      %v2169 = vpop.f32.mrf.mxu0
      %2170 = vdwg.mxu0
      %v2171 = vadd.f32 %v2091, %v2168
      %s2172 = scalar_lea.vmem %s2, 192
      %v2173 = vld [vmem:[%s2172] sm:$0xff]
      %2174 = vrot.lane.b32.xlu0 %v243, 108
      %v2175 = vpop.permute.xlu0 %2174
      %v2177 = vsel %vm260, %v2173, 0
      %v2179 = vsel %vm264, %v2175, 0
      %2181 = vmatprep.subr.mxu0 0.0
      %2182 = vmatpush1.msra.mxu0 0.0
      %2183 = vmatprep.subr.mxu0 0.0
      %2184 = vmatpush1.msra.mxu0 0.0
      %2185 = vmatprep.subr.mxu0 0.0
      %2186 = vmatpush1.msra.mxu0 0.0
      %2187 = vmatprep.subr.mxu0 0.0
      %2188 = vmatpush1.msra.mxu0 0.0
      %2189 = vmatprep.subr.mxu0 0.0
      %2190 = vmatpush1.msra.mxu0 0.0
      %2191 = vmatprep.subr.mxu0 0.0
      %2192 = vmatpush1.msra.mxu0 0.0
      %2193 = vmatprep.subr.mxu0 0.0
      %2194 = vmatpush1.msra.mxu0 0.0
      %2195 = vmatprep.subr.mxu0 0.0
      %2196 = vmatpush1.msra.mxu0 0.0
      %2197 = vmatprep.subr.mxu0 0.0
      %2198 = vmatpush1.msra.mxu0 0.0
      %2199 = vmatprep.subr.mxu0 0.0
      %2200 = vmatpush1.msra.mxu0 0.0
      %2201 = vmatprep.subr.mxu0 0.0
      %2202 = vmatpush1.msra.mxu0 0.0
      %2203 = vmatprep.subr.mxu0 0.0
      %2204 = vmatpush1.msra.mxu0 0.0
      %2205 = vmatprep.subr.mxu0 0.0
      %2206 = vmatpush1.msra.mxu0 0.0
      %2207 = vmatprep.subr.mxu0 0.0
      %2208 = vmatpush1.msra.mxu0 0.0
      %2209 = vmatprep.subr.mxu0 0.0
      %2210 = vmatpush1.msra.mxu0 0.0
      %2211 = vmatprep.subr.mxu0 0.0
      %2212 = vmatpush1.msra.mxu0 %v2179
      %2213 = vmatprep.subr.mxu0 0.0
      %2214 = vmatpush2.msra.mxu0 0.0
      %2215 = vmatprep.subr.mxu0 0.0
      %2216 = vmatpush2.msra.mxu0 0.0
      %2217 = vmatprep.subr.mxu0 0.0
      %2218 = vmatpush2.msra.mxu0 0.0
      %2219 = vmatprep.subr.mxu0 0.0
      %2220 = vmatpush2.msra.mxu0 0.0
      %2221 = vmatprep.subr.mxu0 0.0
      %2222 = vmatpush2.msra.mxu0 0.0
      %2223 = vmatprep.subr.mxu0 0.0
      %2224 = vmatpush2.msra.mxu0 0.0
      %2225 = vmatprep.subr.mxu0 0.0
      %2226 = vmatpush2.msra.mxu0 0.0
      %2227 = vmatprep.subr.mxu0 0.0
      %2228 = vmatpush2.msra.mxu0 0.0
      %2229 = vmatprep.subr.mxu0 0.0
      %2230 = vmatpush2.msra.mxu0 0.0
      %2231 = vmatprep.subr.mxu0 0.0
      %2232 = vmatpush2.msra.mxu0 0.0
      %2233 = vmatprep.subr.mxu0 0.0
      %2234 = vmatpush2.msra.mxu0 0.0
      %2235 = vmatprep.subr.mxu0 0.0
      %2236 = vmatpush2.msra.mxu0 0.0
      %2237 = vmatprep.subr.mxu0 0.0
      %2238 = vmatpush2.msra.mxu0 0.0
      %2239 = vmatprep.subr.mxu0 0.0
      %2240 = vmatpush2.msra.mxu0 0.0
      %2241 = vmatprep.subr.mxu0 0.0
      %2242 = vmatpush2.msra.mxu0 0.0
      %2243 = vmatprep.subr.mxu0 0.0
      %2244 = vmatpush2.msra.mxu0 0.0
      %2245 = vmatprep.mubr.f32.mxu0 0.0
      %2246 = vmatmul.mubr.f32.gmra.mxu0 %v2177
      %v2247 = vpop.f32.mrf.mxu0
      %v2248 = vadd.f32 0.0, %v2247
      %v2249 = vpop.f32.mrf.mxu0
      %2250 = vdwg.mxu0
      %v2251 = vadd.f32 %v2171, %v2248
      %s2252 = scalar_lea.vmem %s2, 200
      %v2253 = vld [vmem:[%s2252] sm:$0xff]
      %2254 = vrot.lane.b32.xlu0 %v245, 108
      %v2255 = vpop.permute.xlu0 %2254
      %v2257 = vsel %vm260, %v2253, 0
      %v2259 = vsel %vm264, %v2255, 0
      %2261 = vmatprep.subr.mxu0 0.0
      %2262 = vmatpush1.msra.mxu0 0.0
      %2263 = vmatprep.subr.mxu0 0.0
      %2264 = vmatpush1.msra.mxu0 0.0
      %2265 = vmatprep.subr.mxu0 0.0
      %2266 = vmatpush1.msra.mxu0 0.0
      %2267 = vmatprep.subr.mxu0 0.0
      %2268 = vmatpush1.msra.mxu0 0.0
      %2269 = vmatprep.subr.mxu0 0.0
      %2270 = vmatpush1.msra.mxu0 0.0
      %2271 = vmatprep.subr.mxu0 0.0
      %2272 = vmatpush1.msra.mxu0 0.0
      %2273 = vmatprep.subr.mxu0 0.0
      %2274 = vmatpush1.msra.mxu0 0.0
      %2275 = vmatprep.subr.mxu0 0.0
      %2276 = vmatpush1.msra.mxu0 0.0
      %2277 = vmatprep.subr.mxu0 0.0
      %2278 = vmatpush1.msra.mxu0 0.0
      %2279 = vmatprep.subr.mxu0 0.0
      %2280 = vmatpush1.msra.mxu0 0.0
      %2281 = vmatprep.subr.mxu0 0.0
      %2282 = vmatpush1.msra.mxu0 0.0
      %2283 = vmatprep.subr.mxu0 0.0
      %2284 = vmatpush1.msra.mxu0 0.0
      %2285 = vmatprep.subr.mxu0 0.0
      %2286 = vmatpush1.msra.mxu0 0.0
      %2287 = vmatprep.subr.mxu0 0.0
      %2288 = vmatpush1.msra.mxu0 0.0
      %2289 = vmatprep.subr.mxu0 0.0
      %2290 = vmatpush1.msra.mxu0 0.0
      %2291 = vmatprep.subr.mxu0 0.0
      %2292 = vmatpush1.msra.mxu0 %v2259
      %2293 = vmatprep.subr.mxu0 0.0
      %2294 = vmatpush2.msra.mxu0 0.0
      %2295 = vmatprep.subr.mxu0 0.0
      %2296 = vmatpush2.msra.mxu0 0.0
      %2297 = vmatprep.subr.mxu0 0.0
      %2298 = vmatpush2.msra.mxu0 0.0
      %2299 = vmatprep.subr.mxu0 0.0
      %2300 = vmatpush2.msra.mxu0 0.0
      %2301 = vmatprep.subr.mxu0 0.0
      %2302 = vmatpush2.msra.mxu0 0.0
      %2303 = vmatprep.subr.mxu0 0.0
      %2304 = vmatpush2.msra.mxu0 0.0
      %2305 = vmatprep.subr.mxu0 0.0
      %2306 = vmatpush2.msra.mxu0 0.0
      %2307 = vmatprep.subr.mxu0 0.0
      %2308 = vmatpush2.msra.mxu0 0.0
      %2309 = vmatprep.subr.mxu0 0.0
      %2310 = vmatpush2.msra.mxu0 0.0
      %2311 = vmatprep.subr.mxu0 0.0
      %2312 = vmatpush2.msra.mxu0 0.0
      %2313 = vmatprep.subr.mxu0 0.0
      %2314 = vmatpush2.msra.mxu0 0.0
      %2315 = vmatprep.subr.mxu0 0.0
      %2316 = vmatpush2.msra.mxu0 0.0
      %2317 = vmatprep.subr.mxu0 0.0
      %2318 = vmatpush2.msra.mxu0 0.0
      %2319 = vmatprep.subr.mxu0 0.0
      %2320 = vmatpush2.msra.mxu0 0.0
      %2321 = vmatprep.subr.mxu0 0.0
      %2322 = vmatpush2.msra.mxu0 0.0
      %2323 = vmatprep.subr.mxu0 0.0
      %2324 = vmatpush2.msra.mxu0 0.0
      %2325 = vmatprep.mubr.f32.mxu0 0.0
      %2326 = vmatmul.mubr.f32.gmra.mxu0 %v2257
      %v2327 = vpop.f32.mrf.mxu0
      %v2328 = vadd.f32 0.0, %v2327
      %v2329 = vpop.f32.mrf.mxu0
      %2330 = vdwg.mxu0
      %v2331 = vadd.f32 %v2251, %v2328
      %s2332 = scalar_lea.vmem %s2, 208
      %v2333 = vld [vmem:[%s2332] sm:$0xff]
      %2334 = vrot.lane.b32.xlu0 %v243, 107
      %v2335 = vpop.permute.xlu0 %2334
      %v2337 = vsel %vm260, %v2333, 0
      %v2339 = vsel %vm264, %v2335, 0
      %2341 = vmatprep.subr.mxu0 0.0
      %2342 = vmatpush1.msra.mxu0 0.0
      %2343 = vmatprep.subr.mxu0 0.0
      %2344 = vmatpush1.msra.mxu0 0.0
      %2345 = vmatprep.subr.mxu0 0.0
      %2346 = vmatpush1.msra.mxu0 0.0
      %2347 = vmatprep.subr.mxu0 0.0
      %2348 = vmatpush1.msra.mxu0 0.0
      %2349 = vmatprep.subr.mxu0 0.0
      %2350 = vmatpush1.msra.mxu0 0.0
      %2351 = vmatprep.subr.mxu0 0.0
      %2352 = vmatpush1.msra.mxu0 0.0
      %2353 = vmatprep.subr.mxu0 0.0
      %2354 = vmatpush1.msra.mxu0 0.0
      %2355 = vmatprep.subr.mxu0 0.0
      %2356 = vmatpush1.msra.mxu0 0.0
      %2357 = vmatprep.subr.mxu0 0.0
      %2358 = vmatpush1.msra.mxu0 0.0
      %2359 = vmatprep.subr.mxu0 0.0
      %2360 = vmatpush1.msra.mxu0 0.0
      %2361 = vmatprep.subr.mxu0 0.0
      %2362 = vmatpush1.msra.mxu0 0.0
      %2363 = vmatprep.subr.mxu0 0.0
      %2364 = vmatpush1.msra.mxu0 0.0
      %2365 = vmatprep.subr.mxu0 0.0
      %2366 = vmatpush1.msra.mxu0 0.0
      %2367 = vmatprep.subr.mxu0 0.0
      %2368 = vmatpush1.msra.mxu0 0.0
      %2369 = vmatprep.subr.mxu0 0.0
      %2370 = vmatpush1.msra.mxu0 0.0
      %2371 = vmatprep.subr.mxu0 0.0
      %2372 = vmatpush1.msra.mxu0 %v2339
      %2373 = vmatprep.subr.mxu0 0.0
      %2374 = vmatpush2.msra.mxu0 0.0
      %2375 = vmatprep.subr.mxu0 0.0
      %2376 = vmatpush2.msra.mxu0 0.0
      %2377 = vmatprep.subr.mxu0 0.0
      %2378 = vmatpush2.msra.mxu0 0.0
      %2379 = vmatprep.subr.mxu0 0.0
      %2380 = vmatpush2.msra.mxu0 0.0
      %2381 = vmatprep.subr.mxu0 0.0
      %2382 = vmatpush2.msra.mxu0 0.0
      %2383 = vmatprep.subr.mxu0 0.0
      %2384 = vmatpush2.msra.mxu0 0.0
      %2385 = vmatprep.subr.mxu0 0.0
      %2386 = vmatpush2.msra.mxu0 0.0
      %2387 = vmatprep.subr.mxu0 0.0
      %2388 = vmatpush2.msra.mxu0 0.0
      %2389 = vmatprep.subr.mxu0 0.0
      %2390 = vmatpush2.msra.mxu0 0.0
      %2391 = vmatprep.subr.mxu0 0.0
      %2392 = vmatpush2.msra.mxu0 0.0
      %2393 = vmatprep.subr.mxu0 0.0
      %2394 = vmatpush2.msra.mxu0 0.0
      %2395 = vmatprep.subr.mxu0 0.0
      %2396 = vmatpush2.msra.mxu0 0.0
      %2397 = vmatprep.subr.mxu0 0.0
      %2398 = vmatpush2.msra.mxu0 0.0
      %2399 = vmatprep.subr.mxu0 0.0
      %2400 = vmatpush2.msra.mxu0 0.0
      %2401 = vmatprep.subr.mxu0 0.0
      %2402 = vmatpush2.msra.mxu0 0.0
      %2403 = vmatprep.subr.mxu0 0.0
      %2404 = vmatpush2.msra.mxu0 0.0
      %2405 = vmatprep.mubr.f32.mxu0 0.0
      %2406 = vmatmul.mubr.f32.gmra.mxu0 %v2337
      %v2407 = vpop.f32.mrf.mxu0
      %v2408 = vadd.f32 0.0, %v2407
      %v2409 = vpop.f32.mrf.mxu0
      %2410 = vdwg.mxu0
      %v2411 = vadd.f32 %v2331, %v2408
      %s2412 = scalar_lea.vmem %s2, 216
      %v2413 = vld [vmem:[%s2412] sm:$0xff]
      %2414 = vrot.lane.b32.xlu0 %v245, 107
      %v2415 = vpop.permute.xlu0 %2414
      %v2417 = vsel %vm260, %v2413, 0
      %v2419 = vsel %vm264, %v2415, 0
      %2421 = vmatprep.subr.mxu0 0.0
      %2422 = vmatpush1.msra.mxu0 0.0
      %2423 = vmatprep.subr.mxu0 0.0
      %2424 = vmatpush1.msra.mxu0 0.0
      %2425 = vmatprep.subr.mxu0 0.0
      %2426 = vmatpush1.msra.mxu0 0.0
      %2427 = vmatprep.subr.mxu0 0.0
      %2428 = vmatpush1.msra.mxu0 0.0
      %2429 = vmatprep.subr.mxu0 0.0
      %2430 = vmatpush1.msra.mxu0 0.0
      %2431 = vmatprep.subr.mxu0 0.0
      %2432 = vmatpush1.msra.mxu0 0.0
      %2433 = vmatprep.subr.mxu0 0.0
      %2434 = vmatpush1.msra.mxu0 0.0
      %2435 = vmatprep.subr.mxu0 0.0
      %2436 = vmatpush1.msra.mxu0 0.0
      %2437 = vmatprep.subr.mxu0 0.0
      %2438 = vmatpush1.msra.mxu0 0.0
      %2439 = vmatprep.subr.mxu0 0.0
      %2440 = vmatpush1.msra.mxu0 0.0
      %2441 = vmatprep.subr.mxu0 0.0
      %2442 = vmatpush1.msra.mxu0 0.0
      %2443 = vmatprep.subr.mxu0 0.0
      %2444 = vmatpush1.msra.mxu0 0.0
      %2445 = vmatprep.subr.mxu0 0.0
      %2446 = vmatpush1.msra.mxu0 0.0
      %2447 = vmatprep.subr.mxu0 0.0
      %2448 = vmatpush1.msra.mxu0 0.0
      %2449 = vmatprep.subr.mxu0 0.0
      %2450 = vmatpush1.msra.mxu0 0.0
      %2451 = vmatprep.subr.mxu0 0.0
      %2452 = vmatpush1.msra.mxu0 %v2419
      %2453 = vmatprep.subr.mxu0 0.0
      %2454 = vmatpush2.msra.mxu0 0.0
      %2455 = vmatprep.subr.mxu0 0.0
      %2456 = vmatpush2.msra.mxu0 0.0
      %2457 = vmatprep.subr.mxu0 0.0
      %2458 = vmatpush2.msra.mxu0 0.0
      %2459 = vmatprep.subr.mxu0 0.0
      %2460 = vmatpush2.msra.mxu0 0.0
      %2461 = vmatprep.subr.mxu0 0.0
      %2462 = vmatpush2.msra.mxu0 0.0
      %2463 = vmatprep.subr.mxu0 0.0
      %2464 = vmatpush2.msra.mxu0 0.0
      %2465 = vmatprep.subr.mxu0 0.0
      %2466 = vmatpush2.msra.mxu0 0.0
      %2467 = vmatprep.subr.mxu0 0.0
      %2468 = vmatpush2.msra.mxu0 0.0
      %2469 = vmatprep.subr.mxu0 0.0
      %2470 = vmatpush2.msra.mxu0 0.0
      %2471 = vmatprep.subr.mxu0 0.0
      %2472 = vmatpush2.msra.mxu0 0.0
      %2473 = vmatprep.subr.mxu0 0.0
      %2474 = vmatpush2.msra.mxu0 0.0
      %2475 = vmatprep.subr.mxu0 0.0
      %2476 = vmatpush2.msra.mxu0 0.0
      %2477 = vmatprep.subr.mxu0 0.0
      %2478 = vmatpush2.msra.mxu0 0.0
      %2479 = vmatprep.subr.mxu0 0.0
      %2480 = vmatpush2.msra.mxu0 0.0
      %2481 = vmatprep.subr.mxu0 0.0
      %2482 = vmatpush2.msra.mxu0 0.0
      %2483 = vmatprep.subr.mxu0 0.0
      %2484 = vmatpush2.msra.mxu0 0.0
      %2485 = vmatprep.mubr.f32.mxu0 0.0
      %2486 = vmatmul.mubr.f32.gmra.mxu0 %v2417
      %v2487 = vpop.f32.mrf.mxu0
      %v2488 = vadd.f32 0.0, %v2487
      %v2489 = vpop.f32.mrf.mxu0
      %2490 = vdwg.mxu0
      %v2491 = vadd.f32 %v2411, %v2488
      %s2492 = scalar_lea.vmem %s2, 224
      %v2493 = vld [vmem:[%s2492] sm:$0xff]
      %2494 = vrot.lane.b32.xlu0 %v243, 106
      %v2495 = vpop.permute.xlu0 %2494
      %v2497 = vsel %vm260, %v2493, 0
      %v2499 = vsel %vm264, %v2495, 0
      %2501 = vmatprep.subr.mxu0 0.0
      %2502 = vmatpush1.msra.mxu0 0.0
      %2503 = vmatprep.subr.mxu0 0.0
      %2504 = vmatpush1.msra.mxu0 0.0
      %2505 = vmatprep.subr.mxu0 0.0
      %2506 = vmatpush1.msra.mxu0 0.0
      %2507 = vmatprep.subr.mxu0 0.0
      %2508 = vmatpush1.msra.mxu0 0.0
      %2509 = vmatprep.subr.mxu0 0.0
      %2510 = vmatpush1.msra.mxu0 0.0
      %2511 = vmatprep.subr.mxu0 0.0
      %2512 = vmatpush1.msra.mxu0 0.0
      %2513 = vmatprep.subr.mxu0 0.0
      %2514 = vmatpush1.msra.mxu0 0.0
      %2515 = vmatprep.subr.mxu0 0.0
      %2516 = vmatpush1.msra.mxu0 0.0
      %2517 = vmatprep.subr.mxu0 0.0
      %2518 = vmatpush1.msra.mxu0 0.0
      %2519 = vmatprep.subr.mxu0 0.0
      %2520 = vmatpush1.msra.mxu0 0.0
      %2521 = vmatprep.subr.mxu0 0.0
      %2522 = vmatpush1.msra.mxu0 0.0
      %2523 = vmatprep.subr.mxu0 0.0
      %2524 = vmatpush1.msra.mxu0 0.0
      %2525 = vmatprep.subr.mxu0 0.0
      %2526 = vmatpush1.msra.mxu0 0.0
      %2527 = vmatprep.subr.mxu0 0.0
      %2528 = vmatpush1.msra.mxu0 0.0
      %2529 = vmatprep.subr.mxu0 0.0
      %2530 = vmatpush1.msra.mxu0 0.0
      %2531 = vmatprep.subr.mxu0 0.0
      %2532 = vmatpush1.msra.mxu0 %v2499
      %2533 = vmatprep.subr.mxu0 0.0
      %2534 = vmatpush2.msra.mxu0 0.0
      %2535 = vmatprep.subr.mxu0 0.0
      %2536 = vmatpush2.msra.mxu0 0.0
      %2537 = vmatprep.subr.mxu0 0.0
      %2538 = vmatpush2.msra.mxu0 0.0
      %2539 = vmatprep.subr.mxu0 0.0
      %2540 = vmatpush2.msra.mxu0 0.0
      %2541 = vmatprep.subr.mxu0 0.0
      %2542 = vmatpush2.msra.mxu0 0.0
      %2543 = vmatprep.subr.mxu0 0.0
      %2544 = vmatpush2.msra.mxu0 0.0
      %2545 = vmatprep.subr.mxu0 0.0
      %2546 = vmatpush2.msra.mxu0 0.0
      %2547 = vmatprep.subr.mxu0 0.0
      %2548 = vmatpush2.msra.mxu0 0.0
      %2549 = vmatprep.subr.mxu0 0.0
      %2550 = vmatpush2.msra.mxu0 0.0
      %2551 = vmatprep.subr.mxu0 0.0
      %2552 = vmatpush2.msra.mxu0 0.0
      %2553 = vmatprep.subr.mxu0 0.0
      %2554 = vmatpush2.msra.mxu0 0.0
      %2555 = vmatprep.subr.mxu0 0.0
      %2556 = vmatpush2.msra.mxu0 0.0
      %2557 = vmatprep.subr.mxu0 0.0
      %2558 = vmatpush2.msra.mxu0 0.0
      %2559 = vmatprep.subr.mxu0 0.0
      %2560 = vmatpush2.msra.mxu0 0.0
      %2561 = vmatprep.subr.mxu0 0.0
      %2562 = vmatpush2.msra.mxu0 0.0
      %2563 = vmatprep.subr.mxu0 0.0
      %2564 = vmatpush2.msra.mxu0 0.0
      %2565 = vmatprep.mubr.f32.mxu0 0.0
      %2566 = vmatmul.mubr.f32.gmra.mxu0 %v2497
      %v2567 = vpop.f32.mrf.mxu0
      %v2568 = vadd.f32 0.0, %v2567
      %v2569 = vpop.f32.mrf.mxu0
      %2570 = vdwg.mxu0
      %v2571 = vadd.f32 %v2491, %v2568
      %s2572 = scalar_lea.vmem %s2, 232
      %v2573 = vld [vmem:[%s2572] sm:$0xff]
      %2574 = vrot.lane.b32.xlu0 %v245, 106
      %v2575 = vpop.permute.xlu0 %2574
      %v2577 = vsel %vm260, %v2573, 0
      %v2579 = vsel %vm264, %v2575, 0
      %2581 = vmatprep.subr.mxu0 0.0
      %2582 = vmatpush1.msra.mxu0 0.0
      %2583 = vmatprep.subr.mxu0 0.0
      %2584 = vmatpush1.msra.mxu0 0.0
      %2585 = vmatprep.subr.mxu0 0.0
      %2586 = vmatpush1.msra.mxu0 0.0
      %2587 = vmatprep.subr.mxu0 0.0
      %2588 = vmatpush1.msra.mxu0 0.0
      %2589 = vmatprep.subr.mxu0 0.0
      %2590 = vmatpush1.msra.mxu0 0.0
      %2591 = vmatprep.subr.mxu0 0.0
      %2592 = vmatpush1.msra.mxu0 0.0
      %2593 = vmatprep.subr.mxu0 0.0
      %2594 = vmatpush1.msra.mxu0 0.0
      %2595 = vmatprep.subr.mxu0 0.0
      %2596 = vmatpush1.msra.mxu0 0.0
      %2597 = vmatprep.subr.mxu0 0.0
      %2598 = vmatpush1.msra.mxu0 0.0
      %2599 = vmatprep.subr.mxu0 0.0
      %2600 = vmatpush1.msra.mxu0 0.0
      %2601 = vmatprep.subr.mxu0 0.0
      %2602 = vmatpush1.msra.mxu0 0.0
      %2603 = vmatprep.subr.mxu0 0.0
      %2604 = vmatpush1.msra.mxu0 0.0
      %2605 = vmatprep.subr.mxu0 0.0
      %2606 = vmatpush1.msra.mxu0 0.0
      %2607 = vmatprep.subr.mxu0 0.0
      %2608 = vmatpush1.msra.mxu0 0.0
      %2609 = vmatprep.subr.mxu0 0.0
      %2610 = vmatpush1.msra.mxu0 0.0
      %2611 = vmatprep.subr.mxu0 0.0
      %2612 = vmatpush1.msra.mxu0 %v2579
      %2613 = vmatprep.subr.mxu0 0.0
      %2614 = vmatpush2.msra.mxu0 0.0
      %2615 = vmatprep.subr.mxu0 0.0
      %2616 = vmatpush2.msra.mxu0 0.0
      %2617 = vmatprep.subr.mxu0 0.0
      %2618 = vmatpush2.msra.mxu0 0.0
      %2619 = vmatprep.subr.mxu0 0.0
      %2620 = vmatpush2.msra.mxu0 0.0
      %2621 = vmatprep.subr.mxu0 0.0
      %2622 = vmatpush2.msra.mxu0 0.0
      %2623 = vmatprep.subr.mxu0 0.0
      %2624 = vmatpush2.msra.mxu0 0.0
      %2625 = vmatprep.subr.mxu0 0.0
      %2626 = vmatpush2.msra.mxu0 0.0
      %2627 = vmatprep.subr.mxu0 0.0
      %2628 = vmatpush2.msra.mxu0 0.0
      %2629 = vmatprep.subr.mxu0 0.0
      %2630 = vmatpush2.msra.mxu0 0.0
      %2631 = vmatprep.subr.mxu0 0.0
      %2632 = vmatpush2.msra.mxu0 0.0
      %2633 = vmatprep.subr.mxu0 0.0
      %2634 = vmatpush2.msra.mxu0 0.0
      %2635 = vmatprep.subr.mxu0 0.0
      %2636 = vmatpush2.msra.mxu0 0.0
      %2637 = vmatprep.subr.mxu0 0.0
      %2638 = vmatpush2.msra.mxu0 0.0
      %2639 = vmatprep.subr.mxu0 0.0
      %2640 = vmatpush2.msra.mxu0 0.0
      %2641 = vmatprep.subr.mxu0 0.0
      %2642 = vmatpush2.msra.mxu0 0.0
      %2643 = vmatprep.subr.mxu0 0.0
      %2644 = vmatpush2.msra.mxu0 0.0
      %2645 = vmatprep.mubr.f32.mxu0 0.0
      %2646 = vmatmul.mubr.f32.gmra.mxu0 %v2577
      %v2647 = vpop.f32.mrf.mxu0
      %v2648 = vadd.f32 0.0, %v2647
      %v2649 = vpop.f32.mrf.mxu0
      %2650 = vdwg.mxu0
      %v2651 = vadd.f32 %v2571, %v2648
      %s2652 = scalar_lea.vmem %s2, 240
      %v2653 = vld [vmem:[%s2652] sm:$0xff]
      %2654 = vrot.lane.b32.xlu0 %v247, 108
      %v2655 = vpop.permute.xlu0 %2654
      %v2657 = vsel %vm260, %v2653, 0
      %v2659 = vsel %vm264, %v2655, 0
      %2661 = vmatprep.subr.mxu0 0.0
      %2662 = vmatpush1.msra.mxu0 0.0
      %2663 = vmatprep.subr.mxu0 0.0
      %2664 = vmatpush1.msra.mxu0 0.0
      %2665 = vmatprep.subr.mxu0 0.0
      %2666 = vmatpush1.msra.mxu0 0.0
      %2667 = vmatprep.subr.mxu0 0.0
      %2668 = vmatpush1.msra.mxu0 0.0
      %2669 = vmatprep.subr.mxu0 0.0
      %2670 = vmatpush1.msra.mxu0 0.0
      %2671 = vmatprep.subr.mxu0 0.0
      %2672 = vmatpush1.msra.mxu0 0.0
      %2673 = vmatprep.subr.mxu0 0.0
      %2674 = vmatpush1.msra.mxu0 0.0
      %2675 = vmatprep.subr.mxu0 0.0
      %2676 = vmatpush1.msra.mxu0 0.0
      %2677 = vmatprep.subr.mxu0 0.0
      %2678 = vmatpush1.msra.mxu0 0.0
      %2679 = vmatprep.subr.mxu0 0.0
      %2680 = vmatpush1.msra.mxu0 0.0
      %2681 = vmatprep.subr.mxu0 0.0
      %2682 = vmatpush1.msra.mxu0 0.0
      %2683 = vmatprep.subr.mxu0 0.0
      %2684 = vmatpush1.msra.mxu0 0.0
      %2685 = vmatprep.subr.mxu0 0.0
      %2686 = vmatpush1.msra.mxu0 0.0
      %2687 = vmatprep.subr.mxu0 0.0
      %2688 = vmatpush1.msra.mxu0 0.0
      %2689 = vmatprep.subr.mxu0 0.0
      %2690 = vmatpush1.msra.mxu0 0.0
      %2691 = vmatprep.subr.mxu0 0.0
      %2692 = vmatpush1.msra.mxu0 %v2659
      %2693 = vmatprep.subr.mxu0 0.0
      %2694 = vmatpush2.msra.mxu0 0.0
      %2695 = vmatprep.subr.mxu0 0.0
      %2696 = vmatpush2.msra.mxu0 0.0
      %2697 = vmatprep.subr.mxu0 0.0
      %2698 = vmatpush2.msra.mxu0 0.0
      %2699 = vmatprep.subr.mxu0 0.0
      %2700 = vmatpush2.msra.mxu0 0.0
      %2701 = vmatprep.subr.mxu0 0.0
      %2702 = vmatpush2.msra.mxu0 0.0
      %2703 = vmatprep.subr.mxu0 0.0
      %2704 = vmatpush2.msra.mxu0 0.0
      %2705 = vmatprep.subr.mxu0 0.0
      %2706 = vmatpush2.msra.mxu0 0.0
      %2707 = vmatprep.subr.mxu0 0.0
      %2708 = vmatpush2.msra.mxu0 0.0
      %2709 = vmatprep.subr.mxu0 0.0
      %2710 = vmatpush2.msra.mxu0 0.0
      %2711 = vmatprep.subr.mxu0 0.0
      %2712 = vmatpush2.msra.mxu0 0.0
      %2713 = vmatprep.subr.mxu0 0.0
      %2714 = vmatpush2.msra.mxu0 0.0
      %2715 = vmatprep.subr.mxu0 0.0
      %2716 = vmatpush2.msra.mxu0 0.0
      %2717 = vmatprep.subr.mxu0 0.0
      %2718 = vmatpush2.msra.mxu0 0.0
      %2719 = vmatprep.subr.mxu0 0.0
      %2720 = vmatpush2.msra.mxu0 0.0
      %2721 = vmatprep.subr.mxu0 0.0
      %2722 = vmatpush2.msra.mxu0 0.0
      %2723 = vmatprep.subr.mxu0 0.0
      %2724 = vmatpush2.msra.mxu0 0.0
      %2725 = vmatprep.mubr.f32.mxu0 0.0
      %2726 = vmatmul.mubr.f32.gmra.mxu0 %v2657
      %v2727 = vpop.f32.mrf.mxu0
      %v2728 = vadd.f32 0.0, %v2727
      %v2729 = vpop.f32.mrf.mxu0
      %2730 = vdwg.mxu0
      %v2731 = vadd.f32 %v2651, %v2728
      %s2732 = scalar_lea.vmem %s2, 248
      %v2733 = vld [vmem:[%s2732] sm:$0xff]
      %2734 = vrot.lane.b32.xlu0 %v249, 108
      %v2735 = vpop.permute.xlu0 %2734
      %v2737 = vsel %vm260, %v2733, 0
      %v2739 = vsel %vm264, %v2735, 0
      %2741 = vmatprep.subr.mxu0 0.0
      %2742 = vmatpush1.msra.mxu0 0.0
      %2743 = vmatprep.subr.mxu0 0.0
      %2744 = vmatpush1.msra.mxu0 0.0
      %2745 = vmatprep.subr.mxu0 0.0
      %2746 = vmatpush1.msra.mxu0 0.0
      %2747 = vmatprep.subr.mxu0 0.0
      %2748 = vmatpush1.msra.mxu0 0.0
      %2749 = vmatprep.subr.mxu0 0.0
      %2750 = vmatpush1.msra.mxu0 0.0
      %2751 = vmatprep.subr.mxu0 0.0
      %2752 = vmatpush1.msra.mxu0 0.0
      %2753 = vmatprep.subr.mxu0 0.0
      %2754 = vmatpush1.msra.mxu0 0.0
      %2755 = vmatprep.subr.mxu0 0.0
      %2756 = vmatpush1.msra.mxu0 0.0
      %2757 = vmatprep.subr.mxu0 0.0
      %2758 = vmatpush1.msra.mxu0 0.0
      %2759 = vmatprep.subr.mxu0 0.0
      %2760 = vmatpush1.msra.mxu0 0.0
      %2761 = vmatprep.subr.mxu0 0.0
      %2762 = vmatpush1.msra.mxu0 0.0
      %2763 = vmatprep.subr.mxu0 0.0
      %2764 = vmatpush1.msra.mxu0 0.0
      %2765 = vmatprep.subr.mxu0 0.0
      %2766 = vmatpush1.msra.mxu0 0.0
      %2767 = vmatprep.subr.mxu0 0.0
      %2768 = vmatpush1.msra.mxu0 0.0
      %2769 = vmatprep.subr.mxu0 0.0
      %2770 = vmatpush1.msra.mxu0 0.0
      %2771 = vmatprep.subr.mxu0 0.0
      %2772 = vmatpush1.msra.mxu0 %v2739
      %2773 = vmatprep.subr.mxu0 0.0
      %2774 = vmatpush2.msra.mxu0 0.0
      %2775 = vmatprep.subr.mxu0 0.0
      %2776 = vmatpush2.msra.mxu0 0.0
      %2777 = vmatprep.subr.mxu0 0.0
      %2778 = vmatpush2.msra.mxu0 0.0
      %2779 = vmatprep.subr.mxu0 0.0
      %2780 = vmatpush2.msra.mxu0 0.0
      %2781 = vmatprep.subr.mxu0 0.0
      %2782 = vmatpush2.msra.mxu0 0.0
      %2783 = vmatprep.subr.mxu0 0.0
      %2784 = vmatpush2.msra.mxu0 0.0
      %2785 = vmatprep.subr.mxu0 0.0
      %2786 = vmatpush2.msra.mxu0 0.0
      %2787 = vmatprep.subr.mxu0 0.0
      %2788 = vmatpush2.msra.mxu0 0.0
      %2789 = vmatprep.subr.mxu0 0.0
      %2790 = vmatpush2.msra.mxu0 0.0
      %2791 = vmatprep.subr.mxu0 0.0
      %2792 = vmatpush2.msra.mxu0 0.0
      %2793 = vmatprep.subr.mxu0 0.0
      %2794 = vmatpush2.msra.mxu0 0.0
      %2795 = vmatprep.subr.mxu0 0.0
      %2796 = vmatpush2.msra.mxu0 0.0
      %2797 = vmatprep.subr.mxu0 0.0
      %2798 = vmatpush2.msra.mxu0 0.0
      %2799 = vmatprep.subr.mxu0 0.0
      %2800 = vmatpush2.msra.mxu0 0.0
      %2801 = vmatprep.subr.mxu0 0.0
      %2802 = vmatpush2.msra.mxu0 0.0
      %2803 = vmatprep.subr.mxu0 0.0
      %2804 = vmatpush2.msra.mxu0 0.0
      %2805 = vmatprep.mubr.f32.mxu0 0.0
      %2806 = vmatmul.mubr.f32.gmra.mxu0 %v2737
      %v2807 = vpop.f32.mrf.mxu0
      %v2808 = vadd.f32 0.0, %v2807
      %v2809 = vpop.f32.mrf.mxu0
      %2810 = vdwg.mxu0
      %v2811 = vadd.f32 %v2731, %v2808
      %s2812 = scalar_lea.vmem %s2, 256
      %v2813 = vld [vmem:[%s2812] sm:$0xff]
      %2814 = vrot.lane.b32.xlu0 %v247, 107
      %v2815 = vpop.permute.xlu0 %2814
      %v2817 = vsel %vm260, %v2813, 0
      %v2819 = vsel %vm264, %v2815, 0
      %2821 = vmatprep.subr.mxu0 0.0
      %2822 = vmatpush1.msra.mxu0 0.0
      %2823 = vmatprep.subr.mxu0 0.0
      %2824 = vmatpush1.msra.mxu0 0.0
      %2825 = vmatprep.subr.mxu0 0.0
      %2826 = vmatpush1.msra.mxu0 0.0
      %2827 = vmatprep.subr.mxu0 0.0
      %2828 = vmatpush1.msra.mxu0 0.0
      %2829 = vmatprep.subr.mxu0 0.0
      %2830 = vmatpush1.msra.mxu0 0.0
      %2831 = vmatprep.subr.mxu0 0.0
      %2832 = vmatpush1.msra.mxu0 0.0
      %2833 = vmatprep.subr.mxu0 0.0
      %2834 = vmatpush1.msra.mxu0 0.0
      %2835 = vmatprep.subr.mxu0 0.0
      %2836 = vmatpush1.msra.mxu0 0.0
      %2837 = vmatprep.subr.mxu0 0.0
      %2838 = vmatpush1.msra.mxu0 0.0
      %2839 = vmatprep.subr.mxu0 0.0
      %2840 = vmatpush1.msra.mxu0 0.0
      %2841 = vmatprep.subr.mxu0 0.0
      %2842 = vmatpush1.msra.mxu0 0.0
      %2843 = vmatprep.subr.mxu0 0.0
      %2844 = vmatpush1.msra.mxu0 0.0
      %2845 = vmatprep.subr.mxu0 0.0
      %2846 = vmatpush1.msra.mxu0 0.0
      %2847 = vmatprep.subr.mxu0 0.0
      %2848 = vmatpush1.msra.mxu0 0.0
      %2849 = vmatprep.subr.mxu0 0.0
      %2850 = vmatpush1.msra.mxu0 0.0
      %2851 = vmatprep.subr.mxu0 0.0
      %2852 = vmatpush1.msra.mxu0 %v2819
      %2853 = vmatprep.subr.mxu0 0.0
      %2854 = vmatpush2.msra.mxu0 0.0
      %2855 = vmatprep.subr.mxu0 0.0
      %2856 = vmatpush2.msra.mxu0 0.0
      %2857 = vmatprep.subr.mxu0 0.0
      %2858 = vmatpush2.msra.mxu0 0.0
      %2859 = vmatprep.subr.mxu0 0.0
      %2860 = vmatpush2.msra.mxu0 0.0
      %2861 = vmatprep.subr.mxu0 0.0
      %2862 = vmatpush2.msra.mxu0 0.0
      %2863 = vmatprep.subr.mxu0 0.0
      %2864 = vmatpush2.msra.mxu0 0.0
      %2865 = vmatprep.subr.mxu0 0.0
      %2866 = vmatpush2.msra.mxu0 0.0
      %2867 = vmatprep.subr.mxu0 0.0
      %2868 = vmatpush2.msra.mxu0 0.0
      %2869 = vmatprep.subr.mxu0 0.0
      %2870 = vmatpush2.msra.mxu0 0.0
      %2871 = vmatprep.subr.mxu0 0.0
      %2872 = vmatpush2.msra.mxu0 0.0
      %2873 = vmatprep.subr.mxu0 0.0
      %2874 = vmatpush2.msra.mxu0 0.0
      %2875 = vmatprep.subr.mxu0 0.0
      %2876 = vmatpush2.msra.mxu0 0.0
      %2877 = vmatprep.subr.mxu0 0.0
      %2878 = vmatpush2.msra.mxu0 0.0
      %2879 = vmatprep.subr.mxu0 0.0
      %2880 = vmatpush2.msra.mxu0 0.0
      %2881 = vmatprep.subr.mxu0 0.0
      %2882 = vmatpush2.msra.mxu0 0.0
      %2883 = vmatprep.subr.mxu0 0.0
      %2884 = vmatpush2.msra.mxu0 0.0
      %2885 = vmatprep.mubr.f32.mxu0 0.0
      %2886 = vmatmul.mubr.f32.gmra.mxu0 %v2817
      %v2887 = vpop.f32.mrf.mxu0
      %v2888 = vadd.f32 0.0, %v2887
      %v2889 = vpop.f32.mrf.mxu0
      %2890 = vdwg.mxu0
      %v2891 = vadd.f32 %v2811, %v2888
      %s2892 = scalar_lea.vmem %s2, 264
      %v2893 = vld [vmem:[%s2892] sm:$0xff]
      %2894 = vrot.lane.b32.xlu0 %v249, 107
      %v2895 = vpop.permute.xlu0 %2894
      %v2897 = vsel %vm260, %v2893, 0
      %v2899 = vsel %vm264, %v2895, 0
      %2901 = vmatprep.subr.mxu0 0.0
      %2902 = vmatpush1.msra.mxu0 0.0
      %2903 = vmatprep.subr.mxu0 0.0
      %2904 = vmatpush1.msra.mxu0 0.0
      %2905 = vmatprep.subr.mxu0 0.0
      %2906 = vmatpush1.msra.mxu0 0.0
      %2907 = vmatprep.subr.mxu0 0.0
      %2908 = vmatpush1.msra.mxu0 0.0
      %2909 = vmatprep.subr.mxu0 0.0
      %2910 = vmatpush1.msra.mxu0 0.0
      %2911 = vmatprep.subr.mxu0 0.0
      %2912 = vmatpush1.msra.mxu0 0.0
      %2913 = vmatprep.subr.mxu0 0.0
      %2914 = vmatpush1.msra.mxu0 0.0
      %2915 = vmatprep.subr.mxu0 0.0
      %2916 = vmatpush1.msra.mxu0 0.0
      %2917 = vmatprep.subr.mxu0 0.0
      %2918 = vmatpush1.msra.mxu0 0.0
      %2919 = vmatprep.subr.mxu0 0.0
      %2920 = vmatpush1.msra.mxu0 0.0
      %2921 = vmatprep.subr.mxu0 0.0
      %2922 = vmatpush1.msra.mxu0 0.0
      %2923 = vmatprep.subr.mxu0 0.0
      %2924 = vmatpush1.msra.mxu0 0.0
      %2925 = vmatprep.subr.mxu0 0.0
      %2926 = vmatpush1.msra.mxu0 0.0
      %2927 = vmatprep.subr.mxu0 0.0
      %2928 = vmatpush1.msra.mxu0 0.0
      %2929 = vmatprep.subr.mxu0 0.0
      %2930 = vmatpush1.msra.mxu0 0.0
      %2931 = vmatprep.subr.mxu0 0.0
      %2932 = vmatpush1.msra.mxu0 %v2899
      %2933 = vmatprep.subr.mxu0 0.0
      %2934 = vmatpush2.msra.mxu0 0.0
      %2935 = vmatprep.subr.mxu0 0.0
      %2936 = vmatpush2.msra.mxu0 0.0
      %2937 = vmatprep.subr.mxu0 0.0
      %2938 = vmatpush2.msra.mxu0 0.0
      %2939 = vmatprep.subr.mxu0 0.0
      %2940 = vmatpush2.msra.mxu0 0.0
      %2941 = vmatprep.subr.mxu0 0.0
      %2942 = vmatpush2.msra.mxu0 0.0
      %2943 = vmatprep.subr.mxu0 0.0
      %2944 = vmatpush2.msra.mxu0 0.0
      %2945 = vmatprep.subr.mxu0 0.0
      %2946 = vmatpush2.msra.mxu0 0.0
      %2947 = vmatprep.subr.mxu0 0.0
      %2948 = vmatpush2.msra.mxu0 0.0
      %2949 = vmatprep.subr.mxu0 0.0
      %2950 = vmatpush2.msra.mxu0 0.0
      %2951 = vmatprep.subr.mxu0 0.0
      %2952 = vmatpush2.msra.mxu0 0.0
      %2953 = vmatprep.subr.mxu0 0.0
      %2954 = vmatpush2.msra.mxu0 0.0
      %2955 = vmatprep.subr.mxu0 0.0
      %2956 = vmatpush2.msra.mxu0 0.0
      %2957 = vmatprep.subr.mxu0 0.0
      %2958 = vmatpush2.msra.mxu0 0.0
      %2959 = vmatprep.subr.mxu0 0.0
      %2960 = vmatpush2.msra.mxu0 0.0
      %2961 = vmatprep.subr.mxu0 0.0
      %2962 = vmatpush2.msra.mxu0 0.0
      %2963 = vmatprep.subr.mxu0 0.0
      %2964 = vmatpush2.msra.mxu0 0.0
      %2965 = vmatprep.mubr.f32.mxu0 0.0
      %2966 = vmatmul.mubr.f32.gmra.mxu0 %v2897
      %v2967 = vpop.f32.mrf.mxu0
      %v2968 = vadd.f32 0.0, %v2967
      %v2969 = vpop.f32.mrf.mxu0
      %2970 = vdwg.mxu0
      %v2971 = vadd.f32 %v2891, %v2968
      %s2972 = scalar_lea.vmem %s2, 272
      %v2973 = vld [vmem:[%s2972] sm:$0xff]
      %2974 = vrot.lane.b32.xlu0 %v247, 106
      %v2975 = vpop.permute.xlu0 %2974
      %v2977 = vsel %vm260, %v2973, 0
      %v2979 = vsel %vm264, %v2975, 0
      %2981 = vmatprep.subr.mxu0 0.0
      %2982 = vmatpush1.msra.mxu0 0.0
      %2983 = vmatprep.subr.mxu0 0.0
      %2984 = vmatpush1.msra.mxu0 0.0
      %2985 = vmatprep.subr.mxu0 0.0
      %2986 = vmatpush1.msra.mxu0 0.0
      %2987 = vmatprep.subr.mxu0 0.0
      %2988 = vmatpush1.msra.mxu0 0.0
      %2989 = vmatprep.subr.mxu0 0.0
      %2990 = vmatpush1.msra.mxu0 0.0
      %2991 = vmatprep.subr.mxu0 0.0
      %2992 = vmatpush1.msra.mxu0 0.0
      %2993 = vmatprep.subr.mxu0 0.0
      %2994 = vmatpush1.msra.mxu0 0.0
      %2995 = vmatprep.subr.mxu0 0.0
      %2996 = vmatpush1.msra.mxu0 0.0
      %2997 = vmatprep.subr.mxu0 0.0
      %2998 = vmatpush1.msra.mxu0 0.0
      %2999 = vmatprep.subr.mxu0 0.0
      %3000 = vmatpush1.msra.mxu0 0.0
      %3001 = vmatprep.subr.mxu0 0.0
      %3002 = vmatpush1.msra.mxu0 0.0
      %3003 = vmatprep.subr.mxu0 0.0
      %3004 = vmatpush1.msra.mxu0 0.0
      %3005 = vmatprep.subr.mxu0 0.0
      %3006 = vmatpush1.msra.mxu0 0.0
      %3007 = vmatprep.subr.mxu0 0.0
      %3008 = vmatpush1.msra.mxu0 0.0
      %3009 = vmatprep.subr.mxu0 0.0
      %3010 = vmatpush1.msra.mxu0 0.0
      %3011 = vmatprep.subr.mxu0 0.0
      %3012 = vmatpush1.msra.mxu0 %v2979
      %3013 = vmatprep.subr.mxu0 0.0
      %3014 = vmatpush2.msra.mxu0 0.0
      %3015 = vmatprep.subr.mxu0 0.0
      %3016 = vmatpush2.msra.mxu0 0.0
      %3017 = vmatprep.subr.mxu0 0.0
      %3018 = vmatpush2.msra.mxu0 0.0
      %3019 = vmatprep.subr.mxu0 0.0
      %3020 = vmatpush2.msra.mxu0 0.0
      %3021 = vmatprep.subr.mxu0 0.0
      %3022 = vmatpush2.msra.mxu0 0.0
      %3023 = vmatprep.subr.mxu0 0.0
      %3024 = vmatpush2.msra.mxu0 0.0
      %3025 = vmatprep.subr.mxu0 0.0
      %3026 = vmatpush2.msra.mxu0 0.0
      %3027 = vmatprep.subr.mxu0 0.0
      %3028 = vmatpush2.msra.mxu0 0.0
      %3029 = vmatprep.subr.mxu0 0.0
      %3030 = vmatpush2.msra.mxu0 0.0
      %3031 = vmatprep.subr.mxu0 0.0
      %3032 = vmatpush2.msra.mxu0 0.0
      %3033 = vmatprep.subr.mxu0 0.0
      %3034 = vmatpush2.msra.mxu0 0.0
      %3035 = vmatprep.subr.mxu0 0.0
      %3036 = vmatpush2.msra.mxu0 0.0
      %3037 = vmatprep.subr.mxu0 0.0
      %3038 = vmatpush2.msra.mxu0 0.0
      %3039 = vmatprep.subr.mxu0 0.0
      %3040 = vmatpush2.msra.mxu0 0.0
      %3041 = vmatprep.subr.mxu0 0.0
      %3042 = vmatpush2.msra.mxu0 0.0
      %3043 = vmatprep.subr.mxu0 0.0
      %3044 = vmatpush2.msra.mxu0 0.0
      %3045 = vmatprep.mubr.f32.mxu0 0.0
      %3046 = vmatmul.mubr.f32.gmra.mxu0 %v2977
      %v3047 = vpop.f32.mrf.mxu0
      %v3048 = vadd.f32 0.0, %v3047
      %v3049 = vpop.f32.mrf.mxu0
      %3050 = vdwg.mxu0
      %v3051 = vadd.f32 %v2971, %v3048
      %s3052 = scalar_lea.vmem %s2, 280
      %v3053 = vld [vmem:[%s3052] sm:$0xff]
      %3054 = vrot.lane.b32.xlu0 %v249, 106
      %v3055 = vpop.permute.xlu0 %3054
      %v3057 = vsel %vm260, %v3053, 0
      %v3059 = vsel %vm264, %v3055, 0
      %3061 = vmatprep.subr.mxu0 0.0
      %3062 = vmatpush1.msra.mxu0 0.0
      %3063 = vmatprep.subr.mxu0 0.0
      %3064 = vmatpush1.msra.mxu0 0.0
      %3065 = vmatprep.subr.mxu0 0.0
      %3066 = vmatpush1.msra.mxu0 0.0
      %3067 = vmatprep.subr.mxu0 0.0
      %3068 = vmatpush1.msra.mxu0 0.0
      %3069 = vmatprep.subr.mxu0 0.0
      %3070 = vmatpush1.msra.mxu0 0.0
      %3071 = vmatprep.subr.mxu0 0.0
      %3072 = vmatpush1.msra.mxu0 0.0
      %3073 = vmatprep.subr.mxu0 0.0
      %3074 = vmatpush1.msra.mxu0 0.0
      %3075 = vmatprep.subr.mxu0 0.0
      %3076 = vmatpush1.msra.mxu0 0.0
      %3077 = vmatprep.subr.mxu0 0.0
      %3078 = vmatpush1.msra.mxu0 0.0
      %3079 = vmatprep.subr.mxu0 0.0
      %3080 = vmatpush1.msra.mxu0 0.0
      %3081 = vmatprep.subr.mxu0 0.0
      %3082 = vmatpush1.msra.mxu0 0.0
      %3083 = vmatprep.subr.mxu0 0.0
      %3084 = vmatpush1.msra.mxu0 0.0
      %3085 = vmatprep.subr.mxu0 0.0
      %3086 = vmatpush1.msra.mxu0 0.0
      %3087 = vmatprep.subr.mxu0 0.0
      %3088 = vmatpush1.msra.mxu0 0.0
      %3089 = vmatprep.subr.mxu0 0.0
      %3090 = vmatpush1.msra.mxu0 0.0
      %3091 = vmatprep.subr.mxu0 0.0
      %3092 = vmatpush1.msra.mxu0 %v3059
      %3093 = vmatprep.subr.mxu0 0.0
      %3094 = vmatpush2.msra.mxu0 0.0
      %3095 = vmatprep.subr.mxu0 0.0
      %3096 = vmatpush2.msra.mxu0 0.0
      %3097 = vmatprep.subr.mxu0 0.0
      %3098 = vmatpush2.msra.mxu0 0.0
      %3099 = vmatprep.subr.mxu0 0.0
      %3100 = vmatpush2.msra.mxu0 0.0
      %3101 = vmatprep.subr.mxu0 0.0
      %3102 = vmatpush2.msra.mxu0 0.0
      %3103 = vmatprep.subr.mxu0 0.0
      %3104 = vmatpush2.msra.mxu0 0.0
      %3105 = vmatprep.subr.mxu0 0.0
      %3106 = vmatpush2.msra.mxu0 0.0
      %3107 = vmatprep.subr.mxu0 0.0
      %3108 = vmatpush2.msra.mxu0 0.0
      %3109 = vmatprep.subr.mxu0 0.0
      %3110 = vmatpush2.msra.mxu0 0.0
      %3111 = vmatprep.subr.mxu0 0.0
      %3112 = vmatpush2.msra.mxu0 0.0
      %3113 = vmatprep.subr.mxu0 0.0
      %3114 = vmatpush2.msra.mxu0 0.0
      %3115 = vmatprep.subr.mxu0 0.0
      %3116 = vmatpush2.msra.mxu0 0.0
      %3117 = vmatprep.subr.mxu0 0.0
      %3118 = vmatpush2.msra.mxu0 0.0
      %3119 = vmatprep.subr.mxu0 0.0
      %3120 = vmatpush2.msra.mxu0 0.0
      %3121 = vmatprep.subr.mxu0 0.0
      %3122 = vmatpush2.msra.mxu0 0.0
      %3123 = vmatprep.subr.mxu0 0.0
      %3124 = vmatpush2.msra.mxu0 0.0
      %3125 = vmatprep.mubr.f32.mxu0 0.0
      %3126 = vmatmul.mubr.f32.gmra.mxu0 %v3057
      %v3127 = vpop.f32.mrf.mxu0
      %v3128 = vadd.f32 0.0, %v3127
      %v3129 = vpop.f32.mrf.mxu0
      %3130 = vdwg.mxu0
      %v3131 = vadd.f32 %v3051, %v3128
      %v3132 = vld [vmem:[%s4] sm:$0xff]
      %3134 = vset.pattern.permute.xlu0 0
      %3135 = vperm.xlu0 %3134, %v3132
      %v3136 = vpop.permute.xlu0 %3135
      %v3138 = vadd.f32 %v3131, %v3136
      %vm3139 = vcmp.ge.f32.partialorder %v3138, 0.0
      %v3140 = vmul.f32 %v3138, 0.2
      %v3141 = vsel %vm3139, %v3138, %v3140
      %v3142 = vld [vmem:[%s3] sm:$0xff]
      %s3143 = scalar_lea.vmem %s3, 8
      %v3144 = vld [vmem:[%s3143] sm:$0xff]
      %v3146 = vsel %vm260, %v3144, 0
      %v3149 = vsel %vm264, %v252, 0
      %3151 = vmatprep.subr.mxu0 0.0
      %3152 = vmatpush1.msra.mxu0 0.0
      %3153 = vmatprep.subr.mxu0 0.0
      %3154 = vmatpush1.msra.mxu0 0.0
      %3155 = vmatprep.subr.mxu0 0.0
      %3156 = vmatpush1.msra.mxu0 0.0
      %3157 = vmatprep.subr.mxu0 0.0
      %3158 = vmatpush1.msra.mxu0 0.0
      %3159 = vmatprep.subr.mxu0 0.0
      %3160 = vmatpush1.msra.mxu0 0.0
      %3161 = vmatprep.subr.mxu0 0.0
      %3162 = vmatpush1.msra.mxu0 0.0
      %3163 = vmatprep.subr.mxu0 0.0
      %3164 = vmatpush1.msra.mxu0 0.0
      %3165 = vmatprep.subr.mxu0 0.0
      %3166 = vmatpush1.msra.mxu0 0.0
      %3167 = vmatprep.subr.mxu0 0.0
      %3168 = vmatpush1.msra.mxu0 0.0
      %3169 = vmatprep.subr.mxu0 0.0
      %3170 = vmatpush1.msra.mxu0 0.0
      %3171 = vmatprep.subr.mxu0 0.0
      %3172 = vmatpush1.msra.mxu0 0.0
      %3173 = vmatprep.subr.mxu0 0.0
      %3174 = vmatpush1.msra.mxu0 0.0
      %3175 = vmatprep.subr.mxu0 0.0
      %3176 = vmatpush1.msra.mxu0 0.0
      %3177 = vmatprep.subr.mxu0 0.0
      %3178 = vmatpush1.msra.mxu0 0.0
      %3179 = vmatprep.subr.mxu0 0.0
      %3180 = vmatpush1.msra.mxu0 0.0
      %3181 = vmatprep.subr.mxu0 0.0
      %3182 = vmatpush1.msra.mxu0 %v3149
      %3183 = vmatprep.subr.mxu0 0.0
      %3184 = vmatpush2.msra.mxu0 0.0
      %3185 = vmatprep.subr.mxu0 0.0
      %3186 = vmatpush2.msra.mxu0 0.0
      %3187 = vmatprep.subr.mxu0 0.0
      %3188 = vmatpush2.msra.mxu0 0.0
      %3189 = vmatprep.subr.mxu0 0.0
      %3190 = vmatpush2.msra.mxu0 0.0
      %3191 = vmatprep.subr.mxu0 0.0
      %3192 = vmatpush2.msra.mxu0 0.0
      %3193 = vmatprep.subr.mxu0 0.0
      %3194 = vmatpush2.msra.mxu0 0.0
      %3195 = vmatprep.subr.mxu0 0.0
      %3196 = vmatpush2.msra.mxu0 0.0
      %3197 = vmatprep.subr.mxu0 0.0
      %3198 = vmatpush2.msra.mxu0 0.0
      %3199 = vmatprep.subr.mxu0 0.0
      %3200 = vmatpush2.msra.mxu0 0.0
      %3201 = vmatprep.subr.mxu0 0.0
      %3202 = vmatpush2.msra.mxu0 0.0
      %3203 = vmatprep.subr.mxu0 0.0
      %3204 = vmatpush2.msra.mxu0 0.0
      %3205 = vmatprep.subr.mxu0 0.0
      %3206 = vmatpush2.msra.mxu0 0.0
      %3207 = vmatprep.subr.mxu0 0.0
      %3208 = vmatpush2.msra.mxu0 0.0
      %3209 = vmatprep.subr.mxu0 0.0
      %3210 = vmatpush2.msra.mxu0 0.0
      %3211 = vmatprep.subr.mxu0 0.0
      %3212 = vmatpush2.msra.mxu0 0.0
      %3213 = vmatprep.subr.mxu0 0.0
      %3214 = vmatpush2.msra.mxu0 0.0
      %3215 = vmatprep.mubr.f32.mxu0 0.0
      %3216 = vmatmul.mubr.f32.gmra.mxu0 %v3146
      %v3217 = vpop.f32.mrf.mxu0
      %v3218 = vadd.f32 0.0, %v3217
      %v3219 = vpop.f32.mrf.mxu0
      %3220 = vdwg.mxu0
      %v3222 = vsel %vm260, %v3142, 0
      %v3225 = vsel %vm264, %v250, 0
      %3227 = vmatprep.subr.mxu0 0.0
      %3228 = vmatpush1.msra.mxu0 0.0
      %3229 = vmatprep.subr.mxu0 0.0
      %3230 = vmatpush1.msra.mxu0 0.0
      %3231 = vmatprep.subr.mxu0 0.0
      %3232 = vmatpush1.msra.mxu0 0.0
      %3233 = vmatprep.subr.mxu0 0.0
      %3234 = vmatpush1.msra.mxu0 0.0
      %3235 = vmatprep.subr.mxu0 0.0
      %3236 = vmatpush1.msra.mxu0 0.0
      %3237 = vmatprep.subr.mxu0 0.0
      %3238 = vmatpush1.msra.mxu0 0.0
      %3239 = vmatprep.subr.mxu0 0.0
      %3240 = vmatpush1.msra.mxu0 0.0
      %3241 = vmatprep.subr.mxu0 0.0
      %3242 = vmatpush1.msra.mxu0 0.0
      %3243 = vmatprep.subr.mxu0 0.0
      %3244 = vmatpush1.msra.mxu0 0.0
      %3245 = vmatprep.subr.mxu0 0.0
      %3246 = vmatpush1.msra.mxu0 0.0
      %3247 = vmatprep.subr.mxu0 0.0
      %3248 = vmatpush1.msra.mxu0 0.0
      %3249 = vmatprep.subr.mxu0 0.0
      %3250 = vmatpush1.msra.mxu0 0.0
      %3251 = vmatprep.subr.mxu0 0.0
      %3252 = vmatpush1.msra.mxu0 0.0
      %3253 = vmatprep.subr.mxu0 0.0
      %3254 = vmatpush1.msra.mxu0 0.0
      %3255 = vmatprep.subr.mxu0 0.0
      %3256 = vmatpush1.msra.mxu0 0.0
      %3257 = vmatprep.subr.mxu0 0.0
      %3258 = vmatpush1.msra.mxu0 %v3225
      %3259 = vmatprep.subr.mxu0 0.0
      %3260 = vmatpush2.msra.mxu0 0.0
      %3261 = vmatprep.subr.mxu0 0.0
      %3262 = vmatpush2.msra.mxu0 0.0
      %3263 = vmatprep.subr.mxu0 0.0
      %3264 = vmatpush2.msra.mxu0 0.0
      %3265 = vmatprep.subr.mxu0 0.0
      %3266 = vmatpush2.msra.mxu0 0.0
      %3267 = vmatprep.subr.mxu0 0.0
      %3268 = vmatpush2.msra.mxu0 0.0
      %3269 = vmatprep.subr.mxu0 0.0
      %3270 = vmatpush2.msra.mxu0 0.0
      %3271 = vmatprep.subr.mxu0 0.0
      %3272 = vmatpush2.msra.mxu0 0.0
      %3273 = vmatprep.subr.mxu0 0.0
      %3274 = vmatpush2.msra.mxu0 0.0
      %3275 = vmatprep.subr.mxu0 0.0
      %3276 = vmatpush2.msra.mxu0 0.0
      %3277 = vmatprep.subr.mxu0 0.0
      %3278 = vmatpush2.msra.mxu0 0.0
      %3279 = vmatprep.subr.mxu0 0.0
      %3280 = vmatpush2.msra.mxu0 0.0
      %3281 = vmatprep.subr.mxu0 0.0
      %3282 = vmatpush2.msra.mxu0 0.0
      %3283 = vmatprep.subr.mxu0 0.0
      %3284 = vmatpush2.msra.mxu0 0.0
      %3285 = vmatprep.subr.mxu0 0.0
      %3286 = vmatpush2.msra.mxu0 0.0
      %3287 = vmatprep.subr.mxu0 0.0
      %3288 = vmatpush2.msra.mxu0 0.0
      %3289 = vmatprep.subr.mxu0 0.0
      %3290 = vmatpush2.msra.mxu0 0.0
      %3291 = vmatprep.mubr.f32.mxu0 0.0
      %3292 = vmatmul.mubr.f32.gmra.mxu0 %v3222
      %v3293 = vpop.f32.mrf.mxu0
      %v3294 = vadd.f32 %v3218, %v3293
      %v3295 = vpop.f32.mrf.mxu0
      %3296 = vdwg.mxu0
      %s3297 = scalar_lea.vmem %s3, 16
      %v3298 = vld [vmem:[%s3297] sm:$0xff]
      %3299 = vrot.lane.b32.xlu0 %v250, 127
      %v3300 = vpop.permute.xlu0 %3299
      %v3302 = vsel %vm260, %v3298, 0
      %v3304 = vsel %vm264, %v3300, 0
      %3306 = vmatprep.subr.mxu0 0.0
      %3307 = vmatpush1.msra.mxu0 0.0
      %3308 = vmatprep.subr.mxu0 0.0
      %3309 = vmatpush1.msra.mxu0 0.0
      %3310 = vmatprep.subr.mxu0 0.0
      %3311 = vmatpush1.msra.mxu0 0.0
      %3312 = vmatprep.subr.mxu0 0.0
      %3313 = vmatpush1.msra.mxu0 0.0
      %3314 = vmatprep.subr.mxu0 0.0
      %3315 = vmatpush1.msra.mxu0 0.0
      %3316 = vmatprep.subr.mxu0 0.0
      %3317 = vmatpush1.msra.mxu0 0.0
      %3318 = vmatprep.subr.mxu0 0.0
      %3319 = vmatpush1.msra.mxu0 0.0
      %3320 = vmatprep.subr.mxu0 0.0
      %3321 = vmatpush1.msra.mxu0 0.0
      %3322 = vmatprep.subr.mxu0 0.0
      %3323 = vmatpush1.msra.mxu0 0.0
      %3324 = vmatprep.subr.mxu0 0.0
      %3325 = vmatpush1.msra.mxu0 0.0
      %3326 = vmatprep.subr.mxu0 0.0
      %3327 = vmatpush1.msra.mxu0 0.0
      %3328 = vmatprep.subr.mxu0 0.0
      %3329 = vmatpush1.msra.mxu0 0.0
      %3330 = vmatprep.subr.mxu0 0.0
      %3331 = vmatpush1.msra.mxu0 0.0
      %3332 = vmatprep.subr.mxu0 0.0
      %3333 = vmatpush1.msra.mxu0 0.0
      %3334 = vmatprep.subr.mxu0 0.0
      %3335 = vmatpush1.msra.mxu0 0.0
      %3336 = vmatprep.subr.mxu0 0.0
      %3337 = vmatpush1.msra.mxu0 %v3304
      %3338 = vmatprep.subr.mxu0 0.0
      %3339 = vmatpush2.msra.mxu0 0.0
      %3340 = vmatprep.subr.mxu0 0.0
      %3341 = vmatpush2.msra.mxu0 0.0
      %3342 = vmatprep.subr.mxu0 0.0
      %3343 = vmatpush2.msra.mxu0 0.0
      %3344 = vmatprep.subr.mxu0 0.0
      %3345 = vmatpush2.msra.mxu0 0.0
      %3346 = vmatprep.subr.mxu0 0.0
      %3347 = vmatpush2.msra.mxu0 0.0
      %3348 = vmatprep.subr.mxu0 0.0
      %3349 = vmatpush2.msra.mxu0 0.0
      %3350 = vmatprep.subr.mxu0 0.0
      %3351 = vmatpush2.msra.mxu0 0.0
      %3352 = vmatprep.subr.mxu0 0.0
      %3353 = vmatpush2.msra.mxu0 0.0
      %3354 = vmatprep.subr.mxu0 0.0
      %3355 = vmatpush2.msra.mxu0 0.0
      %3356 = vmatprep.subr.mxu0 0.0
      %3357 = vmatpush2.msra.mxu0 0.0
      %3358 = vmatprep.subr.mxu0 0.0
      %3359 = vmatpush2.msra.mxu0 0.0
      %3360 = vmatprep.subr.mxu0 0.0
      %3361 = vmatpush2.msra.mxu0 0.0
      %3362 = vmatprep.subr.mxu0 0.0
      %3363 = vmatpush2.msra.mxu0 0.0
      %3364 = vmatprep.subr.mxu0 0.0
      %3365 = vmatpush2.msra.mxu0 0.0
      %3366 = vmatprep.subr.mxu0 0.0
      %3367 = vmatpush2.msra.mxu0 0.0
      %3368 = vmatprep.subr.mxu0 0.0
      %3369 = vmatpush2.msra.mxu0 0.0
      %3370 = vmatprep.mubr.f32.mxu0 0.0
      %3371 = vmatmul.mubr.f32.gmra.mxu0 %v3302
      %v3372 = vpop.f32.mrf.mxu0
      %v3373 = vadd.f32 0.0, %v3372
      %v3374 = vpop.f32.mrf.mxu0
      %3375 = vdwg.mxu0
      %v3376 = vadd.f32 %v3294, %v3373
      %s3377 = scalar_lea.vmem %s3, 24
      %v3378 = vld [vmem:[%s3377] sm:$0xff]
      %3379 = vrot.lane.b32.xlu0 %v252, 127
      %v3380 = vpop.permute.xlu0 %3379
      %v3382 = vsel %vm260, %v3378, 0
      %v3384 = vsel %vm264, %v3380, 0
      %3386 = vmatprep.subr.mxu0 0.0
      %3387 = vmatpush1.msra.mxu0 0.0
      %3388 = vmatprep.subr.mxu0 0.0
      %3389 = vmatpush1.msra.mxu0 0.0
      %3390 = vmatprep.subr.mxu0 0.0
      %3391 = vmatpush1.msra.mxu0 0.0
      %3392 = vmatprep.subr.mxu0 0.0
      %3393 = vmatpush1.msra.mxu0 0.0
      %3394 = vmatprep.subr.mxu0 0.0
      %3395 = vmatpush1.msra.mxu0 0.0
      %3396 = vmatprep.subr.mxu0 0.0
      %3397 = vmatpush1.msra.mxu0 0.0
      %3398 = vmatprep.subr.mxu0 0.0
      %3399 = vmatpush1.msra.mxu0 0.0
      %3400 = vmatprep.subr.mxu0 0.0
      %3401 = vmatpush1.msra.mxu0 0.0
      %3402 = vmatprep.subr.mxu0 0.0
      %3403 = vmatpush1.msra.mxu0 0.0
      %3404 = vmatprep.subr.mxu0 0.0
      %3405 = vmatpush1.msra.mxu0 0.0
      %3406 = vmatprep.subr.mxu0 0.0
      %3407 = vmatpush1.msra.mxu0 0.0
      %3408 = vmatprep.subr.mxu0 0.0
      %3409 = vmatpush1.msra.mxu0 0.0
      %3410 = vmatprep.subr.mxu0 0.0
      %3411 = vmatpush1.msra.mxu0 0.0
      %3412 = vmatprep.subr.mxu0 0.0
      %3413 = vmatpush1.msra.mxu0 0.0
      %3414 = vmatprep.subr.mxu0 0.0
      %3415 = vmatpush1.msra.mxu0 0.0
      %3416 = vmatprep.subr.mxu0 0.0
      %3417 = vmatpush1.msra.mxu0 %v3384
      %3418 = vmatprep.subr.mxu0 0.0
      %3419 = vmatpush2.msra.mxu0 0.0
      %3420 = vmatprep.subr.mxu0 0.0
      %3421 = vmatpush2.msra.mxu0 0.0
      %3422 = vmatprep.subr.mxu0 0.0
      %3423 = vmatpush2.msra.mxu0 0.0
      %3424 = vmatprep.subr.mxu0 0.0
      %3425 = vmatpush2.msra.mxu0 0.0
      %3426 = vmatprep.subr.mxu0 0.0
      %3427 = vmatpush2.msra.mxu0 0.0
      %3428 = vmatprep.subr.mxu0 0.0
      %3429 = vmatpush2.msra.mxu0 0.0
      %3430 = vmatprep.subr.mxu0 0.0
      %3431 = vmatpush2.msra.mxu0 0.0
      %3432 = vmatprep.subr.mxu0 0.0
      %3433 = vmatpush2.msra.mxu0 0.0
      %3434 = vmatprep.subr.mxu0 0.0
      %3435 = vmatpush2.msra.mxu0 0.0
      %3436 = vmatprep.subr.mxu0 0.0
      %3437 = vmatpush2.msra.mxu0 0.0
      %3438 = vmatprep.subr.mxu0 0.0
      %3439 = vmatpush2.msra.mxu0 0.0
      %3440 = vmatprep.subr.mxu0 0.0
      %3441 = vmatpush2.msra.mxu0 0.0
      %3442 = vmatprep.subr.mxu0 0.0
      %3443 = vmatpush2.msra.mxu0 0.0
      %3444 = vmatprep.subr.mxu0 0.0
      %3445 = vmatpush2.msra.mxu0 0.0
      %3446 = vmatprep.subr.mxu0 0.0
      %3447 = vmatpush2.msra.mxu0 0.0
      %3448 = vmatprep.subr.mxu0 0.0
      %3449 = vmatpush2.msra.mxu0 0.0
      %3450 = vmatprep.mubr.f32.mxu0 0.0
      %3451 = vmatmul.mubr.f32.gmra.mxu0 %v3382
      %v3452 = vpop.f32.mrf.mxu0
      %v3453 = vadd.f32 0.0, %v3452
      %v3454 = vpop.f32.mrf.mxu0
      %3455 = vdwg.mxu0
      %v3456 = vadd.f32 %v3376, %v3453
      %s3457 = scalar_lea.vmem %s3, 32
      %v3458 = vld [vmem:[%s3457] sm:$0xff]
      %v3460 = vsel %vm260, %v3458, 0
      %v3463 = vsel %vm264, %v254, 0
      %3465 = vmatprep.subr.mxu0 0.0
      %3466 = vmatpush1.msra.mxu0 0.0
      %3467 = vmatprep.subr.mxu0 0.0
      %3468 = vmatpush1.msra.mxu0 0.0
      %3469 = vmatprep.subr.mxu0 0.0
      %3470 = vmatpush1.msra.mxu0 0.0
      %3471 = vmatprep.subr.mxu0 0.0
      %3472 = vmatpush1.msra.mxu0 0.0
      %3473 = vmatprep.subr.mxu0 0.0
      %3474 = vmatpush1.msra.mxu0 0.0
      %3475 = vmatprep.subr.mxu0 0.0
      %3476 = vmatpush1.msra.mxu0 0.0
      %3477 = vmatprep.subr.mxu0 0.0
      %3478 = vmatpush1.msra.mxu0 0.0
      %3479 = vmatprep.subr.mxu0 0.0
      %3480 = vmatpush1.msra.mxu0 0.0
      %3481 = vmatprep.subr.mxu0 0.0
      %3482 = vmatpush1.msra.mxu0 0.0
      %3483 = vmatprep.subr.mxu0 0.0
      %3484 = vmatpush1.msra.mxu0 0.0
      %3485 = vmatprep.subr.mxu0 0.0
      %3486 = vmatpush1.msra.mxu0 0.0
      %3487 = vmatprep.subr.mxu0 0.0
      %3488 = vmatpush1.msra.mxu0 0.0
      %3489 = vmatprep.subr.mxu0 0.0
      %3490 = vmatpush1.msra.mxu0 0.0
      %3491 = vmatprep.subr.mxu0 0.0
      %3492 = vmatpush1.msra.mxu0 0.0
      %3493 = vmatprep.subr.mxu0 0.0
      %3494 = vmatpush1.msra.mxu0 0.0
      %3495 = vmatprep.subr.mxu0 0.0
      %3496 = vmatpush1.msra.mxu0 %v3463
      %3497 = vmatprep.subr.mxu0 0.0
      %3498 = vmatpush2.msra.mxu0 0.0
      %3499 = vmatprep.subr.mxu0 0.0
      %3500 = vmatpush2.msra.mxu0 0.0
      %3501 = vmatprep.subr.mxu0 0.0
      %3502 = vmatpush2.msra.mxu0 0.0
      %3503 = vmatprep.subr.mxu0 0.0
      %3504 = vmatpush2.msra.mxu0 0.0
      %3505 = vmatprep.subr.mxu0 0.0
      %3506 = vmatpush2.msra.mxu0 0.0
      %3507 = vmatprep.subr.mxu0 0.0
      %3508 = vmatpush2.msra.mxu0 0.0
      %3509 = vmatprep.subr.mxu0 0.0
      %3510 = vmatpush2.msra.mxu0 0.0
      %3511 = vmatprep.subr.mxu0 0.0
      %3512 = vmatpush2.msra.mxu0 0.0
      %3513 = vmatprep.subr.mxu0 0.0
      %3514 = vmatpush2.msra.mxu0 0.0
      %3515 = vmatprep.subr.mxu0 0.0
      %3516 = vmatpush2.msra.mxu0 0.0
      %3517 = vmatprep.subr.mxu0 0.0
      %3518 = vmatpush2.msra.mxu0 0.0
      %3519 = vmatprep.subr.mxu0 0.0
      %3520 = vmatpush2.msra.mxu0 0.0
      %3521 = vmatprep.subr.mxu0 0.0
      %3522 = vmatpush2.msra.mxu0 0.0
      %3523 = vmatprep.subr.mxu0 0.0
      %3524 = vmatpush2.msra.mxu0 0.0
      %3525 = vmatprep.subr.mxu0 0.0
      %3526 = vmatpush2.msra.mxu0 0.0
      %3527 = vmatprep.subr.mxu0 0.0
      %3528 = vmatpush2.msra.mxu0 0.0
      %3529 = vmatprep.mubr.f32.mxu0 0.0
      %3530 = vmatmul.mubr.f32.gmra.mxu0 %v3460
      %v3531 = vpop.f32.mrf.mxu0
      %v3532 = vadd.f32 0.0, %v3531
      %v3533 = vpop.f32.mrf.mxu0
      %3534 = vdwg.mxu0
      %v3535 = vadd.f32 %v3456, %v3532
      %s3536 = scalar_lea.vmem %s3, 40
      %v3537 = vld [vmem:[%s3536] sm:$0xff]
      %v3539 = vsel %vm260, %v3537, 0
      %v3542 = vsel %vm264, %v256, 0
      %3544 = vmatprep.subr.mxu0 0.0
      %3545 = vmatpush1.msra.mxu0 0.0
      %3546 = vmatprep.subr.mxu0 0.0
      %3547 = vmatpush1.msra.mxu0 0.0
      %3548 = vmatprep.subr.mxu0 0.0
      %3549 = vmatpush1.msra.mxu0 0.0
      %3550 = vmatprep.subr.mxu0 0.0
      %3551 = vmatpush1.msra.mxu0 0.0
      %3552 = vmatprep.subr.mxu0 0.0
      %3553 = vmatpush1.msra.mxu0 0.0
      %3554 = vmatprep.subr.mxu0 0.0
      %3555 = vmatpush1.msra.mxu0 0.0
      %3556 = vmatprep.subr.mxu0 0.0
      %3557 = vmatpush1.msra.mxu0 0.0
      %3558 = vmatprep.subr.mxu0 0.0
      %3559 = vmatpush1.msra.mxu0 0.0
      %3560 = vmatprep.subr.mxu0 0.0
      %3561 = vmatpush1.msra.mxu0 0.0
      %3562 = vmatprep.subr.mxu0 0.0
      %3563 = vmatpush1.msra.mxu0 0.0
      %3564 = vmatprep.subr.mxu0 0.0
      %3565 = vmatpush1.msra.mxu0 0.0
      %3566 = vmatprep.subr.mxu0 0.0
      %3567 = vmatpush1.msra.mxu0 0.0
      %3568 = vmatprep.subr.mxu0 0.0
      %3569 = vmatpush1.msra.mxu0 0.0
      %3570 = vmatprep.subr.mxu0 0.0
      %3571 = vmatpush1.msra.mxu0 0.0
      %3572 = vmatprep.subr.mxu0 0.0
      %3573 = vmatpush1.msra.mxu0 0.0
      %3574 = vmatprep.subr.mxu0 0.0
      %3575 = vmatpush1.msra.mxu0 %v3542
      %3576 = vmatprep.subr.mxu0 0.0
      %3577 = vmatpush2.msra.mxu0 0.0
      %3578 = vmatprep.subr.mxu0 0.0
      %3579 = vmatpush2.msra.mxu0 0.0
      %3580 = vmatprep.subr.mxu0 0.0
      %3581 = vmatpush2.msra.mxu0 0.0
      %3582 = vmatprep.subr.mxu0 0.0
      %3583 = vmatpush2.msra.mxu0 0.0
      %3584 = vmatprep.subr.mxu0 0.0
      %3585 = vmatpush2.msra.mxu0 0.0
      %3586 = vmatprep.subr.mxu0 0.0
      %3587 = vmatpush2.msra.mxu0 0.0
      %3588 = vmatprep.subr.mxu0 0.0
      %3589 = vmatpush2.msra.mxu0 0.0
      %3590 = vmatprep.subr.mxu0 0.0
      %3591 = vmatpush2.msra.mxu0 0.0
      %3592 = vmatprep.subr.mxu0 0.0
      %3593 = vmatpush2.msra.mxu0 0.0
      %3594 = vmatprep.subr.mxu0 0.0
      %3595 = vmatpush2.msra.mxu0 0.0
      %3596 = vmatprep.subr.mxu0 0.0
      %3597 = vmatpush2.msra.mxu0 0.0
      %3598 = vmatprep.subr.mxu0 0.0
      %3599 = vmatpush2.msra.mxu0 0.0
      %3600 = vmatprep.subr.mxu0 0.0
      %3601 = vmatpush2.msra.mxu0 0.0
      %3602 = vmatprep.subr.mxu0 0.0
      %3603 = vmatpush2.msra.mxu0 0.0
      %3604 = vmatprep.subr.mxu0 0.0
      %3605 = vmatpush2.msra.mxu0 0.0
      %3606 = vmatprep.subr.mxu0 0.0
      %3607 = vmatpush2.msra.mxu0 0.0
      %3608 = vmatprep.mubr.f32.mxu0 0.0
      %3609 = vmatmul.mubr.f32.gmra.mxu0 %v3539
      %v3610 = vpop.f32.mrf.mxu0
      %v3611 = vadd.f32 0.0, %v3610
      %v3612 = vpop.f32.mrf.mxu0
      %3613 = vdwg.mxu0
      %v3614 = vadd.f32 %v3535, %v3611
      %s3615 = scalar_lea.vmem %s3, 48
      %v3616 = vld [vmem:[%s3615] sm:$0xff]
      %3617 = vrot.lane.b32.xlu0 %v254, 127
      %v3618 = vpop.permute.xlu0 %3617
      %v3620 = vsel %vm260, %v3616, 0
      %v3622 = vsel %vm264, %v3618, 0
      %3624 = vmatprep.subr.mxu0 0.0
      %3625 = vmatpush1.msra.mxu0 0.0
      %3626 = vmatprep.subr.mxu0 0.0
      %3627 = vmatpush1.msra.mxu0 0.0
      %3628 = vmatprep.subr.mxu0 0.0
      %3629 = vmatpush1.msra.mxu0 0.0
      %3630 = vmatprep.subr.mxu0 0.0
      %3631 = vmatpush1.msra.mxu0 0.0
      %3632 = vmatprep.subr.mxu0 0.0
      %3633 = vmatpush1.msra.mxu0 0.0
      %3634 = vmatprep.subr.mxu0 0.0
      %3635 = vmatpush1.msra.mxu0 0.0
      %3636 = vmatprep.subr.mxu0 0.0
      %3637 = vmatpush1.msra.mxu0 0.0
      %3638 = vmatprep.subr.mxu0 0.0
      %3639 = vmatpush1.msra.mxu0 0.0
      %3640 = vmatprep.subr.mxu0 0.0
      %3641 = vmatpush1.msra.mxu0 0.0
      %3642 = vmatprep.subr.mxu0 0.0
      %3643 = vmatpush1.msra.mxu0 0.0
      %3644 = vmatprep.subr.mxu0 0.0
      %3645 = vmatpush1.msra.mxu0 0.0
      %3646 = vmatprep.subr.mxu0 0.0
      %3647 = vmatpush1.msra.mxu0 0.0
      %3648 = vmatprep.subr.mxu0 0.0
      %3649 = vmatpush1.msra.mxu0 0.0
      %3650 = vmatprep.subr.mxu0 0.0
      %3651 = vmatpush1.msra.mxu0 0.0
      %3652 = vmatprep.subr.mxu0 0.0
      %3653 = vmatpush1.msra.mxu0 0.0
      %3654 = vmatprep.subr.mxu0 0.0
      %3655 = vmatpush1.msra.mxu0 %v3622
      %3656 = vmatprep.subr.mxu0 0.0
      %3657 = vmatpush2.msra.mxu0 0.0
      %3658 = vmatprep.subr.mxu0 0.0
      %3659 = vmatpush2.msra.mxu0 0.0
      %3660 = vmatprep.subr.mxu0 0.0
      %3661 = vmatpush2.msra.mxu0 0.0
      %3662 = vmatprep.subr.mxu0 0.0
      %3663 = vmatpush2.msra.mxu0 0.0
      %3664 = vmatprep.subr.mxu0 0.0
      %3665 = vmatpush2.msra.mxu0 0.0
      %3666 = vmatprep.subr.mxu0 0.0
      %3667 = vmatpush2.msra.mxu0 0.0
      %3668 = vmatprep.subr.mxu0 0.0
      %3669 = vmatpush2.msra.mxu0 0.0
      %3670 = vmatprep.subr.mxu0 0.0
      %3671 = vmatpush2.msra.mxu0 0.0
      %3672 = vmatprep.subr.mxu0 0.0
      %3673 = vmatpush2.msra.mxu0 0.0
      %3674 = vmatprep.subr.mxu0 0.0
      %3675 = vmatpush2.msra.mxu0 0.0
      %3676 = vmatprep.subr.mxu0 0.0
      %3677 = vmatpush2.msra.mxu0 0.0
      %3678 = vmatprep.subr.mxu0 0.0
      %3679 = vmatpush2.msra.mxu0 0.0
      %3680 = vmatprep.subr.mxu0 0.0
      %3681 = vmatpush2.msra.mxu0 0.0
      %3682 = vmatprep.subr.mxu0 0.0
      %3683 = vmatpush2.msra.mxu0 0.0
      %3684 = vmatprep.subr.mxu0 0.0
      %3685 = vmatpush2.msra.mxu0 0.0
      %3686 = vmatprep.subr.mxu0 0.0
      %3687 = vmatpush2.msra.mxu0 0.0
      %3688 = vmatprep.mubr.f32.mxu0 0.0
      %3689 = vmatmul.mubr.f32.gmra.mxu0 %v3620
      %v3690 = vpop.f32.mrf.mxu0
      %v3691 = vadd.f32 0.0, %v3690
      %v3692 = vpop.f32.mrf.mxu0
      %3693 = vdwg.mxu0
      %v3694 = vadd.f32 %v3614, %v3691
      %s3695 = scalar_lea.vmem %s3, 56
      %v3696 = vld [vmem:[%s3695] sm:$0xff]
      %3697 = vrot.lane.b32.xlu0 %v256, 127
      %v3698 = vpop.permute.xlu0 %3697
      %v3700 = vsel %vm260, %v3696, 0
      %v3702 = vsel %vm264, %v3698, 0
      %3704 = vmatprep.subr.mxu0 0.0
      %3705 = vmatpush1.msra.mxu0 0.0
      %3706 = vmatprep.subr.mxu0 0.0
      %3707 = vmatpush1.msra.mxu0 0.0
      %3708 = vmatprep.subr.mxu0 0.0
      %3709 = vmatpush1.msra.mxu0 0.0
      %3710 = vmatprep.subr.mxu0 0.0
      %3711 = vmatpush1.msra.mxu0 0.0
      %3712 = vmatprep.subr.mxu0 0.0
      %3713 = vmatpush1.msra.mxu0 0.0
      %3714 = vmatprep.subr.mxu0 0.0
      %3715 = vmatpush1.msra.mxu0 0.0
      %3716 = vmatprep.subr.mxu0 0.0
      %3717 = vmatpush1.msra.mxu0 0.0
      %3718 = vmatprep.subr.mxu0 0.0
      %3719 = vmatpush1.msra.mxu0 0.0
      %3720 = vmatprep.subr.mxu0 0.0
      %3721 = vmatpush1.msra.mxu0 0.0
      %3722 = vmatprep.subr.mxu0 0.0
      %3723 = vmatpush1.msra.mxu0 0.0
      %3724 = vmatprep.subr.mxu0 0.0
      %3725 = vmatpush1.msra.mxu0 0.0
      %3726 = vmatprep.subr.mxu0 0.0
      %3727 = vmatpush1.msra.mxu0 0.0
      %3728 = vmatprep.subr.mxu0 0.0
      %3729 = vmatpush1.msra.mxu0 0.0
      %3730 = vmatprep.subr.mxu0 0.0
      %3731 = vmatpush1.msra.mxu0 0.0
      %3732 = vmatprep.subr.mxu0 0.0
      %3733 = vmatpush1.msra.mxu0 0.0
      %3734 = vmatprep.subr.mxu0 0.0
      %3735 = vmatpush1.msra.mxu0 %v3702
      %3736 = vmatprep.subr.mxu0 0.0
      %3737 = vmatpush2.msra.mxu0 0.0
      %3738 = vmatprep.subr.mxu0 0.0
      %3739 = vmatpush2.msra.mxu0 0.0
      %3740 = vmatprep.subr.mxu0 0.0
      %3741 = vmatpush2.msra.mxu0 0.0
      %3742 = vmatprep.subr.mxu0 0.0
      %3743 = vmatpush2.msra.mxu0 0.0
      %3744 = vmatprep.subr.mxu0 0.0
      %3745 = vmatpush2.msra.mxu0 0.0
      %3746 = vmatprep.subr.mxu0 0.0
      %3747 = vmatpush2.msra.mxu0 0.0
      %3748 = vmatprep.subr.mxu0 0.0
      %3749 = vmatpush2.msra.mxu0 0.0
      %3750 = vmatprep.subr.mxu0 0.0
      %3751 = vmatpush2.msra.mxu0 0.0
      %3752 = vmatprep.subr.mxu0 0.0
      %3753 = vmatpush2.msra.mxu0 0.0
      %3754 = vmatprep.subr.mxu0 0.0
      %3755 = vmatpush2.msra.mxu0 0.0
      %3756 = vmatprep.subr.mxu0 0.0
      %3757 = vmatpush2.msra.mxu0 0.0
      %3758 = vmatprep.subr.mxu0 0.0
      %3759 = vmatpush2.msra.mxu0 0.0
      %3760 = vmatprep.subr.mxu0 0.0
      %3761 = vmatpush2.msra.mxu0 0.0
      %3762 = vmatprep.subr.mxu0 0.0
      %3763 = vmatpush2.msra.mxu0 0.0
      %3764 = vmatprep.subr.mxu0 0.0
      %3765 = vmatpush2.msra.mxu0 0.0
      %3766 = vmatprep.subr.mxu0 0.0
      %3767 = vmatpush2.msra.mxu0 0.0
      %3768 = vmatprep.mubr.f32.mxu0 0.0
      %3769 = vmatmul.mubr.f32.gmra.mxu0 %v3700
      %v3770 = vpop.f32.mrf.mxu0
      %v3771 = vadd.f32 0.0, %v3770
      %v3772 = vpop.f32.mrf.mxu0
      %3773 = vdwg.mxu0
      %v3774 = vadd.f32 %v3694, %v3771
      %s3775 = scalar_lea.vmem %s3, 64
      %v3776 = vld [vmem:[%s3775] sm:$0xff]
      %3777 = vrot.lane.b32.xlu0 %v250, 118
      %v3778 = vpop.permute.xlu0 %3777
      %v3780 = vsel %vm260, %v3776, 0
      %v3782 = vsel %vm264, %v3778, 0
      %3784 = vmatprep.subr.mxu0 0.0
      %3785 = vmatpush1.msra.mxu0 0.0
      %3786 = vmatprep.subr.mxu0 0.0
      %3787 = vmatpush1.msra.mxu0 0.0
      %3788 = vmatprep.subr.mxu0 0.0
      %3789 = vmatpush1.msra.mxu0 0.0
      %3790 = vmatprep.subr.mxu0 0.0
      %3791 = vmatpush1.msra.mxu0 0.0
      %3792 = vmatprep.subr.mxu0 0.0
      %3793 = vmatpush1.msra.mxu0 0.0
      %3794 = vmatprep.subr.mxu0 0.0
      %3795 = vmatpush1.msra.mxu0 0.0
      %3796 = vmatprep.subr.mxu0 0.0
      %3797 = vmatpush1.msra.mxu0 0.0
      %3798 = vmatprep.subr.mxu0 0.0
      %3799 = vmatpush1.msra.mxu0 0.0
      %3800 = vmatprep.subr.mxu0 0.0
      %3801 = vmatpush1.msra.mxu0 0.0
      %3802 = vmatprep.subr.mxu0 0.0
      %3803 = vmatpush1.msra.mxu0 0.0
      %3804 = vmatprep.subr.mxu0 0.0
      %3805 = vmatpush1.msra.mxu0 0.0
      %3806 = vmatprep.subr.mxu0 0.0
      %3807 = vmatpush1.msra.mxu0 0.0
      %3808 = vmatprep.subr.mxu0 0.0
      %3809 = vmatpush1.msra.mxu0 0.0
      %3810 = vmatprep.subr.mxu0 0.0
      %3811 = vmatpush1.msra.mxu0 0.0
      %3812 = vmatprep.subr.mxu0 0.0
      %3813 = vmatpush1.msra.mxu0 0.0
      %3814 = vmatprep.subr.mxu0 0.0
      %3815 = vmatpush1.msra.mxu0 %v3782
      %3816 = vmatprep.subr.mxu0 0.0
      %3817 = vmatpush2.msra.mxu0 0.0
      %3818 = vmatprep.subr.mxu0 0.0
      %3819 = vmatpush2.msra.mxu0 0.0
      %3820 = vmatprep.subr.mxu0 0.0
      %3821 = vmatpush2.msra.mxu0 0.0
      %3822 = vmatprep.subr.mxu0 0.0
      %3823 = vmatpush2.msra.mxu0 0.0
      %3824 = vmatprep.subr.mxu0 0.0
      %3825 = vmatpush2.msra.mxu0 0.0
      %3826 = vmatprep.subr.mxu0 0.0
      %3827 = vmatpush2.msra.mxu0 0.0
      %3828 = vmatprep.subr.mxu0 0.0
      %3829 = vmatpush2.msra.mxu0 0.0
      %3830 = vmatprep.subr.mxu0 0.0
      %3831 = vmatpush2.msra.mxu0 0.0
      %3832 = vmatprep.subr.mxu0 0.0
      %3833 = vmatpush2.msra.mxu0 0.0
      %3834 = vmatprep.subr.mxu0 0.0
      %3835 = vmatpush2.msra.mxu0 0.0
      %3836 = vmatprep.subr.mxu0 0.0
      %3837 = vmatpush2.msra.mxu0 0.0
      %3838 = vmatprep.subr.mxu0 0.0
      %3839 = vmatpush2.msra.mxu0 0.0
      %3840 = vmatprep.subr.mxu0 0.0
      %3841 = vmatpush2.msra.mxu0 0.0
      %3842 = vmatprep.subr.mxu0 0.0
      %3843 = vmatpush2.msra.mxu0 0.0
      %3844 = vmatprep.subr.mxu0 0.0
      %3845 = vmatpush2.msra.mxu0 0.0
      %3846 = vmatprep.subr.mxu0 0.0
      %3847 = vmatpush2.msra.mxu0 0.0
      %3848 = vmatprep.mubr.f32.mxu0 0.0
      %3849 = vmatmul.mubr.f32.gmra.mxu0 %v3780
      %v3850 = vpop.f32.mrf.mxu0
      %v3851 = vadd.f32 0.0, %v3850
      %v3852 = vpop.f32.mrf.mxu0
      %3853 = vdwg.mxu0
      %v3854 = vadd.f32 %v3774, %v3851
      %s3855 = scalar_lea.vmem %s3, 72
      %v3856 = vld [vmem:[%s3855] sm:$0xff]
      %3857 = vrot.lane.b32.xlu0 %v252, 118
      %v3858 = vpop.permute.xlu0 %3857
      %v3860 = vsel %vm260, %v3856, 0
      %v3862 = vsel %vm264, %v3858, 0
      %3864 = vmatprep.subr.mxu0 0.0
      %3865 = vmatpush1.msra.mxu0 0.0
      %3866 = vmatprep.subr.mxu0 0.0
      %3867 = vmatpush1.msra.mxu0 0.0
      %3868 = vmatprep.subr.mxu0 0.0
      %3869 = vmatpush1.msra.mxu0 0.0
      %3870 = vmatprep.subr.mxu0 0.0
      %3871 = vmatpush1.msra.mxu0 0.0
      %3872 = vmatprep.subr.mxu0 0.0
      %3873 = vmatpush1.msra.mxu0 0.0
      %3874 = vmatprep.subr.mxu0 0.0
      %3875 = vmatpush1.msra.mxu0 0.0
      %3876 = vmatprep.subr.mxu0 0.0
      %3877 = vmatpush1.msra.mxu0 0.0
      %3878 = vmatprep.subr.mxu0 0.0
      %3879 = vmatpush1.msra.mxu0 0.0
      %3880 = vmatprep.subr.mxu0 0.0
      %3881 = vmatpush1.msra.mxu0 0.0
      %3882 = vmatprep.subr.mxu0 0.0
      %3883 = vmatpush1.msra.mxu0 0.0
      %3884 = vmatprep.subr.mxu0 0.0
      %3885 = vmatpush1.msra.mxu0 0.0
      %3886 = vmatprep.subr.mxu0 0.0
      %3887 = vmatpush1.msra.mxu0 0.0
      %3888 = vmatprep.subr.mxu0 0.0
      %3889 = vmatpush1.msra.mxu0 0.0
      %3890 = vmatprep.subr.mxu0 0.0
      %3891 = vmatpush1.msra.mxu0 0.0
      %3892 = vmatprep.subr.mxu0 0.0
      %3893 = vmatpush1.msra.mxu0 0.0
      %3894 = vmatprep.subr.mxu0 0.0
      %3895 = vmatpush1.msra.mxu0 %v3862
      %3896 = vmatprep.subr.mxu0 0.0
      %3897 = vmatpush2.msra.mxu0 0.0
      %3898 = vmatprep.subr.mxu0 0.0
      %3899 = vmatpush2.msra.mxu0 0.0
      %3900 = vmatprep.subr.mxu0 0.0
      %3901 = vmatpush2.msra.mxu0 0.0
      %3902 = vmatprep.subr.mxu0 0.0
      %3903 = vmatpush2.msra.mxu0 0.0
      %3904 = vmatprep.subr.mxu0 0.0
      %3905 = vmatpush2.msra.mxu0 0.0
      %3906 = vmatprep.subr.mxu0 0.0
      %3907 = vmatpush2.msra.mxu0 0.0
      %3908 = vmatprep.subr.mxu0 0.0
      %3909 = vmatpush2.msra.mxu0 0.0
      %3910 = vmatprep.subr.mxu0 0.0
      %3911 = vmatpush2.msra.mxu0 0.0
      %3912 = vmatprep.subr.mxu0 0.0
      %3913 = vmatpush2.msra.mxu0 0.0
      %3914 = vmatprep.subr.mxu0 0.0
      %3915 = vmatpush2.msra.mxu0 0.0
      %3916 = vmatprep.subr.mxu0 0.0
      %3917 = vmatpush2.msra.mxu0 0.0
      %3918 = vmatprep.subr.mxu0 0.0
      %3919 = vmatpush2.msra.mxu0 0.0
      %3920 = vmatprep.subr.mxu0 0.0
      %3921 = vmatpush2.msra.mxu0 0.0
      %3922 = vmatprep.subr.mxu0 0.0
      %3923 = vmatpush2.msra.mxu0 0.0
      %3924 = vmatprep.subr.mxu0 0.0
      %3925 = vmatpush2.msra.mxu0 0.0
      %3926 = vmatprep.subr.mxu0 0.0
      %3927 = vmatpush2.msra.mxu0 0.0
      %3928 = vmatprep.mubr.f32.mxu0 0.0
      %3929 = vmatmul.mubr.f32.gmra.mxu0 %v3860
      %v3930 = vpop.f32.mrf.mxu0
      %v3931 = vadd.f32 0.0, %v3930
      %v3932 = vpop.f32.mrf.mxu0
      %3933 = vdwg.mxu0
      %v3934 = vadd.f32 %v3854, %v3931
      %s3935 = scalar_lea.vmem %s3, 80
      %v3936 = vld [vmem:[%s3935] sm:$0xff]
      %3937 = vrot.lane.b32.xlu0 %v250, 117
      %v3938 = vpop.permute.xlu0 %3937
      %v3940 = vsel %vm260, %v3936, 0
      %v3942 = vsel %vm264, %v3938, 0
      %3944 = vmatprep.subr.mxu0 0.0
      %3945 = vmatpush1.msra.mxu0 0.0
      %3946 = vmatprep.subr.mxu0 0.0
      %3947 = vmatpush1.msra.mxu0 0.0
      %3948 = vmatprep.subr.mxu0 0.0
      %3949 = vmatpush1.msra.mxu0 0.0
      %3950 = vmatprep.subr.mxu0 0.0
      %3951 = vmatpush1.msra.mxu0 0.0
      %3952 = vmatprep.subr.mxu0 0.0
      %3953 = vmatpush1.msra.mxu0 0.0
      %3954 = vmatprep.subr.mxu0 0.0
      %3955 = vmatpush1.msra.mxu0 0.0
      %3956 = vmatprep.subr.mxu0 0.0
      %3957 = vmatpush1.msra.mxu0 0.0
      %3958 = vmatprep.subr.mxu0 0.0
      %3959 = vmatpush1.msra.mxu0 0.0
      %3960 = vmatprep.subr.mxu0 0.0
      %3961 = vmatpush1.msra.mxu0 0.0
      %3962 = vmatprep.subr.mxu0 0.0
      %3963 = vmatpush1.msra.mxu0 0.0
      %3964 = vmatprep.subr.mxu0 0.0
      %3965 = vmatpush1.msra.mxu0 0.0
      %3966 = vmatprep.subr.mxu0 0.0
      %3967 = vmatpush1.msra.mxu0 0.0
      %3968 = vmatprep.subr.mxu0 0.0
      %3969 = vmatpush1.msra.mxu0 0.0
      %3970 = vmatprep.subr.mxu0 0.0
      %3971 = vmatpush1.msra.mxu0 0.0
      %3972 = vmatprep.subr.mxu0 0.0
      %3973 = vmatpush1.msra.mxu0 0.0
      %3974 = vmatprep.subr.mxu0 0.0
      %3975 = vmatpush1.msra.mxu0 %v3942
      %3976 = vmatprep.subr.mxu0 0.0
      %3977 = vmatpush2.msra.mxu0 0.0
      %3978 = vmatprep.subr.mxu0 0.0
      %3979 = vmatpush2.msra.mxu0 0.0
      %3980 = vmatprep.subr.mxu0 0.0
      %3981 = vmatpush2.msra.mxu0 0.0
      %3982 = vmatprep.subr.mxu0 0.0
      %3983 = vmatpush2.msra.mxu0 0.0
      %3984 = vmatprep.subr.mxu0 0.0
      %3985 = vmatpush2.msra.mxu0 0.0
      %3986 = vmatprep.subr.mxu0 0.0
      %3987 = vmatpush2.msra.mxu0 0.0
      %3988 = vmatprep.subr.mxu0 0.0
      %3989 = vmatpush2.msra.mxu0 0.0
      %3990 = vmatprep.subr.mxu0 0.0
      %3991 = vmatpush2.msra.mxu0 0.0
      %3992 = vmatprep.subr.mxu0 0.0
      %3993 = vmatpush2.msra.mxu0 0.0
      %3994 = vmatprep.subr.mxu0 0.0
      %3995 = vmatpush2.msra.mxu0 0.0
      %3996 = vmatprep.subr.mxu0 0.0
      %3997 = vmatpush2.msra.mxu0 0.0
      %3998 = vmatprep.subr.mxu0 0.0
      %3999 = vmatpush2.msra.mxu0 0.0
      %4000 = vmatprep.subr.mxu0 0.0
      %4001 = vmatpush2.msra.mxu0 0.0
      %4002 = vmatprep.subr.mxu0 0.0
      %4003 = vmatpush2.msra.mxu0 0.0
      %4004 = vmatprep.subr.mxu0 0.0
      %4005 = vmatpush2.msra.mxu0 0.0
      %4006 = vmatprep.subr.mxu0 0.0
      %4007 = vmatpush2.msra.mxu0 0.0
      %4008 = vmatprep.mubr.f32.mxu0 0.0
      %4009 = vmatmul.mubr.f32.gmra.mxu0 %v3940
      %v4010 = vpop.f32.mrf.mxu0
      %v4011 = vadd.f32 0.0, %v4010
      %v4012 = vpop.f32.mrf.mxu0
      %4013 = vdwg.mxu0
      %v4014 = vadd.f32 %v3934, %v4011
      %s4015 = scalar_lea.vmem %s3, 88
      %v4016 = vld [vmem:[%s4015] sm:$0xff]
      %4017 = vrot.lane.b32.xlu0 %v252, 117
      %v4018 = vpop.permute.xlu0 %4017
      %v4020 = vsel %vm260, %v4016, 0
      %v4022 = vsel %vm264, %v4018, 0
      %4024 = vmatprep.subr.mxu0 0.0
      %4025 = vmatpush1.msra.mxu0 0.0
      %4026 = vmatprep.subr.mxu0 0.0
      %4027 = vmatpush1.msra.mxu0 0.0
      %4028 = vmatprep.subr.mxu0 0.0
      %4029 = vmatpush1.msra.mxu0 0.0
      %4030 = vmatprep.subr.mxu0 0.0
      %4031 = vmatpush1.msra.mxu0 0.0
      %4032 = vmatprep.subr.mxu0 0.0
      %4033 = vmatpush1.msra.mxu0 0.0
      %4034 = vmatprep.subr.mxu0 0.0
      %4035 = vmatpush1.msra.mxu0 0.0
      %4036 = vmatprep.subr.mxu0 0.0
      %4037 = vmatpush1.msra.mxu0 0.0
      %4038 = vmatprep.subr.mxu0 0.0
      %4039 = vmatpush1.msra.mxu0 0.0
      %4040 = vmatprep.subr.mxu0 0.0
      %4041 = vmatpush1.msra.mxu0 0.0
      %4042 = vmatprep.subr.mxu0 0.0
      %4043 = vmatpush1.msra.mxu0 0.0
      %4044 = vmatprep.subr.mxu0 0.0
      %4045 = vmatpush1.msra.mxu0 0.0
      %4046 = vmatprep.subr.mxu0 0.0
      %4047 = vmatpush1.msra.mxu0 0.0
      %4048 = vmatprep.subr.mxu0 0.0
      %4049 = vmatpush1.msra.mxu0 0.0
      %4050 = vmatprep.subr.mxu0 0.0
      %4051 = vmatpush1.msra.mxu0 0.0
      %4052 = vmatprep.subr.mxu0 0.0
      %4053 = vmatpush1.msra.mxu0 0.0
      %4054 = vmatprep.subr.mxu0 0.0
      %4055 = vmatpush1.msra.mxu0 %v4022
      %4056 = vmatprep.subr.mxu0 0.0
      %4057 = vmatpush2.msra.mxu0 0.0
      %4058 = vmatprep.subr.mxu0 0.0
      %4059 = vmatpush2.msra.mxu0 0.0
      %4060 = vmatprep.subr.mxu0 0.0
      %4061 = vmatpush2.msra.mxu0 0.0
      %4062 = vmatprep.subr.mxu0 0.0
      %4063 = vmatpush2.msra.mxu0 0.0
      %4064 = vmatprep.subr.mxu0 0.0
      %4065 = vmatpush2.msra.mxu0 0.0
      %4066 = vmatprep.subr.mxu0 0.0
      %4067 = vmatpush2.msra.mxu0 0.0
      %4068 = vmatprep.subr.mxu0 0.0
      %4069 = vmatpush2.msra.mxu0 0.0
      %4070 = vmatprep.subr.mxu0 0.0
      %4071 = vmatpush2.msra.mxu0 0.0
      %4072 = vmatprep.subr.mxu0 0.0
      %4073 = vmatpush2.msra.mxu0 0.0
      %4074 = vmatprep.subr.mxu0 0.0
      %4075 = vmatpush2.msra.mxu0 0.0
      %4076 = vmatprep.subr.mxu0 0.0
      %4077 = vmatpush2.msra.mxu0 0.0
      %4078 = vmatprep.subr.mxu0 0.0
      %4079 = vmatpush2.msra.mxu0 0.0
      %4080 = vmatprep.subr.mxu0 0.0
      %4081 = vmatpush2.msra.mxu0 0.0
      %4082 = vmatprep.subr.mxu0 0.0
      %4083 = vmatpush2.msra.mxu0 0.0
      %4084 = vmatprep.subr.mxu0 0.0
      %4085 = vmatpush2.msra.mxu0 0.0
      %4086 = vmatprep.subr.mxu0 0.0
      %4087 = vmatpush2.msra.mxu0 0.0
      %4088 = vmatprep.mubr.f32.mxu0 0.0
      %4089 = vmatmul.mubr.f32.gmra.mxu0 %v4020
      %v4090 = vpop.f32.mrf.mxu0
      %v4091 = vadd.f32 0.0, %v4090
      %v4092 = vpop.f32.mrf.mxu0
      %4093 = vdwg.mxu0
      %v4094 = vadd.f32 %v4014, %v4091
      %s4095 = scalar_lea.vmem %s3, 96
      %v4096 = vld [vmem:[%s4095] sm:$0xff]
      %4097 = vrot.lane.b32.xlu0 %v254, 118
      %v4098 = vpop.permute.xlu0 %4097
      %v4100 = vsel %vm260, %v4096, 0
      %v4102 = vsel %vm264, %v4098, 0
      %4104 = vmatprep.subr.mxu0 0.0
      %4105 = vmatpush1.msra.mxu0 0.0
      %4106 = vmatprep.subr.mxu0 0.0
      %4107 = vmatpush1.msra.mxu0 0.0
      %4108 = vmatprep.subr.mxu0 0.0
      %4109 = vmatpush1.msra.mxu0 0.0
      %4110 = vmatprep.subr.mxu0 0.0
      %4111 = vmatpush1.msra.mxu0 0.0
      %4112 = vmatprep.subr.mxu0 0.0
      %4113 = vmatpush1.msra.mxu0 0.0
      %4114 = vmatprep.subr.mxu0 0.0
      %4115 = vmatpush1.msra.mxu0 0.0
      %4116 = vmatprep.subr.mxu0 0.0
      %4117 = vmatpush1.msra.mxu0 0.0
      %4118 = vmatprep.subr.mxu0 0.0
      %4119 = vmatpush1.msra.mxu0 0.0
      %4120 = vmatprep.subr.mxu0 0.0
      %4121 = vmatpush1.msra.mxu0 0.0
      %4122 = vmatprep.subr.mxu0 0.0
      %4123 = vmatpush1.msra.mxu0 0.0
      %4124 = vmatprep.subr.mxu0 0.0
      %4125 = vmatpush1.msra.mxu0 0.0
      %4126 = vmatprep.subr.mxu0 0.0
      %4127 = vmatpush1.msra.mxu0 0.0
      %4128 = vmatprep.subr.mxu0 0.0
      %4129 = vmatpush1.msra.mxu0 0.0
      %4130 = vmatprep.subr.mxu0 0.0
      %4131 = vmatpush1.msra.mxu0 0.0
      %4132 = vmatprep.subr.mxu0 0.0
      %4133 = vmatpush1.msra.mxu0 0.0
      %4134 = vmatprep.subr.mxu0 0.0
      %4135 = vmatpush1.msra.mxu0 %v4102
      %4136 = vmatprep.subr.mxu0 0.0
      %4137 = vmatpush2.msra.mxu0 0.0
      %4138 = vmatprep.subr.mxu0 0.0
      %4139 = vmatpush2.msra.mxu0 0.0
      %4140 = vmatprep.subr.mxu0 0.0
      %4141 = vmatpush2.msra.mxu0 0.0
      %4142 = vmatprep.subr.mxu0 0.0
      %4143 = vmatpush2.msra.mxu0 0.0
      %4144 = vmatprep.subr.mxu0 0.0
      %4145 = vmatpush2.msra.mxu0 0.0
      %4146 = vmatprep.subr.mxu0 0.0
      %4147 = vmatpush2.msra.mxu0 0.0
      %4148 = vmatprep.subr.mxu0 0.0
      %4149 = vmatpush2.msra.mxu0 0.0
      %4150 = vmatprep.subr.mxu0 0.0
      %4151 = vmatpush2.msra.mxu0 0.0
      %4152 = vmatprep.subr.mxu0 0.0
      %4153 = vmatpush2.msra.mxu0 0.0
      %4154 = vmatprep.subr.mxu0 0.0
      %4155 = vmatpush2.msra.mxu0 0.0
      %4156 = vmatprep.subr.mxu0 0.0
      %4157 = vmatpush2.msra.mxu0 0.0
      %4158 = vmatprep.subr.mxu0 0.0
      %4159 = vmatpush2.msra.mxu0 0.0
      %4160 = vmatprep.subr.mxu0 0.0
      %4161 = vmatpush2.msra.mxu0 0.0
      %4162 = vmatprep.subr.mxu0 0.0
      %4163 = vmatpush2.msra.mxu0 0.0
      %4164 = vmatprep.subr.mxu0 0.0
      %4165 = vmatpush2.msra.mxu0 0.0
      %4166 = vmatprep.subr.mxu0 0.0
      %4167 = vmatpush2.msra.mxu0 0.0
      %4168 = vmatprep.mubr.f32.mxu0 0.0
      %4169 = vmatmul.mubr.f32.gmra.mxu0 %v4100
      %v4170 = vpop.f32.mrf.mxu0
      %v4171 = vadd.f32 0.0, %v4170
      %v4172 = vpop.f32.mrf.mxu0
      %4173 = vdwg.mxu0
      %v4174 = vadd.f32 %v4094, %v4171
      %s4175 = scalar_lea.vmem %s3, 104
      %v4176 = vld [vmem:[%s4175] sm:$0xff]
      %4177 = vrot.lane.b32.xlu0 %v256, 118
      %v4178 = vpop.permute.xlu0 %4177
      %v4180 = vsel %vm260, %v4176, 0
      %v4182 = vsel %vm264, %v4178, 0
      %4184 = vmatprep.subr.mxu0 0.0
      %4185 = vmatpush1.msra.mxu0 0.0
      %4186 = vmatprep.subr.mxu0 0.0
      %4187 = vmatpush1.msra.mxu0 0.0
      %4188 = vmatprep.subr.mxu0 0.0
      %4189 = vmatpush1.msra.mxu0 0.0
      %4190 = vmatprep.subr.mxu0 0.0
      %4191 = vmatpush1.msra.mxu0 0.0
      %4192 = vmatprep.subr.mxu0 0.0
      %4193 = vmatpush1.msra.mxu0 0.0
      %4194 = vmatprep.subr.mxu0 0.0
      %4195 = vmatpush1.msra.mxu0 0.0
      %4196 = vmatprep.subr.mxu0 0.0
      %4197 = vmatpush1.msra.mxu0 0.0
      %4198 = vmatprep.subr.mxu0 0.0
      %4199 = vmatpush1.msra.mxu0 0.0
      %4200 = vmatprep.subr.mxu0 0.0
      %4201 = vmatpush1.msra.mxu0 0.0
      %4202 = vmatprep.subr.mxu0 0.0
      %4203 = vmatpush1.msra.mxu0 0.0
      %4204 = vmatprep.subr.mxu0 0.0
      %4205 = vmatpush1.msra.mxu0 0.0
      %4206 = vmatprep.subr.mxu0 0.0
      %4207 = vmatpush1.msra.mxu0 0.0
      %4208 = vmatprep.subr.mxu0 0.0
      %4209 = vmatpush1.msra.mxu0 0.0
      %4210 = vmatprep.subr.mxu0 0.0
      %4211 = vmatpush1.msra.mxu0 0.0
      %4212 = vmatprep.subr.mxu0 0.0
      %4213 = vmatpush1.msra.mxu0 0.0
      %4214 = vmatprep.subr.mxu0 0.0
      %4215 = vmatpush1.msra.mxu0 %v4182
      %4216 = vmatprep.subr.mxu0 0.0
      %4217 = vmatpush2.msra.mxu0 0.0
      %4218 = vmatprep.subr.mxu0 0.0
      %4219 = vmatpush2.msra.mxu0 0.0
      %4220 = vmatprep.subr.mxu0 0.0
      %4221 = vmatpush2.msra.mxu0 0.0
      %4222 = vmatprep.subr.mxu0 0.0
      %4223 = vmatpush2.msra.mxu0 0.0
      %4224 = vmatprep.subr.mxu0 0.0
      %4225 = vmatpush2.msra.mxu0 0.0
      %4226 = vmatprep.subr.mxu0 0.0
      %4227 = vmatpush2.msra.mxu0 0.0
      %4228 = vmatprep.subr.mxu0 0.0
      %4229 = vmatpush2.msra.mxu0 0.0
      %4230 = vmatprep.subr.mxu0 0.0
      %4231 = vmatpush2.msra.mxu0 0.0
      %4232 = vmatprep.subr.mxu0 0.0
      %4233 = vmatpush2.msra.mxu0 0.0
      %4234 = vmatprep.subr.mxu0 0.0
      %4235 = vmatpush2.msra.mxu0 0.0
      %4236 = vmatprep.subr.mxu0 0.0
      %4237 = vmatpush2.msra.mxu0 0.0
      %4238 = vmatprep.subr.mxu0 0.0
      %4239 = vmatpush2.msra.mxu0 0.0
      %4240 = vmatprep.subr.mxu0 0.0
      %4241 = vmatpush2.msra.mxu0 0.0
      %4242 = vmatprep.subr.mxu0 0.0
      %4243 = vmatpush2.msra.mxu0 0.0
      %4244 = vmatprep.subr.mxu0 0.0
      %4245 = vmatpush2.msra.mxu0 0.0
      %4246 = vmatprep.subr.mxu0 0.0
      %4247 = vmatpush2.msra.mxu0 0.0
      %4248 = vmatprep.mubr.f32.mxu0 0.0
      %4249 = vmatmul.mubr.f32.gmra.mxu0 %v4180
      %v4250 = vpop.f32.mrf.mxu0
      %v4251 = vadd.f32 0.0, %v4250
      %v4252 = vpop.f32.mrf.mxu0
      %4253 = vdwg.mxu0
      %v4254 = vadd.f32 %v4174, %v4251
      %s4255 = scalar_lea.vmem %s3, 112
      %v4256 = vld [vmem:[%s4255] sm:$0xff]
      %4257 = vrot.lane.b32.xlu0 %v254, 117
      %v4258 = vpop.permute.xlu0 %4257
      %v4260 = vsel %vm260, %v4256, 0
      %v4262 = vsel %vm264, %v4258, 0
      %4264 = vmatprep.subr.mxu0 0.0
      %4265 = vmatpush1.msra.mxu0 0.0
      %4266 = vmatprep.subr.mxu0 0.0
      %4267 = vmatpush1.msra.mxu0 0.0
      %4268 = vmatprep.subr.mxu0 0.0
      %4269 = vmatpush1.msra.mxu0 0.0
      %4270 = vmatprep.subr.mxu0 0.0
      %4271 = vmatpush1.msra.mxu0 0.0
      %4272 = vmatprep.subr.mxu0 0.0
      %4273 = vmatpush1.msra.mxu0 0.0
      %4274 = vmatprep.subr.mxu0 0.0
      %4275 = vmatpush1.msra.mxu0 0.0
      %4276 = vmatprep.subr.mxu0 0.0
      %4277 = vmatpush1.msra.mxu0 0.0
      %4278 = vmatprep.subr.mxu0 0.0
      %4279 = vmatpush1.msra.mxu0 0.0
      %4280 = vmatprep.subr.mxu0 0.0
      %4281 = vmatpush1.msra.mxu0 0.0
      %4282 = vmatprep.subr.mxu0 0.0
      %4283 = vmatpush1.msra.mxu0 0.0
      %4284 = vmatprep.subr.mxu0 0.0
      %4285 = vmatpush1.msra.mxu0 0.0
      %4286 = vmatprep.subr.mxu0 0.0
      %4287 = vmatpush1.msra.mxu0 0.0
      %4288 = vmatprep.subr.mxu0 0.0
      %4289 = vmatpush1.msra.mxu0 0.0
      %4290 = vmatprep.subr.mxu0 0.0
      %4291 = vmatpush1.msra.mxu0 0.0
      %4292 = vmatprep.subr.mxu0 0.0
      %4293 = vmatpush1.msra.mxu0 0.0
      %4294 = vmatprep.subr.mxu0 0.0
      %4295 = vmatpush1.msra.mxu0 %v4262
      %4296 = vmatprep.subr.mxu0 0.0
      %4297 = vmatpush2.msra.mxu0 0.0
      %4298 = vmatprep.subr.mxu0 0.0
      %4299 = vmatpush2.msra.mxu0 0.0
      %4300 = vmatprep.subr.mxu0 0.0
      %4301 = vmatpush2.msra.mxu0 0.0
      %4302 = vmatprep.subr.mxu0 0.0
      %4303 = vmatpush2.msra.mxu0 0.0
      %4304 = vmatprep.subr.mxu0 0.0
      %4305 = vmatpush2.msra.mxu0 0.0
      %4306 = vmatprep.subr.mxu0 0.0
      %4307 = vmatpush2.msra.mxu0 0.0
      %4308 = vmatprep.subr.mxu0 0.0
      %4309 = vmatpush2.msra.mxu0 0.0
      %4310 = vmatprep.subr.mxu0 0.0
      %4311 = vmatpush2.msra.mxu0 0.0
      %4312 = vmatprep.subr.mxu0 0.0
      %4313 = vmatpush2.msra.mxu0 0.0
      %4314 = vmatprep.subr.mxu0 0.0
      %4315 = vmatpush2.msra.mxu0 0.0
      %4316 = vmatprep.subr.mxu0 0.0
      %4317 = vmatpush2.msra.mxu0 0.0
      %4318 = vmatprep.subr.mxu0 0.0
      %4319 = vmatpush2.msra.mxu0 0.0
      %4320 = vmatprep.subr.mxu0 0.0
      %4321 = vmatpush2.msra.mxu0 0.0
      %4322 = vmatprep.subr.mxu0 0.0
      %4323 = vmatpush2.msra.mxu0 0.0
      %4324 = vmatprep.subr.mxu0 0.0
      %4325 = vmatpush2.msra.mxu0 0.0
      %4326 = vmatprep.subr.mxu0 0.0
      %4327 = vmatpush2.msra.mxu0 0.0
      %4328 = vmatprep.mubr.f32.mxu0 0.0
      %4329 = vmatmul.mubr.f32.gmra.mxu0 %v4260
      %v4330 = vpop.f32.mrf.mxu0
      %v4331 = vadd.f32 0.0, %v4330
      %v4332 = vpop.f32.mrf.mxu0
      %4333 = vdwg.mxu0
      %v4334 = vadd.f32 %v4254, %v4331
      %s4335 = scalar_lea.vmem %s3, 120
      %v4336 = vld [vmem:[%s4335] sm:$0xff]
      %4337 = vrot.lane.b32.xlu0 %v256, 117
      %v4338 = vpop.permute.xlu0 %4337
      %v4340 = vsel %vm260, %v4336, 0
      %v4342 = vsel %vm264, %v4338, 0
      %4344 = vmatprep.subr.mxu0 0.0
      %4345 = vmatpush1.msra.mxu0 0.0
      %4346 = vmatprep.subr.mxu0 0.0
      %4347 = vmatpush1.msra.mxu0 0.0
      %4348 = vmatprep.subr.mxu0 0.0
      %4349 = vmatpush1.msra.mxu0 0.0
      %4350 = vmatprep.subr.mxu0 0.0
      %4351 = vmatpush1.msra.mxu0 0.0
      %4352 = vmatprep.subr.mxu0 0.0
      %4353 = vmatpush1.msra.mxu0 0.0
      %4354 = vmatprep.subr.mxu0 0.0
      %4355 = vmatpush1.msra.mxu0 0.0
      %4356 = vmatprep.subr.mxu0 0.0
      %4357 = vmatpush1.msra.mxu0 0.0
      %4358 = vmatprep.subr.mxu0 0.0
      %4359 = vmatpush1.msra.mxu0 0.0
      %4360 = vmatprep.subr.mxu0 0.0
      %4361 = vmatpush1.msra.mxu0 0.0
      %4362 = vmatprep.subr.mxu0 0.0
      %4363 = vmatpush1.msra.mxu0 0.0
      %4364 = vmatprep.subr.mxu0 0.0
      %4365 = vmatpush1.msra.mxu0 0.0
      %4366 = vmatprep.subr.mxu0 0.0
      %4367 = vmatpush1.msra.mxu0 0.0
      %4368 = vmatprep.subr.mxu0 0.0
      %4369 = vmatpush1.msra.mxu0 0.0
      %4370 = vmatprep.subr.mxu0 0.0
      %4371 = vmatpush1.msra.mxu0 0.0
      %4372 = vmatprep.subr.mxu0 0.0
      %4373 = vmatpush1.msra.mxu0 0.0
      %4374 = vmatprep.subr.mxu0 0.0
      %4375 = vmatpush1.msra.mxu0 %v4342
      %4376 = vmatprep.subr.mxu0 0.0
      %4377 = vmatpush2.msra.mxu0 0.0
      %4378 = vmatprep.subr.mxu0 0.0
      %4379 = vmatpush2.msra.mxu0 0.0
      %4380 = vmatprep.subr.mxu0 0.0
      %4381 = vmatpush2.msra.mxu0 0.0
      %4382 = vmatprep.subr.mxu0 0.0
      %4383 = vmatpush2.msra.mxu0 0.0
      %4384 = vmatprep.subr.mxu0 0.0
      %4385 = vmatpush2.msra.mxu0 0.0
      %4386 = vmatprep.subr.mxu0 0.0
      %4387 = vmatpush2.msra.mxu0 0.0
      %4388 = vmatprep.subr.mxu0 0.0
      %4389 = vmatpush2.msra.mxu0 0.0
      %4390 = vmatprep.subr.mxu0 0.0
      %4391 = vmatpush2.msra.mxu0 0.0
      %4392 = vmatprep.subr.mxu0 0.0
      %4393 = vmatpush2.msra.mxu0 0.0
      %4394 = vmatprep.subr.mxu0 0.0
      %4395 = vmatpush2.msra.mxu0 0.0
      %4396 = vmatprep.subr.mxu0 0.0
      %4397 = vmatpush2.msra.mxu0 0.0
      %4398 = vmatprep.subr.mxu0 0.0
      %4399 = vmatpush2.msra.mxu0 0.0
      %4400 = vmatprep.subr.mxu0 0.0
      %4401 = vmatpush2.msra.mxu0 0.0
      %4402 = vmatprep.subr.mxu0 0.0
      %4403 = vmatpush2.msra.mxu0 0.0
      %4404 = vmatprep.subr.mxu0 0.0
      %4405 = vmatpush2.msra.mxu0 0.0
      %4406 = vmatprep.subr.mxu0 0.0
      %4407 = vmatpush2.msra.mxu0 0.0
      %4408 = vmatprep.mubr.f32.mxu0 0.0
      %4409 = vmatmul.mubr.f32.gmra.mxu0 %v4340
      %v4410 = vpop.f32.mrf.mxu0
      %v4411 = vadd.f32 0.0, %v4410
      %v4412 = vpop.f32.mrf.mxu0
      %4413 = vdwg.mxu0
      %v4414 = vadd.f32 %v4334, %v4411
      %v4415 = vadd.f32 %v3141, %v4414
      %vm4416 = vcmask 637952
      %4417 = vst.msk [vmem:[%s242] sm:$0xff] %vm4416, %v4415
      %vm4418 = vcmask 654960
      %4419 = vst.msk [vmem:[%s242] sm:$0xff] %vm4418, 0.0
      %p4420 = scmp.lt.s32.totalorder %s16, 1
      %s4421 = scalar_select %p4420, %s16, 1
      %s4422 = smul.addr %s4421, 8
      %s4423 = scalar_lea.vmem %s5, %s4422
      // Predicated region
      $region41: #{res_block.3} parent=39 // pred_check
        %p4424 = pneg %p149
      $region42: #{res_block.3} parent=39 // pred_check_branch
        %4426 = sbr.rel (%p4424) target = $region44
      $region43: #{res_block.3} parent=39 // pred_region
        _
      $region44: #{res_block.3} parent=39 // pred_fallthru
        _
    $region40: #{res_block.3} parent=5 // pred_fallthru
      _
    %p4427 = scmp.le.s32.totalorder 2, %s11
    // Predicated region
    $region45: #{res_block.3} parent=5 // pred_check
      %p4428 = pneg %p4427
    $region46: #{res_block.3} parent=5 // pred_check_branch
      %4430 = sbr.rel (%p4428) target = $region48
    $region47: #{res_block.3} parent=5 // pred_region
      %s4431 = ssub.s32 %s11, 2
      // Predicated region
      $region49: #{res_block.3} parent=47 // pred_check
        %p4432 = pneg %p155
      $region50: #{res_block.3} parent=47 // pred_check_branch
        %4434 = sbr.rel (%p4432) target = $region52
      $region51: #{res_block.3} parent=47 // pred_region
        %p4435 = scmp.lt.s32.totalorder %s17, 1
        %s4436 = scalar_select %p4435, %s17, 1
        %s4437 = smul.addr %s4436, 8
        %s4438 = scalar_lea.vmem %s5, %s4437
      $region52: #{res_block.3} parent=47 // pred_fallthru
        _
    $region48: #{res_block.3} parent=5 // pred_fallthru
      _
  $region6: #{res_block.3} parent=0 // loop_footer
    %s15 = sadd.s32 1, %s11
  $region7: #{res_block.3} parent=0 // loop_footer_branch
    %10 = sbr.rel target = $region3
  $region8: #{res_block.3} parent=0 // loop_exit
    _

</llo_original>
